<compile_context>
chip_gen: v6e
topology: v6e:2x2x1
jax: 0.10.0
libtpu: 0.0.40
codegen_flags: <defaults>
</compile_context>

<pallas_src>
import functools

import jax
import jax.numpy as jnp
from jax.experimental import pallas as pl
from jax.experimental.pallas import tpu as pltpu

SE_HIDDEN_PAD = 128  # pad SE bottleneck dim to a full lane width (zero-padded, exact)


def _fused_kernel(x_ref, w1_ref, w2_ref, bnp_ref,
                  se1w1_ref, se1w2_ref, se2w1_ref, se2w2_ref,
                  out_ref, xpad1_ref, xpad2_ref,
                  *, H, W, d, use_identity_conv):
    """One image per grid step: both conv+BN+SE+residual+ReLU blocks, fully in VMEM.

    x_ref     : (1, H, W, Cin)  f32   unpadded input image
    w1_ref    : (9*Cin, Wout1)  bf16  conv1 im2col weights (tap-major, Cin-minor);
                                      if use_identity_conv, cols [Cout:2*Cout] hold the
                                      1x1 identity conv (center-tap rows only)
    w2_ref    : (9*Cout, Cout)  bf16  conv2 (dilated) im2col weights
    bnp_ref   : (5, Cout)       f32   rows: [scale1, bias1, id_bias, scale2, bias2]
    se*w*_ref : SE FC weights, transposed, hidden dim zero-padded to 128
    out_ref   : (1, H*W, Cout)  f32
    xpad1_ref : (H+2,  W+2,  Cin)  bf16 scratch (padded input,  block 1)
    xpad2_ref : (H+2d, W+2d, Cout) bf16 scratch (padded out1,   block 2)
    """
    Cin = x_ref.shape[3]
    Cout = se1w1_ref.shape[0]
    M = H * W
    f32 = jnp.float32

    scale1 = bnp_ref[0:1, :]
    bias1 = bnp_ref[1:2, :]
    id_b = bnp_ref[2:3, :]
    scale2 = bnp_ref[3:4, :]
    bias2 = bnp_ref[4:5, :]

    # ---------------- block 1: conv3x3 (pad=1) + BN -> SE -> + identity -> ReLU --------
    # In-kernel zero padding (scratch zeroed every step: grid may be split across cores).
    xpad1_ref[...] = jnp.zeros_like(xpad1_ref)
    xpad1_ref[1:1 + H, 1:1 + W, :] = x_ref[0, :, :, :].astype(xpad1_ref.dtype)

    acc1 = None
    for t in range(9):                      # 9 accumulating bf16 matmuls, f32 accumulator
        dh, dw = divmod(t, 3)
        tap = xpad1_ref[dh:dh + H, dw:dw + W, :].reshape(M, Cin)
        part = jnp.dot(tap, w1_ref[t * Cin:(t + 1) * Cin, :],
                       preferred_element_type=f32)
        acc1 = part if acc1 is None else acc1 + part

    if use_identity_conv:
        z1 = acc1[:, :Cout] * scale1 + bias1          # folded BN (inference)
        ident1 = acc1[:, Cout:] + id_b                # 1x1 identity conv (fused columns)
    else:
        z1 = acc1 * scale1 + bias1
        ident1 = x_ref[0, :, :, :].reshape(M, Cout)   # Cin == Cout: identity is the input

    # SE1: global avg pool -> FC -> ReLU -> FC -> sigmoid
    s1 = jnp.sum(z1, axis=0, keepdims=True) * (1.0 / M)                    # (1, Cout)
    h1 = jnp.maximum(jnp.dot(s1, se1w1_ref[...], preferred_element_type=f32), 0.0)
    g1 = 1.0 / (1.0 + jnp.exp(-jnp.dot(h1, se1w2_ref[...], preferred_element_type=f32)))

    out1 = jnp.maximum(z1 * g1 + ident1, 0.0)                              # (M, Cout) f32

    # ---------------- block 2: dilated conv3x3 (pad=d) + BN -> SE -> + out1 -> ReLU ----
    xpad2_ref[...] = jnp.zeros_like(xpad2_ref)
    xpad2_ref[d:d + H, d:d + W, :] = out1.reshape(H, W, Cout).astype(xpad2_ref.dtype)

    acc2 = None
    for t in range(9):
        dh, dw = divmod(t, 3)
        tap = xpad2_ref[dh * d:dh * d + H, dw * d:dw * d + W, :].reshape(M, Cout)
        part = jnp.dot(tap, w2_ref[t * Cout:(t + 1) * Cout, :],
                       preferred_element_type=f32)
        acc2 = part if acc2 is None else acc2 + part

    z2 = acc2 * scale2 + bias2
    s2 = jnp.sum(z2, axis=0, keepdims=True) * (1.0 / M)
    h2 = jnp.maximum(jnp.dot(s2, se2w1_ref[...], preferred_element_type=f32), 0.0)
    g2 = 1.0 / (1.0 + jnp.exp(-jnp.dot(h2, se2w2_ref[...], preferred_element_type=f32)))

    out2 = jnp.maximum(z2 * g2 + out1, 0.0)
    out_ref[0, :, :] = out2.astype(out_ref.dtype)


def dilated_double_conv_with_se(x_nchw, params, dilation, eps=1e-5):
    """Forward pass of DilatedDoubleConvWithSE. x_nchw: (N, Cin, H, W) float32."""
    p = params
    N, Cin, H, W = x_nchw.shape
    Cout = p["conv1_w"].shape[0]
    d = int(dilation)
    use_id = (Cin != Cout)

    x_nhwc = jnp.transpose(x_nchw, (0, 2, 3, 1)).astype(jnp.float32)

    # Folded BatchNorm (inference mode), conv bias included; one small (5, Cout) block.
    def fold_bn(conv_b, gamma, beta, mean, var):
        scale = gamma / jnp.sqrt(var + eps)
        bias = beta + (conv_b - mean) * scale
        return scale, bias

    s1, b1 = fold_bn(p["conv1_b"], p["bn1_gamma"], p["bn1_beta"], p["bn1_mean"], p["bn1_var"])
    s2, b2 = fold_bn(p["conv2_b"], p["bn2_gamma"], p["bn2_beta"], p["bn2_mean"], p["bn2_var"])
    id_bias = p["id_b"] if use_id else jnp.zeros((Cout,), jnp.float32)
    bnp = jnp.stack([s1, b1, id_bias, s2, b2], axis=0).astype(jnp.float32)     # (5, Cout)

    # conv1 (OIHW) -> (9*Cin, Cout), tap-major / Cin-minor; fold the 1x1 identity conv
    # into extra columns [Cout:2*Cout] (nonzero only on the center-tap rows).
    w1_conv = jnp.transpose(p["conv1_w"], (2, 3, 1, 0)).reshape(9 * Cin, Cout)
    if use_id:
        idw = jnp.transpose(p["id_w"][:, :, 0, 0], (1, 0))                     # (Cin, Cout)
        w1_id = jnp.zeros((9 * Cin, Cout), jnp.float32).at[4 * Cin:5 * Cin, :].set(idw)
        w1_mat = jnp.concatenate([w1_conv, w1_id], axis=1)
    else:
        w1_mat = w1_conv
    w1_mat = w1_mat.astype(jnp.bfloat16)
    Wout1 = w1_mat.shape[1]

    w2_mat = jnp.transpose(p["conv2_w"], (2, 3, 1, 0)).reshape(9 * Cout, Cout)
    w2_mat = w2_mat.astype(jnp.bfloat16)

    def se_mats(w1, w2):
        # torch Linear: y = sigmoid(relu(s @ w1.T) @ w2.T); pad hidden dim to 128 (exact).
        cr = w1.shape[0]
        m1 = jnp.zeros((Cout, SE_HIDDEN_PAD), jnp.float32).at[:, :cr].set(w1.T)
        m2 = jnp.zeros((SE_HIDDEN_PAD, Cout), jnp.float32).at[:cr, :].set(w2.T)
        return m1, m2

    se1_m1, se1_m2 = se_mats(p["se1_w1"], p["se1_w2"])
    se2_m1, se2_m2 = se_mats(p["se2_w1"], p["se2_w2"])

    kernel = functools.partial(_fused_kernel, H=H, W=W, d=d, use_identity_conv=use_id)

    out_flat = pl.pallas_call(
        kernel,
        out_shape=jax.ShapeDtypeStruct((N, H * W, Cout), jnp.float32),
        grid_spec=pltpu.PrefetchScalarGridSpec(
            num_scalar_prefetch=0,
            grid=(N,),
            in_specs=[
                pl.BlockSpec((1, H, W, Cin), lambda n: (n, 0, 0, 0)),
                pl.BlockSpec((9 * Cin, Wout1), lambda n: (0, 0)),
                pl.BlockSpec((9 * Cout, Cout), lambda n: (0, 0)),
                pl.BlockSpec((5, Cout), lambda n: (0, 0)),
                pl.BlockSpec((Cout, SE_HIDDEN_PAD), lambda n: (0, 0)),
                pl.BlockSpec((SE_HIDDEN_PAD, Cout), lambda n: (0, 0)),
                pl.BlockSpec((Cout, SE_HIDDEN_PAD), lambda n: (0, 0)),
                pl.BlockSpec((SE_HIDDEN_PAD, Cout), lambda n: (0, 0)),
            ],
            out_specs=pl.BlockSpec((1, H * W, Cout), lambda n: (n, 0, 0)),
            scratch_shapes=[
                pltpu.VMEM((H + 2, W + 2, Cin), jnp.bfloat16),
                pltpu.VMEM((H + 2 * d, W + 2 * d, Cout), jnp.bfloat16),
            ],
        ),
        compiler_params=pltpu.CompilerParams(
            dimension_semantics=("parallel",),
            vmem_limit_bytes=32 * 1024 * 1024,
        ),
    )(x_nhwc, w1_mat, w2_mat, bnp, se1_m1, se1_m2, se2_m1, se2_m2)

    out_nhwc = out_flat.reshape(N, H, W, Cout)
    return jnp.transpose(out_nhwc, (0, 3, 1, 2))                               # back to NCHW


def _reference(x, params, dilation, eps=1e-5):
    """Pure-JAX f32 reference matching the PyTorch module (inference-mode BN)."""
    p = params

    def conv_bn(t, w, b, gamma, beta, mean, var, dil):
        y = jax.lax.conv_general_dilated(
            t, w, window_strides=(1, 1),
            padding=((dil, dil), (dil, dil)),
            rhs_dilation=(dil, dil),
            dimension_numbers=("NCHW", "OIHW", "NCHW"))
        y = y + b.reshape(1, -1, 1, 1)
        y = (y - mean.reshape(1, -1, 1, 1)) / jnp.sqrt(var.reshape(1, -1, 1, 1) + eps)
        return y * gamma.reshape(1, -1, 1, 1) + beta.reshape(1, -1, 1, 1)

    def se(t, w1, w2):
        s = jnp.mean(t, axis=(2, 3))
        h = jnp.maximum(s @ w1.T, 0.0)
        y = jax.nn.sigmoid(h @ w2.T)
        return t * y[:, :, None, None]

    Cin = x.shape[1]
    Cout = p["conv1_w"].shape[0]
    if Cin == Cout:
        identity1 = x
    else:
        identity1 = jax.lax.conv_general_dilated(
            x, p["id_w"], (1, 1), ((0, 0), (0, 0)),
            dimension_numbers=("NCHW", "OIHW", "NCHW")) + p["id_b"].reshape(1, -1, 1, 1)

    z1 = conv_bn(x, p["conv1_w"], p["conv1_b"], p["bn1_gamma"], p["bn1_beta"],
                 p["bn1_mean"], p["bn1_var"], 1)
    out1 = jnp.maximum(se(z1, p["se1_w1"], p["se1_w2"]) + identity1, 0.0)

    z2 = conv_bn(out1, p["conv2_w"], p["conv2_b"], p["bn2_gamma"], p["bn2_beta"],
                 p["bn2_mean"], p["bn2_var"], dilation)
    out2 = jnp.maximum(se(z2, p["se2_w1"], p["se2_w2"]) + out1, 0.0)
    return out2


if __name__ == "__main__":
    key = jax.random.PRNGKey(0)
    N, Cin, Cout, H, W, dilation = 2, 4, 32, 16, 16, 2
    Cr = Cout // 16  # SELayer default reduction=16

    ks = jax.random.split(key, 20)

    def nrm(i, shape, s=1.0):
        return s * jax.random.normal(ks[i], shape, dtype=jnp.float32)

    x = nrm(0, (N, Cin, H, W))
    params = dict(
        conv1_w=nrm(1, (Cout, Cin, 3, 3), 0.1), conv1_b=nrm(2, (Cout,), 0.1),
        bn1_gamma=1.0 + nrm(3, (Cout,), 0.1), bn1_beta=nrm(4, (Cout,), 0.1),
        bn1_mean=nrm(5, (Cout,), 0.1), bn1_var=jnp.abs(1.0 + nrm(6, (Cout,), 0.1)),
        se1_w1=nrm(7, (Cr, Cout), 0.3), se1_w2=nrm(8, (Cout, Cr), 0.3),
        id_w=nrm(9, (Cout, Cin, 1, 1), 0.3), id_b=nrm(10, (Cout,), 0.1),
        conv2_w=nrm(11, (Cout, Cout, 3, 3), 0.05), conv2_b=nrm(12, (Cout,), 0.1),
        bn2_gamma=1.0 + nrm(13, (Cout,), 0.1), bn2_beta=nrm(14, (Cout,), 0.1),
        bn2_mean=nrm(15, (Cout,), 0.1), bn2_var=jnp.abs(1.0 + nrm(16, (Cout,), 0.1)),
        se2_w1=nrm(17, (Cr, Cout), 0.3), se2_w2=nrm(18, (Cout, Cr), 0.3),
    )

    out = dilated_double_conv_with_se(x, params, dilation)
    out = jax.block_until_ready(out)

    ref = _reference(x, params, dilation)
    assert out.shape == (N, Cout, H, W)
    max_err = float(jnp.max(jnp.abs(out - ref)))
    # bf16 MXU operands with f32 accumulation -> bf16-level tolerance vs f32 reference.
    assert jnp.allclose(out, ref, atol=3e-2, rtol=3e-2), \
        f"mismatch vs reference (max abs err {max_err})"
    print("KERNEL_OK")
</pallas_src>

<mosaic_0001>
module attributes {stable_mosaic.version = 11 : i64} {
  func.func @_fused_kernel(%arg0: i32, %arg1: memref<1x16x16x4xf32, #tpu.memory_space<vmem>>, %arg2: memref<36x64xbf16, #tpu.memory_space<vmem>>, %arg3: memref<288x32xbf16, #tpu.memory_space<vmem>>, %arg4: memref<5x32xf32, #tpu.memory_space<vmem>>, %arg5: memref<32x128xf32, #tpu.memory_space<vmem>>, %arg6: memref<128x32xf32, #tpu.memory_space<vmem>>, %arg7: memref<32x128xf32, #tpu.memory_space<vmem>>, %arg8: memref<128x32xf32, #tpu.memory_space<vmem>>, %arg9: memref<1x256x32xf32, #tpu.memory_space<vmem>>, %arg10: memref<18x18x4xbf16, #tpu.memory_space<vmem>>, %arg11: memref<20x20x32xbf16, #tpu.memory_space<vmem>>) attributes {dimension_semantics = [#tpu.dimension_semantics<parallel>], iteration_bounds = array<i64: 2>, scalar_prefetch = 0 : i64, scratch_operands = 2 : i64, tpu.core_type = #tpu.core_type<tc>, window_params = [{transform_indices = @transform_0, window_bounds = array<i64: 1, 16, 16, 4>}, {pipeline_mode = #tpu.pipeline_mode<synchronous>, transform_indices = @transform_1, window_bounds = array<i64: 36, 64>}, {pipeline_mode = #tpu.pipeline_mode<synchronous>, transform_indices = @transform_2, window_bounds = array<i64: 288, 32>}, {pipeline_mode = #tpu.pipeline_mode<synchronous>, transform_indices = @transform_3, window_bounds = array<i64: 5, 32>}, {pipeline_mode = #tpu.pipeline_mode<synchronous>, transform_indices = @transform_4, window_bounds = array<i64: 32, 128>}, {pipeline_mode = #tpu.pipeline_mode<synchronous>, transform_indices = @transform_5, window_bounds = array<i64: 128, 32>}, {pipeline_mode = #tpu.pipeline_mode<synchronous>, transform_indices = @transform_6, window_bounds = array<i64: 32, 128>}, {pipeline_mode = #tpu.pipeline_mode<synchronous>, transform_indices = @transform_7, window_bounds = array<i64: 128, 32>}, {transform_indices = @transform_8, window_bounds = array<i64: 1, 256, 32>}]} {
    %c0 = arith.constant 0 : index
    %c0_0 = arith.constant 0 : index
    %0 = vector.load %arg4[%c0, %c0_0] : memref<5x32xf32, #tpu.memory_space<vmem>>, vector<1x32xf32>
    %c1 = arith.constant 1 : index
    %c0_1 = arith.constant 0 : index
    %1 = vector.load %arg4[%c1, %c0_1] : memref<5x32xf32, #tpu.memory_space<vmem>>, vector<1x32xf32>
    %c2 = arith.constant 2 : index
    %c0_2 = arith.constant 0 : index
    %2 = vector.load %arg4[%c2, %c0_2] : memref<5x32xf32, #tpu.memory_space<vmem>>, vector<1x32xf32>
    %c3 = arith.constant 3 : index
    %c0_3 = arith.constant 0 : index
    %3 = vector.load %arg4[%c3, %c0_3] : memref<5x32xf32, #tpu.memory_space<vmem>>, vector<1x32xf32>
    %c4 = arith.constant 4 : index
    %c0_4 = arith.constant 0 : index
    %4 = vector.load %arg4[%c4, %c0_4] : memref<5x32xf32, #tpu.memory_space<vmem>>, vector<1x32xf32>
    %cst = arith.constant 0.000000e+00 : bf16
    %5 = vector.broadcast %cst : bf16 to vector<18x18x4xbf16>
    %c0_5 = arith.constant 0 : index
    %c0_6 = arith.constant 0 : index
    %c0_7 = arith.constant 0 : index
    %6 = vector.load %arg10[%c0_5, %c0_6, %c0_7] : memref<18x18x4xbf16, #tpu.memory_space<vmem>>, vector<18x18x4xbf16>
    tpu.vector_store %arg10[%c0_5, %c0_6, %c0_7], %5 {strides = array<i32>} : memref<18x18x4xbf16, #tpu.memory_space<vmem>>, vector<18x18x4xbf16>,
    %c0_8 = arith.constant 0 : index
    %c0_9 = arith.constant 0 : index
    %c0_10 = arith.constant 0 : index
    %c0_11 = arith.constant 0 : index
    %7 = vector.load %arg1[%c0_8, %c0_9, %c0_10, %c0_11] : memref<1x16x16x4xf32, #tpu.memory_space<vmem>>, vector<1x16x16x4xf32>
    %8 = vector.shape_cast %7 : vector<1x16x16x4xf32> to vector<16x16x4xf32>
    %9 = arith.truncf %8 : vector<16x16x4xf32> to vector<16x16x4xbf16>
    %c1_12 = arith.constant 1 : index
    %c1_13 = arith.constant 1 : index
    %c0_14 = arith.constant 0 : index
    %10 = vector.load %arg10[%c1_12, %c1_13, %c0_14] : memref<18x18x4xbf16, #tpu.memory_space<vmem>>, vector<16x16x4xbf16>
    tpu.vector_store %arg10[%c1_12, %c1_13, %c0_14], %9 {strides = array<i32>} : memref<18x18x4xbf16, #tpu.memory_space<vmem>>, vector<16x16x4xbf16>,
    %c0_15 = arith.constant 0 : index
    %c0_16 = arith.constant 0 : index
    %c0_17 = arith.constant 0 : index
    %11 = vector.load %arg10[%c0_15, %c0_16, %c0_17] : memref<18x18x4xbf16, #tpu.memory_space<vmem>>, vector<16x16x4xbf16>
    %12 = vector.shape_cast %11 : vector<16x16x4xbf16> to vector<256x4xbf16>
    %c0_18 = arith.constant 0 : index
    %c0_19 = arith.constant 0 : index
    %13 = vector.load %arg2[%c0_18, %c0_19] : memref<36x64xbf16, #tpu.memory_space<vmem>>, vector<4x64xbf16>
    %cst_20 = arith.constant dense<0.000000e+00> : vector<256x64xf32>
    %14 = tpu.matmul %12, %13, %cst_20 {dimension_numbers = #tpu.dot_dimension_numbers<[1], [0], [0], [1], [0, 0, 1, 1], [], []>} : vector<256x4xbf16>, vector<4x64xbf16>, vector<256x64xf32> -> vector<256x64xf32>
    %c0_21 = arith.constant 0 : index
    %c1_22 = arith.constant 1 : index
    %c0_23 = arith.constant 0 : index
    %15 = vector.load %arg10[%c0_21, %c1_22, %c0_23] : memref<18x18x4xbf16, #tpu.memory_space<vmem>>, vector<16x16x4xbf16>
    %16 = vector.shape_cast %15 : vector<16x16x4xbf16> to vector<256x4xbf16>
    %c4_24 = arith.constant 4 : index
    %c0_25 = arith.constant 0 : index
    %17 = vector.load %arg2[%c4_24, %c0_25] : memref<36x64xbf16, #tpu.memory_space<vmem>>, vector<4x64xbf16>
    %cst_26 = arith.constant dense<0.000000e+00> : vector<256x64xf32>
    %18 = tpu.matmul %16, %17, %cst_26 {dimension_numbers = #tpu.dot_dimension_numbers<[1], [0], [0], [1], [0, 0, 1, 1], [], []>} : vector<256x4xbf16>, vector<4x64xbf16>, vector<256x64xf32> -> vector<256x64xf32>
    %19 = arith.addf %14, %18 : vector<256x64xf32>
    %c0_27 = arith.constant 0 : index
    %c2_28 = arith.constant 2 : index
    %c0_29 = arith.constant 0 : index
    %20 = vector.load %arg10[%c0_27, %c2_28, %c0_29] : memref<18x18x4xbf16, #tpu.memory_space<vmem>>, vector<16x16x4xbf16>
    %21 = vector.shape_cast %20 : vector<16x16x4xbf16> to vector<256x4xbf16>
    %c8 = arith.constant 8 : index
    %c0_30 = arith.constant 0 : index
    %22 = vector.load %arg2[%c8, %c0_30] : memref<36x64xbf16, #tpu.memory_space<vmem>>, vector<4x64xbf16>
    %cst_31 = arith.constant dense<0.000000e+00> : vector<256x64xf32>
    %23 = tpu.matmul %21, %22, %cst_31 {dimension_numbers = #tpu.dot_dimension_numbers<[1], [0], [0], [1], [0, 0, 1, 1], [], []>} : vector<256x4xbf16>, vector<4x64xbf16>, vector<256x64xf32> -> vector<256x64xf32>
    %24 = arith.addf %19, %23 : vector<256x64xf32>
    %c1_32 = arith.constant 1 : index
    %c0_33 = arith.constant 0 : index
    %c0_34 = arith.constant 0 : index
    %25 = vector.load %arg10[%c1_32, %c0_33, %c0_34] : memref<18x18x4xbf16, #tpu.memory_space<vmem>>, vector<16x16x4xbf16>
    %26 = vector.shape_cast %25 : vector<16x16x4xbf16> to vector<256x4xbf16>
    %c12 = arith.constant 12 : index
    %c0_35 = arith.constant 0 : index
    %27 = vector.load %arg2[%c12, %c0_35] : memref<36x64xbf16, #tpu.memory_space<vmem>>, vector<4x64xbf16>
    %cst_36 = arith.constant dense<0.000000e+00> : vector<256x64xf32>
    %28 = tpu.matmul %26, %27, %cst_36 {dimension_numbers = #tpu.dot_dimension_numbers<[1], [0], [0], [1], [0, 0, 1, 1], [], []>} : vector<256x4xbf16>, vector<4x64xbf16>, vector<256x64xf32> -> vector<256x64xf32>
    %29 = arith.addf %24, %28 : vector<256x64xf32>
    %c1_37 = arith.constant 1 : index
    %c1_38 = arith.constant 1 : index
    %c0_39 = arith.constant 0 : index
    %30 = vector.load %arg10[%c1_37, %c1_38, %c0_39] : memref<18x18x4xbf16, #tpu.memory_space<vmem>>, vector<16x16x4xbf16>
    %31 = vector.shape_cast %30 : vector<16x16x4xbf16> to vector<256x4xbf16>
    %c16 = arith.constant 16 : index
    %c0_40 = arith.constant 0 : index
    %32 = vector.load %arg2[%c16, %c0_40] : memref<36x64xbf16, #tpu.memory_space<vmem>>, vector<4x64xbf16>
    %cst_41 = arith.constant dense<0.000000e+00> : vector<256x64xf32>
    %33 = tpu.matmul %31, %32, %cst_41 {dimension_numbers = #tpu.dot_dimension_numbers<[1], [0], [0], [1], [0, 0, 1, 1], [], []>} : vector<256x4xbf16>, vector<4x64xbf16>, vector<256x64xf32> -> vector<256x64xf32>
    %34 = arith.addf %29, %33 : vector<256x64xf32>
    %c1_42 = arith.constant 1 : index
    %c2_43 = arith.constant 2 : index
    %c0_44 = arith.constant 0 : index
    %35 = vector.load %arg10[%c1_42, %c2_43, %c0_44] : memref<18x18x4xbf16, #tpu.memory_space<vmem>>, vector<16x16x4xbf16>
    %36 = vector.shape_cast %35 : vector<16x16x4xbf16> to vector<256x4xbf16>
    %c20 = arith.constant 20 : index
    %c0_45 = arith.constant 0 : index
    %37 = vector.load %arg2[%c20, %c0_45] : memref<36x64xbf16, #tpu.memory_space<vmem>>, vector<4x64xbf16>
    %cst_46 = arith.constant dense<0.000000e+00> : vector<256x64xf32>
    %38 = tpu.matmul %36, %37, %cst_46 {dimension_numbers = #tpu.dot_dimension_numbers<[1], [0], [0], [1], [0, 0, 1, 1], [], []>} : vector<256x4xbf16>, vector<4x64xbf16>, vector<256x64xf32> -> vector<256x64xf32>
    %39 = arith.addf %34, %38 : vector<256x64xf32>
    %c2_47 = arith.constant 2 : index
    %c0_48 = arith.constant 0 : index
    %c0_49 = arith.constant 0 : index
    %40 = vector.load %arg10[%c2_47, %c0_48, %c0_49] : memref<18x18x4xbf16, #tpu.memory_space<vmem>>, vector<16x16x4xbf16>
    %41 = vector.shape_cast %40 : vector<16x16x4xbf16> to vector<256x4xbf16>
    %c24 = arith.constant 24 : index
    %c0_50 = arith.constant 0 : index
    %42 = vector.load %arg2[%c24, %c0_50] : memref<36x64xbf16, #tpu.memory_space<vmem>>, vector<4x64xbf16>
    %cst_51 = arith.constant dense<0.000000e+00> : vector<256x64xf32>
    %43 = tpu.matmul %41, %42, %cst_51 {dimension_numbers = #tpu.dot_dimension_numbers<[1], [0], [0], [1], [0, 0, 1, 1], [], []>} : vector<256x4xbf16>, vector<4x64xbf16>, vector<256x64xf32> -> vector<256x64xf32>
    %44 = arith.addf %39, %43 : vector<256x64xf32>
    %c2_52 = arith.constant 2 : index
    %c1_53 = arith.constant 1 : index
    %c0_54 = arith.constant 0 : index
    %45 = vector.load %arg10[%c2_52, %c1_53, %c0_54] : memref<18x18x4xbf16, #tpu.memory_space<vmem>>, vector<16x16x4xbf16>
    %46 = vector.shape_cast %45 : vector<16x16x4xbf16> to vector<256x4xbf16>
    %c28 = arith.constant 28 : index
    %c0_55 = arith.constant 0 : index
    %47 = vector.load %arg2[%c28, %c0_55] : memref<36x64xbf16, #tpu.memory_space<vmem>>, vector<4x64xbf16>
    %cst_56 = arith.constant dense<0.000000e+00> : vector<256x64xf32>
    %48 = tpu.matmul %46, %47, %cst_56 {dimension_numbers = #tpu.dot_dimension_numbers<[1], [0], [0], [1], [0, 0, 1, 1], [], []>} : vector<256x4xbf16>, vector<4x64xbf16>, vector<256x64xf32> -> vector<256x64xf32>
    %49 = arith.addf %44, %48 : vector<256x64xf32>
    %c2_57 = arith.constant 2 : index
    %c2_58 = arith.constant 2 : index
    %c0_59 = arith.constant 0 : index
    %50 = vector.load %arg10[%c2_57, %c2_58, %c0_59] : memref<18x18x4xbf16, #tpu.memory_space<vmem>>, vector<16x16x4xbf16>
    %51 = vector.shape_cast %50 : vector<16x16x4xbf16> to vector<256x4xbf16>
    %c32 = arith.constant 32 : index
    %c0_60 = arith.constant 0 : index
    %52 = vector.load %arg2[%c32, %c0_60] : memref<36x64xbf16, #tpu.memory_space<vmem>>, vector<4x64xbf16>
    %cst_61 = arith.constant dense<0.000000e+00> : vector<256x64xf32>
    %53 = tpu.matmul %51, %52, %cst_61 {dimension_numbers = #tpu.dot_dimension_numbers<[1], [0], [0], [1], [0, 0, 1, 1], [], []>} : vector<256x4xbf16>, vector<4x64xbf16>, vector<256x64xf32> -> vector<256x64xf32>
    %54 = arith.addf %49, %53 : vector<256x64xf32>
    %55 = vector.extract_strided_slice %54 {offsets = [0, 0], sizes = [256, 32], strides = [1, 1]} : vector<256x64xf32> to vector<256x32xf32>
    %56 = vector.broadcast %0 : vector<1x32xf32> to vector<256x32xf32>
    %57 = arith.mulf %55, %56 : vector<256x32xf32>
    %58 = vector.broadcast %1 : vector<1x32xf32> to vector<256x32xf32>
    %59 = arith.addf %57, %58 : vector<256x32xf32>
    %60 = vector.extract_strided_slice %54 {offsets = [0, 32], sizes = [256, 32], strides = [1, 1]} : vector<256x64xf32> to vector<256x32xf32>
    %61 = vector.broadcast %2 : vector<1x32xf32> to vector<256x32xf32>
    %62 = arith.addf %60, %61 : vector<256x32xf32>
    %cst_62 = arith.constant dense<0.000000e+00> : vector<32xf32>
    %63 = vector.multi_reduction <add>, %59, %cst_62 [0] : vector<256x32xf32> to vector<32xf32>
    %64 = vector.shape_cast %63 : vector<32xf32> to vector<1x32xf32>
    %cst_63 = arith.constant 3.906250e-03 : f32
    %65 = vector.broadcast %cst_63 : f32 to vector<1x32xf32>
    %66 = arith.mulf %64, %65 : vector<1x32xf32>
    %c0_64 = arith.constant 0 : index
    %c0_65 = arith.constant 0 : index
    %67 = vector.load %arg5[%c0_64, %c0_65] : memref<32x128xf32, #tpu.memory_space<vmem>>, vector<32x128xf32>
    %cst_66 = arith.constant dense<0.000000e+00> : vector<1x128xf32>
    %68 = tpu.matmul %66, %67, %cst_66 {dimension_numbers = #tpu.dot_dimension_numbers<[1], [0], [0], [1], [0, 0, 1, 1], [], []>} : vector<1x32xf32>, vector<32x128xf32>, vector<1x128xf32> -> vector<1x128xf32>
    %cst_67 = arith.constant 0.000000e+00 : f32
    %69 = vector.broadcast %cst_67 : f32 to vector<1x128xf32>
    %70 = arith.maximumf %68, %69 : vector<1x128xf32>
    %c0_68 = arith.constant 0 : index
    %c0_69 = arith.constant 0 : index
    %71 = vector.load %arg6[%c0_68, %c0_69] : memref<128x32xf32, #tpu.memory_space<vmem>>, vector<128x32xf32>
    %cst_70 = arith.constant dense<0.000000e+00> : vector<1x32xf32>
    %72 = tpu.matmul %70, %71, %cst_70 {dimension_numbers = #tpu.dot_dimension_numbers<[1], [0], [0], [1], [0, 0, 1, 1], [], []>} : vector<1x128xf32>, vector<128x32xf32>, vector<1x32xf32> -> vector<1x32xf32>
    %cst_71 = arith.constant 0.000000e+00 : f32
    %73 = vector.broadcast %cst_71 : f32 to vector<1x32xf32>
    %74 = arith.subf %73, %72 : vector<1x32xf32>
    %75 = math.exp %74 : vector<1x32xf32>
    %cst_72 = arith.constant 1.000000e+00 : f32
    %76 = vector.broadcast %cst_72 : f32 to vector<1x32xf32>
    %77 = arith.addf %76, %75 : vector<1x32xf32>
    %cst_73 = arith.constant 1.000000e+00 : f32
    %78 = vector.broadcast %cst_73 : f32 to vector<1x32xf32>
    %79 = arith.divf %78, %77 : vector<1x32xf32>
    %80 = vector.broadcast %79 : vector<1x32xf32> to vector<256x32xf32>
    %81 = arith.mulf %59, %80 : vector<256x32xf32>
    %82 = arith.addf %81, %62 : vector<256x32xf32>
    %cst_74 = arith.constant 0.000000e+00 : f32
    %83 = vector.broadcast %cst_74 : f32 to vector<256x32xf32>
    %84 = arith.maximumf %82, %83 : vector<256x32xf32>
    %cst_75 = arith.constant 0.000000e+00 : bf16
    %85 = vector.broadcast %cst_75 : bf16 to vector<20x20x32xbf16>
    %c0_76 = arith.constant 0 : index
    %c0_77 = arith.constant 0 : index
    %c0_78 = arith.constant 0 : index
    %86 = vector.load %arg11[%c0_76, %c0_77, %c0_78] : memref<20x20x32xbf16, #tpu.memory_space<vmem>>, vector<20x20x32xbf16>
    tpu.vector_store %arg11[%c0_76, %c0_77, %c0_78], %85 {strides = array<i32>} : memref<20x20x32xbf16, #tpu.memory_space<vmem>>, vector<20x20x32xbf16>,
    %87 = vector.shape_cast %84 : vector<256x32xf32> to vector<16x16x32xf32>
    %88 = arith.truncf %87 : vector<16x16x32xf32> to vector<16x16x32xbf16>
    %c2_79 = arith.constant 2 : index
    %c2_80 = arith.constant 2 : index
    %c0_81 = arith.constant 0 : index
    %89 = vector.load %arg11[%c2_79, %c2_80, %c0_81] : memref<20x20x32xbf16, #tpu.memory_space<vmem>>, vector<16x16x32xbf16>
    tpu.vector_store %arg11[%c2_79, %c2_80, %c0_81], %88 {strides = array<i32>} : memref<20x20x32xbf16, #tpu.memory_space<vmem>>, vector<16x16x32xbf16>,
    %c0_82 = arith.constant 0 : index
    %c0_83 = arith.constant 0 : index
    %c0_84 = arith.constant 0 : index
    %90 = vector.load %arg11[%c0_82, %c0_83, %c0_84] : memref<20x20x32xbf16, #tpu.memory_space<vmem>>, vector<16x16x32xbf16>
    %91 = vector.shape_cast %90 : vector<16x16x32xbf16> to vector<256x32xbf16>
    %c0_85 = arith.constant 0 : index
    %c0_86 = arith.constant 0 : index
    %92 = vector.load %arg3[%c0_85, %c0_86] : memref<288x32xbf16, #tpu.memory_space<vmem>>, vector<32x32xbf16>
    %cst_87 = arith.constant dense<0.000000e+00> : vector<256x32xf32>
    %93 = tpu.matmul %91, %92, %cst_87 {dimension_numbers = #tpu.dot_dimension_numbers<[1], [0], [0], [1], [0, 0, 1, 1], [], []>} : vector<256x32xbf16>, vector<32x32xbf16>, vector<256x32xf32> -> vector<256x32xf32>
    %c0_88 = arith.constant 0 : index
    %c2_89 = arith.constant 2 : index
    %c0_90 = arith.constant 0 : index
    %94 = vector.load %arg11[%c0_88, %c2_89, %c0_90] : memref<20x20x32xbf16, #tpu.memory_space<vmem>>, vector<16x16x32xbf16>
    %95 = vector.shape_cast %94 : vector<16x16x32xbf16> to vector<256x32xbf16>
    %c32_91 = arith.constant 32 : index
    %c0_92 = arith.constant 0 : index
    %96 = vector.load %arg3[%c32_91, %c0_92] : memref<288x32xbf16, #tpu.memory_space<vmem>>, vector<32x32xbf16>
    %cst_93 = arith.constant dense<0.000000e+00> : vector<256x32xf32>
    %97 = tpu.matmul %95, %96, %cst_93 {dimension_numbers = #tpu.dot_dimension_numbers<[1], [0], [0], [1], [0, 0, 1, 1], [], []>} : vector<256x32xbf16>, vector<32x32xbf16>, vector<256x32xf32> -> vector<256x32xf32>
    %98 = arith.addf %93, %97 : vector<256x32xf32>
    %c0_94 = arith.constant 0 : index
    %c4_95 = arith.constant 4 : index
    %c0_96 = arith.constant 0 : index
    %99 = vector.load %arg11[%c0_94, %c4_95, %c0_96] : memref<20x20x32xbf16, #tpu.memory_space<vmem>>, vector<16x16x32xbf16>
    %100 = vector.shape_cast %99 : vector<16x16x32xbf16> to vector<256x32xbf16>
    %c64 = arith.constant 64 : index
    %c0_97 = arith.constant 0 : index
    %101 = vector.load %arg3[%c64, %c0_97] : memref<288x32xbf16, #tpu.memory_space<vmem>>, vector<32x32xbf16>
    %cst_98 = arith.constant dense<0.000000e+00> : vector<256x32xf32>
    %102 = tpu.matmul %100, %101, %cst_98 {dimension_numbers = #tpu.dot_dimension_numbers<[1], [0], [0], [1], [0, 0, 1, 1], [], []>} : vector<256x32xbf16>, vector<32x32xbf16>, vector<256x32xf32> -> vector<256x32xf32>
    %103 = arith.addf %98, %102 : vector<256x32xf32>
    %c2_99 = arith.constant 2 : index
    %c0_100 = arith.constant 0 : index
    %c0_101 = arith.constant 0 : index
    %104 = vector.load %arg11[%c2_99, %c0_100, %c0_101] : memref<20x20x32xbf16, #tpu.memory_space<vmem>>, vector<16x16x32xbf16>
    %105 = vector.shape_cast %104 : vector<16x16x32xbf16> to vector<256x32xbf16>
    %c96 = arith.constant 96 : index
    %c0_102 = arith.constant 0 : index
    %106 = vector.load %arg3[%c96, %c0_102] : memref<288x32xbf16, #tpu.memory_space<vmem>>, vector<32x32xbf16>
    %cst_103 = arith.constant dense<0.000000e+00> : vector<256x32xf32>
    %107 = tpu.matmul %105, %106, %cst_103 {dimension_numbers = #tpu.dot_dimension_numbers<[1], [0], [0], [1], [0, 0, 1, 1], [], []>} : vector<256x32xbf16>, vector<32x32xbf16>, vector<256x32xf32> -> vector<256x32xf32>
    %108 = arith.addf %103, %107 : vector<256x32xf32>
    %c2_104 = arith.constant 2 : index
    %c2_105 = arith.constant 2 : index
    %c0_106 = arith.constant 0 : index
    %109 = vector.load %arg11[%c2_104, %c2_105, %c0_106] : memref<20x20x32xbf16, #tpu.memory_space<vmem>>, vector<16x16x32xbf16>
    %110 = vector.shape_cast %109 : vector<16x16x32xbf16> to vector<256x32xbf16>
    %c128 = arith.constant 128 : index
    %c0_107 = arith.constant 0 : index
    %111 = vector.load %arg3[%c128, %c0_107] : memref<288x32xbf16, #tpu.memory_space<vmem>>, vector<32x32xbf16>
    %cst_108 = arith.constant dense<0.000000e+00> : vector<256x32xf32>
    %112 = tpu.matmul %110, %111, %cst_108 {dimension_numbers = #tpu.dot_dimension_numbers<[1], [0], [0], [1], [0, 0, 1, 1], [], []>} : vector<256x32xbf16>, vector<32x32xbf16>, vector<256x32xf32> -> vector<256x32xf32>
    %113 = arith.addf %108, %112 : vector<256x32xf32>
    %c2_109 = arith.constant 2 : index
    %c4_110 = arith.constant 4 : index
    %c0_111 = arith.constant 0 : index
    %114 = vector.load %arg11[%c2_109, %c4_110, %c0_111] : memref<20x20x32xbf16, #tpu.memory_space<vmem>>, vector<16x16x32xbf16>
    %115 = vector.shape_cast %114 : vector<16x16x32xbf16> to vector<256x32xbf16>
    %c160 = arith.constant 160 : index
    %c0_112 = arith.constant 0 : index
    %116 = vector.load %arg3[%c160, %c0_112] : memref<288x32xbf16, #tpu.memory_space<vmem>>, vector<32x32xbf16>
    %cst_113 = arith.constant dense<0.000000e+00> : vector<256x32xf32>
    %117 = tpu.matmul %115, %116, %cst_113 {dimension_numbers = #tpu.dot_dimension_numbers<[1], [0], [0], [1], [0, 0, 1, 1], [], []>} : vector<256x32xbf16>, vector<32x32xbf16>, vector<256x32xf32> -> vector<256x32xf32>
    %118 = arith.addf %113, %117 : vector<256x32xf32>
    %c4_114 = arith.constant 4 : index
    %c0_115 = arith.constant 0 : index
    %c0_116 = arith.constant 0 : index
    %119 = vector.load %arg11[%c4_114, %c0_115, %c0_116] : memref<20x20x32xbf16, #tpu.memory_space<vmem>>, vector<16x16x32xbf16>
    %120 = vector.shape_cast %119 : vector<16x16x32xbf16> to vector<256x32xbf16>
    %c192 = arith.constant 192 : index
    %c0_117 = arith.constant 0 : index
    %121 = vector.load %arg3[%c192, %c0_117] : memref<288x32xbf16, #tpu.memory_space<vmem>>, vector<32x32xbf16>
    %cst_118 = arith.constant dense<0.000000e+00> : vector<256x32xf32>
    %122 = tpu.matmul %120, %121, %cst_118 {dimension_numbers = #tpu.dot_dimension_numbers<[1], [0], [0], [1], [0, 0, 1, 1], [], []>} : vector<256x32xbf16>, vector<32x32xbf16>, vector<256x32xf32> -> vector<256x32xf32>
    %123 = arith.addf %118, %122 : vector<256x32xf32>
    %c4_119 = arith.constant 4 : index
    %c2_120 = arith.constant 2 : index
    %c0_121 = arith.constant 0 : index
    %124 = vector.load %arg11[%c4_119, %c2_120, %c0_121] : memref<20x20x32xbf16, #tpu.memory_space<vmem>>, vector<16x16x32xbf16>
    %125 = vector.shape_cast %124 : vector<16x16x32xbf16> to vector<256x32xbf16>
    %c224 = arith.constant 224 : index
    %c0_122 = arith.constant 0 : index
    %126 = vector.load %arg3[%c224, %c0_122] : memref<288x32xbf16, #tpu.memory_space<vmem>>, vector<32x32xbf16>
    %cst_123 = arith.constant dense<0.000000e+00> : vector<256x32xf32>
    %127 = tpu.matmul %125, %126, %cst_123 {dimension_numbers = #tpu.dot_dimension_numbers<[1], [0], [0], [1], [0, 0, 1, 1], [], []>} : vector<256x32xbf16>, vector<32x32xbf16>, vector<256x32xf32> -> vector<256x32xf32>
    %128 = arith.addf %123, %127 : vector<256x32xf32>
    %c4_124 = arith.constant 4 : index
    %c4_125 = arith.constant 4 : index
    %c0_126 = arith.constant 0 : index
    %129 = vector.load %arg11[%c4_124, %c4_125, %c0_126] : memref<20x20x32xbf16, #tpu.memory_space<vmem>>, vector<16x16x32xbf16>
    %130 = vector.shape_cast %129 : vector<16x16x32xbf16> to vector<256x32xbf16>
    %c256 = arith.constant 256 : index
    %c0_127 = arith.constant 0 : index
    %131 = vector.load %arg3[%c256, %c0_127] : memref<288x32xbf16, #tpu.memory_space<vmem>>, vector<32x32xbf16>
    %cst_128 = arith.constant dense<0.000000e+00> : vector<256x32xf32>
    %132 = tpu.matmul %130, %131, %cst_128 {dimension_numbers = #tpu.dot_dimension_numbers<[1], [0], [0], [1], [0, 0, 1, 1], [], []>} : vector<256x32xbf16>, vector<32x32xbf16>, vector<256x32xf32> -> vector<256x32xf32>
    %133 = arith.addf %128, %132 : vector<256x32xf32>
    %134 = vector.broadcast %3 : vector<1x32xf32> to vector<256x32xf32>
    %135 = arith.mulf %133, %134 : vector<256x32xf32>
    %136 = vector.broadcast %4 : vector<1x32xf32> to vector<256x32xf32>
    %137 = arith.addf %135, %136 : vector<256x32xf32>
    %cst_129 = arith.constant dense<0.000000e+00> : vector<32xf32>
    %138 = vector.multi_reduction <add>, %137, %cst_129 [0] : vector<256x32xf32> to vector<32xf32>
    %139 = vector.shape_cast %138 : vector<32xf32> to vector<1x32xf32>
    %cst_130 = arith.constant 3.906250e-03 : f32
    %140 = vector.broadcast %cst_130 : f32 to vector<1x32xf32>
    %141 = arith.mulf %139, %140 : vector<1x32xf32>
    %c0_131 = arith.constant 0 : index
    %c0_132 = arith.constant 0 : index
    %142 = vector.load %arg7[%c0_131, %c0_132] : memref<32x128xf32, #tpu.memory_space<vmem>>, vector<32x128xf32>
    %cst_133 = arith.constant dense<0.000000e+00> : vector<1x128xf32>
    %143 = tpu.matmul %141, %142, %cst_133 {dimension_numbers = #tpu.dot_dimension_numbers<[1], [0], [0], [1], [0, 0, 1, 1], [], []>} : vector<1x32xf32>, vector<32x128xf32>, vector<1x128xf32> -> vector<1x128xf32>
    %cst_134 = arith.constant 0.000000e+00 : f32
    %144 = vector.broadcast %cst_134 : f32 to vector<1x128xf32>
    %145 = arith.maximumf %143, %144 : vector<1x128xf32>
    %c0_135 = arith.constant 0 : index
    %c0_136 = arith.constant 0 : index
    %146 = vector.load %arg8[%c0_135, %c0_136] : memref<128x32xf32, #tpu.memory_space<vmem>>, vector<128x32xf32>
    %cst_137 = arith.constant dense<0.000000e+00> : vector<1x32xf32>
    %147 = tpu.matmul %145, %146, %cst_137 {dimension_numbers = #tpu.dot_dimension_numbers<[1], [0], [0], [1], [0, 0, 1, 1], [], []>} : vector<1x128xf32>, vector<128x32xf32>, vector<1x32xf32> -> vector<1x32xf32>
    %cst_138 = arith.constant 0.000000e+00 : f32
    %148 = vector.broadcast %cst_138 : f32 to vector<1x32xf32>
    %149 = arith.subf %148, %147 : vector<1x32xf32>
    %150 = math.exp %149 : vector<1x32xf32>
    %cst_139 = arith.constant 1.000000e+00 : f32
    %151 = vector.broadcast %cst_139 : f32 to vector<1x32xf32>
    %152 = arith.addf %151, %150 : vector<1x32xf32>
    %cst_140 = arith.constant 1.000000e+00 : f32
    %153 = vector.broadcast %cst_140 : f32 to vector<1x32xf32>
    %154 = arith.divf %153, %152 : vector<1x32xf32>
    %155 = vector.broadcast %154 : vector<1x32xf32> to vector<256x32xf32>
    %156 = arith.mulf %137, %155 : vector<256x32xf32>
    %157 = arith.addf %156, %84 : vector<256x32xf32>
    %cst_141 = arith.constant 0.000000e+00 : f32
    %158 = vector.broadcast %cst_141 : f32 to vector<256x32xf32>
    %159 = arith.maximumf %157, %158 : vector<256x32xf32>
    %c0_142 = arith.constant 0 : index
    %c0_143 = arith.constant 0 : index
    %c0_144 = arith.constant 0 : index
    %160 = vector.load %arg9[%c0_142, %c0_143, %c0_144] : memref<1x256x32xf32, #tpu.memory_space<vmem>>, vector<1x256x32xf32>
    %161 = vector.shape_cast %160 : vector<1x256x32xf32> to vector<256x32xf32>
    %162 = vector.shape_cast %159 : vector<256x32xf32> to vector<1x256x32xf32>
    tpu.vector_store %arg9[%c0_142, %c0_143, %c0_144], %162 {strides = array<i32>} : memref<1x256x32xf32, #tpu.memory_space<vmem>>, vector<1x256x32xf32>,
    return
  }
  func.func @transform_0(%arg0: i32) -> (i32, i32, i32, i32) {
    %c0_i32 = arith.constant 0 : i32
    %c0_i32_0 = arith.constant 0 : i32
    %c0_i32_1 = arith.constant 0 : i32
    %c0_i32_2 = arith.constant 0 : i32
    return %arg0, %c0_i32, %c0_i32_0, %c0_i32_1 : i32, i32, i32, i32
  }
  func.func @transform_1(%arg0: i32) -> (i32, i32) {
    %c0_i32 = arith.constant 0 : i32
    %c0_i32_0 = arith.constant 0 : i32
    %c0_i32_1 = arith.constant 0 : i32
    return %c0_i32, %c0_i32_0 : i32, i32
  }
  func.func @transform_2(%arg0: i32) -> (i32, i32) {
    %c0_i32 = arith.constant 0 : i32
    %c0_i32_0 = arith.constant 0 : i32
    %c0_i32_1 = arith.constant 0 : i32
    return %c0_i32, %c0_i32_0 : i32, i32
  }
  func.func @transform_3(%arg0: i32) -> (i32, i32) {
    %c0_i32 = arith.constant 0 : i32
    %c0_i32_0 = arith.constant 0 : i32
    %c0_i32_1 = arith.constant 0 : i32
    return %c0_i32, %c0_i32_0 : i32, i32
  }
  func.func @transform_4(%arg0: i32) -> (i32, i32) {
    %c0_i32 = arith.constant 0 : i32
    %c0_i32_0 = arith.constant 0 : i32
    %c0_i32_1 = arith.constant 0 : i32
    return %c0_i32, %c0_i32_0 : i32, i32
  }
  func.func @transform_5(%arg0: i32) -> (i32, i32) {
    %c0_i32 = arith.constant 0 : i32
    %c0_i32_0 = arith.constant 0 : i32
    %c0_i32_1 = arith.constant 0 : i32
    return %c0_i32, %c0_i32_0 : i32, i32
  }
  func.func @transform_6(%arg0: i32) -> (i32, i32) {
    %c0_i32 = arith.constant 0 : i32
    %c0_i32_0 = arith.constant 0 : i32
    %c0_i32_1 = arith.constant 0 : i32
    return %c0_i32, %c0_i32_0 : i32, i32
  }
  func.func @transform_7(%arg0: i32) -> (i32, i32) {
    %c0_i32 = arith.constant 0 : i32
    %c0_i32_0 = arith.constant 0 : i32
    %c0_i32_1 = arith.constant 0 : i32
    return %c0_i32, %c0_i32_0 : i32, i32
  }
  func.func @transform_8(%arg0: i32) -> (i32, i32, i32) {
    %c0_i32 = arith.constant 0 : i32
    %c0_i32_0 = arith.constant 0 : i32
    %c0_i32_1 = arith.constant 0 : i32
    return %arg0, %c0_i32, %c0_i32_0 : i32, i32, i32
  }
}

</mosaic_0001>

<llo_original>
// kernel: tpu_custom_call.1
$region0: #{tpu_custom_call.1}
  #allocation0 [shape = 'u32[]', space=smem, size = 0x4, offset = 0x4, fixed_abs, tag = 'smem constant byte address 0x4 - core index']
  #allocation1 [shape = 'u32[144,128]{1,0:T(1,128)}', space=vmem, size = 0x12000, scoped, tag = 'internal scratch']
  #allocation2 [shape = 'bf16[18,18,4]{2,1,0:T(8,128)(2,1)}', space=vmem, size = 0x1b000, scoped, tag = 'scratch operand']
  #allocation3 [shape = 'bf16[20,20,32]{2,1,0:T(8,128)(2,1)}', space=vmem, size = 0x1e000, scoped, tag = 'scratch operand']
  %s0 = inlined_call_operand.vmem [shape: f32[2,16,16,4], index: 0, kind: input, shape index: {}]
  %s1 = inlined_call_operand.vmem [shape: bf16[36,64], index: 1, kind: input, shape index: {}]
  %s2 = inlined_call_operand.vmem [shape: bf16[288,32], index: 2, kind: input, shape index: {}]
  %s3 = inlined_call_operand.vmem [shape: f32[5,32], index: 3, kind: input, shape index: {}]
  %s4 = inlined_call_operand.vmem [shape: f32[32,128], index: 4, kind: input, shape index: {}]
  %s5 = inlined_call_operand.vmem [shape: f32[128,32], index: 5, kind: input, shape index: {}]
  %s6 = inlined_call_operand.vmem [shape: f32[32,128], index: 6, kind: input, shape index: {}]
  %s7 = inlined_call_operand.vmem [shape: f32[128,32], index: 7, kind: input, shape index: {}]
  %s8 = inlined_call_operand.vmem [shape: f32[2,256,32], index: 8, kind: output, shape index: {}]
  %s9 = sld [smem:[#allocation0]]
  $region65: #{tpu_custom_call.1} parent=0
    _
  %s11 = ssub.s32 1, %s9
  %s12 = scalar_select 0, %s11, %s9
  loop: start=0, step=1, limit=4
  $region2: #{tpu_custom_call.1} parent=0 // loop_pre_header
    _
  $region3: #{tpu_custom_call.1} parent=0 // loop_header
    %s14 = sphi 0, %s18
    %p15 = scmp.ge.s32.totalorder %s14, 4
    %s24 = sphi 0, %s26
    %s27 = sphi 0, %s24
    %s28 = sphi 0, %s27
    %s44 = sphi 0, %s28
    %s48 = sphi 0, %s48
    %s50 = sphi 0, %s48
    %s51 = sphi 0, %s50
    %s65 = sphi 0, %s51
    %s69 = sphi 0, %s69
    %s71 = sphi 0, %s69
    %s72 = sphi 0, %s71
    %s86 = sphi 0, %s72
    %s90 = sphi 0, %s90
    %s92 = sphi 0, %s90
    %s93 = sphi 0, %s92
    %s107 = sphi 0, %s93
    %s111 = sphi 0, %s111
    %s113 = sphi 0, %s111
    %s114 = sphi 0, %s113
    %s128 = sphi 0, %s114
    %s132 = sphi 0, %s132
    %s134 = sphi 0, %s132
    %s135 = sphi 0, %s134
    %s149 = sphi 0, %s135
    %s153 = sphi 0, %s153
    %s155 = sphi 0, %s153
    %s156 = sphi 0, %s155
    %s170 = sphi 0, %s156
    %s174 = sphi 0, %s174
    %s176 = sphi 0, %s174
    %s177 = sphi 0, %s176
    %s191 = sphi 0, %s177
    %s197 = sphi 0, %s199
    %s200 = sphi 0, %s197
    %s201 = sphi 0, %s200
    %s217 = sphi 0, %s201
  $region4: #{tpu_custom_call.1} parent=0 // loop_header_branch
    %17 = sbr.rel (%p15) target = $region8
  $region5: #{tpu_custom_call.1} parent=0 // loop_body
    %s19 = ssub.s32 %s14, 1
    %s20 = ssub.s32 %s14, 2
    %s21 = sadd.s32 %s14, 1
    %s22 = ssub.s32 %s14, %s21
    %p23 = scmp.eq.s32.totalorder %s22, 0
    %s25 = sadd.s32 %s24, 1
    %s26 = scalar_select %p23, %s24, %s25
    %p29 = pneg %p23
    %p30 = scmp.eq.s32.totalorder %s14, 1
    %p31 = por %p29, %p30
    %p32 = scmp.ne.s32.totalorder %s24, %s27
    %p33 = scmp.eq.s32.totalorder %s14, 0
    %p34 = por %p32, %p33
    %p35 = scmp.ne.s32.totalorder %s24, %s27
    %p36 = scmp.eq.s32.totalorder %s19, 1
    %p37 = por %p35, %p36
    %p38 = scmp.ne.s32.totalorder %s27, %s28
    %p39 = scmp.eq.s32.totalorder %s19, 0
    %p40 = por %p38, %p39
    %p41 = scmp.ne.s32.totalorder %s27, %s28
    %p42 = scmp.eq.s32.totalorder %s20, 1
    %p43 = por %p41, %p42
    %p45 = scmp.ne.s32.totalorder %s28, %s44
    %p46 = scmp.eq.s32.totalorder %s20, 0
    %p47 = por %p45, %p46
    %s49 = sadd.s32 %s48, 1
    %p52 = scmp.eq.s32.totalorder %s14, 1
    %p53 = scmp.ne.s32.totalorder %s48, %s50
    %p54 = scmp.eq.s32.totalorder %s14, 0
    %p55 = por %p53, %p54
    %p56 = scmp.ne.s32.totalorder %s48, %s50
    %p57 = scmp.eq.s32.totalorder %s19, 1
    %p58 = por %p56, %p57
    %p59 = scmp.ne.s32.totalorder %s50, %s51
    %p60 = scmp.eq.s32.totalorder %s19, 0
    %p61 = por %p59, %p60
    %p62 = scmp.ne.s32.totalorder %s50, %s51
    %p63 = scmp.eq.s32.totalorder %s20, 1
    %p64 = por %p62, %p63
    %p66 = scmp.ne.s32.totalorder %s51, %s65
    %p67 = scmp.eq.s32.totalorder %s20, 0
    %p68 = por %p66, %p67
    %s70 = sadd.s32 %s69, 1
    %p73 = scmp.eq.s32.totalorder %s14, 1
    %p74 = scmp.ne.s32.totalorder %s69, %s71
    %p75 = scmp.eq.s32.totalorder %s14, 0
    %p76 = por %p74, %p75
    %p77 = scmp.ne.s32.totalorder %s69, %s71
    %p78 = scmp.eq.s32.totalorder %s19, 1
    %p79 = por %p77, %p78
    %p80 = scmp.ne.s32.totalorder %s71, %s72
    %p81 = scmp.eq.s32.totalorder %s19, 0
    %p82 = por %p80, %p81
    %p83 = scmp.ne.s32.totalorder %s71, %s72
    %p84 = scmp.eq.s32.totalorder %s20, 1
    %p85 = por %p83, %p84
    %p87 = scmp.ne.s32.totalorder %s72, %s86
    %p88 = scmp.eq.s32.totalorder %s20, 0
    %p89 = por %p87, %p88
    %s91 = sadd.s32 %s90, 1
    %p94 = scmp.eq.s32.totalorder %s14, 1
    %p95 = scmp.ne.s32.totalorder %s90, %s92
    %p96 = scmp.eq.s32.totalorder %s14, 0
    %p97 = por %p95, %p96
    %p98 = scmp.ne.s32.totalorder %s90, %s92
    %p99 = scmp.eq.s32.totalorder %s19, 1
    %p100 = por %p98, %p99
    %p101 = scmp.ne.s32.totalorder %s92, %s93
    %p102 = scmp.eq.s32.totalorder %s19, 0
    %p103 = por %p101, %p102
    %p104 = scmp.ne.s32.totalorder %s92, %s93
    %p105 = scmp.eq.s32.totalorder %s20, 1
    %p106 = por %p104, %p105
    %p108 = scmp.ne.s32.totalorder %s93, %s107
    %p109 = scmp.eq.s32.totalorder %s20, 0
    %p110 = por %p108, %p109
    %s112 = sadd.s32 %s111, 1
    %p115 = scmp.eq.s32.totalorder %s14, 1
    %p116 = scmp.ne.s32.totalorder %s111, %s113
    %p117 = scmp.eq.s32.totalorder %s14, 0
    %p118 = por %p116, %p117
    %p119 = scmp.ne.s32.totalorder %s111, %s113
    %p120 = scmp.eq.s32.totalorder %s19, 1
    %p121 = por %p119, %p120
    %p122 = scmp.ne.s32.totalorder %s113, %s114
    %p123 = scmp.eq.s32.totalorder %s19, 0
    %p124 = por %p122, %p123
    %p125 = scmp.ne.s32.totalorder %s113, %s114
    %p126 = scmp.eq.s32.totalorder %s20, 1
    %p127 = por %p125, %p126
    %p129 = scmp.ne.s32.totalorder %s114, %s128
    %p130 = scmp.eq.s32.totalorder %s20, 0
    %p131 = por %p129, %p130
    %s133 = sadd.s32 %s132, 1
    %p136 = scmp.eq.s32.totalorder %s14, 1
    %p137 = scmp.ne.s32.totalorder %s132, %s134
    %p138 = scmp.eq.s32.totalorder %s14, 0
    %p139 = por %p137, %p138
    %p140 = scmp.ne.s32.totalorder %s132, %s134
    %p141 = scmp.eq.s32.totalorder %s19, 1
    %p142 = por %p140, %p141
    %p143 = scmp.ne.s32.totalorder %s134, %s135
    %p144 = scmp.eq.s32.totalorder %s19, 0
    %p145 = por %p143, %p144
    %p146 = scmp.ne.s32.totalorder %s134, %s135
    %p147 = scmp.eq.s32.totalorder %s20, 1
    %p148 = por %p146, %p147
    %p150 = scmp.ne.s32.totalorder %s135, %s149
    %p151 = scmp.eq.s32.totalorder %s20, 0
    %p152 = por %p150, %p151
    %s154 = sadd.s32 %s153, 1
    %p157 = scmp.eq.s32.totalorder %s14, 1
    %p158 = scmp.ne.s32.totalorder %s153, %s155
    %p159 = scmp.eq.s32.totalorder %s14, 0
    %p160 = por %p158, %p159
    %p161 = scmp.ne.s32.totalorder %s153, %s155
    %p162 = scmp.eq.s32.totalorder %s19, 1
    %p163 = por %p161, %p162
    %p164 = scmp.ne.s32.totalorder %s155, %s156
    %p165 = scmp.eq.s32.totalorder %s19, 0
    %p166 = por %p164, %p165
    %p167 = scmp.ne.s32.totalorder %s155, %s156
    %p168 = scmp.eq.s32.totalorder %s20, 1
    %p169 = por %p167, %p168
    %p171 = scmp.ne.s32.totalorder %s156, %s170
    %p172 = scmp.eq.s32.totalorder %s20, 0
    %p173 = por %p171, %p172
    %s175 = sadd.s32 %s174, 1
    %p178 = scmp.eq.s32.totalorder %s14, 1
    %p179 = scmp.ne.s32.totalorder %s174, %s176
    %p180 = scmp.eq.s32.totalorder %s14, 0
    %p181 = por %p179, %p180
    %p182 = scmp.ne.s32.totalorder %s174, %s176
    %p183 = scmp.eq.s32.totalorder %s19, 1
    %p184 = por %p182, %p183
    %p185 = scmp.ne.s32.totalorder %s176, %s177
    %p186 = scmp.eq.s32.totalorder %s19, 0
    %p187 = por %p185, %p186
    %p188 = scmp.ne.s32.totalorder %s176, %s177
    %p189 = scmp.eq.s32.totalorder %s20, 1
    %p190 = por %p188, %p189
    %p192 = scmp.ne.s32.totalorder %s177, %s191
    %p193 = scmp.eq.s32.totalorder %s20, 0
    %p194 = por %p192, %p193
    %s195 = ssub.s32 %s14, %s21
    %p196 = scmp.eq.s32.totalorder %s195, 0
    %s198 = sadd.s32 %s197, 1
    %s199 = scalar_select %p196, %s197, %s198
    %p202 = pneg %p196
    %p203 = scmp.eq.s32.totalorder %s14, 1
    %p204 = por %p202, %p203
    %p205 = scmp.ne.s32.totalorder %s197, %s200
    %p206 = scmp.eq.s32.totalorder %s14, 0
    %p207 = por %p205, %p206
    %p208 = scmp.ne.s32.totalorder %s197, %s200
    %p209 = scmp.eq.s32.totalorder %s19, 1
    %p210 = por %p208, %p209
    %p211 = scmp.ne.s32.totalorder %s200, %s201
    %p212 = scmp.eq.s32.totalorder %s19, 0
    %p213 = por %p211, %p212
    %p214 = scmp.ne.s32.totalorder %s200, %s201
    %p215 = scmp.eq.s32.totalorder %s20, 1
    %p216 = por %p214, %p215
    %p218 = scmp.ne.s32.totalorder %s201, %s217
    %p219 = scmp.eq.s32.totalorder %s20, 0
    %p220 = por %p218, %p219
    %p221 = scmp.le.s32.totalorder 1, %s14
    %p222 = scmp.lt.s32.totalorder %s14, 3
    %p223 = pnand %p221, %p222
    %p224 = pneg %p223
    // Predicated region
    $region9: #{tpu_custom_call.1} parent=5 // pred_check
      _
    $region10: #{tpu_custom_call.1} parent=5 // pred_check_branch
      %226 = sbr.rel (%p223) target = $region12
    $region11: #{tpu_custom_call.1} parent=5 // pred_region
      %s227 = ssub.s32 %s14, 1
      // Predicated region
      $region13: #{tpu_custom_call.1} parent=11 // pred_check
        %p228 = pneg %p61
      $region14: #{tpu_custom_call.1} parent=11 // pred_check_branch
        %230 = sbr.rel (%p228) target = $region16
      $region15: #{tpu_custom_call.1} parent=11 // pred_region
        _
      $region16: #{tpu_custom_call.1} parent=11 // pred_fallthru
        _
      // Predicated region
      $region17: #{tpu_custom_call.1} parent=11 // pred_check
        %p231 = pneg %p82
      $region18: #{tpu_custom_call.1} parent=11 // pred_check_branch
        %233 = sbr.rel (%p231) target = $region20
      $region19: #{tpu_custom_call.1} parent=11 // pred_region
        _
      $region20: #{tpu_custom_call.1} parent=11 // pred_fallthru
        _
      // Predicated region
      $region21: #{tpu_custom_call.1} parent=11 // pred_check
        %p234 = pneg %p103
      $region22: #{tpu_custom_call.1} parent=11 // pred_check_branch
        %236 = sbr.rel (%p234) target = $region24
      $region23: #{tpu_custom_call.1} parent=11 // pred_region
        _
      $region24: #{tpu_custom_call.1} parent=11 // pred_fallthru
        _
      // Predicated region
      $region25: #{tpu_custom_call.1} parent=11 // pred_check
        %p237 = pneg %p124
      $region26: #{tpu_custom_call.1} parent=11 // pred_check_branch
        %239 = sbr.rel (%p237) target = $region28
      $region27: #{tpu_custom_call.1} parent=11 // pred_region
        _
      $region28: #{tpu_custom_call.1} parent=11 // pred_fallthru
        _
      // Predicated region
      $region29: #{tpu_custom_call.1} parent=11 // pred_check
        %p240 = pneg %p145
      $region30: #{tpu_custom_call.1} parent=11 // pred_check_branch
        %242 = sbr.rel (%p240) target = $region32
      $region31: #{tpu_custom_call.1} parent=11 // pred_region
        _
      $region32: #{tpu_custom_call.1} parent=11 // pred_fallthru
        _
      // Predicated region
      $region33: #{tpu_custom_call.1} parent=11 // pred_check
        %p243 = pneg %p166
      $region34: #{tpu_custom_call.1} parent=11 // pred_check_branch
        %245 = sbr.rel (%p243) target = $region36
      $region35: #{tpu_custom_call.1} parent=11 // pred_region
        _
      $region36: #{tpu_custom_call.1} parent=11 // pred_fallthru
        _
      // Predicated region
      $region37: #{tpu_custom_call.1} parent=11 // pred_check
        %p246 = pneg %p187
      $region38: #{tpu_custom_call.1} parent=11 // pred_check_branch
        %248 = sbr.rel (%p246) target = $region40
      $region39: #{tpu_custom_call.1} parent=11 // pred_region
        _
      $region40: #{tpu_custom_call.1} parent=11 // pred_fallthru
        _
    $region12: #{tpu_custom_call.1} parent=5 // pred_fallthru
      _
    %p249 = scmp.lt.s32.totalorder %s14, 2
    // Predicated region
    $region41: #{tpu_custom_call.1} parent=5 // pred_check
      %p250 = pneg %p249
    $region42: #{tpu_custom_call.1} parent=5 // pred_check_branch
      %252 = sbr.rel (%p250) target = $region44
    $region43: #{tpu_custom_call.1} parent=5 // pred_region
      // Predicated region
      $region45: #{tpu_custom_call.1} parent=43 // pred_check
        %p253 = pneg %p34
      $region46: #{tpu_custom_call.1} parent=43 // pred_check_branch
        %255 = sbr.rel (%p253) target = $region48
      $region47: #{tpu_custom_call.1} parent=43 // pred_region
        %p256 = scmp.lt.s32.totalorder %s14, 1
        %s257 = scalar_select %p256, %s14, 1
        %s258 = smul.addr %s257, 32
        %s259 = smul.addr %s258, 8
        %s260 = scalar_lea.vmem %s0, %s259
      $region48: #{tpu_custom_call.1} parent=43 // pred_fallthru
        _
    $region44: #{tpu_custom_call.1} parent=5 // pred_fallthru
      _
    %p261 = scmp.le.s32.totalorder 1, %s14
    %p262 = scmp.lt.s32.totalorder %s14, 3
    %p263 = pnand %p261, %p262
    %p264 = pneg %p263
    // Predicated region
    $region49: #{tpu_custom_call.1} parent=5 // pred_check
      _
    $region50: #{tpu_custom_call.1} parent=5 // pred_check_branch
      %266 = sbr.rel (%p263) target = $region52
    $region51: #{tpu_custom_call.1} parent=5 // pred_region
      %s267 = ssub.s32 %s14, 1
      %p268 = scmp.lt.s32.totalorder %s19, 1
      %s269 = scalar_select %p268, %s19, 1
      %s270 = smul.addr %s269, 32
      %s271 = smul.addr %s270, 8
      %s272 = scalar_lea.vmem %s0, %s271
      %p273 = pneg %p40
      %p274 = pneg %p37
      %p275 = pneg %p61
      %p276 = pneg %p58
      %p277 = pneg %p82
      %p278 = pneg %p79
      %p279 = pneg %p103
      %p280 = pneg %p100
      %p281 = pneg %p124
      %p282 = pneg %p121
      %p283 = pneg %p145
      %p284 = pneg %p142
      %p285 = pneg %p166
      %p286 = pneg %p163
      %p287 = pneg %p187
      %p288 = pneg %p184
      %p289 = pneg %p213
      %p290 = pneg %p210
      %p291 = scmp.lt.s32.totalorder %s19, 1
      %s292 = scalar_select %p291, %s19, 1
      %s293 = smul.addr %s292, 32
      %s294 = smul.addr %s293, 8
      %s295 = scalar_lea.vmem %s8, %s294
      %p296 = scmp.lt.s32.totalorder %s19, 1
      %s297 = scalar_select %p296, %s19, 1
      %s298 = smul.addr %s297, 32
      %s299 = smul.addr %s298, 8
      %s300 = scalar_lea.vmem %s0, %s299
      %p301 = scmp.lt.s32.totalorder %s19, 1
      %s302 = scalar_select %p301, %s19, 1
      %s303 = smul.addr %s302, 32
      %s304 = smul.addr %s303, 8
      %s305 = scalar_lea.vmem %s8, %s304
      %v307 = vld [vmem:[%s3] sm:$0x1]
      %v308 = vld [vmem:[%s3 + $0x1] sm:$0x1]
      %v309 = vld [vmem:[%s3 + $0x2] sm:$0x1]
      %v310 = vld [vmem:[%s3 + $0x3] sm:$0x1]
      %v311 = vld [vmem:[%s3 + $0x4] sm:$0x1]
      %vm312 = vcmask 27648
      %313 = vst.msk [vmem:[#allocation2] sm:$0xf] %vm312, 0
      %314 = vst.msk [vmem:[#allocation2 + $0x4] sm:$0xf] %vm312, 0
      %vm315 = vcmask 24576
      %316 = vst.msk [vmem:[#allocation2 + $0x8] sm:$0x1] %vm315, 0
      %317 = vst.msk [vmem:[#allocation2 + $0xc] sm:$0xf] %vm312, 0
      %318 = vst.msk [vmem:[#allocation2 + $0x10] sm:$0xf] %vm312, 0
      %319 = vst.msk [vmem:[#allocation2 + $0x14] sm:$0x1] %vm315, 0
      %320 = vst.msk [vmem:[#allocation2 + $0x18] sm:$0xf] %vm312, 0
      %321 = vst.msk [vmem:[#allocation2 + $0x1c] sm:$0xf] %vm312, 0
      %322 = vst.msk [vmem:[#allocation2 + $0x20] sm:$0x1] %vm315, 0
      %323 = vst.msk [vmem:[#allocation2 + $0x24] sm:$0xf] %vm312, 0
      %324 = vst.msk [vmem:[#allocation2 + $0x28] sm:$0xf] %vm312, 0
      %325 = vst.msk [vmem:[#allocation2 + $0x2c] sm:$0x1] %vm315, 0
      %326 = vst.msk [vmem:[#allocation2 + $0x30] sm:$0xf] %vm312, 0
      %327 = vst.msk [vmem:[#allocation2 + $0x34] sm:$0xf] %vm312, 0
      %328 = vst.msk [vmem:[#allocation2 + $0x38] sm:$0x1] %vm315, 0
      %329 = vst.msk [vmem:[#allocation2 + $0x3c] sm:$0xf] %vm312, 0
      %330 = vst.msk [vmem:[#allocation2 + $0x40] sm:$0xf] %vm312, 0
      %331 = vst.msk [vmem:[#allocation2 + $0x44] sm:$0x1] %vm315, 0
      %332 = vst.msk [vmem:[#allocation2 + $0x48] sm:$0xf] %vm312, 0
      %333 = vst.msk [vmem:[#allocation2 + $0x4c] sm:$0xf] %vm312, 0
      %334 = vst.msk [vmem:[#allocation2 + $0x50] sm:$0x1] %vm315, 0
      %335 = vst.msk [vmem:[#allocation2 + $0x54] sm:$0xf] %vm312, 0
      %336 = vst.msk [vmem:[#allocation2 + $0x58] sm:$0xf] %vm312, 0
      %337 = vst.msk [vmem:[#allocation2 + $0x5c] sm:$0x1] %vm315, 0
      %338 = vst.msk [vmem:[#allocation2 + $0x60] sm:$0xf] %vm312, 0
      %339 = vst.msk [vmem:[#allocation2 + $0x64] sm:$0xf] %vm312, 0
      %340 = vst.msk [vmem:[#allocation2 + $0x68] sm:$0x1] %vm315, 0
      %341 = vst.msk [vmem:[#allocation2 + $0x6c] sm:$0xf] %vm312, 0
      %342 = vst.msk [vmem:[#allocation2 + $0x70] sm:$0xf] %vm312, 0
      %343 = vst.msk [vmem:[#allocation2 + $0x74] sm:$0x1] %vm315, 0
      %344 = vst.msk [vmem:[#allocation2 + $0x78] sm:$0xf] %vm312, 0
      %345 = vst.msk [vmem:[#allocation2 + $0x7c] sm:$0xf] %vm312, 0
      %346 = vst.msk [vmem:[#allocation2 + $0x80] sm:$0x1] %vm315, 0
      %347 = vst.msk [vmem:[#allocation2 + $0x84] sm:$0xf] %vm312, 0
      %348 = vst.msk [vmem:[#allocation2 + $0x88] sm:$0xf] %vm312, 0
      %349 = vst.msk [vmem:[#allocation2 + $0x8c] sm:$0x1] %vm315, 0
      %350 = vst.msk [vmem:[#allocation2 + $0x90] sm:$0xf] %vm312, 0
      %351 = vst.msk [vmem:[#allocation2 + $0x94] sm:$0xf] %vm312, 0
      %352 = vst.msk [vmem:[#allocation2 + $0x98] sm:$0x1] %vm315, 0
      %353 = vst.msk [vmem:[#allocation2 + $0x9c] sm:$0xf] %vm312, 0
      %354 = vst.msk [vmem:[#allocation2 + $0xa0] sm:$0xf] %vm312, 0
      %355 = vst.msk [vmem:[#allocation2 + $0xa4] sm:$0x1] %vm315, 0
      %356 = vst.msk [vmem:[#allocation2 + $0xa8] sm:$0xf] %vm312, 0
      %357 = vst.msk [vmem:[#allocation2 + $0xac] sm:$0xf] %vm312, 0
      %358 = vst.msk [vmem:[#allocation2 + $0xb0] sm:$0x1] %vm315, 0
      %359 = vst.msk [vmem:[#allocation2 + $0xb4] sm:$0xf] %vm312, 0
      %360 = vst.msk [vmem:[#allocation2 + $0xb8] sm:$0xf] %vm312, 0
      %361 = vst.msk [vmem:[#allocation2 + $0xbc] sm:$0x1] %vm315, 0
      %362 = vst.msk [vmem:[#allocation2 + $0xc0] sm:$0xf] %vm312, 0
      %363 = vst.msk [vmem:[#allocation2 + $0xc4] sm:$0xf] %vm312, 0
      %364 = vst.msk [vmem:[#allocation2 + $0xc8] sm:$0x1] %vm315, 0
      %365 = vst.msk [vmem:[#allocation2 + $0xcc] sm:$0xf] %vm312, 0
      %366 = vst.msk [vmem:[#allocation2 + $0xd0] sm:$0xf] %vm312, 0
      %367 = vst.msk [vmem:[#allocation2 + $0xd4] sm:$0x1] %vm315, 0
      %v368 = vld [vmem:[%s300] sm:$0xff]
      %v369 = vld [vmem:[%s300 + $0x8] sm:$0xff]
      %v370 = vld [vmem:[%s300 + $0x10] sm:$0xff]
      %v371 = vld [vmem:[%s300 + $0x18] sm:$0xff]
      %v372 = vld [vmem:[%s300 + $0x20] sm:$0xff]
      %v373 = vld [vmem:[%s300 + $0x28] sm:$0xff]
      %v374 = vld [vmem:[%s300 + $0x30] sm:$0xff]
      %v375 = vld [vmem:[%s300 + $0x38] sm:$0xff]
      %v376 = vld [vmem:[%s300 + $0x40] sm:$0xff]
      %v377 = vld [vmem:[%s300 + $0x48] sm:$0xff]
      %v378 = vld [vmem:[%s300 + $0x50] sm:$0xff]
      %v379 = vld [vmem:[%s300 + $0x58] sm:$0xff]
      %v380 = vld [vmem:[%s300 + $0x60] sm:$0xff]
      %v381 = vld [vmem:[%s300 + $0x68] sm:$0xff]
      %v382 = vld [vmem:[%s300 + $0x70] sm:$0xff]
      %v383 = vld [vmem:[%s300 + $0x78] sm:$0xff]
      %v384 = vld [vmem:[%s300 + $0x80] sm:$0xff]
      %v385 = vld [vmem:[%s300 + $0x88] sm:$0xff]
      %v386 = vld [vmem:[%s300 + $0x90] sm:$0xff]
      %v387 = vld [vmem:[%s300 + $0x98] sm:$0xff]
      %v388 = vld [vmem:[%s300 + $0xa0] sm:$0xff]
      %v389 = vld [vmem:[%s300 + $0xa8] sm:$0xff]
      %v390 = vld [vmem:[%s300 + $0xb0] sm:$0xff]
      %v391 = vld [vmem:[%s300 + $0xb8] sm:$0xff]
      %v392 = vld [vmem:[%s300 + $0xc0] sm:$0xff]
      %v393 = vld [vmem:[%s300 + $0xc8] sm:$0xff]
      %v394 = vld [vmem:[%s300 + $0xd0] sm:$0xff]
      %v395 = vld [vmem:[%s300 + $0xd8] sm:$0xff]
      %v396 = vld [vmem:[%s300 + $0xe0] sm:$0xff]
      %v397 = vld [vmem:[%s300 + $0xe8] sm:$0xff]
      %v398 = vld [vmem:[%s300 + $0xf0] sm:$0xff]
      %v399 = vld [vmem:[%s300 + $0xf8] sm:$0xff]
      %v400 = vpack.c.bf16 %v369, %v368
      %v401 = vpack.c.bf16 %v371, %v370
      %v402 = vpack.c.bf16 %v373, %v372
      %v403 = vpack.c.bf16 %v375, %v374
      %v404 = vpack.c.bf16 %v377, %v376
      %v405 = vpack.c.bf16 %v379, %v378
      %v406 = vpack.c.bf16 %v381, %v380
      %v407 = vpack.c.bf16 %v383, %v382
      %v408 = vpack.c.bf16 %v385, %v384
      %v409 = vpack.c.bf16 %v387, %v386
      %v410 = vpack.c.bf16 %v389, %v388
      %v411 = vpack.c.bf16 %v391, %v390
      %v412 = vpack.c.bf16 %v393, %v392
      %v413 = vpack.c.bf16 %v395, %v394
      %v414 = vpack.c.bf16 %v397, %v396
      %v415 = vpack.c.bf16 %v399, %v398
      %v432 = vunpack.c.l.b16 %v400
      %v433 = vunpack.c.h.b16 %v400
      %v434 = vunpack.c.l.b16 %v401
      %v435 = vunpack.c.h.b16 %v401
      %v436 = vunpack.c.l.b16 %v402
      %v437 = vunpack.c.h.b16 %v402
      %v438 = vunpack.c.l.b16 %v403
      %v439 = vunpack.c.h.b16 %v403
      %v440 = vunpack.c.l.b16 %v404
      %v441 = vunpack.c.h.b16 %v404
      %v442 = vunpack.c.l.b16 %v405
      %v443 = vunpack.c.h.b16 %v405
      %v444 = vunpack.c.l.b16 %v406
      %v445 = vunpack.c.h.b16 %v406
      %v446 = vunpack.c.l.b16 %v407
      %v447 = vunpack.c.h.b16 %v407
      %v448 = vunpack.c.l.b16 %v408
      %v449 = vunpack.c.h.b16 %v408
      %v450 = vunpack.c.l.b16 %v409
      %v451 = vunpack.c.h.b16 %v409
      %v452 = vunpack.c.l.b16 %v410
      %v453 = vunpack.c.h.b16 %v410
      %v454 = vunpack.c.l.b16 %v411
      %v455 = vunpack.c.h.b16 %v411
      %v456 = vunpack.c.l.b16 %v412
      %v457 = vunpack.c.h.b16 %v412
      %v458 = vunpack.c.l.b16 %v413
      %v459 = vunpack.c.h.b16 %v413
      %v460 = vunpack.c.l.b16 %v414
      %v461 = vunpack.c.h.b16 %v414
      %v462 = vunpack.c.l.b16 %v415
      %v463 = vunpack.c.h.b16 %v415
      %v464 = vpack.c.b16 %v432, %v432
      %v465 = vpack.c.b16 %v433, %v433
      %v466 = vpack.c.b16 %v434, %v434
      %v467 = vpack.c.b16 %v435, %v435
      %v468 = vpack.c.b16 %v436, %v436
      %v469 = vpack.c.b16 %v437, %v437
      %v470 = vpack.c.b16 %v438, %v438
      %v471 = vpack.c.b16 %v439, %v439
      %v472 = vpack.c.b16 %v440, %v440
      %v473 = vpack.c.b16 %v441, %v441
      %v474 = vpack.c.b16 %v442, %v442
      %v475 = vpack.c.b16 %v443, %v443
      %v476 = vpack.c.b16 %v444, %v444
      %v477 = vpack.c.b16 %v445, %v445
      %v478 = vpack.c.b16 %v446, %v446
      %v479 = vpack.c.b16 %v447, %v447
      %v480 = vpack.c.b16 %v448, %v448
      %v481 = vpack.c.b16 %v449, %v449
      %v482 = vpack.c.b16 %v450, %v450
      %v483 = vpack.c.b16 %v451, %v451
      %v484 = vpack.c.b16 %v452, %v452
      %v485 = vpack.c.b16 %v453, %v453
      %v486 = vpack.c.b16 %v454, %v454
      %v487 = vpack.c.b16 %v455, %v455
      %v488 = vpack.c.b16 %v456, %v456
      %v489 = vpack.c.b16 %v457, %v457
      %v490 = vpack.c.b16 %v458, %v458
      %v491 = vpack.c.b16 %v459, %v459
      %v492 = vpack.c.b16 %v460, %v460
      %v493 = vpack.c.b16 %v461, %v461
      %v494 = vpack.c.b16 %v462, %v462
      %v495 = vpack.c.b16 %v463, %v463
      %vm496 = vsmask.f32 256
      %vm497 = vsmask.f32 4368
      %vm498 = vmor %vm496, %vm497
      %v500 = vshrl.u32 %v464, 16
      %v502 = vrot.slane %v500, 7
      %v503 = vshll.u32 %v464, 16
      %v505 = vor.u32 %v502, %v503
      %v506 = vrot.slane %v502, 4
      %v508 = vshrl.u32 %v465, 16
      %v510 = vrot.slane %v508, 7
      %v511 = vshll.u32 %v465, 16
      %v513 = vor.u32 %v510, %v511
      %v514 = vsel %vm498, %v506, %v513
      %v515 = vrot.slane %v510, 4
      %v517 = vshrl.u32 %v466, 16
      %v519 = vrot.slane %v517, 7
      %v520 = vshll.u32 %v466, 16
      %v522 = vor.u32 %v519, %v520
      %v523 = vrot.slane %v519, 4
      %v525 = vshrl.u32 %v467, 16
      %v527 = vrot.slane %v525, 7
      %v528 = vshll.u32 %v467, 16
      %v530 = vor.u32 %v527, %v528
      %v531 = vsel %vm498, %v523, %v530
      %v532 = vrot.slane %v527, 4
      %v534 = vshrl.u32 %v468, 16
      %v536 = vrot.slane %v534, 7
      %v537 = vshll.u32 %v468, 16
      %v539 = vor.u32 %v536, %v537
      %v540 = vrot.slane %v536, 4
      %v542 = vshrl.u32 %v469, 16
      %v544 = vrot.slane %v542, 7
      %v545 = vshll.u32 %v469, 16
      %v547 = vor.u32 %v544, %v545
      %v548 = vsel %vm498, %v540, %v547
      %v549 = vrot.slane %v544, 4
      %v551 = vshrl.u32 %v470, 16
      %v553 = vrot.slane %v551, 7
      %v554 = vshll.u32 %v470, 16
      %v556 = vor.u32 %v553, %v554
      %v557 = vrot.slane %v553, 4
      %v559 = vshrl.u32 %v471, 16
      %v561 = vrot.slane %v559, 7
      %v562 = vshll.u32 %v471, 16
      %v564 = vor.u32 %v561, %v562
      %v565 = vsel %vm498, %v557, %v564
      %v566 = vrot.slane %v561, 4
      %v568 = vshrl.u32 %v472, 16
      %v570 = vrot.slane %v568, 7
      %v571 = vshll.u32 %v472, 16
      %v573 = vor.u32 %v570, %v571
      %v574 = vrot.slane %v570, 4
      %v576 = vshrl.u32 %v473, 16
      %v578 = vrot.slane %v576, 7
      %v579 = vshll.u32 %v473, 16
      %v581 = vor.u32 %v578, %v579
      %v582 = vsel %vm498, %v574, %v581
      %v583 = vrot.slane %v578, 4
      %v585 = vshrl.u32 %v474, 16
      %v587 = vrot.slane %v585, 7
      %v588 = vshll.u32 %v474, 16
      %v590 = vor.u32 %v587, %v588
      %v591 = vrot.slane %v587, 4
      %v593 = vshrl.u32 %v475, 16
      %v595 = vrot.slane %v593, 7
      %v596 = vshll.u32 %v475, 16
      %v598 = vor.u32 %v595, %v596
      %v599 = vsel %vm498, %v591, %v598
      %v600 = vrot.slane %v595, 4
      %v602 = vshrl.u32 %v476, 16
      %v604 = vrot.slane %v602, 7
      %v605 = vshll.u32 %v476, 16
      %v607 = vor.u32 %v604, %v605
      %v608 = vrot.slane %v604, 4
      %v610 = vshrl.u32 %v477, 16
      %v612 = vrot.slane %v610, 7
      %v613 = vshll.u32 %v477, 16
      %v615 = vor.u32 %v612, %v613
      %v616 = vsel %vm498, %v608, %v615
      %v617 = vrot.slane %v612, 4
      %v619 = vshrl.u32 %v478, 16
      %v621 = vrot.slane %v619, 7
      %v622 = vshll.u32 %v478, 16
      %v624 = vor.u32 %v621, %v622
      %v625 = vrot.slane %v621, 4
      %v627 = vshrl.u32 %v479, 16
      %v629 = vrot.slane %v627, 7
      %v630 = vshll.u32 %v479, 16
      %v632 = vor.u32 %v629, %v630
      %v633 = vsel %vm498, %v625, %v632
      %v634 = vrot.slane %v629, 4
      %v636 = vshrl.u32 %v480, 16
      %v638 = vrot.slane %v636, 7
      %v639 = vshll.u32 %v480, 16
      %v641 = vor.u32 %v638, %v639
      %v642 = vrot.slane %v638, 4
      %v644 = vshrl.u32 %v481, 16
      %v646 = vrot.slane %v644, 7
      %v647 = vshll.u32 %v481, 16
      %v649 = vor.u32 %v646, %v647
      %v650 = vsel %vm498, %v642, %v649
      %v651 = vrot.slane %v646, 4
      %v653 = vshrl.u32 %v482, 16
      %v655 = vrot.slane %v653, 7
      %v656 = vshll.u32 %v482, 16
      %v658 = vor.u32 %v655, %v656
      %v659 = vrot.slane %v655, 4
      %v661 = vshrl.u32 %v483, 16
      %v663 = vrot.slane %v661, 7
      %v664 = vshll.u32 %v483, 16
      %v666 = vor.u32 %v663, %v664
      %v667 = vsel %vm498, %v659, %v666
      %v668 = vrot.slane %v663, 4
      %v670 = vshrl.u32 %v484, 16
      %v672 = vrot.slane %v670, 7
      %v673 = vshll.u32 %v484, 16
      %v675 = vor.u32 %v672, %v673
      %v676 = vrot.slane %v672, 4
      %v678 = vshrl.u32 %v485, 16
      %v680 = vrot.slane %v678, 7
      %v681 = vshll.u32 %v485, 16
      %v683 = vor.u32 %v680, %v681
      %v684 = vsel %vm498, %v676, %v683
      %v685 = vrot.slane %v680, 4
      %v687 = vshrl.u32 %v486, 16
      %v689 = vrot.slane %v687, 7
      %v690 = vshll.u32 %v486, 16
      %v692 = vor.u32 %v689, %v690
      %v693 = vrot.slane %v689, 4
      %v695 = vshrl.u32 %v487, 16
      %v697 = vrot.slane %v695, 7
      %v698 = vshll.u32 %v487, 16
      %v700 = vor.u32 %v697, %v698
      %v701 = vsel %vm498, %v693, %v700
      %v702 = vrot.slane %v697, 4
      %v704 = vshrl.u32 %v488, 16
      %v706 = vrot.slane %v704, 7
      %v707 = vshll.u32 %v488, 16
      %v709 = vor.u32 %v706, %v707
      %v710 = vrot.slane %v706, 4
      %v712 = vshrl.u32 %v489, 16
      %v714 = vrot.slane %v712, 7
      %v715 = vshll.u32 %v489, 16
      %v717 = vor.u32 %v714, %v715
      %v718 = vsel %vm498, %v710, %v717
      %v719 = vrot.slane %v714, 4
      %v721 = vshrl.u32 %v490, 16
      %v723 = vrot.slane %v721, 7
      %v724 = vshll.u32 %v490, 16
      %v726 = vor.u32 %v723, %v724
      %v727 = vrot.slane %v723, 4
      %v729 = vshrl.u32 %v491, 16
      %v731 = vrot.slane %v729, 7
      %v732 = vshll.u32 %v491, 16
      %v734 = vor.u32 %v731, %v732
      %v735 = vsel %vm498, %v727, %v734
      %v736 = vrot.slane %v731, 4
      %v738 = vshrl.u32 %v492, 16
      %v740 = vrot.slane %v738, 7
      %v741 = vshll.u32 %v492, 16
      %v743 = vor.u32 %v740, %v741
      %v744 = vrot.slane %v740, 4
      %v746 = vshrl.u32 %v493, 16
      %v748 = vrot.slane %v746, 7
      %v749 = vshll.u32 %v493, 16
      %v751 = vor.u32 %v748, %v749
      %v752 = vsel %vm498, %v744, %v751
      %v753 = vrot.slane %v748, 4
      %v755 = vshrl.u32 %v494, 16
      %v757 = vrot.slane %v755, 7
      %v758 = vshll.u32 %v494, 16
      %v760 = vor.u32 %v757, %v758
      %v761 = vrot.slane %v757, 4
      %v763 = vshrl.u32 %v495, 16
      %v765 = vrot.slane %v763, 7
      %v766 = vshll.u32 %v495, 16
      %v768 = vor.u32 %v765, %v766
      %v769 = vsel %vm498, %v761, %v768
      %v770 = vrot.slane %v765, 4
      %s819 = scalar_lea.vmem [#allocation2], 12
      %vm820 = vcmask 27648
      %vm821 = vsmask.f32 7938
      %vm822 = vmand %vm820, %vm821
      %v823 = vld [vmem:[%s819] sm:$0xf]
      %v824 = vsel %vm822, %v505, %v823
      %825 = vst [vmem:[%s819] sm:$0xf] %v824
      %826 = vst.msk [vmem:[%s819 + $0x4] sm:$0xf] %vm312, %v514
      %vm827 = vcmask 24576
      %vm828 = vmand %vm827, %vm496
      %v829 = vld [vmem:[%s819 + $0x8] sm:$0x1]
      %v830 = vsel %vm828, %v515, %v829
      %831 = vst [vmem:[%s819 + $0x8] sm:$0x1] %v830
      %v832 = vld [vmem:[%s819 + $0xc] sm:$0xf]
      %v833 = vsel %vm822, %v522, %v832
      %834 = vst [vmem:[%s819 + $0xc] sm:$0xf] %v833
      %835 = vst.msk [vmem:[%s819 + $0x10] sm:$0xf] %vm312, %v531
      %v836 = vld [vmem:[%s819 + $0x14] sm:$0x1]
      %v837 = vsel %vm828, %v532, %v836
      %838 = vst [vmem:[%s819 + $0x14] sm:$0x1] %v837
      %v839 = vld [vmem:[%s819 + $0x18] sm:$0xf]
      %v840 = vsel %vm822, %v539, %v839
      %841 = vst [vmem:[%s819 + $0x18] sm:$0xf] %v840
      %842 = vst.msk [vmem:[%s819 + $0x1c] sm:$0xf] %vm312, %v548
      %v843 = vld [vmem:[%s819 + $0x20] sm:$0x1]
      %v844 = vsel %vm828, %v549, %v843
      %845 = vst [vmem:[%s819 + $0x20] sm:$0x1] %v844
      %v846 = vld [vmem:[%s819 + $0x24] sm:$0xf]
      %v847 = vsel %vm822, %v556, %v846
      %848 = vst [vmem:[%s819 + $0x24] sm:$0xf] %v847
      %849 = vst.msk [vmem:[%s819 + $0x28] sm:$0xf] %vm312, %v565
      %v850 = vld [vmem:[%s819 + $0x2c] sm:$0x1]
      %v851 = vsel %vm828, %v566, %v850
      %852 = vst [vmem:[%s819 + $0x2c] sm:$0x1] %v851
      %v853 = vld [vmem:[%s819 + $0x30] sm:$0xf]
      %v854 = vsel %vm822, %v573, %v853
      %855 = vst [vmem:[%s819 + $0x30] sm:$0xf] %v854
      %856 = vst.msk [vmem:[%s819 + $0x34] sm:$0xf] %vm312, %v582
      %v857 = vld [vmem:[%s819 + $0x38] sm:$0x1]
      %v858 = vsel %vm828, %v583, %v857
      %859 = vst [vmem:[%s819 + $0x38] sm:$0x1] %v858
      %v860 = vld [vmem:[%s819 + $0x3c] sm:$0xf]
      %v861 = vsel %vm822, %v590, %v860
      %862 = vst [vmem:[%s819 + $0x3c] sm:$0xf] %v861
      %863 = vst.msk [vmem:[%s819 + $0x40] sm:$0xf] %vm312, %v599
      %v864 = vld [vmem:[%s819 + $0x44] sm:$0x1]
      %v865 = vsel %vm828, %v600, %v864
      %866 = vst [vmem:[%s819 + $0x44] sm:$0x1] %v865
      %v867 = vld [vmem:[%s819 + $0x48] sm:$0xf]
      %v868 = vsel %vm822, %v607, %v867
      %869 = vst [vmem:[%s819 + $0x48] sm:$0xf] %v868
      %870 = vst.msk [vmem:[%s819 + $0x4c] sm:$0xf] %vm312, %v616
      %v871 = vld [vmem:[%s819 + $0x50] sm:$0x1]
      %v872 = vsel %vm828, %v617, %v871
      %873 = vst [vmem:[%s819 + $0x50] sm:$0x1] %v872
      %v874 = vld [vmem:[%s819 + $0x54] sm:$0xf]
      %v875 = vsel %vm822, %v624, %v874
      %876 = vst [vmem:[%s819 + $0x54] sm:$0xf] %v875
      %877 = vst.msk [vmem:[%s819 + $0x58] sm:$0xf] %vm312, %v633
      %v878 = vld [vmem:[%s819 + $0x5c] sm:$0x1]
      %v879 = vsel %vm828, %v634, %v878
      %880 = vst [vmem:[%s819 + $0x5c] sm:$0x1] %v879
      %v881 = vld [vmem:[%s819 + $0x60] sm:$0xf]
      %v882 = vsel %vm822, %v641, %v881
      %883 = vst [vmem:[%s819 + $0x60] sm:$0xf] %v882
      %884 = vst.msk [vmem:[%s819 + $0x64] sm:$0xf] %vm312, %v650
      %v885 = vld [vmem:[%s819 + $0x68] sm:$0x1]
      %v886 = vsel %vm828, %v651, %v885
      %887 = vst [vmem:[%s819 + $0x68] sm:$0x1] %v886
      %v888 = vld [vmem:[%s819 + $0x6c] sm:$0xf]
      %v889 = vsel %vm822, %v658, %v888
      %890 = vst [vmem:[%s819 + $0x6c] sm:$0xf] %v889
      %891 = vst.msk [vmem:[%s819 + $0x70] sm:$0xf] %vm312, %v667
      %v892 = vld [vmem:[%s819 + $0x74] sm:$0x1]
      %v893 = vsel %vm828, %v668, %v892
      %894 = vst [vmem:[%s819 + $0x74] sm:$0x1] %v893
      %v895 = vld [vmem:[%s819 + $0x78] sm:$0xf]
      %v896 = vsel %vm822, %v675, %v895
      %897 = vst [vmem:[%s819 + $0x78] sm:$0xf] %v896
      %898 = vst.msk [vmem:[%s819 + $0x7c] sm:$0xf] %vm312, %v684
      %v899 = vld [vmem:[%s819 + $0x80] sm:$0x1]
      %v900 = vsel %vm828, %v685, %v899
      %901 = vst [vmem:[%s819 + $0x80] sm:$0x1] %v900
      %v902 = vld [vmem:[%s819 + $0x84] sm:$0xf]
      %v903 = vsel %vm822, %v692, %v902
      %904 = vst [vmem:[%s819 + $0x84] sm:$0xf] %v903
      %905 = vst.msk [vmem:[%s819 + $0x88] sm:$0xf] %vm312, %v701
      %v906 = vld [vmem:[%s819 + $0x8c] sm:$0x1]
      %v907 = vsel %vm828, %v702, %v906
      %908 = vst [vmem:[%s819 + $0x8c] sm:$0x1] %v907
      %v909 = vld [vmem:[%s819 + $0x90] sm:$0xf]
      %v910 = vsel %vm822, %v709, %v909
      %911 = vst [vmem:[%s819 + $0x90] sm:$0xf] %v910
      %912 = vst.msk [vmem:[%s819 + $0x94] sm:$0xf] %vm312, %v718
      %v913 = vld [vmem:[%s819 + $0x98] sm:$0x1]
      %v914 = vsel %vm828, %v719, %v913
      %915 = vst [vmem:[%s819 + $0x98] sm:$0x1] %v914
      %v916 = vld [vmem:[%s819 + $0x9c] sm:$0xf]
      %v917 = vsel %vm822, %v726, %v916
      %918 = vst [vmem:[%s819 + $0x9c] sm:$0xf] %v917
      %919 = vst.msk [vmem:[%s819 + $0xa0] sm:$0xf] %vm312, %v735
      %v920 = vld [vmem:[%s819 + $0xa4] sm:$0x1]
      %v921 = vsel %vm828, %v736, %v920
      %922 = vst [vmem:[%s819 + $0xa4] sm:$0x1] %v921
      %v923 = vld [vmem:[%s819 + $0xa8] sm:$0xf]
      %v924 = vsel %vm822, %v743, %v923
      %925 = vst [vmem:[%s819 + $0xa8] sm:$0xf] %v924
      %926 = vst.msk [vmem:[%s819 + $0xac] sm:$0xf] %vm312, %v752
      %v927 = vld [vmem:[%s819 + $0xb0] sm:$0x1]
      %v928 = vsel %vm828, %v753, %v927
      %929 = vst [vmem:[%s819 + $0xb0] sm:$0x1] %v928
      %v930 = vld [vmem:[%s819 + $0xb4] sm:$0xf]
      %v931 = vsel %vm822, %v760, %v930
      %932 = vst [vmem:[%s819 + $0xb4] sm:$0xf] %v931
      %933 = vst.msk [vmem:[%s819 + $0xb8] sm:$0xf] %vm312, %v769
      %v934 = vld [vmem:[%s819 + $0xbc] sm:$0x1]
      %v935 = vsel %vm828, %v770, %v934
      %936 = vst [vmem:[%s819 + $0xbc] sm:$0x1] %v935
      %v937 = vld [vmem:[#allocation2] sm:$0xf]
      %v938 = vld [vmem:[#allocation2 + $0x4] sm:$0xf]
      %v939 = vld [vmem:[#allocation2 + $0xc] sm:$0xf]
      %v940 = vld [vmem:[#allocation2 + $0x10] sm:$0xf]
      %v941 = vld [vmem:[#allocation2 + $0x18] sm:$0xf]
      %v942 = vld [vmem:[#allocation2 + $0x1c] sm:$0xf]
      %v943 = vld [vmem:[#allocation2 + $0x24] sm:$0xf]
      %v944 = vld [vmem:[#allocation2 + $0x28] sm:$0xf]
      %v945 = vld [vmem:[#allocation2 + $0x30] sm:$0xf]
      %v946 = vld [vmem:[#allocation2 + $0x34] sm:$0xf]
      %v947 = vld [vmem:[#allocation2 + $0x3c] sm:$0xf]
      %v948 = vld [vmem:[#allocation2 + $0x40] sm:$0xf]
      %v949 = vld [vmem:[#allocation2 + $0x48] sm:$0xf]
      %v950 = vld [vmem:[#allocation2 + $0x4c] sm:$0xf]
      %v951 = vld [vmem:[#allocation2 + $0x54] sm:$0xf]
      %v952 = vld [vmem:[#allocation2 + $0x58] sm:$0xf]
      %v953 = vld [vmem:[#allocation2 + $0x60] sm:$0xf]
      %v954 = vld [vmem:[#allocation2 + $0x64] sm:$0xf]
      %v955 = vld [vmem:[#allocation2 + $0x6c] sm:$0xf]
      %v956 = vld [vmem:[#allocation2 + $0x70] sm:$0xf]
      %v957 = vld [vmem:[#allocation2 + $0x78] sm:$0xf]
      %v958 = vld [vmem:[#allocation2 + $0x7c] sm:$0xf]
      %v959 = vld [vmem:[#allocation2 + $0x84] sm:$0xf]
      %v960 = vld [vmem:[#allocation2 + $0x88] sm:$0xf]
      %v961 = vld [vmem:[#allocation2 + $0x90] sm:$0xf]
      %v962 = vld [vmem:[#allocation2 + $0x94] sm:$0xf]
      %v963 = vld [vmem:[#allocation2 + $0x9c] sm:$0xf]
      %v964 = vld [vmem:[#allocation2 + $0xa0] sm:$0xf]
      %v965 = vld [vmem:[#allocation2 + $0xa8] sm:$0xf]
      %v966 = vld [vmem:[#allocation2 + $0xac] sm:$0xf]
      %v967 = vld [vmem:[#allocation2 + $0xb4] sm:$0xf]
      %v968 = vld [vmem:[#allocation2 + $0xb8] sm:$0xf]
      %v969 = vld [vmem:[%s1] sm:$0x3]
      %v970 = vld [vmem:[#allocation2 + $0x8] sm:$0x1]
      %v971 = vld [vmem:[#allocation2 + $0x14] sm:$0x1]
      %v972 = vld [vmem:[#allocation2 + $0x20] sm:$0x1]
      %v973 = vld [vmem:[#allocation2 + $0x2c] sm:$0x1]
      %v974 = vld [vmem:[#allocation2 + $0x38] sm:$0x1]
      %v975 = vld [vmem:[#allocation2 + $0x44] sm:$0x1]
      %v976 = vld [vmem:[#allocation2 + $0x50] sm:$0x1]
      %v977 = vld [vmem:[#allocation2 + $0x5c] sm:$0x1]
      %v978 = vld [vmem:[#allocation2 + $0x68] sm:$0x1]
      %v979 = vld [vmem:[#allocation2 + $0x74] sm:$0x1]
      %v980 = vld [vmem:[#allocation2 + $0x80] sm:$0x1]
      %v981 = vld [vmem:[#allocation2 + $0x8c] sm:$0x1]
      %v982 = vld [vmem:[#allocation2 + $0x98] sm:$0x1]
      %v983 = vld [vmem:[#allocation2 + $0xa4] sm:$0x1]
      %v984 = vld [vmem:[#allocation2 + $0xb0] sm:$0x1]
      %v985 = vld [vmem:[#allocation2 + $0xbc] sm:$0x1]
      %vm986 = vsmask.f32 3328
      %vm987 = vsmask.f32 7440
      %vm988 = vmor %vm986, %vm987
      %v990 = vshrl.u32 %v937, 16
      %v992 = vrot.slane %v990, 4
      %v993 = vshll.u32 %v937, 16
      %v995 = vrot.slane %v993, 5
      %v996 = vor.u32 %v992, %v995
      %v997 = vrot.slane %v996, 4
      %v999 = vshll.u32 %v938, 16
      %v1001 = vrot.slane %v999, 5
      %v1002 = vsel %vm988, %v997, %v1001
      %v1003 = vshrl.u32 %v938, 16
      %v1005 = vrot.slane %v1003, 4
      %v1006 = vor.u32 %v1005, %v1001
      %v1007 = vrot.slane %v1006, 4
      %v1009 = vshll.u32 %v970, 16
      %v1011 = vrot.slane %v1009, 5
      %v1012 = vsel %vm988, %v1007, %v1011
      %v1014 = vshrl.u32 %v939, 16
      %v1016 = vrot.slane %v1014, 4
      %v1017 = vshll.u32 %v939, 16
      %v1019 = vrot.slane %v1017, 5
      %v1020 = vor.u32 %v1016, %v1019
      %v1021 = vrot.slane %v1020, 4
      %v1023 = vshll.u32 %v940, 16
      %v1025 = vrot.slane %v1023, 5
      %v1026 = vsel %vm988, %v1021, %v1025
      %v1027 = vshrl.u32 %v940, 16
      %v1029 = vrot.slane %v1027, 4
      %v1030 = vor.u32 %v1029, %v1025
      %v1031 = vrot.slane %v1030, 4
      %v1033 = vshll.u32 %v971, 16
      %v1035 = vrot.slane %v1033, 5
      %v1036 = vsel %vm988, %v1031, %v1035
      %v1038 = vshrl.u32 %v941, 16
      %v1040 = vrot.slane %v1038, 4
      %v1041 = vshll.u32 %v941, 16
      %v1043 = vrot.slane %v1041, 5
      %v1044 = vor.u32 %v1040, %v1043
      %v1045 = vrot.slane %v1044, 4
      %v1047 = vshll.u32 %v942, 16
      %v1049 = vrot.slane %v1047, 5
      %v1050 = vsel %vm988, %v1045, %v1049
      %v1051 = vshrl.u32 %v942, 16
      %v1053 = vrot.slane %v1051, 4
      %v1054 = vor.u32 %v1053, %v1049
      %v1055 = vrot.slane %v1054, 4
      %v1057 = vshll.u32 %v972, 16
      %v1059 = vrot.slane %v1057, 5
      %v1060 = vsel %vm988, %v1055, %v1059
      %v1062 = vshrl.u32 %v943, 16
      %v1064 = vrot.slane %v1062, 4
      %v1065 = vshll.u32 %v943, 16
      %v1067 = vrot.slane %v1065, 5
      %v1068 = vor.u32 %v1064, %v1067
      %v1069 = vrot.slane %v1068, 4
      %v1071 = vshll.u32 %v944, 16
      %v1073 = vrot.slane %v1071, 5
      %v1074 = vsel %vm988, %v1069, %v1073
      %v1075 = vshrl.u32 %v944, 16
      %v1077 = vrot.slane %v1075, 4
      %v1078 = vor.u32 %v1077, %v1073
      %v1079 = vrot.slane %v1078, 4
      %v1081 = vshll.u32 %v973, 16
      %v1083 = vrot.slane %v1081, 5
      %v1084 = vsel %vm988, %v1079, %v1083
      %v1086 = vshrl.u32 %v945, 16
      %v1088 = vrot.slane %v1086, 4
      %v1089 = vshll.u32 %v945, 16
      %v1091 = vrot.slane %v1089, 5
      %v1092 = vor.u32 %v1088, %v1091
      %v1093 = vrot.slane %v1092, 4
      %v1095 = vshll.u32 %v946, 16
      %v1097 = vrot.slane %v1095, 5
      %v1098 = vsel %vm988, %v1093, %v1097
      %v1099 = vshrl.u32 %v946, 16
      %v1101 = vrot.slane %v1099, 4
      %v1102 = vor.u32 %v1101, %v1097
      %v1103 = vrot.slane %v1102, 4
      %v1105 = vshll.u32 %v974, 16
      %v1107 = vrot.slane %v1105, 5
      %v1108 = vsel %vm988, %v1103, %v1107
      %v1110 = vshrl.u32 %v947, 16
      %v1112 = vrot.slane %v1110, 4
      %v1113 = vshll.u32 %v947, 16
      %v1115 = vrot.slane %v1113, 5
      %v1116 = vor.u32 %v1112, %v1115
      %v1117 = vrot.slane %v1116, 4
      %v1119 = vshll.u32 %v948, 16
      %v1121 = vrot.slane %v1119, 5
      %v1122 = vsel %vm988, %v1117, %v1121
      %v1123 = vshrl.u32 %v948, 16
      %v1125 = vrot.slane %v1123, 4
      %v1126 = vor.u32 %v1125, %v1121
      %v1127 = vrot.slane %v1126, 4
      %v1129 = vshll.u32 %v975, 16
      %v1131 = vrot.slane %v1129, 5
      %v1132 = vsel %vm988, %v1127, %v1131
      %v1134 = vshrl.u32 %v949, 16
      %v1136 = vrot.slane %v1134, 4
      %v1137 = vshll.u32 %v949, 16
      %v1139 = vrot.slane %v1137, 5
      %v1140 = vor.u32 %v1136, %v1139
      %v1141 = vrot.slane %v1140, 4
      %v1143 = vshll.u32 %v950, 16
      %v1145 = vrot.slane %v1143, 5
      %v1146 = vsel %vm988, %v1141, %v1145
      %v1147 = vshrl.u32 %v950, 16
      %v1149 = vrot.slane %v1147, 4
      %v1150 = vor.u32 %v1149, %v1145
      %v1151 = vrot.slane %v1150, 4
      %v1153 = vshll.u32 %v976, 16
      %v1155 = vrot.slane %v1153, 5
      %v1156 = vsel %vm988, %v1151, %v1155
      %v1158 = vshrl.u32 %v951, 16
      %v1160 = vrot.slane %v1158, 4
      %v1161 = vshll.u32 %v951, 16
      %v1163 = vrot.slane %v1161, 5
      %v1164 = vor.u32 %v1160, %v1163
      %v1165 = vrot.slane %v1164, 4
      %v1167 = vshll.u32 %v952, 16
      %v1169 = vrot.slane %v1167, 5
      %v1170 = vsel %vm988, %v1165, %v1169
      %v1171 = vshrl.u32 %v952, 16
      %v1173 = vrot.slane %v1171, 4
      %v1174 = vor.u32 %v1173, %v1169
      %v1175 = vrot.slane %v1174, 4
      %v1177 = vshll.u32 %v977, 16
      %v1179 = vrot.slane %v1177, 5
      %v1180 = vsel %vm988, %v1175, %v1179
      %v1182 = vshrl.u32 %v953, 16
      %v1184 = vrot.slane %v1182, 4
      %v1185 = vshll.u32 %v953, 16
      %v1187 = vrot.slane %v1185, 5
      %v1188 = vor.u32 %v1184, %v1187
      %v1189 = vrot.slane %v1188, 4
      %v1191 = vshll.u32 %v954, 16
      %v1193 = vrot.slane %v1191, 5
      %v1194 = vsel %vm988, %v1189, %v1193
      %v1195 = vshrl.u32 %v954, 16
      %v1197 = vrot.slane %v1195, 4
      %v1198 = vor.u32 %v1197, %v1193
      %v1199 = vrot.slane %v1198, 4
      %v1201 = vshll.u32 %v978, 16
      %v1203 = vrot.slane %v1201, 5
      %v1204 = vsel %vm988, %v1199, %v1203
      %v1206 = vshrl.u32 %v955, 16
      %v1208 = vrot.slane %v1206, 4
      %v1209 = vshll.u32 %v955, 16
      %v1211 = vrot.slane %v1209, 5
      %v1212 = vor.u32 %v1208, %v1211
      %v1213 = vrot.slane %v1212, 4
      %v1215 = vshll.u32 %v956, 16
      %v1217 = vrot.slane %v1215, 5
      %v1218 = vsel %vm988, %v1213, %v1217
      %v1219 = vshrl.u32 %v956, 16
      %v1221 = vrot.slane %v1219, 4
      %v1222 = vor.u32 %v1221, %v1217
      %v1223 = vrot.slane %v1222, 4
      %v1225 = vshll.u32 %v979, 16
      %v1227 = vrot.slane %v1225, 5
      %v1228 = vsel %vm988, %v1223, %v1227
      %v1230 = vshrl.u32 %v957, 16
      %v1232 = vrot.slane %v1230, 4
      %v1233 = vshll.u32 %v957, 16
      %v1235 = vrot.slane %v1233, 5
      %v1236 = vor.u32 %v1232, %v1235
      %v1237 = vrot.slane %v1236, 4
      %v1239 = vshll.u32 %v958, 16
      %v1241 = vrot.slane %v1239, 5
      %v1242 = vsel %vm988, %v1237, %v1241
      %v1243 = vshrl.u32 %v958, 16
      %v1245 = vrot.slane %v1243, 4
      %v1246 = vor.u32 %v1245, %v1241
      %v1247 = vrot.slane %v1246, 4
      %v1249 = vshll.u32 %v980, 16
      %v1251 = vrot.slane %v1249, 5
      %v1252 = vsel %vm988, %v1247, %v1251
      %v1254 = vshrl.u32 %v959, 16
      %v1256 = vrot.slane %v1254, 4
      %v1257 = vshll.u32 %v959, 16
      %v1259 = vrot.slane %v1257, 5
      %v1260 = vor.u32 %v1256, %v1259
      %v1261 = vrot.slane %v1260, 4
      %v1263 = vshll.u32 %v960, 16
      %v1265 = vrot.slane %v1263, 5
      %v1266 = vsel %vm988, %v1261, %v1265
      %v1267 = vshrl.u32 %v960, 16
      %v1269 = vrot.slane %v1267, 4
      %v1270 = vor.u32 %v1269, %v1265
      %v1271 = vrot.slane %v1270, 4
      %v1273 = vshll.u32 %v981, 16
      %v1275 = vrot.slane %v1273, 5
      %v1276 = vsel %vm988, %v1271, %v1275
      %v1278 = vshrl.u32 %v961, 16
      %v1280 = vrot.slane %v1278, 4
      %v1281 = vshll.u32 %v961, 16
      %v1283 = vrot.slane %v1281, 5
      %v1284 = vor.u32 %v1280, %v1283
      %v1285 = vrot.slane %v1284, 4
      %v1287 = vshll.u32 %v962, 16
      %v1289 = vrot.slane %v1287, 5
      %v1290 = vsel %vm988, %v1285, %v1289
      %v1291 = vshrl.u32 %v962, 16
      %v1293 = vrot.slane %v1291, 4
      %v1294 = vor.u32 %v1293, %v1289
      %v1295 = vrot.slane %v1294, 4
      %v1297 = vshll.u32 %v982, 16
      %v1299 = vrot.slane %v1297, 5
      %v1300 = vsel %vm988, %v1295, %v1299
      %v1302 = vshrl.u32 %v963, 16
      %v1304 = vrot.slane %v1302, 4
      %v1305 = vshll.u32 %v963, 16
      %v1307 = vrot.slane %v1305, 5
      %v1308 = vor.u32 %v1304, %v1307
      %v1309 = vrot.slane %v1308, 4
      %v1311 = vshll.u32 %v964, 16
      %v1313 = vrot.slane %v1311, 5
      %v1314 = vsel %vm988, %v1309, %v1313
      %v1315 = vshrl.u32 %v964, 16
      %v1317 = vrot.slane %v1315, 4
      %v1318 = vor.u32 %v1317, %v1313
      %v1319 = vrot.slane %v1318, 4
      %v1321 = vshll.u32 %v983, 16
      %v1323 = vrot.slane %v1321, 5
      %v1324 = vsel %vm988, %v1319, %v1323
      %v1326 = vshrl.u32 %v965, 16
      %v1328 = vrot.slane %v1326, 4
      %v1329 = vshll.u32 %v965, 16
      %v1331 = vrot.slane %v1329, 5
      %v1332 = vor.u32 %v1328, %v1331
      %v1333 = vrot.slane %v1332, 4
      %v1335 = vshll.u32 %v966, 16
      %v1337 = vrot.slane %v1335, 5
      %v1338 = vsel %vm988, %v1333, %v1337
      %v1339 = vshrl.u32 %v966, 16
      %v1341 = vrot.slane %v1339, 4
      %v1342 = vor.u32 %v1341, %v1337
      %v1343 = vrot.slane %v1342, 4
      %v1345 = vshll.u32 %v984, 16
      %v1347 = vrot.slane %v1345, 5
      %v1348 = vsel %vm988, %v1343, %v1347
      %v1350 = vshrl.u32 %v967, 16
      %v1352 = vrot.slane %v1350, 4
      %v1353 = vshll.u32 %v967, 16
      %v1355 = vrot.slane %v1353, 5
      %v1356 = vor.u32 %v1352, %v1355
      %v1357 = vrot.slane %v1356, 4
      %v1359 = vshll.u32 %v968, 16
      %v1361 = vrot.slane %v1359, 5
      %v1362 = vsel %vm988, %v1357, %v1361
      %v1363 = vshrl.u32 %v968, 16
      %v1365 = vrot.slane %v1363, 4
      %v1366 = vor.u32 %v1365, %v1361
      %v1367 = vrot.slane %v1366, 4
      %v1369 = vshll.u32 %v985, 16
      %v1371 = vrot.slane %v1369, 5
      %v1372 = vsel %vm988, %v1367, %v1371
      %v1373 = vld [vmem:[%s1] sm:$0xc]
      %v1374 = vunpack.c.l.b16 %v1002
      %v1375 = vunpack.c.l.b16 %v1012
      %v1376 = vunpack.c.l.b16 %v1026
      %v1377 = vunpack.c.l.b16 %v1036
      %v1378 = vunpack.c.l.b16 %v1050
      %v1379 = vunpack.c.l.b16 %v1060
      %v1380 = vunpack.c.l.b16 %v1074
      %v1381 = vunpack.c.l.b16 %v1084
      %v1382 = vunpack.c.l.b16 %v1098
      %v1383 = vunpack.c.l.b16 %v1108
      %v1384 = vunpack.c.l.b16 %v1122
      %v1385 = vunpack.c.l.b16 %v1132
      %v1386 = vunpack.c.l.b16 %v1146
      %v1387 = vunpack.c.l.b16 %v1156
      %v1388 = vunpack.c.l.b16 %v1170
      %v1389 = vunpack.c.l.b16 %v1180
      %v1390 = vunpack.c.l.b16 %v1194
      %v1391 = vunpack.c.l.b16 %v1204
      %v1392 = vunpack.c.l.b16 %v1218
      %v1393 = vunpack.c.l.b16 %v1228
      %v1394 = vunpack.c.l.b16 %v1242
      %v1395 = vunpack.c.l.b16 %v1252
      %v1396 = vunpack.c.l.b16 %v1266
      %v1397 = vunpack.c.l.b16 %v1276
      %v1398 = vunpack.c.l.b16 %v1290
      %v1399 = vunpack.c.l.b16 %v1300
      %v1400 = vunpack.c.l.b16 %v1314
      %v1401 = vunpack.c.l.b16 %v1324
      %v1402 = vunpack.c.l.b16 %v1338
      %v1403 = vunpack.c.l.b16 %v1348
      %v1404 = vunpack.c.l.b16 %v1362
      %v1405 = vunpack.c.l.b16 %v1372
      %v1406 = vpack.c.b16 %v1375, %v1374
      %v1407 = vpack.c.b16 %v1377, %v1376
      %v1408 = vpack.c.b16 %v1379, %v1378
      %v1409 = vpack.c.b16 %v1381, %v1380
      %v1410 = vpack.c.b16 %v1383, %v1382
      %v1411 = vpack.c.b16 %v1385, %v1384
      %v1412 = vpack.c.b16 %v1387, %v1386
      %v1413 = vpack.c.b16 %v1389, %v1388
      %v1414 = vpack.c.b16 %v1391, %v1390
      %v1415 = vpack.c.b16 %v1393, %v1392
      %v1416 = vpack.c.b16 %v1395, %v1394
      %v1417 = vpack.c.b16 %v1397, %v1396
      %v1418 = vpack.c.b16 %v1399, %v1398
      %v1419 = vpack.c.b16 %v1401, %v1400
      %v1420 = vpack.c.b16 %v1403, %v1402
      %v1421 = vpack.c.b16 %v1405, %v1404
      %v1423 = vunpack.c.l.b16 %v1373
      %v1424 = vpack.c.b16 %v1423, %v1423
      %v1425 = vrot.slane %v1424, 2
      %vm1426 = vcmask 31744
      %v1428 = vsel %vm1426, %v1406, 0
      %v1431 = vsel %vm1426, %v1407, 0
      %v1434 = vsel %vm1426, %v1408, 0
      %v1437 = vsel %vm1426, %v1409, 0
      %v1440 = vsel %vm1426, %v1410, 0
      %v1443 = vsel %vm1426, %v1411, 0
      %v1446 = vsel %vm1426, %v1412, 0
      %v1449 = vsel %vm1426, %v1413, 0
      %v1452 = vsel %vm1426, %v1414, 0
      %v1455 = vsel %vm1426, %v1415, 0
      %v1458 = vsel %vm1426, %v1416, 0
      %v1461 = vsel %vm1426, %v1417, 0
      %v1464 = vsel %vm1426, %v1418, 0
      %v1467 = vsel %vm1426, %v1419, 0
      %v1470 = vsel %vm1426, %v1420, 0
      %v1473 = vsel %vm1426, %v1421, 0
      %vm1475 = vcmask 1041408
      %v1477 = vsel %vm1475, %v1425, 0
      %1479 = vmatprep.subr.bf16.mxu0 0
      %1480 = vmatpush1.bf16.msra.mxu0 0
      %1481 = vmatprep.subr.bf16.mxu0 0
      %1482 = vmatpush1.bf16.msra.mxu0 0
      %1483 = vmatprep.subr.bf16.mxu0 0
      %1484 = vmatpush1.bf16.msra.mxu0 0
      %1485 = vmatprep.subr.bf16.mxu0 0
      %1486 = vmatpush1.bf16.msra.mxu0 0
      %1487 = vmatprep.subr.bf16.mxu0 0
      %1488 = vmatpush1.bf16.msra.mxu0 0
      %1489 = vmatprep.subr.bf16.mxu0 0
      %1490 = vmatpush1.bf16.msra.mxu0 0
      %1491 = vmatprep.subr.bf16.mxu0 0
      %1492 = vmatpush1.bf16.msra.mxu0 0
      %1493 = vmatprep.subr.bf16.mxu0 0
      %1494 = vmatpush1.bf16.msra.mxu0 %v1477
      %1495 = vmatprep.subr.bf16.mxu0 0
      %1496 = vmatpush2.bf16.msra.mxu0 0
      %1497 = vmatprep.subr.bf16.mxu0 0
      %1498 = vmatpush2.bf16.msra.mxu0 0
      %1499 = vmatprep.subr.bf16.mxu0 0
      %1500 = vmatpush2.bf16.msra.mxu0 0
      %1501 = vmatprep.subr.bf16.mxu0 0
      %1502 = vmatpush2.bf16.msra.mxu0 0
      %1503 = vmatprep.subr.bf16.mxu0 0
      %1504 = vmatpush2.bf16.msra.mxu0 0
      %1505 = vmatprep.subr.bf16.mxu0 0
      %1506 = vmatpush2.bf16.msra.mxu0 0
      %1507 = vmatprep.subr.bf16.mxu0 0
      %1508 = vmatpush2.bf16.msra.mxu0 0
      %1509 = vmatprep.subr.bf16.mxu0 0
      %1510 = vmatpush2.bf16.msra.mxu0 0
      %1511 = vmatprep.mubr.bf16.mxu0 0
      %1512 = vmatmul.mubr.bf16.gmra.mxu0 %v1428
      %v1513 = vpop.f32.mrf.mxu0
      %v1514 = vadd.f32 0.0, %v1513
      %v1515 = vpop.f32.mrf.mxu0
      %v1516 = vpop.f32.mrf.mxu0
      %v1517 = vadd.f32 0.0, %v1516
      %v1518 = vpop.f32.mrf.mxu0
      %1519 = vmatprep.mubr.bf16.mxu0 0
      %1520 = vmatmul.mubr.bf16.gmra.mxu0 %v1431
      %v1521 = vpop.f32.mrf.mxu0
      %v1522 = vadd.f32 0.0, %v1521
      %v1523 = vpop.f32.mrf.mxu0
      %v1524 = vpop.f32.mrf.mxu0
      %v1525 = vadd.f32 0.0, %v1524
      %v1526 = vpop.f32.mrf.mxu0
      %1527 = vmatprep.mubr.bf16.mxu0 0
      %1528 = vmatmul.mubr.bf16.gmra.mxu0 %v1434
      %v1529 = vpop.f32.mrf.mxu0
      %v1530 = vadd.f32 0.0, %v1529
      %v1531 = vpop.f32.mrf.mxu0
      %v1532 = vpop.f32.mrf.mxu0
      %v1533 = vadd.f32 0.0, %v1532
      %v1534 = vpop.f32.mrf.mxu0
      %1535 = vmatprep.mubr.bf16.mxu0 0
      %1536 = vmatmul.mubr.bf16.gmra.mxu0 %v1437
      %v1537 = vpop.f32.mrf.mxu0
      %v1538 = vadd.f32 0.0, %v1537
      %v1539 = vpop.f32.mrf.mxu0
      %v1540 = vpop.f32.mrf.mxu0
      %v1541 = vadd.f32 0.0, %v1540
      %v1542 = vpop.f32.mrf.mxu0
      %1543 = vmatprep.mubr.bf16.mxu0 0
      %1544 = vmatmul.mubr.bf16.gmra.mxu0 %v1440
      %v1545 = vpop.f32.mrf.mxu0
      %v1546 = vadd.f32 0.0, %v1545
      %v1547 = vpop.f32.mrf.mxu0
      %v1548 = vpop.f32.mrf.mxu0
      %v1549 = vadd.f32 0.0, %v1548
      %v1550 = vpop.f32.mrf.mxu0
      %1551 = vmatprep.mubr.bf16.mxu0 0
      %1552 = vmatmul.mubr.bf16.gmra.mxu0 %v1443
      %v1553 = vpop.f32.mrf.mxu0
      %v1554 = vadd.f32 0.0, %v1553
      %v1555 = vpop.f32.mrf.mxu0
      %v1556 = vpop.f32.mrf.mxu0
      %v1557 = vadd.f32 0.0, %v1556
      %v1558 = vpop.f32.mrf.mxu0
      %1559 = vmatprep.mubr.bf16.mxu0 0
      %1560 = vmatmul.mubr.bf16.gmra.mxu0 %v1446
      %v1561 = vpop.f32.mrf.mxu0
      %v1562 = vadd.f32 0.0, %v1561
      %v1563 = vpop.f32.mrf.mxu0
      %v1564 = vpop.f32.mrf.mxu0
      %v1565 = vadd.f32 0.0, %v1564
      %v1566 = vpop.f32.mrf.mxu0
      %1567 = vmatprep.mubr.bf16.mxu0 0
      %1568 = vmatmul.mubr.bf16.gmra.mxu0 %v1449
      %v1569 = vpop.f32.mrf.mxu0
      %v1570 = vadd.f32 0.0, %v1569
      %v1571 = vpop.f32.mrf.mxu0
      %v1572 = vpop.f32.mrf.mxu0
      %v1573 = vadd.f32 0.0, %v1572
      %v1574 = vpop.f32.mrf.mxu0
      %1575 = vmatprep.mubr.bf16.mxu0 0
      %1576 = vmatmul.mubr.bf16.gmra.mxu0 %v1452
      %v1577 = vpop.f32.mrf.mxu0
      %v1578 = vadd.f32 0.0, %v1577
      %v1579 = vpop.f32.mrf.mxu0
      %v1580 = vpop.f32.mrf.mxu0
      %v1581 = vadd.f32 0.0, %v1580
      %v1582 = vpop.f32.mrf.mxu0
      %1583 = vmatprep.mubr.bf16.mxu0 0
      %1584 = vmatmul.mubr.bf16.gmra.mxu0 %v1455
      %v1585 = vpop.f32.mrf.mxu0
      %v1586 = vadd.f32 0.0, %v1585
      %v1587 = vpop.f32.mrf.mxu0
      %v1588 = vpop.f32.mrf.mxu0
      %v1589 = vadd.f32 0.0, %v1588
      %v1590 = vpop.f32.mrf.mxu0
      %1591 = vmatprep.mubr.bf16.mxu0 0
      %1592 = vmatmul.mubr.bf16.gmra.mxu0 %v1458
      %v1593 = vpop.f32.mrf.mxu0
      %v1594 = vadd.f32 0.0, %v1593
      %v1595 = vpop.f32.mrf.mxu0
      %v1596 = vpop.f32.mrf.mxu0
      %v1597 = vadd.f32 0.0, %v1596
      %v1598 = vpop.f32.mrf.mxu0
      %1599 = vmatprep.mubr.bf16.mxu0 0
      %1600 = vmatmul.mubr.bf16.gmra.mxu0 %v1461
      %v1601 = vpop.f32.mrf.mxu0
      %v1602 = vadd.f32 0.0, %v1601
      %v1603 = vpop.f32.mrf.mxu0
      %v1604 = vpop.f32.mrf.mxu0
      %v1605 = vadd.f32 0.0, %v1604
      %v1606 = vpop.f32.mrf.mxu0
      %1607 = vmatprep.mubr.bf16.mxu0 0
      %1608 = vmatmul.mubr.bf16.gmra.mxu0 %v1464
      %v1609 = vpop.f32.mrf.mxu0
      %v1610 = vadd.f32 0.0, %v1609
      %v1611 = vpop.f32.mrf.mxu0
      %v1612 = vpop.f32.mrf.mxu0
      %v1613 = vadd.f32 0.0, %v1612
      %v1614 = vpop.f32.mrf.mxu0
      %1615 = vmatprep.mubr.bf16.mxu0 0
      %1616 = vmatmul.mubr.bf16.gmra.mxu0 %v1467
      %v1617 = vpop.f32.mrf.mxu0
      %v1618 = vadd.f32 0.0, %v1617
      %v1619 = vpop.f32.mrf.mxu0
      %v1620 = vpop.f32.mrf.mxu0
      %v1621 = vadd.f32 0.0, %v1620
      %v1622 = vpop.f32.mrf.mxu0
      %1623 = vmatprep.mubr.bf16.mxu0 0
      %1624 = vmatmul.mubr.bf16.gmra.mxu0 %v1470
      %v1625 = vpop.f32.mrf.mxu0
      %v1626 = vadd.f32 0.0, %v1625
      %v1627 = vpop.f32.mrf.mxu0
      %v1628 = vpop.f32.mrf.mxu0
      %v1629 = vadd.f32 0.0, %v1628
      %v1630 = vpop.f32.mrf.mxu0
      %1631 = vmatprep.mubr.bf16.mxu0 0
      %1632 = vmatmul.mubr.bf16.gmra.mxu0 %v1473
      %v1633 = vpop.f32.mrf.mxu0
      %v1634 = vadd.f32 0.0, %v1633
      %v1635 = vpop.f32.mrf.mxu0
      %v1636 = vpop.f32.mrf.mxu0
      %v1637 = vadd.f32 0.0, %v1636
      %v1638 = vpop.f32.mrf.mxu0
      %1639 = vdwg.mxu0
      %v1672 = vunpack.c.l.b16 %v937
      %v1673 = vunpack.c.l.b16 %v938
      %v1674 = vunpack.c.l.b16 %v939
      %v1675 = vunpack.c.l.b16 %v940
      %v1676 = vunpack.c.l.b16 %v941
      %v1677 = vunpack.c.l.b16 %v942
      %v1678 = vunpack.c.l.b16 %v943
      %v1679 = vunpack.c.l.b16 %v944
      %v1680 = vunpack.c.l.b16 %v945
      %v1681 = vunpack.c.l.b16 %v946
      %v1682 = vunpack.c.l.b16 %v947
      %v1683 = vunpack.c.l.b16 %v948
      %v1684 = vunpack.c.l.b16 %v949
      %v1685 = vunpack.c.l.b16 %v950
      %v1686 = vunpack.c.l.b16 %v951
      %v1687 = vunpack.c.l.b16 %v952
      %v1688 = vunpack.c.l.b16 %v953
      %v1689 = vunpack.c.l.b16 %v954
      %v1690 = vunpack.c.l.b16 %v955
      %v1691 = vunpack.c.l.b16 %v956
      %v1692 = vunpack.c.l.b16 %v957
      %v1693 = vunpack.c.l.b16 %v958
      %v1694 = vunpack.c.l.b16 %v959
      %v1695 = vunpack.c.l.b16 %v960
      %v1696 = vunpack.c.l.b16 %v961
      %v1697 = vunpack.c.l.b16 %v962
      %v1698 = vunpack.c.l.b16 %v963
      %v1699 = vunpack.c.l.b16 %v964
      %v1700 = vunpack.c.l.b16 %v965
      %v1701 = vunpack.c.l.b16 %v966
      %v1702 = vunpack.c.l.b16 %v967
      %v1703 = vunpack.c.l.b16 %v968
      %v1704 = vpack.c.b16 %v1673, %v1672
      %v1705 = vpack.c.b16 %v1675, %v1674
      %v1706 = vpack.c.b16 %v1677, %v1676
      %v1707 = vpack.c.b16 %v1679, %v1678
      %v1708 = vpack.c.b16 %v1681, %v1680
      %v1709 = vpack.c.b16 %v1683, %v1682
      %v1710 = vpack.c.b16 %v1685, %v1684
      %v1711 = vpack.c.b16 %v1687, %v1686
      %v1712 = vpack.c.b16 %v1689, %v1688
      %v1713 = vpack.c.b16 %v1691, %v1690
      %v1714 = vpack.c.b16 %v1693, %v1692
      %v1715 = vpack.c.b16 %v1695, %v1694
      %v1716 = vpack.c.b16 %v1697, %v1696
      %v1717 = vpack.c.b16 %v1699, %v1698
      %v1718 = vpack.c.b16 %v1701, %v1700
      %v1719 = vpack.c.b16 %v1703, %v1702
      %v1721 = vsel %vm1426, %v1704, 0
      %v1724 = vsel %vm1426, %v1705, 0
      %v1727 = vsel %vm1426, %v1706, 0
      %v1730 = vsel %vm1426, %v1707, 0
      %v1733 = vsel %vm1426, %v1708, 0
      %v1736 = vsel %vm1426, %v1709, 0
      %v1739 = vsel %vm1426, %v1710, 0
      %v1742 = vsel %vm1426, %v1711, 0
      %v1745 = vsel %vm1426, %v1712, 0
      %v1748 = vsel %vm1426, %v1713, 0
      %v1751 = vsel %vm1426, %v1714, 0
      %v1754 = vsel %vm1426, %v1715, 0
      %v1757 = vsel %vm1426, %v1716, 0
      %v1760 = vsel %vm1426, %v1717, 0
      %v1763 = vsel %vm1426, %v1718, 0
      %v1766 = vsel %vm1426, %v1719, 0
      %v1769 = vsel %vm1475, %v969, 0
      %1771 = vmatprep.subr.bf16.mxu0 0
      %1772 = vmatpush1.bf16.msra.mxu0 0
      %1773 = vmatprep.subr.bf16.mxu0 0
      %1774 = vmatpush1.bf16.msra.mxu0 0
      %1775 = vmatprep.subr.bf16.mxu0 0
      %1776 = vmatpush1.bf16.msra.mxu0 0
      %1777 = vmatprep.subr.bf16.mxu0 0
      %1778 = vmatpush1.bf16.msra.mxu0 0
      %1779 = vmatprep.subr.bf16.mxu0 0
      %1780 = vmatpush1.bf16.msra.mxu0 0
      %1781 = vmatprep.subr.bf16.mxu0 0
      %1782 = vmatpush1.bf16.msra.mxu0 0
      %1783 = vmatprep.subr.bf16.mxu0 0
      %1784 = vmatpush1.bf16.msra.mxu0 0
      %1785 = vmatprep.subr.bf16.mxu0 0
      %1786 = vmatpush1.bf16.msra.mxu0 %v1769
      %1787 = vmatprep.subr.bf16.mxu0 0
      %1788 = vmatpush2.bf16.msra.mxu0 0
      %1789 = vmatprep.subr.bf16.mxu0 0
      %1790 = vmatpush2.bf16.msra.mxu0 0
      %1791 = vmatprep.subr.bf16.mxu0 0
      %1792 = vmatpush2.bf16.msra.mxu0 0
      %1793 = vmatprep.subr.bf16.mxu0 0
      %1794 = vmatpush2.bf16.msra.mxu0 0
      %1795 = vmatprep.subr.bf16.mxu0 0
      %1796 = vmatpush2.bf16.msra.mxu0 0
      %1797 = vmatprep.subr.bf16.mxu0 0
      %1798 = vmatpush2.bf16.msra.mxu0 0
      %1799 = vmatprep.subr.bf16.mxu0 0
      %1800 = vmatpush2.bf16.msra.mxu0 0
      %1801 = vmatprep.subr.bf16.mxu0 0
      %1802 = vmatpush2.bf16.msra.mxu0 0
      %1803 = vmatprep.mubr.bf16.mxu0 0
      %1804 = vmatmul.mubr.bf16.gmra.mxu0 %v1721
      %v1805 = vpop.f32.mrf.mxu0
      %v1806 = vadd.f32 %v1514, %v1805
      %v1807 = vpop.f32.mrf.mxu0
      %v1808 = vpop.f32.mrf.mxu0
      %v1809 = vadd.f32 %v1517, %v1808
      %v1810 = vpop.f32.mrf.mxu0
      %1811 = vmatprep.mubr.bf16.mxu0 0
      %1812 = vmatmul.mubr.bf16.gmra.mxu0 %v1724
      %v1813 = vpop.f32.mrf.mxu0
      %v1814 = vadd.f32 %v1522, %v1813
      %v1815 = vpop.f32.mrf.mxu0
      %v1816 = vpop.f32.mrf.mxu0
      %v1817 = vadd.f32 %v1525, %v1816
      %v1818 = vpop.f32.mrf.mxu0
      %1819 = vmatprep.mubr.bf16.mxu0 0
      %1820 = vmatmul.mubr.bf16.gmra.mxu0 %v1727
      %v1821 = vpop.f32.mrf.mxu0
      %v1822 = vadd.f32 %v1530, %v1821
      %v1823 = vpop.f32.mrf.mxu0
      %v1824 = vpop.f32.mrf.mxu0
      %v1825 = vadd.f32 %v1533, %v1824
      %v1826 = vpop.f32.mrf.mxu0
      %1827 = vmatprep.mubr.bf16.mxu0 0
      %1828 = vmatmul.mubr.bf16.gmra.mxu0 %v1730
      %v1829 = vpop.f32.mrf.mxu0
      %v1830 = vadd.f32 %v1538, %v1829
      %v1831 = vpop.f32.mrf.mxu0
      %v1832 = vpop.f32.mrf.mxu0
      %v1833 = vadd.f32 %v1541, %v1832
      %v1834 = vpop.f32.mrf.mxu0
      %1835 = vmatprep.mubr.bf16.mxu0 0
      %1836 = vmatmul.mubr.bf16.gmra.mxu0 %v1733
      %v1837 = vpop.f32.mrf.mxu0
      %v1838 = vadd.f32 %v1546, %v1837
      %v1839 = vpop.f32.mrf.mxu0
      %v1840 = vpop.f32.mrf.mxu0
      %v1841 = vadd.f32 %v1549, %v1840
      %v1842 = vpop.f32.mrf.mxu0
      %1843 = vmatprep.mubr.bf16.mxu0 0
      %1844 = vmatmul.mubr.bf16.gmra.mxu0 %v1736
      %v1845 = vpop.f32.mrf.mxu0
      %v1846 = vadd.f32 %v1554, %v1845
      %v1847 = vpop.f32.mrf.mxu0
      %v1848 = vpop.f32.mrf.mxu0
      %v1849 = vadd.f32 %v1557, %v1848
      %v1850 = vpop.f32.mrf.mxu0
      %1851 = vmatprep.mubr.bf16.mxu0 0
      %1852 = vmatmul.mubr.bf16.gmra.mxu0 %v1739
      %v1853 = vpop.f32.mrf.mxu0
      %v1854 = vadd.f32 %v1562, %v1853
      %v1855 = vpop.f32.mrf.mxu0
      %v1856 = vpop.f32.mrf.mxu0
      %v1857 = vadd.f32 %v1565, %v1856
      %v1858 = vpop.f32.mrf.mxu0
      %1859 = vmatprep.mubr.bf16.mxu0 0
      %1860 = vmatmul.mubr.bf16.gmra.mxu0 %v1742
      %v1861 = vpop.f32.mrf.mxu0
      %v1862 = vadd.f32 %v1570, %v1861
      %v1863 = vpop.f32.mrf.mxu0
      %v1864 = vpop.f32.mrf.mxu0
      %v1865 = vadd.f32 %v1573, %v1864
      %v1866 = vpop.f32.mrf.mxu0
      %1867 = vmatprep.mubr.bf16.mxu0 0
      %1868 = vmatmul.mubr.bf16.gmra.mxu0 %v1745
      %v1869 = vpop.f32.mrf.mxu0
      %v1870 = vadd.f32 %v1578, %v1869
      %v1871 = vpop.f32.mrf.mxu0
      %v1872 = vpop.f32.mrf.mxu0
      %v1873 = vadd.f32 %v1581, %v1872
      %v1874 = vpop.f32.mrf.mxu0
      %1875 = vmatprep.mubr.bf16.mxu0 0
      %1876 = vmatmul.mubr.bf16.gmra.mxu0 %v1748
      %v1877 = vpop.f32.mrf.mxu0
      %v1878 = vadd.f32 %v1586, %v1877
      %v1879 = vpop.f32.mrf.mxu0
      %v1880 = vpop.f32.mrf.mxu0
      %v1881 = vadd.f32 %v1589, %v1880
      %v1882 = vpop.f32.mrf.mxu0
      %1883 = vmatprep.mubr.bf16.mxu0 0
      %1884 = vmatmul.mubr.bf16.gmra.mxu0 %v1751
      %v1885 = vpop.f32.mrf.mxu0
      %v1886 = vadd.f32 %v1594, %v1885
      %v1887 = vpop.f32.mrf.mxu0
      %v1888 = vpop.f32.mrf.mxu0
      %v1889 = vadd.f32 %v1597, %v1888
      %v1890 = vpop.f32.mrf.mxu0
      %1891 = vmatprep.mubr.bf16.mxu0 0
      %1892 = vmatmul.mubr.bf16.gmra.mxu0 %v1754
      %v1893 = vpop.f32.mrf.mxu0
      %v1894 = vadd.f32 %v1602, %v1893
      %v1895 = vpop.f32.mrf.mxu0
      %v1896 = vpop.f32.mrf.mxu0
      %v1897 = vadd.f32 %v1605, %v1896
      %v1898 = vpop.f32.mrf.mxu0
      %1899 = vmatprep.mubr.bf16.mxu0 0
      %1900 = vmatmul.mubr.bf16.gmra.mxu0 %v1757
      %v1901 = vpop.f32.mrf.mxu0
      %v1902 = vadd.f32 %v1610, %v1901
      %v1903 = vpop.f32.mrf.mxu0
      %v1904 = vpop.f32.mrf.mxu0
      %v1905 = vadd.f32 %v1613, %v1904
      %v1906 = vpop.f32.mrf.mxu0
      %1907 = vmatprep.mubr.bf16.mxu0 0
      %1908 = vmatmul.mubr.bf16.gmra.mxu0 %v1760
      %v1909 = vpop.f32.mrf.mxu0
      %v1910 = vadd.f32 %v1618, %v1909
      %v1911 = vpop.f32.mrf.mxu0
      %v1912 = vpop.f32.mrf.mxu0
      %v1913 = vadd.f32 %v1621, %v1912
      %v1914 = vpop.f32.mrf.mxu0
      %1915 = vmatprep.mubr.bf16.mxu0 0
      %1916 = vmatmul.mubr.bf16.gmra.mxu0 %v1763
      %v1917 = vpop.f32.mrf.mxu0
      %v1918 = vadd.f32 %v1626, %v1917
      %v1919 = vpop.f32.mrf.mxu0
      %v1920 = vpop.f32.mrf.mxu0
      %v1921 = vadd.f32 %v1629, %v1920
      %v1922 = vpop.f32.mrf.mxu0
      %1923 = vmatprep.mubr.bf16.mxu0 0
      %1924 = vmatmul.mubr.bf16.gmra.mxu0 %v1766
      %v1925 = vpop.f32.mrf.mxu0
      %v1926 = vadd.f32 %v1634, %v1925
      %v1927 = vpop.f32.mrf.mxu0
      %v1928 = vpop.f32.mrf.mxu0
      %v1929 = vadd.f32 %v1637, %v1928
      %v1930 = vpop.f32.mrf.mxu0
      %1931 = vdwg.mxu0
      %v1932 = vld [vmem:[#allocation2] sm:$0xe]
      %v1933 = vld [vmem:[#allocation2 + $0xc] sm:$0xe]
      %v1934 = vld [vmem:[#allocation2 + $0x18] sm:$0xe]
      %v1935 = vld [vmem:[#allocation2 + $0x24] sm:$0xe]
      %v1936 = vld [vmem:[#allocation2 + $0x30] sm:$0xe]
      %v1937 = vld [vmem:[#allocation2 + $0x3c] sm:$0xe]
      %v1938 = vld [vmem:[#allocation2 + $0x48] sm:$0xe]
      %v1939 = vld [vmem:[#allocation2 + $0x54] sm:$0xe]
      %v1940 = vld [vmem:[#allocation2 + $0x60] sm:$0xe]
      %v1941 = vld [vmem:[#allocation2 + $0x6c] sm:$0xe]
      %v1942 = vld [vmem:[#allocation2 + $0x78] sm:$0xe]
      %v1943 = vld [vmem:[#allocation2 + $0x84] sm:$0xe]
      %v1944 = vld [vmem:[#allocation2 + $0x90] sm:$0xe]
      %v1945 = vld [vmem:[#allocation2 + $0x9c] sm:$0xe]
      %v1946 = vld [vmem:[#allocation2 + $0xa8] sm:$0xe]
      %v1947 = vld [vmem:[#allocation2 + $0xb4] sm:$0xe]
      %vm1980 = vcmask 1042432
      %vm1981 = vcmask 1046532
      %vm1982 = vmor %vm1980, %vm1981
      %v1983 = vrot.slane %v1932, 5
      %v1984 = vrot.slane %v1983, 4
      %v1985 = vrot.slane %v938, 5
      %v1986 = vsel %vm1982, %v1984, %v1985
      %v1987 = vrot.slane %v1985, 4
      %v1988 = vrot.slane %v970, 5
      %v1989 = vsel %vm1982, %v1987, %v1988
      %v1990 = vrot.slane %v1933, 5
      %v1991 = vrot.slane %v1990, 4
      %v1992 = vrot.slane %v940, 5
      %v1993 = vsel %vm1982, %v1991, %v1992
      %v1994 = vrot.slane %v1992, 4
      %v1995 = vrot.slane %v971, 5
      %v1996 = vsel %vm1982, %v1994, %v1995
      %v1997 = vrot.slane %v1934, 5
      %v1998 = vrot.slane %v1997, 4
      %v1999 = vrot.slane %v942, 5
      %v2000 = vsel %vm1982, %v1998, %v1999
      %v2001 = vrot.slane %v1999, 4
      %v2002 = vrot.slane %v972, 5
      %v2003 = vsel %vm1982, %v2001, %v2002
      %v2004 = vrot.slane %v1935, 5
      %v2005 = vrot.slane %v2004, 4
      %v2006 = vrot.slane %v944, 5
      %v2007 = vsel %vm1982, %v2005, %v2006
      %v2008 = vrot.slane %v2006, 4
      %v2009 = vrot.slane %v973, 5
      %v2010 = vsel %vm1982, %v2008, %v2009
      %v2011 = vrot.slane %v1936, 5
      %v2012 = vrot.slane %v2011, 4
      %v2013 = vrot.slane %v946, 5
      %v2014 = vsel %vm1982, %v2012, %v2013
      %v2015 = vrot.slane %v2013, 4
      %v2016 = vrot.slane %v974, 5
      %v2017 = vsel %vm1982, %v2015, %v2016
      %v2018 = vrot.slane %v1937, 5
      %v2019 = vrot.slane %v2018, 4
      %v2020 = vrot.slane %v948, 5
      %v2021 = vsel %vm1982, %v2019, %v2020
      %v2022 = vrot.slane %v2020, 4
      %v2023 = vrot.slane %v975, 5
      %v2024 = vsel %vm1982, %v2022, %v2023
      %v2025 = vrot.slane %v1938, 5
      %v2026 = vrot.slane %v2025, 4
      %v2027 = vrot.slane %v950, 5
      %v2028 = vsel %vm1982, %v2026, %v2027
      %v2029 = vrot.slane %v2027, 4
      %v2030 = vrot.slane %v976, 5
      %v2031 = vsel %vm1982, %v2029, %v2030
      %v2032 = vrot.slane %v1939, 5
      %v2033 = vrot.slane %v2032, 4
      %v2034 = vrot.slane %v952, 5
      %v2035 = vsel %vm1982, %v2033, %v2034
      %v2036 = vrot.slane %v2034, 4
      %v2037 = vrot.slane %v977, 5
      %v2038 = vsel %vm1982, %v2036, %v2037
      %v2039 = vrot.slane %v1940, 5
      %v2040 = vrot.slane %v2039, 4
      %v2041 = vrot.slane %v954, 5
      %v2042 = vsel %vm1982, %v2040, %v2041
      %v2043 = vrot.slane %v2041, 4
      %v2044 = vrot.slane %v978, 5
      %v2045 = vsel %vm1982, %v2043, %v2044
      %v2046 = vrot.slane %v1941, 5
      %v2047 = vrot.slane %v2046, 4
      %v2048 = vrot.slane %v956, 5
      %v2049 = vsel %vm1982, %v2047, %v2048
      %v2050 = vrot.slane %v2048, 4
      %v2051 = vrot.slane %v979, 5
      %v2052 = vsel %vm1982, %v2050, %v2051
      %v2053 = vrot.slane %v1942, 5
      %v2054 = vrot.slane %v2053, 4
      %v2055 = vrot.slane %v958, 5
      %v2056 = vsel %vm1982, %v2054, %v2055
      %v2057 = vrot.slane %v2055, 4
      %v2058 = vrot.slane %v980, 5
      %v2059 = vsel %vm1982, %v2057, %v2058
      %v2060 = vrot.slane %v1943, 5
      %v2061 = vrot.slane %v2060, 4
      %v2062 = vrot.slane %v960, 5
      %v2063 = vsel %vm1982, %v2061, %v2062
      %v2064 = vrot.slane %v2062, 4
      %v2065 = vrot.slane %v981, 5
      %v2066 = vsel %vm1982, %v2064, %v2065
      %v2067 = vrot.slane %v1944, 5
      %v2068 = vrot.slane %v2067, 4
      %v2069 = vrot.slane %v962, 5
      %v2070 = vsel %vm1982, %v2068, %v2069
      %v2071 = vrot.slane %v2069, 4
      %v2072 = vrot.slane %v982, 5
      %v2073 = vsel %vm1982, %v2071, %v2072
      %v2074 = vrot.slane %v1945, 5
      %v2075 = vrot.slane %v2074, 4
      %v2076 = vrot.slane %v964, 5
      %v2077 = vsel %vm1982, %v2075, %v2076
      %v2078 = vrot.slane %v2076, 4
      %v2079 = vrot.slane %v983, 5
      %v2080 = vsel %vm1982, %v2078, %v2079
      %v2081 = vrot.slane %v1946, 5
      %v2082 = vrot.slane %v2081, 4
      %v2083 = vrot.slane %v966, 5
      %v2084 = vsel %vm1982, %v2082, %v2083
      %v2085 = vrot.slane %v2083, 4
      %v2086 = vrot.slane %v984, 5
      %v2087 = vsel %vm1982, %v2085, %v2086
      %v2088 = vrot.slane %v1947, 5
      %v2089 = vrot.slane %v2088, 4
      %v2090 = vrot.slane %v968, 5
      %v2091 = vsel %vm1982, %v2089, %v2090
      %v2092 = vrot.slane %v2090, 4
      %v2093 = vrot.slane %v985, 5
      %v2094 = vsel %vm1982, %v2092, %v2093
      %v2095 = vld [vmem:[%s1 + $0x4] sm:$0x3]
      %v2096 = vunpack.c.l.b16 %v1986
      %v2097 = vunpack.c.l.b16 %v1989
      %v2098 = vunpack.c.l.b16 %v1993
      %v2099 = vunpack.c.l.b16 %v1996
      %v2100 = vunpack.c.l.b16 %v2000
      %v2101 = vunpack.c.l.b16 %v2003
      %v2102 = vunpack.c.l.b16 %v2007
      %v2103 = vunpack.c.l.b16 %v2010
      %v2104 = vunpack.c.l.b16 %v2014
      %v2105 = vunpack.c.l.b16 %v2017
      %v2106 = vunpack.c.l.b16 %v2021
      %v2107 = vunpack.c.l.b16 %v2024
      %v2108 = vunpack.c.l.b16 %v2028
      %v2109 = vunpack.c.l.b16 %v2031
      %v2110 = vunpack.c.l.b16 %v2035
      %v2111 = vunpack.c.l.b16 %v2038
      %v2112 = vunpack.c.l.b16 %v2042
      %v2113 = vunpack.c.l.b16 %v2045
      %v2114 = vunpack.c.l.b16 %v2049
      %v2115 = vunpack.c.l.b16 %v2052
      %v2116 = vunpack.c.l.b16 %v2056
      %v2117 = vunpack.c.l.b16 %v2059
      %v2118 = vunpack.c.l.b16 %v2063
      %v2119 = vunpack.c.l.b16 %v2066
      %v2120 = vunpack.c.l.b16 %v2070
      %v2121 = vunpack.c.l.b16 %v2073
      %v2122 = vunpack.c.l.b16 %v2077
      %v2123 = vunpack.c.l.b16 %v2080
      %v2124 = vunpack.c.l.b16 %v2084
      %v2125 = vunpack.c.l.b16 %v2087
      %v2126 = vunpack.c.l.b16 %v2091
      %v2127 = vunpack.c.l.b16 %v2094
      %v2128 = vpack.c.b16 %v2097, %v2096
      %v2129 = vpack.c.b16 %v2099, %v2098
      %v2130 = vpack.c.b16 %v2101, %v2100
      %v2131 = vpack.c.b16 %v2103, %v2102
      %v2132 = vpack.c.b16 %v2105, %v2104
      %v2133 = vpack.c.b16 %v2107, %v2106
      %v2134 = vpack.c.b16 %v2109, %v2108
      %v2135 = vpack.c.b16 %v2111, %v2110
      %v2136 = vpack.c.b16 %v2113, %v2112
      %v2137 = vpack.c.b16 %v2115, %v2114
      %v2138 = vpack.c.b16 %v2117, %v2116
      %v2139 = vpack.c.b16 %v2119, %v2118
      %v2140 = vpack.c.b16 %v2121, %v2120
      %v2141 = vpack.c.b16 %v2123, %v2122
      %v2142 = vpack.c.b16 %v2125, %v2124
      %v2143 = vpack.c.b16 %v2127, %v2126
      %v2145 = vsel %vm1426, %v2128, 0
      %v2148 = vsel %vm1426, %v2129, 0
      %v2151 = vsel %vm1426, %v2130, 0
      %v2154 = vsel %vm1426, %v2131, 0
      %v2157 = vsel %vm1426, %v2132, 0
      %v2160 = vsel %vm1426, %v2133, 0
      %v2163 = vsel %vm1426, %v2134, 0
      %v2166 = vsel %vm1426, %v2135, 0
      %v2169 = vsel %vm1426, %v2136, 0
      %v2172 = vsel %vm1426, %v2137, 0
      %v2175 = vsel %vm1426, %v2138, 0
      %v2178 = vsel %vm1426, %v2139, 0
      %v2181 = vsel %vm1426, %v2140, 0
      %v2184 = vsel %vm1426, %v2141, 0
      %v2187 = vsel %vm1426, %v2142, 0
      %v2190 = vsel %vm1426, %v2143, 0
      %v2193 = vsel %vm1475, %v2095, 0
      %2195 = vmatprep.subr.bf16.mxu0 0
      %2196 = vmatpush1.bf16.msra.mxu0 0
      %2197 = vmatprep.subr.bf16.mxu0 0
      %2198 = vmatpush1.bf16.msra.mxu0 0
      %2199 = vmatprep.subr.bf16.mxu0 0
      %2200 = vmatpush1.bf16.msra.mxu0 0
      %2201 = vmatprep.subr.bf16.mxu0 0
      %2202 = vmatpush1.bf16.msra.mxu0 0
      %2203 = vmatprep.subr.bf16.mxu0 0
      %2204 = vmatpush1.bf16.msra.mxu0 0
      %2205 = vmatprep.subr.bf16.mxu0 0
      %2206 = vmatpush1.bf16.msra.mxu0 0
      %2207 = vmatprep.subr.bf16.mxu0 0
      %2208 = vmatpush1.bf16.msra.mxu0 0
      %2209 = vmatprep.subr.bf16.mxu0 0
      %2210 = vmatpush1.bf16.msra.mxu0 %v2193
      %2211 = vmatprep.subr.bf16.mxu0 0
      %2212 = vmatpush2.bf16.msra.mxu0 0
      %2213 = vmatprep.subr.bf16.mxu0 0
      %2214 = vmatpush2.bf16.msra.mxu0 0
      %2215 = vmatprep.subr.bf16.mxu0 0
      %2216 = vmatpush2.bf16.msra.mxu0 0
      %2217 = vmatprep.subr.bf16.mxu0 0
      %2218 = vmatpush2.bf16.msra.mxu0 0
      %2219 = vmatprep.subr.bf16.mxu0 0
      %2220 = vmatpush2.bf16.msra.mxu0 0
      %2221 = vmatprep.subr.bf16.mxu0 0
      %2222 = vmatpush2.bf16.msra.mxu0 0
      %2223 = vmatprep.subr.bf16.mxu0 0
      %2224 = vmatpush2.bf16.msra.mxu0 0
      %2225 = vmatprep.subr.bf16.mxu0 0
      %2226 = vmatpush2.bf16.msra.mxu0 0
      %2227 = vmatprep.mubr.bf16.mxu0 0
      %2228 = vmatmul.mubr.bf16.gmra.mxu0 %v2145
      %v2229 = vpop.f32.mrf.mxu0
      %v2230 = vadd.f32 0.0, %v2229
      %v2231 = vpop.f32.mrf.mxu0
      %v2232 = vpop.f32.mrf.mxu0
      %v2233 = vadd.f32 0.0, %v2232
      %v2234 = vpop.f32.mrf.mxu0
      %2235 = vmatprep.mubr.bf16.mxu0 0
      %2236 = vmatmul.mubr.bf16.gmra.mxu0 %v2148
      %v2237 = vpop.f32.mrf.mxu0
      %v2238 = vadd.f32 0.0, %v2237
      %v2239 = vpop.f32.mrf.mxu0
      %v2240 = vpop.f32.mrf.mxu0
      %v2241 = vadd.f32 0.0, %v2240
      %v2242 = vpop.f32.mrf.mxu0
      %2243 = vmatprep.mubr.bf16.mxu0 0
      %2244 = vmatmul.mubr.bf16.gmra.mxu0 %v2151
      %v2245 = vpop.f32.mrf.mxu0
      %v2246 = vadd.f32 0.0, %v2245
      %v2247 = vpop.f32.mrf.mxu0
      %v2248 = vpop.f32.mrf.mxu0
      %v2249 = vadd.f32 0.0, %v2248
      %v2250 = vpop.f32.mrf.mxu0
      %2251 = vmatprep.mubr.bf16.mxu0 0
      %2252 = vmatmul.mubr.bf16.gmra.mxu0 %v2154
      %v2253 = vpop.f32.mrf.mxu0
      %v2254 = vadd.f32 0.0, %v2253
      %v2255 = vpop.f32.mrf.mxu0
      %v2256 = vpop.f32.mrf.mxu0
      %v2257 = vadd.f32 0.0, %v2256
      %v2258 = vpop.f32.mrf.mxu0
      %2259 = vmatprep.mubr.bf16.mxu0 0
      %2260 = vmatmul.mubr.bf16.gmra.mxu0 %v2157
      %v2261 = vpop.f32.mrf.mxu0
      %v2262 = vadd.f32 0.0, %v2261
      %v2263 = vpop.f32.mrf.mxu0
      %v2264 = vpop.f32.mrf.mxu0
      %v2265 = vadd.f32 0.0, %v2264
      %v2266 = vpop.f32.mrf.mxu0
      %2267 = vmatprep.mubr.bf16.mxu0 0
      %2268 = vmatmul.mubr.bf16.gmra.mxu0 %v2160
      %v2269 = vpop.f32.mrf.mxu0
      %v2270 = vadd.f32 0.0, %v2269
      %v2271 = vpop.f32.mrf.mxu0
      %v2272 = vpop.f32.mrf.mxu0
      %v2273 = vadd.f32 0.0, %v2272
      %v2274 = vpop.f32.mrf.mxu0
      %2275 = vmatprep.mubr.bf16.mxu0 0
      %2276 = vmatmul.mubr.bf16.gmra.mxu0 %v2163
      %v2277 = vpop.f32.mrf.mxu0
      %v2278 = vadd.f32 0.0, %v2277
      %v2279 = vpop.f32.mrf.mxu0
      %v2280 = vpop.f32.mrf.mxu0
      %v2281 = vadd.f32 0.0, %v2280
      %v2282 = vpop.f32.mrf.mxu0
      %2283 = vmatprep.mubr.bf16.mxu0 0
      %2284 = vmatmul.mubr.bf16.gmra.mxu0 %v2166
      %v2285 = vpop.f32.mrf.mxu0
      %v2286 = vadd.f32 0.0, %v2285
      %v2287 = vpop.f32.mrf.mxu0
      %v2288 = vpop.f32.mrf.mxu0
      %v2289 = vadd.f32 0.0, %v2288
      %v2290 = vpop.f32.mrf.mxu0
      %2291 = vmatprep.mubr.bf16.mxu0 0
      %2292 = vmatmul.mubr.bf16.gmra.mxu0 %v2169
      %v2293 = vpop.f32.mrf.mxu0
      %v2294 = vadd.f32 0.0, %v2293
      %v2295 = vpop.f32.mrf.mxu0
      %v2296 = vpop.f32.mrf.mxu0
      %v2297 = vadd.f32 0.0, %v2296
      %v2298 = vpop.f32.mrf.mxu0
      %2299 = vmatprep.mubr.bf16.mxu0 0
      %2300 = vmatmul.mubr.bf16.gmra.mxu0 %v2172
      %v2301 = vpop.f32.mrf.mxu0
      %v2302 = vadd.f32 0.0, %v2301
      %v2303 = vpop.f32.mrf.mxu0
      %v2304 = vpop.f32.mrf.mxu0
      %v2305 = vadd.f32 0.0, %v2304
      %v2306 = vpop.f32.mrf.mxu0
      %2307 = vmatprep.mubr.bf16.mxu0 0
      %2308 = vmatmul.mubr.bf16.gmra.mxu0 %v2175
      %v2309 = vpop.f32.mrf.mxu0
      %v2310 = vadd.f32 0.0, %v2309
      %v2311 = vpop.f32.mrf.mxu0
      %v2312 = vpop.f32.mrf.mxu0
      %v2313 = vadd.f32 0.0, %v2312
      %v2314 = vpop.f32.mrf.mxu0
      %2315 = vmatprep.mubr.bf16.mxu0 0
      %2316 = vmatmul.mubr.bf16.gmra.mxu0 %v2178
      %v2317 = vpop.f32.mrf.mxu0
      %v2318 = vadd.f32 0.0, %v2317
      %v2319 = vpop.f32.mrf.mxu0
      %v2320 = vpop.f32.mrf.mxu0
      %v2321 = vadd.f32 0.0, %v2320
      %v2322 = vpop.f32.mrf.mxu0
      %2323 = vmatprep.mubr.bf16.mxu0 0
      %2324 = vmatmul.mubr.bf16.gmra.mxu0 %v2181
      %v2325 = vpop.f32.mrf.mxu0
      %v2326 = vadd.f32 0.0, %v2325
      %v2327 = vpop.f32.mrf.mxu0
      %v2328 = vpop.f32.mrf.mxu0
      %v2329 = vadd.f32 0.0, %v2328
      %v2330 = vpop.f32.mrf.mxu0
      %2331 = vmatprep.mubr.bf16.mxu0 0
      %2332 = vmatmul.mubr.bf16.gmra.mxu0 %v2184
      %v2333 = vpop.f32.mrf.mxu0
      %v2334 = vadd.f32 0.0, %v2333
      %v2335 = vpop.f32.mrf.mxu0
      %v2336 = vpop.f32.mrf.mxu0
      %v2337 = vadd.f32 0.0, %v2336
      %v2338 = vpop.f32.mrf.mxu0
      %2339 = vmatprep.mubr.bf16.mxu0 0
      %2340 = vmatmul.mubr.bf16.gmra.mxu0 %v2187
      %v2341 = vpop.f32.mrf.mxu0
      %v2342 = vadd.f32 0.0, %v2341
      %v2343 = vpop.f32.mrf.mxu0
      %v2344 = vpop.f32.mrf.mxu0
      %v2345 = vadd.f32 0.0, %v2344
      %v2346 = vpop.f32.mrf.mxu0
      %2347 = vmatprep.mubr.bf16.mxu0 0
      %2348 = vmatmul.mubr.bf16.gmra.mxu0 %v2190
      %v2349 = vpop.f32.mrf.mxu0
      %v2350 = vadd.f32 0.0, %v2349
      %v2351 = vpop.f32.mrf.mxu0
      %v2352 = vpop.f32.mrf.mxu0
      %v2353 = vadd.f32 0.0, %v2352
      %v2354 = vpop.f32.mrf.mxu0
      %2355 = vdwg.mxu0
      %v2356 = vadd.f32 %v1806, %v2230
      %v2357 = vadd.f32 %v1809, %v2233
      %v2358 = vadd.f32 %v1814, %v2238
      %v2359 = vadd.f32 %v1817, %v2241
      %v2360 = vadd.f32 %v1822, %v2246
      %v2361 = vadd.f32 %v1825, %v2249
      %v2362 = vadd.f32 %v1830, %v2254
      %v2363 = vadd.f32 %v1833, %v2257
      %v2364 = vadd.f32 %v1838, %v2262
      %v2365 = vadd.f32 %v1841, %v2265
      %v2366 = vadd.f32 %v1846, %v2270
      %v2367 = vadd.f32 %v1849, %v2273
      %v2368 = vadd.f32 %v1854, %v2278
      %v2369 = vadd.f32 %v1857, %v2281
      %v2370 = vadd.f32 %v1862, %v2286
      %v2371 = vadd.f32 %v1865, %v2289
      %v2372 = vadd.f32 %v1870, %v2294
      %v2373 = vadd.f32 %v1873, %v2297
      %v2374 = vadd.f32 %v1878, %v2302
      %v2375 = vadd.f32 %v1881, %v2305
      %v2376 = vadd.f32 %v1886, %v2310
      %v2377 = vadd.f32 %v1889, %v2313
      %v2378 = vadd.f32 %v1894, %v2318
      %v2379 = vadd.f32 %v1897, %v2321
      %v2380 = vadd.f32 %v1902, %v2326
      %v2381 = vadd.f32 %v1905, %v2329
      %v2382 = vadd.f32 %v1910, %v2334
      %v2383 = vadd.f32 %v1913, %v2337
      %v2384 = vadd.f32 %v1918, %v2342
      %v2385 = vadd.f32 %v1921, %v2345
      %v2386 = vadd.f32 %v1926, %v2350
      %v2387 = vadd.f32 %v1929, %v2353
      %v2388 = vld [vmem:[%s819] sm:$0xf]
      %v2389 = vld [vmem:[%s819 + $0x4] sm:$0xf]
      %v2390 = vld [vmem:[%s819 + $0xc] sm:$0xf]
      %v2391 = vld [vmem:[%s819 + $0x10] sm:$0xf]
      %v2392 = vld [vmem:[%s819 + $0x18] sm:$0xf]
      %v2393 = vld [vmem:[%s819 + $0x1c] sm:$0xf]
      %v2394 = vld [vmem:[%s819 + $0x24] sm:$0xf]
      %v2395 = vld [vmem:[%s819 + $0x28] sm:$0xf]
      %v2396 = vld [vmem:[%s819 + $0x30] sm:$0xf]
      %v2397 = vld [vmem:[%s819 + $0x34] sm:$0xf]
      %v2398 = vld [vmem:[%s819 + $0x3c] sm:$0xf]
      %v2399 = vld [vmem:[%s819 + $0x40] sm:$0xf]
      %v2400 = vld [vmem:[%s819 + $0x48] sm:$0xf]
      %v2401 = vld [vmem:[%s819 + $0x4c] sm:$0xf]
      %v2402 = vld [vmem:[%s819 + $0x54] sm:$0xf]
      %v2403 = vld [vmem:[%s819 + $0x58] sm:$0xf]
      %v2404 = vld [vmem:[%s819 + $0x60] sm:$0xf]
      %v2405 = vld [vmem:[%s819 + $0x64] sm:$0xf]
      %v2406 = vld [vmem:[%s819 + $0x6c] sm:$0xf]
      %v2407 = vld [vmem:[%s819 + $0x70] sm:$0xf]
      %v2408 = vld [vmem:[%s819 + $0x78] sm:$0xf]
      %v2409 = vld [vmem:[%s819 + $0x7c] sm:$0xf]
      %v2410 = vld [vmem:[%s819 + $0x84] sm:$0xf]
      %v2411 = vld [vmem:[%s819 + $0x88] sm:$0xf]
      %v2412 = vld [vmem:[%s819 + $0x90] sm:$0xf]
      %v2413 = vld [vmem:[%s819 + $0x94] sm:$0xf]
      %v2414 = vld [vmem:[%s819 + $0x9c] sm:$0xf]
      %v2415 = vld [vmem:[%s819 + $0xa0] sm:$0xf]
      %v2416 = vld [vmem:[%s819 + $0xa8] sm:$0xf]
      %v2417 = vld [vmem:[%s819 + $0xac] sm:$0xf]
      %v2418 = vld [vmem:[%s819 + $0xb4] sm:$0xf]
      %v2419 = vld [vmem:[%s819 + $0xb8] sm:$0xf]
      %v2420 = vld [vmem:[%s1 + $0x4] sm:$0xc]
      %v2453 = vunpack.c.l.b16 %v2388
      %v2454 = vunpack.c.l.b16 %v2389
      %v2455 = vunpack.c.l.b16 %v2390
      %v2456 = vunpack.c.l.b16 %v2391
      %v2457 = vunpack.c.l.b16 %v2392
      %v2458 = vunpack.c.l.b16 %v2393
      %v2459 = vunpack.c.l.b16 %v2394
      %v2460 = vunpack.c.l.b16 %v2395
      %v2461 = vunpack.c.l.b16 %v2396
      %v2462 = vunpack.c.l.b16 %v2397
      %v2463 = vunpack.c.l.b16 %v2398
      %v2464 = vunpack.c.l.b16 %v2399
      %v2465 = vunpack.c.l.b16 %v2400
      %v2466 = vunpack.c.l.b16 %v2401
      %v2467 = vunpack.c.l.b16 %v2402
      %v2468 = vunpack.c.l.b16 %v2403
      %v2469 = vunpack.c.l.b16 %v2404
      %v2470 = vunpack.c.l.b16 %v2405
      %v2471 = vunpack.c.l.b16 %v2406
      %v2472 = vunpack.c.l.b16 %v2407
      %v2473 = vunpack.c.l.b16 %v2408
      %v2474 = vunpack.c.l.b16 %v2409
      %v2475 = vunpack.c.l.b16 %v2410
      %v2476 = vunpack.c.l.b16 %v2411
      %v2477 = vunpack.c.l.b16 %v2412
      %v2478 = vunpack.c.l.b16 %v2413
      %v2479 = vunpack.c.l.b16 %v2414
      %v2480 = vunpack.c.l.b16 %v2415
      %v2481 = vunpack.c.l.b16 %v2416
      %v2482 = vunpack.c.l.b16 %v2417
      %v2483 = vunpack.c.l.b16 %v2418
      %v2484 = vunpack.c.l.b16 %v2419
      %v2485 = vpack.c.b16 %v2454, %v2453
      %v2486 = vpack.c.b16 %v2456, %v2455
      %v2487 = vpack.c.b16 %v2458, %v2457
      %v2488 = vpack.c.b16 %v2460, %v2459
      %v2489 = vpack.c.b16 %v2462, %v2461
      %v2490 = vpack.c.b16 %v2464, %v2463
      %v2491 = vpack.c.b16 %v2466, %v2465
      %v2492 = vpack.c.b16 %v2468, %v2467
      %v2493 = vpack.c.b16 %v2470, %v2469
      %v2494 = vpack.c.b16 %v2472, %v2471
      %v2495 = vpack.c.b16 %v2474, %v2473
      %v2496 = vpack.c.b16 %v2476, %v2475
      %v2497 = vpack.c.b16 %v2478, %v2477
      %v2498 = vpack.c.b16 %v2480, %v2479
      %v2499 = vpack.c.b16 %v2482, %v2481
      %v2500 = vpack.c.b16 %v2484, %v2483
      %v2502 = vunpack.c.l.b16 %v2420
      %v2503 = vpack.c.b16 %v2502, %v2502
      %v2504 = vrot.slane %v2503, 2
      %v2506 = vsel %vm1426, %v2485, 0
      %v2509 = vsel %vm1426, %v2486, 0
      %v2512 = vsel %vm1426, %v2487, 0
      %v2515 = vsel %vm1426, %v2488, 0
      %v2518 = vsel %vm1426, %v2489, 0
      %v2521 = vsel %vm1426, %v2490, 0
      %v2524 = vsel %vm1426, %v2491, 0
      %v2527 = vsel %vm1426, %v2492, 0
      %v2530 = vsel %vm1426, %v2493, 0
      %v2533 = vsel %vm1426, %v2494, 0
      %v2536 = vsel %vm1426, %v2495, 0
      %v2539 = vsel %vm1426, %v2496, 0
      %v2542 = vsel %vm1426, %v2497, 0
      %v2545 = vsel %vm1426, %v2498, 0
      %v2548 = vsel %vm1426, %v2499, 0
      %v2551 = vsel %vm1426, %v2500, 0
      %v2554 = vsel %vm1475, %v2504, 0
      %2556 = vmatprep.subr.bf16.mxu0 0
      %2557 = vmatpush1.bf16.msra.mxu0 0
      %2558 = vmatprep.subr.bf16.mxu0 0
      %2559 = vmatpush1.bf16.msra.mxu0 0
      %2560 = vmatprep.subr.bf16.mxu0 0
      %2561 = vmatpush1.bf16.msra.mxu0 0
      %2562 = vmatprep.subr.bf16.mxu0 0
      %2563 = vmatpush1.bf16.msra.mxu0 0
      %2564 = vmatprep.subr.bf16.mxu0 0
      %2565 = vmatpush1.bf16.msra.mxu0 0
      %2566 = vmatprep.subr.bf16.mxu0 0
      %2567 = vmatpush1.bf16.msra.mxu0 0
      %2568 = vmatprep.subr.bf16.mxu0 0
      %2569 = vmatpush1.bf16.msra.mxu0 0
      %2570 = vmatprep.subr.bf16.mxu0 0
      %2571 = vmatpush1.bf16.msra.mxu0 %v2554
      %2572 = vmatprep.subr.bf16.mxu0 0
      %2573 = vmatpush2.bf16.msra.mxu0 0
      %2574 = vmatprep.subr.bf16.mxu0 0
      %2575 = vmatpush2.bf16.msra.mxu0 0
      %2576 = vmatprep.subr.bf16.mxu0 0
      %2577 = vmatpush2.bf16.msra.mxu0 0
      %2578 = vmatprep.subr.bf16.mxu0 0
      %2579 = vmatpush2.bf16.msra.mxu0 0
      %2580 = vmatprep.subr.bf16.mxu0 0
      %2581 = vmatpush2.bf16.msra.mxu0 0
      %2582 = vmatprep.subr.bf16.mxu0 0
      %2583 = vmatpush2.bf16.msra.mxu0 0
      %2584 = vmatprep.subr.bf16.mxu0 0
      %2585 = vmatpush2.bf16.msra.mxu0 0
      %2586 = vmatprep.subr.bf16.mxu0 0
      %2587 = vmatpush2.bf16.msra.mxu0 0
      %2588 = vmatprep.mubr.bf16.mxu0 0
      %2589 = vmatmul.mubr.bf16.gmra.mxu0 %v2506
      %v2590 = vpop.f32.mrf.mxu0
      %v2591 = vadd.f32 0.0, %v2590
      %v2592 = vpop.f32.mrf.mxu0
      %v2593 = vpop.f32.mrf.mxu0
      %v2594 = vadd.f32 0.0, %v2593
      %v2595 = vpop.f32.mrf.mxu0
      %2596 = vmatprep.mubr.bf16.mxu0 0
      %2597 = vmatmul.mubr.bf16.gmra.mxu0 %v2509
      %v2598 = vpop.f32.mrf.mxu0
      %v2599 = vadd.f32 0.0, %v2598
      %v2600 = vpop.f32.mrf.mxu0
      %v2601 = vpop.f32.mrf.mxu0
      %v2602 = vadd.f32 0.0, %v2601
      %v2603 = vpop.f32.mrf.mxu0
      %2604 = vmatprep.mubr.bf16.mxu0 0
      %2605 = vmatmul.mubr.bf16.gmra.mxu0 %v2512
      %v2606 = vpop.f32.mrf.mxu0
      %v2607 = vadd.f32 0.0, %v2606
      %v2608 = vpop.f32.mrf.mxu0
      %v2609 = vpop.f32.mrf.mxu0
      %v2610 = vadd.f32 0.0, %v2609
      %v2611 = vpop.f32.mrf.mxu0
      %2612 = vmatprep.mubr.bf16.mxu0 0
      %2613 = vmatmul.mubr.bf16.gmra.mxu0 %v2515
      %v2614 = vpop.f32.mrf.mxu0
      %v2615 = vadd.f32 0.0, %v2614
      %v2616 = vpop.f32.mrf.mxu0
      %v2617 = vpop.f32.mrf.mxu0
      %v2618 = vadd.f32 0.0, %v2617
      %v2619 = vpop.f32.mrf.mxu0
      %2620 = vmatprep.mubr.bf16.mxu0 0
      %2621 = vmatmul.mubr.bf16.gmra.mxu0 %v2518
      %v2622 = vpop.f32.mrf.mxu0
      %v2623 = vadd.f32 0.0, %v2622
      %v2624 = vpop.f32.mrf.mxu0
      %v2625 = vpop.f32.mrf.mxu0
      %v2626 = vadd.f32 0.0, %v2625
      %v2627 = vpop.f32.mrf.mxu0
      %2628 = vmatprep.mubr.bf16.mxu0 0
      %2629 = vmatmul.mubr.bf16.gmra.mxu0 %v2521
      %v2630 = vpop.f32.mrf.mxu0
      %v2631 = vadd.f32 0.0, %v2630
      %v2632 = vpop.f32.mrf.mxu0
      %v2633 = vpop.f32.mrf.mxu0
      %v2634 = vadd.f32 0.0, %v2633
      %v2635 = vpop.f32.mrf.mxu0
      %2636 = vmatprep.mubr.bf16.mxu0 0
      %2637 = vmatmul.mubr.bf16.gmra.mxu0 %v2524
      %v2638 = vpop.f32.mrf.mxu0
      %v2639 = vadd.f32 0.0, %v2638
      %v2640 = vpop.f32.mrf.mxu0
      %v2641 = vpop.f32.mrf.mxu0
      %v2642 = vadd.f32 0.0, %v2641
      %v2643 = vpop.f32.mrf.mxu0
      %2644 = vmatprep.mubr.bf16.mxu0 0
      %2645 = vmatmul.mubr.bf16.gmra.mxu0 %v2527
      %v2646 = vpop.f32.mrf.mxu0
      %v2647 = vadd.f32 0.0, %v2646
      %v2648 = vpop.f32.mrf.mxu0
      %v2649 = vpop.f32.mrf.mxu0
      %v2650 = vadd.f32 0.0, %v2649
      %v2651 = vpop.f32.mrf.mxu0
      %2652 = vmatprep.mubr.bf16.mxu0 0
      %2653 = vmatmul.mubr.bf16.gmra.mxu0 %v2530
      %v2654 = vpop.f32.mrf.mxu0
      %v2655 = vadd.f32 0.0, %v2654
      %v2656 = vpop.f32.mrf.mxu0
      %v2657 = vpop.f32.mrf.mxu0
      %v2658 = vadd.f32 0.0, %v2657
      %v2659 = vpop.f32.mrf.mxu0
      %2660 = vmatprep.mubr.bf16.mxu0 0
      %2661 = vmatmul.mubr.bf16.gmra.mxu0 %v2533
      %v2662 = vpop.f32.mrf.mxu0
      %v2663 = vadd.f32 0.0, %v2662
      %v2664 = vpop.f32.mrf.mxu0
      %v2665 = vpop.f32.mrf.mxu0
      %v2666 = vadd.f32 0.0, %v2665
      %v2667 = vpop.f32.mrf.mxu0
      %2668 = vmatprep.mubr.bf16.mxu0 0
      %2669 = vmatmul.mubr.bf16.gmra.mxu0 %v2536
      %v2670 = vpop.f32.mrf.mxu0
      %v2671 = vadd.f32 0.0, %v2670
      %v2672 = vpop.f32.mrf.mxu0
      %v2673 = vpop.f32.mrf.mxu0
      %v2674 = vadd.f32 0.0, %v2673
      %v2675 = vpop.f32.mrf.mxu0
      %2676 = vmatprep.mubr.bf16.mxu0 0
      %2677 = vmatmul.mubr.bf16.gmra.mxu0 %v2539
      %v2678 = vpop.f32.mrf.mxu0
      %v2679 = vadd.f32 0.0, %v2678
      %v2680 = vpop.f32.mrf.mxu0
      %v2681 = vpop.f32.mrf.mxu0
      %v2682 = vadd.f32 0.0, %v2681
      %v2683 = vpop.f32.mrf.mxu0
      %2684 = vmatprep.mubr.bf16.mxu0 0
      %2685 = vmatmul.mubr.bf16.gmra.mxu0 %v2542
      %v2686 = vpop.f32.mrf.mxu0
      %v2687 = vadd.f32 0.0, %v2686
      %v2688 = vpop.f32.mrf.mxu0
      %v2689 = vpop.f32.mrf.mxu0
      %v2690 = vadd.f32 0.0, %v2689
      %v2691 = vpop.f32.mrf.mxu0
      %2692 = vmatprep.mubr.bf16.mxu0 0
      %2693 = vmatmul.mubr.bf16.gmra.mxu0 %v2545
      %v2694 = vpop.f32.mrf.mxu0
      %v2695 = vadd.f32 0.0, %v2694
      %v2696 = vpop.f32.mrf.mxu0
      %v2697 = vpop.f32.mrf.mxu0
      %v2698 = vadd.f32 0.0, %v2697
      %v2699 = vpop.f32.mrf.mxu0
      %2700 = vmatprep.mubr.bf16.mxu0 0
      %2701 = vmatmul.mubr.bf16.gmra.mxu0 %v2548
      %v2702 = vpop.f32.mrf.mxu0
      %v2703 = vadd.f32 0.0, %v2702
      %v2704 = vpop.f32.mrf.mxu0
      %v2705 = vpop.f32.mrf.mxu0
      %v2706 = vadd.f32 0.0, %v2705
      %v2707 = vpop.f32.mrf.mxu0
      %2708 = vmatprep.mubr.bf16.mxu0 0
      %2709 = vmatmul.mubr.bf16.gmra.mxu0 %v2551
      %v2710 = vpop.f32.mrf.mxu0
      %v2711 = vadd.f32 0.0, %v2710
      %v2712 = vpop.f32.mrf.mxu0
      %v2713 = vpop.f32.mrf.mxu0
      %v2714 = vadd.f32 0.0, %v2713
      %v2715 = vpop.f32.mrf.mxu0
      %2716 = vdwg.mxu0
      %v2717 = vadd.f32 %v2356, %v2591
      %v2718 = vadd.f32 %v2357, %v2594
      %v2719 = vadd.f32 %v2358, %v2599
      %v2720 = vadd.f32 %v2359, %v2602
      %v2721 = vadd.f32 %v2360, %v2607
      %v2722 = vadd.f32 %v2361, %v2610
      %v2723 = vadd.f32 %v2362, %v2615
      %v2724 = vadd.f32 %v2363, %v2618
      %v2725 = vadd.f32 %v2364, %v2623
      %v2726 = vadd.f32 %v2365, %v2626
      %v2727 = vadd.f32 %v2366, %v2631
      %v2728 = vadd.f32 %v2367, %v2634
      %v2729 = vadd.f32 %v2368, %v2639
      %v2730 = vadd.f32 %v2369, %v2642
      %v2731 = vadd.f32 %v2370, %v2647
      %v2732 = vadd.f32 %v2371, %v2650
      %v2733 = vadd.f32 %v2372, %v2655
      %v2734 = vadd.f32 %v2373, %v2658
      %v2735 = vadd.f32 %v2374, %v2663
      %v2736 = vadd.f32 %v2375, %v2666
      %v2737 = vadd.f32 %v2376, %v2671
      %v2738 = vadd.f32 %v2377, %v2674
      %v2739 = vadd.f32 %v2378, %v2679
      %v2740 = vadd.f32 %v2379, %v2682
      %v2741 = vadd.f32 %v2380, %v2687
      %v2742 = vadd.f32 %v2381, %v2690
      %v2743 = vadd.f32 %v2382, %v2695
      %v2744 = vadd.f32 %v2383, %v2698
      %v2745 = vadd.f32 %v2384, %v2703
      %v2746 = vadd.f32 %v2385, %v2706
      %v2747 = vadd.f32 %v2386, %v2711
      %v2748 = vadd.f32 %v2387, %v2714
      %v2749 = vld [vmem:[%s819] sm:$0xf]
      %v2750 = vld [vmem:[%s819 + $0x4] sm:$0xf]
      %v2751 = vld [vmem:[%s819 + $0x8] sm:$0x1]
      %v2752 = vld [vmem:[%s819 + $0xc] sm:$0xf]
      %v2753 = vld [vmem:[%s819 + $0x10] sm:$0xf]
      %v2754 = vld [vmem:[%s819 + $0x14] sm:$0x1]
      %v2755 = vld [vmem:[%s819 + $0x18] sm:$0xf]
      %v2756 = vld [vmem:[%s819 + $0x1c] sm:$0xf]
      %v2757 = vld [vmem:[%s819 + $0x20] sm:$0x1]
      %v2758 = vld [vmem:[%s819 + $0x24] sm:$0xf]
      %v2759 = vld [vmem:[%s819 + $0x28] sm:$0xf]
      %v2760 = vld [vmem:[%s819 + $0x2c] sm:$0x1]
      %v2761 = vld [vmem:[%s819 + $0x30] sm:$0xf]
      %v2762 = vld [vmem:[%s819 + $0x34] sm:$0xf]
      %v2763 = vld [vmem:[%s819 + $0x38] sm:$0x1]
      %v2764 = vld [vmem:[%s819 + $0x3c] sm:$0xf]
      %v2765 = vld [vmem:[%s819 + $0x40] sm:$0xf]
      %v2766 = vld [vmem:[%s819 + $0x44] sm:$0x1]
      %v2767 = vld [vmem:[%s819 + $0x48] sm:$0xf]
      %v2768 = vld [vmem:[%s819 + $0x4c] sm:$0xf]
      %v2769 = vld [vmem:[%s819 + $0x50] sm:$0x1]
      %v2770 = vld [vmem:[%s819 + $0x54] sm:$0xf]
      %v2771 = vld [vmem:[%s819 + $0x58] sm:$0xf]
      %v2772 = vld [vmem:[%s819 + $0x5c] sm:$0x1]
      %v2773 = vld [vmem:[%s819 + $0x60] sm:$0xf]
      %v2774 = vld [vmem:[%s819 + $0x64] sm:$0xf]
      %v2775 = vld [vmem:[%s819 + $0x68] sm:$0x1]
      %v2776 = vld [vmem:[%s819 + $0x6c] sm:$0xf]
      %v2777 = vld [vmem:[%s819 + $0x70] sm:$0xf]
      %v2778 = vld [vmem:[%s819 + $0x74] sm:$0x1]
      %v2779 = vld [vmem:[%s819 + $0x78] sm:$0xf]
      %v2780 = vld [vmem:[%s819 + $0x7c] sm:$0xf]
      %v2781 = vld [vmem:[%s819 + $0x80] sm:$0x1]
      %v2782 = vld [vmem:[%s819 + $0x84] sm:$0xf]
      %v2783 = vld [vmem:[%s819 + $0x88] sm:$0xf]
      %v2784 = vld [vmem:[%s819 + $0x8c] sm:$0x1]
      %v2785 = vld [vmem:[%s819 + $0x90] sm:$0xf]
      %v2786 = vld [vmem:[%s819 + $0x94] sm:$0xf]
      %v2787 = vld [vmem:[%s819 + $0x98] sm:$0x1]
      %v2788 = vld [vmem:[%s819 + $0x9c] sm:$0xf]
      %v2789 = vld [vmem:[%s819 + $0xa0] sm:$0xf]
      %v2790 = vld [vmem:[%s819 + $0xa4] sm:$0x1]
      %v2791 = vld [vmem:[%s819 + $0xa8] sm:$0xf]
      %v2792 = vld [vmem:[%s819 + $0xac] sm:$0xf]
      %v2793 = vld [vmem:[%s819 + $0xb0] sm:$0x1]
      %v2794 = vld [vmem:[%s819 + $0xb4] sm:$0xf]
      %v2795 = vld [vmem:[%s819 + $0xb8] sm:$0xf]
      %v2796 = vld [vmem:[%s819 + $0xbc] sm:$0x1]
      %v2798 = vshrl.u32 %v2749, 16
      %v2800 = vrot.slane %v2798, 4
      %v2801 = vshll.u32 %v2749, 16
      %v2803 = vrot.slane %v2801, 5
      %v2804 = vor.u32 %v2800, %v2803
      %v2805 = vrot.slane %v2804, 4
      %v2807 = vshll.u32 %v2750, 16
      %v2809 = vrot.slane %v2807, 5
      %v2810 = vsel %vm988, %v2805, %v2809
      %v2811 = vshrl.u32 %v2750, 16
      %v2813 = vrot.slane %v2811, 4
      %v2814 = vor.u32 %v2813, %v2809
      %v2815 = vrot.slane %v2814, 4
      %v2817 = vshll.u32 %v2751, 16
      %v2819 = vrot.slane %v2817, 5
      %v2820 = vsel %vm988, %v2815, %v2819
      %v2822 = vshrl.u32 %v2752, 16
      %v2824 = vrot.slane %v2822, 4
      %v2825 = vshll.u32 %v2752, 16
      %v2827 = vrot.slane %v2825, 5
      %v2828 = vor.u32 %v2824, %v2827
      %v2829 = vrot.slane %v2828, 4
      %v2831 = vshll.u32 %v2753, 16
      %v2833 = vrot.slane %v2831, 5
      %v2834 = vsel %vm988, %v2829, %v2833
      %v2835 = vshrl.u32 %v2753, 16
      %v2837 = vrot.slane %v2835, 4
      %v2838 = vor.u32 %v2837, %v2833
      %v2839 = vrot.slane %v2838, 4
      %v2841 = vshll.u32 %v2754, 16
      %v2843 = vrot.slane %v2841, 5
      %v2844 = vsel %vm988, %v2839, %v2843
      %v2846 = vshrl.u32 %v2755, 16
      %v2848 = vrot.slane %v2846, 4
      %v2849 = vshll.u32 %v2755, 16
      %v2851 = vrot.slane %v2849, 5
      %v2852 = vor.u32 %v2848, %v2851
      %v2853 = vrot.slane %v2852, 4
      %v2855 = vshll.u32 %v2756, 16
      %v2857 = vrot.slane %v2855, 5
      %v2858 = vsel %vm988, %v2853, %v2857
      %v2859 = vshrl.u32 %v2756, 16
      %v2861 = vrot.slane %v2859, 4
      %v2862 = vor.u32 %v2861, %v2857
      %v2863 = vrot.slane %v2862, 4
      %v2865 = vshll.u32 %v2757, 16
      %v2867 = vrot.slane %v2865, 5
      %v2868 = vsel %vm988, %v2863, %v2867
      %v2870 = vshrl.u32 %v2758, 16
      %v2872 = vrot.slane %v2870, 4
      %v2873 = vshll.u32 %v2758, 16
      %v2875 = vrot.slane %v2873, 5
      %v2876 = vor.u32 %v2872, %v2875
      %v2877 = vrot.slane %v2876, 4
      %v2879 = vshll.u32 %v2759, 16
      %v2881 = vrot.slane %v2879, 5
      %v2882 = vsel %vm988, %v2877, %v2881
      %v2883 = vshrl.u32 %v2759, 16
      %v2885 = vrot.slane %v2883, 4
      %v2886 = vor.u32 %v2885, %v2881
      %v2887 = vrot.slane %v2886, 4
      %v2889 = vshll.u32 %v2760, 16
      %v2891 = vrot.slane %v2889, 5
      %v2892 = vsel %vm988, %v2887, %v2891
      %v2894 = vshrl.u32 %v2761, 16
      %v2896 = vrot.slane %v2894, 4
      %v2897 = vshll.u32 %v2761, 16
      %v2899 = vrot.slane %v2897, 5
      %v2900 = vor.u32 %v2896, %v2899
      %v2901 = vrot.slane %v2900, 4
      %v2903 = vshll.u32 %v2762, 16
      %v2905 = vrot.slane %v2903, 5
      %v2906 = vsel %vm988, %v2901, %v2905
      %v2907 = vshrl.u32 %v2762, 16
      %v2909 = vrot.slane %v2907, 4
      %v2910 = vor.u32 %v2909, %v2905
      %v2911 = vrot.slane %v2910, 4
      %v2913 = vshll.u32 %v2763, 16
      %v2915 = vrot.slane %v2913, 5
      %v2916 = vsel %vm988, %v2911, %v2915
      %v2918 = vshrl.u32 %v2764, 16
      %v2920 = vrot.slane %v2918, 4
      %v2921 = vshll.u32 %v2764, 16
      %v2923 = vrot.slane %v2921, 5
      %v2924 = vor.u32 %v2920, %v2923
      %v2925 = vrot.slane %v2924, 4
      %v2927 = vshll.u32 %v2765, 16
      %v2929 = vrot.slane %v2927, 5
      %v2930 = vsel %vm988, %v2925, %v2929
      %v2931 = vshrl.u32 %v2765, 16
      %v2933 = vrot.slane %v2931, 4
      %v2934 = vor.u32 %v2933, %v2929
      %v2935 = vrot.slane %v2934, 4
      %v2937 = vshll.u32 %v2766, 16
      %v2939 = vrot.slane %v2937, 5
      %v2940 = vsel %vm988, %v2935, %v2939
      %v2942 = vshrl.u32 %v2767, 16
      %v2944 = vrot.slane %v2942, 4
      %v2945 = vshll.u32 %v2767, 16
      %v2947 = vrot.slane %v2945, 5
      %v2948 = vor.u32 %v2944, %v2947
      %v2949 = vrot.slane %v2948, 4
      %v2951 = vshll.u32 %v2768, 16
      %v2953 = vrot.slane %v2951, 5
      %v2954 = vsel %vm988, %v2949, %v2953
      %v2955 = vshrl.u32 %v2768, 16
      %v2957 = vrot.slane %v2955, 4
      %v2958 = vor.u32 %v2957, %v2953
      %v2959 = vrot.slane %v2958, 4
      %v2961 = vshll.u32 %v2769, 16
      %v2963 = vrot.slane %v2961, 5
      %v2964 = vsel %vm988, %v2959, %v2963
      %v2966 = vshrl.u32 %v2770, 16
      %v2968 = vrot.slane %v2966, 4
      %v2969 = vshll.u32 %v2770, 16
      %v2971 = vrot.slane %v2969, 5
      %v2972 = vor.u32 %v2968, %v2971
      %v2973 = vrot.slane %v2972, 4
      %v2975 = vshll.u32 %v2771, 16
      %v2977 = vrot.slane %v2975, 5
      %v2978 = vsel %vm988, %v2973, %v2977
      %v2979 = vshrl.u32 %v2771, 16
      %v2981 = vrot.slane %v2979, 4
      %v2982 = vor.u32 %v2981, %v2977
      %v2983 = vrot.slane %v2982, 4
      %v2985 = vshll.u32 %v2772, 16
      %v2987 = vrot.slane %v2985, 5
      %v2988 = vsel %vm988, %v2983, %v2987
      %v2990 = vshrl.u32 %v2773, 16
      %v2992 = vrot.slane %v2990, 4
      %v2993 = vshll.u32 %v2773, 16
      %v2995 = vrot.slane %v2993, 5
      %v2996 = vor.u32 %v2992, %v2995
      %v2997 = vrot.slane %v2996, 4
      %v2999 = vshll.u32 %v2774, 16
      %v3001 = vrot.slane %v2999, 5
      %v3002 = vsel %vm988, %v2997, %v3001
      %v3003 = vshrl.u32 %v2774, 16
      %v3005 = vrot.slane %v3003, 4
      %v3006 = vor.u32 %v3005, %v3001
      %v3007 = vrot.slane %v3006, 4
      %v3009 = vshll.u32 %v2775, 16
      %v3011 = vrot.slane %v3009, 5
      %v3012 = vsel %vm988, %v3007, %v3011
      %v3014 = vshrl.u32 %v2776, 16
      %v3016 = vrot.slane %v3014, 4
      %v3017 = vshll.u32 %v2776, 16
      %v3019 = vrot.slane %v3017, 5
      %v3020 = vor.u32 %v3016, %v3019
      %v3021 = vrot.slane %v3020, 4
      %v3023 = vshll.u32 %v2777, 16
      %v3025 = vrot.slane %v3023, 5
      %v3026 = vsel %vm988, %v3021, %v3025
      %v3027 = vshrl.u32 %v2777, 16
      %v3029 = vrot.slane %v3027, 4
      %v3030 = vor.u32 %v3029, %v3025
      %v3031 = vrot.slane %v3030, 4
      %v3033 = vshll.u32 %v2778, 16
      %v3035 = vrot.slane %v3033, 5
      %v3036 = vsel %vm988, %v3031, %v3035
      %v3038 = vshrl.u32 %v2779, 16
      %v3040 = vrot.slane %v3038, 4
      %v3041 = vshll.u32 %v2779, 16
      %v3043 = vrot.slane %v3041, 5
      %v3044 = vor.u32 %v3040, %v3043
      %v3045 = vrot.slane %v3044, 4
      %v3047 = vshll.u32 %v2780, 16
      %v3049 = vrot.slane %v3047, 5
      %v3050 = vsel %vm988, %v3045, %v3049
      %v3051 = vshrl.u32 %v2780, 16
      %v3053 = vrot.slane %v3051, 4
      %v3054 = vor.u32 %v3053, %v3049
      %v3055 = vrot.slane %v3054, 4
      %v3057 = vshll.u32 %v2781, 16
      %v3059 = vrot.slane %v3057, 5
      %v3060 = vsel %vm988, %v3055, %v3059
      %v3062 = vshrl.u32 %v2782, 16
      %v3064 = vrot.slane %v3062, 4
      %v3065 = vshll.u32 %v2782, 16
      %v3067 = vrot.slane %v3065, 5
      %v3068 = vor.u32 %v3064, %v3067
      %v3069 = vrot.slane %v3068, 4
      %v3071 = vshll.u32 %v2783, 16
      %v3073 = vrot.slane %v3071, 5
      %v3074 = vsel %vm988, %v3069, %v3073
      %v3075 = vshrl.u32 %v2783, 16
      %v3077 = vrot.slane %v3075, 4
      %v3078 = vor.u32 %v3077, %v3073
      %v3079 = vrot.slane %v3078, 4
      %v3081 = vshll.u32 %v2784, 16
      %v3083 = vrot.slane %v3081, 5
      %v3084 = vsel %vm988, %v3079, %v3083
      %v3086 = vshrl.u32 %v2785, 16
      %v3088 = vrot.slane %v3086, 4
      %v3089 = vshll.u32 %v2785, 16
      %v3091 = vrot.slane %v3089, 5
      %v3092 = vor.u32 %v3088, %v3091
      %v3093 = vrot.slane %v3092, 4
      %v3095 = vshll.u32 %v2786, 16
      %v3097 = vrot.slane %v3095, 5
      %v3098 = vsel %vm988, %v3093, %v3097
      %v3099 = vshrl.u32 %v2786, 16
      %v3101 = vrot.slane %v3099, 4
      %v3102 = vor.u32 %v3101, %v3097
      %v3103 = vrot.slane %v3102, 4
      %v3105 = vshll.u32 %v2787, 16
      %v3107 = vrot.slane %v3105, 5
      %v3108 = vsel %vm988, %v3103, %v3107
      %v3110 = vshrl.u32 %v2788, 16
      %v3112 = vrot.slane %v3110, 4
      %v3113 = vshll.u32 %v2788, 16
      %v3115 = vrot.slane %v3113, 5
      %v3116 = vor.u32 %v3112, %v3115
      %v3117 = vrot.slane %v3116, 4
      %v3119 = vshll.u32 %v2789, 16
      %v3121 = vrot.slane %v3119, 5
      %v3122 = vsel %vm988, %v3117, %v3121
      %v3123 = vshrl.u32 %v2789, 16
      %v3125 = vrot.slane %v3123, 4
      %v3126 = vor.u32 %v3125, %v3121
      %v3127 = vrot.slane %v3126, 4
      %v3129 = vshll.u32 %v2790, 16
      %v3131 = vrot.slane %v3129, 5
      %v3132 = vsel %vm988, %v3127, %v3131
      %v3134 = vshrl.u32 %v2791, 16
      %v3136 = vrot.slane %v3134, 4
      %v3137 = vshll.u32 %v2791, 16
      %v3139 = vrot.slane %v3137, 5
      %v3140 = vor.u32 %v3136, %v3139
      %v3141 = vrot.slane %v3140, 4
      %v3143 = vshll.u32 %v2792, 16
      %v3145 = vrot.slane %v3143, 5
      %v3146 = vsel %vm988, %v3141, %v3145
      %v3147 = vshrl.u32 %v2792, 16
      %v3149 = vrot.slane %v3147, 4
      %v3150 = vor.u32 %v3149, %v3145
      %v3151 = vrot.slane %v3150, 4
      %v3153 = vshll.u32 %v2793, 16
      %v3155 = vrot.slane %v3153, 5
      %v3156 = vsel %vm988, %v3151, %v3155
      %v3158 = vshrl.u32 %v2794, 16
      %v3160 = vrot.slane %v3158, 4
      %v3161 = vshll.u32 %v2794, 16
      %v3163 = vrot.slane %v3161, 5
      %v3164 = vor.u32 %v3160, %v3163
      %v3165 = vrot.slane %v3164, 4
      %v3167 = vshll.u32 %v2795, 16
      %v3169 = vrot.slane %v3167, 5
      %v3170 = vsel %vm988, %v3165, %v3169
      %v3171 = vshrl.u32 %v2795, 16
      %v3173 = vrot.slane %v3171, 4
      %v3174 = vor.u32 %v3173, %v3169
      %v3175 = vrot.slane %v3174, 4
      %v3177 = vshll.u32 %v2796, 16
      %v3179 = vrot.slane %v3177, 5
      %v3180 = vsel %vm988, %v3175, %v3179
      %v3181 = vld [vmem:[%s1 + $0x8] sm:$0x3]
      %v3182 = vunpack.c.l.b16 %v2810
      %v3183 = vunpack.c.l.b16 %v2820
      %v3184 = vunpack.c.l.b16 %v2834
      %v3185 = vunpack.c.l.b16 %v2844
      %v3186 = vunpack.c.l.b16 %v2858
      %v3187 = vunpack.c.l.b16 %v2868
      %v3188 = vunpack.c.l.b16 %v2882
      %v3189 = vunpack.c.l.b16 %v2892
      %v3190 = vunpack.c.l.b16 %v2906
      %v3191 = vunpack.c.l.b16 %v2916
      %v3192 = vunpack.c.l.b16 %v2930
      %v3193 = vunpack.c.l.b16 %v2940
      %v3194 = vunpack.c.l.b16 %v2954
      %v3195 = vunpack.c.l.b16 %v2964
      %v3196 = vunpack.c.l.b16 %v2978
      %v3197 = vunpack.c.l.b16 %v2988
      %v3198 = vunpack.c.l.b16 %v3002
      %v3199 = vunpack.c.l.b16 %v3012
      %v3200 = vunpack.c.l.b16 %v3026
      %v3201 = vunpack.c.l.b16 %v3036
      %v3202 = vunpack.c.l.b16 %v3050
      %v3203 = vunpack.c.l.b16 %v3060
      %v3204 = vunpack.c.l.b16 %v3074
      %v3205 = vunpack.c.l.b16 %v3084
      %v3206 = vunpack.c.l.b16 %v3098
      %v3207 = vunpack.c.l.b16 %v3108
      %v3208 = vunpack.c.l.b16 %v3122
      %v3209 = vunpack.c.l.b16 %v3132
      %v3210 = vunpack.c.l.b16 %v3146
      %v3211 = vunpack.c.l.b16 %v3156
      %v3212 = vunpack.c.l.b16 %v3170
      %v3213 = vunpack.c.l.b16 %v3180
      %v3214 = vpack.c.b16 %v3183, %v3182
      %v3215 = vpack.c.b16 %v3185, %v3184
      %v3216 = vpack.c.b16 %v3187, %v3186
      %v3217 = vpack.c.b16 %v3189, %v3188
      %v3218 = vpack.c.b16 %v3191, %v3190
      %v3219 = vpack.c.b16 %v3193, %v3192
      %v3220 = vpack.c.b16 %v3195, %v3194
      %v3221 = vpack.c.b16 %v3197, %v3196
      %v3222 = vpack.c.b16 %v3199, %v3198
      %v3223 = vpack.c.b16 %v3201, %v3200
      %v3224 = vpack.c.b16 %v3203, %v3202
      %v3225 = vpack.c.b16 %v3205, %v3204
      %v3226 = vpack.c.b16 %v3207, %v3206
      %v3227 = vpack.c.b16 %v3209, %v3208
      %v3228 = vpack.c.b16 %v3211, %v3210
      %v3229 = vpack.c.b16 %v3213, %v3212
      %v3231 = vsel %vm1426, %v3214, 0
      %v3234 = vsel %vm1426, %v3215, 0
      %v3237 = vsel %vm1426, %v3216, 0
      %v3240 = vsel %vm1426, %v3217, 0
      %v3243 = vsel %vm1426, %v3218, 0
      %v3246 = vsel %vm1426, %v3219, 0
      %v3249 = vsel %vm1426, %v3220, 0
      %v3252 = vsel %vm1426, %v3221, 0
      %v3255 = vsel %vm1426, %v3222, 0
      %v3258 = vsel %vm1426, %v3223, 0
      %v3261 = vsel %vm1426, %v3224, 0
      %v3264 = vsel %vm1426, %v3225, 0
      %v3267 = vsel %vm1426, %v3226, 0
      %v3270 = vsel %vm1426, %v3227, 0
      %v3273 = vsel %vm1426, %v3228, 0
      %v3276 = vsel %vm1426, %v3229, 0
      %v3279 = vsel %vm1475, %v3181, 0
      %3281 = vmatprep.subr.bf16.mxu0 0
      %3282 = vmatpush1.bf16.msra.mxu0 0
      %3283 = vmatprep.subr.bf16.mxu0 0
      %3284 = vmatpush1.bf16.msra.mxu0 0
      %3285 = vmatprep.subr.bf16.mxu0 0
      %3286 = vmatpush1.bf16.msra.mxu0 0
      %3287 = vmatprep.subr.bf16.mxu0 0
      %3288 = vmatpush1.bf16.msra.mxu0 0
      %3289 = vmatprep.subr.bf16.mxu0 0
      %3290 = vmatpush1.bf16.msra.mxu0 0
      %3291 = vmatprep.subr.bf16.mxu0 0
      %3292 = vmatpush1.bf16.msra.mxu0 0
      %3293 = vmatprep.subr.bf16.mxu0 0
      %3294 = vmatpush1.bf16.msra.mxu0 0
      %3295 = vmatprep.subr.bf16.mxu0 0
      %3296 = vmatpush1.bf16.msra.mxu0 %v3279
      %3297 = vmatprep.subr.bf16.mxu0 0
      %3298 = vmatpush2.bf16.msra.mxu0 0
      %3299 = vmatprep.subr.bf16.mxu0 0
      %3300 = vmatpush2.bf16.msra.mxu0 0
      %3301 = vmatprep.subr.bf16.mxu0 0
      %3302 = vmatpush2.bf16.msra.mxu0 0
      %3303 = vmatprep.subr.bf16.mxu0 0
      %3304 = vmatpush2.bf16.msra.mxu0 0
      %3305 = vmatprep.subr.bf16.mxu0 0
      %3306 = vmatpush2.bf16.msra.mxu0 0
      %3307 = vmatprep.subr.bf16.mxu0 0
      %3308 = vmatpush2.bf16.msra.mxu0 0
      %3309 = vmatprep.subr.bf16.mxu0 0
      %3310 = vmatpush2.bf16.msra.mxu0 0
      %3311 = vmatprep.subr.bf16.mxu0 0
      %3312 = vmatpush2.bf16.msra.mxu0 0
      %3313 = vmatprep.mubr.bf16.mxu0 0
      %3314 = vmatmul.mubr.bf16.gmra.mxu0 %v3231
      %v3315 = vpop.f32.mrf.mxu0
      %v3316 = vadd.f32 0.0, %v3315
      %v3317 = vpop.f32.mrf.mxu0
      %v3318 = vpop.f32.mrf.mxu0
      %v3319 = vadd.f32 0.0, %v3318
      %v3320 = vpop.f32.mrf.mxu0
      %3321 = vmatprep.mubr.bf16.mxu0 0
      %3322 = vmatmul.mubr.bf16.gmra.mxu0 %v3234
      %v3323 = vpop.f32.mrf.mxu0
      %v3324 = vadd.f32 0.0, %v3323
      %v3325 = vpop.f32.mrf.mxu0
      %v3326 = vpop.f32.mrf.mxu0
      %v3327 = vadd.f32 0.0, %v3326
      %v3328 = vpop.f32.mrf.mxu0
      %3329 = vmatprep.mubr.bf16.mxu0 0
      %3330 = vmatmul.mubr.bf16.gmra.mxu0 %v3237
      %v3331 = vpop.f32.mrf.mxu0
      %v3332 = vadd.f32 0.0, %v3331
      %v3333 = vpop.f32.mrf.mxu0
      %v3334 = vpop.f32.mrf.mxu0
      %v3335 = vadd.f32 0.0, %v3334
      %v3336 = vpop.f32.mrf.mxu0
      %3337 = vmatprep.mubr.bf16.mxu0 0
      %3338 = vmatmul.mubr.bf16.gmra.mxu0 %v3240
      %v3339 = vpop.f32.mrf.mxu0
      %v3340 = vadd.f32 0.0, %v3339
      %v3341 = vpop.f32.mrf.mxu0
      %v3342 = vpop.f32.mrf.mxu0
      %v3343 = vadd.f32 0.0, %v3342
      %v3344 = vpop.f32.mrf.mxu0
      %3345 = vmatprep.mubr.bf16.mxu0 0
      %3346 = vmatmul.mubr.bf16.gmra.mxu0 %v3243
      %v3347 = vpop.f32.mrf.mxu0
      %v3348 = vadd.f32 0.0, %v3347
      %v3349 = vpop.f32.mrf.mxu0
      %v3350 = vpop.f32.mrf.mxu0
      %v3351 = vadd.f32 0.0, %v3350
      %v3352 = vpop.f32.mrf.mxu0
      %3353 = vmatprep.mubr.bf16.mxu0 0
      %3354 = vmatmul.mubr.bf16.gmra.mxu0 %v3246
      %v3355 = vpop.f32.mrf.mxu0
      %v3356 = vadd.f32 0.0, %v3355
      %v3357 = vpop.f32.mrf.mxu0
      %v3358 = vpop.f32.mrf.mxu0
      %v3359 = vadd.f32 0.0, %v3358
      %v3360 = vpop.f32.mrf.mxu0
      %3361 = vmatprep.mubr.bf16.mxu0 0
      %3362 = vmatmul.mubr.bf16.gmra.mxu0 %v3249
      %v3363 = vpop.f32.mrf.mxu0
      %v3364 = vadd.f32 0.0, %v3363
      %v3365 = vpop.f32.mrf.mxu0
      %v3366 = vpop.f32.mrf.mxu0
      %v3367 = vadd.f32 0.0, %v3366
      %v3368 = vpop.f32.mrf.mxu0
      %3369 = vmatprep.mubr.bf16.mxu0 0
      %3370 = vmatmul.mubr.bf16.gmra.mxu0 %v3252
      %v3371 = vpop.f32.mrf.mxu0
      %v3372 = vadd.f32 0.0, %v3371
      %v3373 = vpop.f32.mrf.mxu0
      %v3374 = vpop.f32.mrf.mxu0
      %v3375 = vadd.f32 0.0, %v3374
      %v3376 = vpop.f32.mrf.mxu0
      %3377 = vmatprep.mubr.bf16.mxu0 0
      %3378 = vmatmul.mubr.bf16.gmra.mxu0 %v3255
      %v3379 = vpop.f32.mrf.mxu0
      %v3380 = vadd.f32 0.0, %v3379
      %v3381 = vpop.f32.mrf.mxu0
      %v3382 = vpop.f32.mrf.mxu0
      %v3383 = vadd.f32 0.0, %v3382
      %v3384 = vpop.f32.mrf.mxu0
      %3385 = vmatprep.mubr.bf16.mxu0 0
      %3386 = vmatmul.mubr.bf16.gmra.mxu0 %v3258
      %v3387 = vpop.f32.mrf.mxu0
      %v3388 = vadd.f32 0.0, %v3387
      %v3389 = vpop.f32.mrf.mxu0
      %v3390 = vpop.f32.mrf.mxu0
      %v3391 = vadd.f32 0.0, %v3390
      %v3392 = vpop.f32.mrf.mxu0
      %3393 = vmatprep.mubr.bf16.mxu0 0
      %3394 = vmatmul.mubr.bf16.gmra.mxu0 %v3261
      %v3395 = vpop.f32.mrf.mxu0
      %v3396 = vadd.f32 0.0, %v3395
      %v3397 = vpop.f32.mrf.mxu0
      %v3398 = vpop.f32.mrf.mxu0
      %v3399 = vadd.f32 0.0, %v3398
      %v3400 = vpop.f32.mrf.mxu0
      %3401 = vmatprep.mubr.bf16.mxu0 0
      %3402 = vmatmul.mubr.bf16.gmra.mxu0 %v3264
      %v3403 = vpop.f32.mrf.mxu0
      %v3404 = vadd.f32 0.0, %v3403
      %v3405 = vpop.f32.mrf.mxu0
      %v3406 = vpop.f32.mrf.mxu0
      %v3407 = vadd.f32 0.0, %v3406
      %v3408 = vpop.f32.mrf.mxu0
      %3409 = vmatprep.mubr.bf16.mxu0 0
      %3410 = vmatmul.mubr.bf16.gmra.mxu0 %v3267
      %v3411 = vpop.f32.mrf.mxu0
      %v3412 = vadd.f32 0.0, %v3411
      %v3413 = vpop.f32.mrf.mxu0
      %v3414 = vpop.f32.mrf.mxu0
      %v3415 = vadd.f32 0.0, %v3414
      %v3416 = vpop.f32.mrf.mxu0
      %3417 = vmatprep.mubr.bf16.mxu0 0
      %3418 = vmatmul.mubr.bf16.gmra.mxu0 %v3270
      %v3419 = vpop.f32.mrf.mxu0
      %v3420 = vadd.f32 0.0, %v3419
      %v3421 = vpop.f32.mrf.mxu0
      %v3422 = vpop.f32.mrf.mxu0
      %v3423 = vadd.f32 0.0, %v3422
      %v3424 = vpop.f32.mrf.mxu0
      %3425 = vmatprep.mubr.bf16.mxu0 0
      %3426 = vmatmul.mubr.bf16.gmra.mxu0 %v3273
      %v3427 = vpop.f32.mrf.mxu0
      %v3428 = vadd.f32 0.0, %v3427
      %v3429 = vpop.f32.mrf.mxu0
      %v3430 = vpop.f32.mrf.mxu0
      %v3431 = vadd.f32 0.0, %v3430
      %v3432 = vpop.f32.mrf.mxu0
      %3433 = vmatprep.mubr.bf16.mxu0 0
      %3434 = vmatmul.mubr.bf16.gmra.mxu0 %v3276
      %v3435 = vpop.f32.mrf.mxu0
      %v3436 = vadd.f32 0.0, %v3435
      %v3437 = vpop.f32.mrf.mxu0
      %v3438 = vpop.f32.mrf.mxu0
      %v3439 = vadd.f32 0.0, %v3438
      %v3440 = vpop.f32.mrf.mxu0
      %3441 = vdwg.mxu0
      %v3442 = vadd.f32 %v2717, %v3316
      %v3443 = vadd.f32 %v2718, %v3319
      %v3444 = vadd.f32 %v2719, %v3324
      %v3445 = vadd.f32 %v2720, %v3327
      %v3446 = vadd.f32 %v2721, %v3332
      %v3447 = vadd.f32 %v2722, %v3335
      %v3448 = vadd.f32 %v2723, %v3340
      %v3449 = vadd.f32 %v2724, %v3343
      %v3450 = vadd.f32 %v2725, %v3348
      %v3451 = vadd.f32 %v2726, %v3351
      %v3452 = vadd.f32 %v2727, %v3356
      %v3453 = vadd.f32 %v2728, %v3359
      %v3454 = vadd.f32 %v2729, %v3364
      %v3455 = vadd.f32 %v2730, %v3367
      %v3456 = vadd.f32 %v2731, %v3372
      %v3457 = vadd.f32 %v2732, %v3375
      %v3458 = vadd.f32 %v2733, %v3380
      %v3459 = vadd.f32 %v2734, %v3383
      %v3460 = vadd.f32 %v2735, %v3388
      %v3461 = vadd.f32 %v2736, %v3391
      %v3462 = vadd.f32 %v2737, %v3396
      %v3463 = vadd.f32 %v2738, %v3399
      %v3464 = vadd.f32 %v2739, %v3404
      %v3465 = vadd.f32 %v2740, %v3407
      %v3466 = vadd.f32 %v2741, %v3412
      %v3467 = vadd.f32 %v2742, %v3415
      %v3468 = vadd.f32 %v2743, %v3420
      %v3469 = vadd.f32 %v2744, %v3423
      %v3470 = vadd.f32 %v2745, %v3428
      %v3471 = vadd.f32 %v2746, %v3431
      %v3472 = vadd.f32 %v2747, %v3436
      %v3473 = vadd.f32 %v2748, %v3439
      %v3474 = vld [vmem:[%s819] sm:$0xe]
      %v3475 = vld [vmem:[%s819 + $0xc] sm:$0xe]
      %v3476 = vld [vmem:[%s819 + $0x18] sm:$0xe]
      %v3477 = vld [vmem:[%s819 + $0x24] sm:$0xe]
      %v3478 = vld [vmem:[%s819 + $0x30] sm:$0xe]
      %v3479 = vld [vmem:[%s819 + $0x3c] sm:$0xe]
      %v3480 = vld [vmem:[%s819 + $0x48] sm:$0xe]
      %v3481 = vld [vmem:[%s819 + $0x54] sm:$0xe]
      %v3482 = vld [vmem:[%s819 + $0x60] sm:$0xe]
      %v3483 = vld [vmem:[%s819 + $0x6c] sm:$0xe]
      %v3484 = vld [vmem:[%s819 + $0x78] sm:$0xe]
      %v3485 = vld [vmem:[%s819 + $0x84] sm:$0xe]
      %v3486 = vld [vmem:[%s819 + $0x90] sm:$0xe]
      %v3487 = vld [vmem:[%s819 + $0x9c] sm:$0xe]
      %v3488 = vld [vmem:[%s819 + $0xa8] sm:$0xe]
      %v3489 = vld [vmem:[%s819 + $0xb4] sm:$0xe]
      %v3538 = vrot.slane %v3474, 5
      %v3539 = vrot.slane %v3538, 4
      %v3540 = vrot.slane %v2750, 5
      %v3541 = vsel %vm1982, %v3539, %v3540
      %v3542 = vrot.slane %v3540, 4
      %v3543 = vrot.slane %v2751, 5
      %v3544 = vsel %vm1982, %v3542, %v3543
      %v3545 = vrot.slane %v3475, 5
      %v3546 = vrot.slane %v3545, 4
      %v3547 = vrot.slane %v2753, 5
      %v3548 = vsel %vm1982, %v3546, %v3547
      %v3549 = vrot.slane %v3547, 4
      %v3550 = vrot.slane %v2754, 5
      %v3551 = vsel %vm1982, %v3549, %v3550
      %v3552 = vrot.slane %v3476, 5
      %v3553 = vrot.slane %v3552, 4
      %v3554 = vrot.slane %v2756, 5
      %v3555 = vsel %vm1982, %v3553, %v3554
      %v3556 = vrot.slane %v3554, 4
      %v3557 = vrot.slane %v2757, 5
      %v3558 = vsel %vm1982, %v3556, %v3557
      %v3559 = vrot.slane %v3477, 5
      %v3560 = vrot.slane %v3559, 4
      %v3561 = vrot.slane %v2759, 5
      %v3562 = vsel %vm1982, %v3560, %v3561
      %v3563 = vrot.slane %v3561, 4
      %v3564 = vrot.slane %v2760, 5
      %v3565 = vsel %vm1982, %v3563, %v3564
      %v3566 = vrot.slane %v3478, 5
      %v3567 = vrot.slane %v3566, 4
      %v3568 = vrot.slane %v2762, 5
      %v3569 = vsel %vm1982, %v3567, %v3568
      %v3570 = vrot.slane %v3568, 4
      %v3571 = vrot.slane %v2763, 5
      %v3572 = vsel %vm1982, %v3570, %v3571
      %v3573 = vrot.slane %v3479, 5
      %v3574 = vrot.slane %v3573, 4
      %v3575 = vrot.slane %v2765, 5
      %v3576 = vsel %vm1982, %v3574, %v3575
      %v3577 = vrot.slane %v3575, 4
      %v3578 = vrot.slane %v2766, 5
      %v3579 = vsel %vm1982, %v3577, %v3578
      %v3580 = vrot.slane %v3480, 5
      %v3581 = vrot.slane %v3580, 4
      %v3582 = vrot.slane %v2768, 5
      %v3583 = vsel %vm1982, %v3581, %v3582
      %v3584 = vrot.slane %v3582, 4
      %v3585 = vrot.slane %v2769, 5
      %v3586 = vsel %vm1982, %v3584, %v3585
      %v3587 = vrot.slane %v3481, 5
      %v3588 = vrot.slane %v3587, 4
      %v3589 = vrot.slane %v2771, 5
      %v3590 = vsel %vm1982, %v3588, %v3589
      %v3591 = vrot.slane %v3589, 4
      %v3592 = vrot.slane %v2772, 5
      %v3593 = vsel %vm1982, %v3591, %v3592
      %v3594 = vrot.slane %v3482, 5
      %v3595 = vrot.slane %v3594, 4
      %v3596 = vrot.slane %v2774, 5
      %v3597 = vsel %vm1982, %v3595, %v3596
      %v3598 = vrot.slane %v3596, 4
      %v3599 = vrot.slane %v2775, 5
      %v3600 = vsel %vm1982, %v3598, %v3599
      %v3601 = vrot.slane %v3483, 5
      %v3602 = vrot.slane %v3601, 4
      %v3603 = vrot.slane %v2777, 5
      %v3604 = vsel %vm1982, %v3602, %v3603
      %v3605 = vrot.slane %v3603, 4
      %v3606 = vrot.slane %v2778, 5
      %v3607 = vsel %vm1982, %v3605, %v3606
      %v3608 = vrot.slane %v3484, 5
      %v3609 = vrot.slane %v3608, 4
      %v3610 = vrot.slane %v2780, 5
      %v3611 = vsel %vm1982, %v3609, %v3610
      %v3612 = vrot.slane %v3610, 4
      %v3613 = vrot.slane %v2781, 5
      %v3614 = vsel %vm1982, %v3612, %v3613
      %v3615 = vrot.slane %v3485, 5
      %v3616 = vrot.slane %v3615, 4
      %v3617 = vrot.slane %v2783, 5
      %v3618 = vsel %vm1982, %v3616, %v3617
      %v3619 = vrot.slane %v3617, 4
      %v3620 = vrot.slane %v2784, 5
      %v3621 = vsel %vm1982, %v3619, %v3620
      %v3622 = vrot.slane %v3486, 5
      %v3623 = vrot.slane %v3622, 4
      %v3624 = vrot.slane %v2786, 5
      %v3625 = vsel %vm1982, %v3623, %v3624
      %v3626 = vrot.slane %v3624, 4
      %v3627 = vrot.slane %v2787, 5
      %v3628 = vsel %vm1982, %v3626, %v3627
      %v3629 = vrot.slane %v3487, 5
      %v3630 = vrot.slane %v3629, 4
      %v3631 = vrot.slane %v2789, 5
      %v3632 = vsel %vm1982, %v3630, %v3631
      %v3633 = vrot.slane %v3631, 4
      %v3634 = vrot.slane %v2790, 5
      %v3635 = vsel %vm1982, %v3633, %v3634
      %v3636 = vrot.slane %v3488, 5
      %v3637 = vrot.slane %v3636, 4
      %v3638 = vrot.slane %v2792, 5
      %v3639 = vsel %vm1982, %v3637, %v3638
      %v3640 = vrot.slane %v3638, 4
      %v3641 = vrot.slane %v2793, 5
      %v3642 = vsel %vm1982, %v3640, %v3641
      %v3643 = vrot.slane %v3489, 5
      %v3644 = vrot.slane %v3643, 4
      %v3645 = vrot.slane %v2795, 5
      %v3646 = vsel %vm1982, %v3644, %v3645
      %v3647 = vrot.slane %v3645, 4
      %v3648 = vrot.slane %v2796, 5
      %v3649 = vsel %vm1982, %v3647, %v3648
      %v3650 = vld [vmem:[%s1 + $0x8] sm:$0xc]
      %v3651 = vunpack.c.l.b16 %v3541
      %v3652 = vunpack.c.l.b16 %v3544
      %v3653 = vunpack.c.l.b16 %v3548
      %v3654 = vunpack.c.l.b16 %v3551
      %v3655 = vunpack.c.l.b16 %v3555
      %v3656 = vunpack.c.l.b16 %v3558
      %v3657 = vunpack.c.l.b16 %v3562
      %v3658 = vunpack.c.l.b16 %v3565
      %v3659 = vunpack.c.l.b16 %v3569
      %v3660 = vunpack.c.l.b16 %v3572
      %v3661 = vunpack.c.l.b16 %v3576
      %v3662 = vunpack.c.l.b16 %v3579
      %v3663 = vunpack.c.l.b16 %v3583
      %v3664 = vunpack.c.l.b16 %v3586
      %v3665 = vunpack.c.l.b16 %v3590
      %v3666 = vunpack.c.l.b16 %v3593
      %v3667 = vunpack.c.l.b16 %v3597
      %v3668 = vunpack.c.l.b16 %v3600
      %v3669 = vunpack.c.l.b16 %v3604
      %v3670 = vunpack.c.l.b16 %v3607
      %v3671 = vunpack.c.l.b16 %v3611
      %v3672 = vunpack.c.l.b16 %v3614
      %v3673 = vunpack.c.l.b16 %v3618
      %v3674 = vunpack.c.l.b16 %v3621
      %v3675 = vunpack.c.l.b16 %v3625
      %v3676 = vunpack.c.l.b16 %v3628
      %v3677 = vunpack.c.l.b16 %v3632
      %v3678 = vunpack.c.l.b16 %v3635
      %v3679 = vunpack.c.l.b16 %v3639
      %v3680 = vunpack.c.l.b16 %v3642
      %v3681 = vunpack.c.l.b16 %v3646
      %v3682 = vunpack.c.l.b16 %v3649
      %v3683 = vpack.c.b16 %v3652, %v3651
      %v3684 = vpack.c.b16 %v3654, %v3653
      %v3685 = vpack.c.b16 %v3656, %v3655
      %v3686 = vpack.c.b16 %v3658, %v3657
      %v3687 = vpack.c.b16 %v3660, %v3659
      %v3688 = vpack.c.b16 %v3662, %v3661
      %v3689 = vpack.c.b16 %v3664, %v3663
      %v3690 = vpack.c.b16 %v3666, %v3665
      %v3691 = vpack.c.b16 %v3668, %v3667
      %v3692 = vpack.c.b16 %v3670, %v3669
      %v3693 = vpack.c.b16 %v3672, %v3671
      %v3694 = vpack.c.b16 %v3674, %v3673
      %v3695 = vpack.c.b16 %v3676, %v3675
      %v3696 = vpack.c.b16 %v3678, %v3677
      %v3697 = vpack.c.b16 %v3680, %v3679
      %v3698 = vpack.c.b16 %v3682, %v3681
      %v3700 = vunpack.c.l.b16 %v3650
      %v3701 = vpack.c.b16 %v3700, %v3700
      %v3702 = vrot.slane %v3701, 2
      %v3704 = vsel %vm1426, %v3683, 0
      %v3707 = vsel %vm1426, %v3684, 0
      %v3710 = vsel %vm1426, %v3685, 0
      %v3713 = vsel %vm1426, %v3686, 0
      %v3716 = vsel %vm1426, %v3687, 0
      %v3719 = vsel %vm1426, %v3688, 0
      %v3722 = vsel %vm1426, %v3689, 0
      %v3725 = vsel %vm1426, %v3690, 0
      %v3728 = vsel %vm1426, %v3691, 0
      %v3731 = vsel %vm1426, %v3692, 0
      %v3734 = vsel %vm1426, %v3693, 0
      %v3737 = vsel %vm1426, %v3694, 0
      %v3740 = vsel %vm1426, %v3695, 0
      %v3743 = vsel %vm1426, %v3696, 0
      %v3746 = vsel %vm1426, %v3697, 0
      %v3749 = vsel %vm1426, %v3698, 0
      %v3752 = vsel %vm1475, %v3702, 0
      %3754 = vmatprep.subr.bf16.mxu0 0
      %3755 = vmatpush1.bf16.msra.mxu0 0
      %3756 = vmatprep.subr.bf16.mxu0 0
      %3757 = vmatpush1.bf16.msra.mxu0 0
      %3758 = vmatprep.subr.bf16.mxu0 0
      %3759 = vmatpush1.bf16.msra.mxu0 0
      %3760 = vmatprep.subr.bf16.mxu0 0
      %3761 = vmatpush1.bf16.msra.mxu0 0
      %3762 = vmatprep.subr.bf16.mxu0 0
      %3763 = vmatpush1.bf16.msra.mxu0 0
      %3764 = vmatprep.subr.bf16.mxu0 0
      %3765 = vmatpush1.bf16.msra.mxu0 0
      %3766 = vmatprep.subr.bf16.mxu0 0
      %3767 = vmatpush1.bf16.msra.mxu0 0
      %3768 = vmatprep.subr.bf16.mxu0 0
      %3769 = vmatpush1.bf16.msra.mxu0 %v3752
      %3770 = vmatprep.subr.bf16.mxu0 0
      %3771 = vmatpush2.bf16.msra.mxu0 0
      %3772 = vmatprep.subr.bf16.mxu0 0
      %3773 = vmatpush2.bf16.msra.mxu0 0
      %3774 = vmatprep.subr.bf16.mxu0 0
      %3775 = vmatpush2.bf16.msra.mxu0 0
      %3776 = vmatprep.subr.bf16.mxu0 0
      %3777 = vmatpush2.bf16.msra.mxu0 0
      %3778 = vmatprep.subr.bf16.mxu0 0
      %3779 = vmatpush2.bf16.msra.mxu0 0
      %3780 = vmatprep.subr.bf16.mxu0 0
      %3781 = vmatpush2.bf16.msra.mxu0 0
      %3782 = vmatprep.subr.bf16.mxu0 0
      %3783 = vmatpush2.bf16.msra.mxu0 0
      %3784 = vmatprep.subr.bf16.mxu0 0
      %3785 = vmatpush2.bf16.msra.mxu0 0
      %3786 = vmatprep.mubr.bf16.mxu0 0
      %3787 = vmatmul.mubr.bf16.gmra.mxu0 %v3704
      %v3788 = vpop.f32.mrf.mxu0
      %v3789 = vadd.f32 0.0, %v3788
      %v3790 = vpop.f32.mrf.mxu0
      %v3791 = vpop.f32.mrf.mxu0
      %v3792 = vadd.f32 0.0, %v3791
      %v3793 = vpop.f32.mrf.mxu0
      %3794 = vmatprep.mubr.bf16.mxu0 0
      %3795 = vmatmul.mubr.bf16.gmra.mxu0 %v3707
      %v3796 = vpop.f32.mrf.mxu0
      %v3797 = vadd.f32 0.0, %v3796
      %v3798 = vpop.f32.mrf.mxu0
      %v3799 = vpop.f32.mrf.mxu0
      %v3800 = vadd.f32 0.0, %v3799
      %v3801 = vpop.f32.mrf.mxu0
      %3802 = vmatprep.mubr.bf16.mxu0 0
      %3803 = vmatmul.mubr.bf16.gmra.mxu0 %v3710
      %v3804 = vpop.f32.mrf.mxu0
      %v3805 = vadd.f32 0.0, %v3804
      %v3806 = vpop.f32.mrf.mxu0
      %v3807 = vpop.f32.mrf.mxu0
      %v3808 = vadd.f32 0.0, %v3807
      %v3809 = vpop.f32.mrf.mxu0
      %3810 = vmatprep.mubr.bf16.mxu0 0
      %3811 = vmatmul.mubr.bf16.gmra.mxu0 %v3713
      %v3812 = vpop.f32.mrf.mxu0
      %v3813 = vadd.f32 0.0, %v3812
      %v3814 = vpop.f32.mrf.mxu0
      %v3815 = vpop.f32.mrf.mxu0
      %v3816 = vadd.f32 0.0, %v3815
      %v3817 = vpop.f32.mrf.mxu0
      %3818 = vmatprep.mubr.bf16.mxu0 0
      %3819 = vmatmul.mubr.bf16.gmra.mxu0 %v3716
      %v3820 = vpop.f32.mrf.mxu0
      %v3821 = vadd.f32 0.0, %v3820
      %v3822 = vpop.f32.mrf.mxu0
      %v3823 = vpop.f32.mrf.mxu0
      %v3824 = vadd.f32 0.0, %v3823
      %v3825 = vpop.f32.mrf.mxu0
      %3826 = vmatprep.mubr.bf16.mxu0 0
      %3827 = vmatmul.mubr.bf16.gmra.mxu0 %v3719
      %v3828 = vpop.f32.mrf.mxu0
      %v3829 = vadd.f32 0.0, %v3828
      %v3830 = vpop.f32.mrf.mxu0
      %v3831 = vpop.f32.mrf.mxu0
      %v3832 = vadd.f32 0.0, %v3831
      %v3833 = vpop.f32.mrf.mxu0
      %3834 = vmatprep.mubr.bf16.mxu0 0
      %3835 = vmatmul.mubr.bf16.gmra.mxu0 %v3722
      %v3836 = vpop.f32.mrf.mxu0
      %v3837 = vadd.f32 0.0, %v3836
      %v3838 = vpop.f32.mrf.mxu0
      %v3839 = vpop.f32.mrf.mxu0
      %v3840 = vadd.f32 0.0, %v3839
      %v3841 = vpop.f32.mrf.mxu0
      %3842 = vmatprep.mubr.bf16.mxu0 0
      %3843 = vmatmul.mubr.bf16.gmra.mxu0 %v3725
      %v3844 = vpop.f32.mrf.mxu0
      %v3845 = vadd.f32 0.0, %v3844
      %v3846 = vpop.f32.mrf.mxu0
      %v3847 = vpop.f32.mrf.mxu0
      %v3848 = vadd.f32 0.0, %v3847
      %v3849 = vpop.f32.mrf.mxu0
      %3850 = vmatprep.mubr.bf16.mxu0 0
      %3851 = vmatmul.mubr.bf16.gmra.mxu0 %v3728
      %v3852 = vpop.f32.mrf.mxu0
      %v3853 = vadd.f32 0.0, %v3852
      %v3854 = vpop.f32.mrf.mxu0
      %v3855 = vpop.f32.mrf.mxu0
      %v3856 = vadd.f32 0.0, %v3855
      %v3857 = vpop.f32.mrf.mxu0
      %3858 = vmatprep.mubr.bf16.mxu0 0
      %3859 = vmatmul.mubr.bf16.gmra.mxu0 %v3731
      %v3860 = vpop.f32.mrf.mxu0
      %v3861 = vadd.f32 0.0, %v3860
      %v3862 = vpop.f32.mrf.mxu0
      %v3863 = vpop.f32.mrf.mxu0
      %v3864 = vadd.f32 0.0, %v3863
      %v3865 = vpop.f32.mrf.mxu0
      %3866 = vmatprep.mubr.bf16.mxu0 0
      %3867 = vmatmul.mubr.bf16.gmra.mxu0 %v3734
      %v3868 = vpop.f32.mrf.mxu0
      %v3869 = vadd.f32 0.0, %v3868
      %v3870 = vpop.f32.mrf.mxu0
      %v3871 = vpop.f32.mrf.mxu0
      %v3872 = vadd.f32 0.0, %v3871
      %v3873 = vpop.f32.mrf.mxu0
      %3874 = vmatprep.mubr.bf16.mxu0 0
      %3875 = vmatmul.mubr.bf16.gmra.mxu0 %v3737
      %v3876 = vpop.f32.mrf.mxu0
      %v3877 = vadd.f32 0.0, %v3876
      %v3878 = vpop.f32.mrf.mxu0
      %v3879 = vpop.f32.mrf.mxu0
      %v3880 = vadd.f32 0.0, %v3879
      %v3881 = vpop.f32.mrf.mxu0
      %3882 = vmatprep.mubr.bf16.mxu0 0
      %3883 = vmatmul.mubr.bf16.gmra.mxu0 %v3740
      %v3884 = vpop.f32.mrf.mxu0
      %v3885 = vadd.f32 0.0, %v3884
      %v3886 = vpop.f32.mrf.mxu0
      %v3887 = vpop.f32.mrf.mxu0
      %v3888 = vadd.f32 0.0, %v3887
      %v3889 = vpop.f32.mrf.mxu0
      %3890 = vmatprep.mubr.bf16.mxu0 0
      %3891 = vmatmul.mubr.bf16.gmra.mxu0 %v3743
      %v3892 = vpop.f32.mrf.mxu0
      %v3893 = vadd.f32 0.0, %v3892
      %v3894 = vpop.f32.mrf.mxu0
      %v3895 = vpop.f32.mrf.mxu0
      %v3896 = vadd.f32 0.0, %v3895
      %v3897 = vpop.f32.mrf.mxu0
      %3898 = vmatprep.mubr.bf16.mxu0 0
      %3899 = vmatmul.mubr.bf16.gmra.mxu0 %v3746
      %v3900 = vpop.f32.mrf.mxu0
      %v3901 = vadd.f32 0.0, %v3900
      %v3902 = vpop.f32.mrf.mxu0
      %v3903 = vpop.f32.mrf.mxu0
      %v3904 = vadd.f32 0.0, %v3903
      %v3905 = vpop.f32.mrf.mxu0
      %3906 = vmatprep.mubr.bf16.mxu0 0
      %3907 = vmatmul.mubr.bf16.gmra.mxu0 %v3749
      %v3908 = vpop.f32.mrf.mxu0
      %v3909 = vadd.f32 0.0, %v3908
      %v3910 = vpop.f32.mrf.mxu0
      %v3911 = vpop.f32.mrf.mxu0
      %v3912 = vadd.f32 0.0, %v3911
      %v3913 = vpop.f32.mrf.mxu0
      %3914 = vdwg.mxu0
      %v3915 = vadd.f32 %v3442, %v3789
      %v3916 = vadd.f32 %v3443, %v3792
      %v3917 = vadd.f32 %v3444, %v3797
      %v3918 = vadd.f32 %v3445, %v3800
      %v3919 = vadd.f32 %v3446, %v3805
      %v3920 = vadd.f32 %v3447, %v3808
      %v3921 = vadd.f32 %v3448, %v3813
      %v3922 = vadd.f32 %v3449, %v3816
      %v3923 = vadd.f32 %v3450, %v3821
      %v3924 = vadd.f32 %v3451, %v3824
      %v3925 = vadd.f32 %v3452, %v3829
      %v3926 = vadd.f32 %v3453, %v3832
      %v3927 = vadd.f32 %v3454, %v3837
      %v3928 = vadd.f32 %v3455, %v3840
      %v3929 = vadd.f32 %v3456, %v3845
      %v3930 = vadd.f32 %v3457, %v3848
      %v3931 = vadd.f32 %v3458, %v3853
      %v3932 = vadd.f32 %v3459, %v3856
      %v3933 = vadd.f32 %v3460, %v3861
      %v3934 = vadd.f32 %v3461, %v3864
      %v3935 = vadd.f32 %v3462, %v3869
      %v3936 = vadd.f32 %v3463, %v3872
      %v3937 = vadd.f32 %v3464, %v3877
      %v3938 = vadd.f32 %v3465, %v3880
      %v3939 = vadd.f32 %v3466, %v3885
      %v3940 = vadd.f32 %v3467, %v3888
      %v3941 = vadd.f32 %v3468, %v3893
      %v3942 = vadd.f32 %v3469, %v3896
      %v3943 = vadd.f32 %v3470, %v3901
      %v3944 = vadd.f32 %v3471, %v3904
      %v3945 = vadd.f32 %v3472, %v3909
      %v3946 = vadd.f32 %v3473, %v3912
      %s3947 = scalar_lea.vmem [#allocation2], 24
      %v3948 = vld [vmem:[%s3947] sm:$0xf]
      %v3949 = vld [vmem:[%s3947 + $0x4] sm:$0xf]
      %v3950 = vld [vmem:[%s3947 + $0xc] sm:$0xf]
      %v3951 = vld [vmem:[%s3947 + $0x10] sm:$0xf]
      %v3952 = vld [vmem:[%s3947 + $0x18] sm:$0xf]
      %v3953 = vld [vmem:[%s3947 + $0x1c] sm:$0xf]
      %v3954 = vld [vmem:[%s3947 + $0x24] sm:$0xf]
      %v3955 = vld [vmem:[%s3947 + $0x28] sm:$0xf]
      %v3956 = vld [vmem:[%s3947 + $0x30] sm:$0xf]
      %v3957 = vld [vmem:[%s3947 + $0x34] sm:$0xf]
      %v3958 = vld [vmem:[%s3947 + $0x3c] sm:$0xf]
      %v3959 = vld [vmem:[%s3947 + $0x40] sm:$0xf]
      %v3960 = vld [vmem:[%s3947 + $0x48] sm:$0xf]
      %v3961 = vld [vmem:[%s3947 + $0x4c] sm:$0xf]
      %v3962 = vld [vmem:[%s3947 + $0x54] sm:$0xf]
      %v3963 = vld [vmem:[%s3947 + $0x58] sm:$0xf]
      %v3964 = vld [vmem:[%s3947 + $0x60] sm:$0xf]
      %v3965 = vld [vmem:[%s3947 + $0x64] sm:$0xf]
      %v3966 = vld [vmem:[%s3947 + $0x6c] sm:$0xf]
      %v3967 = vld [vmem:[%s3947 + $0x70] sm:$0xf]
      %v3968 = vld [vmem:[%s3947 + $0x78] sm:$0xf]
      %v3969 = vld [vmem:[%s3947 + $0x7c] sm:$0xf]
      %v3970 = vld [vmem:[%s3947 + $0x84] sm:$0xf]
      %v3971 = vld [vmem:[%s3947 + $0x88] sm:$0xf]
      %v3972 = vld [vmem:[%s3947 + $0x90] sm:$0xf]
      %v3973 = vld [vmem:[%s3947 + $0x94] sm:$0xf]
      %v3974 = vld [vmem:[%s3947 + $0x9c] sm:$0xf]
      %v3975 = vld [vmem:[%s3947 + $0xa0] sm:$0xf]
      %v3976 = vld [vmem:[%s3947 + $0xa8] sm:$0xf]
      %v3977 = vld [vmem:[%s3947 + $0xac] sm:$0xf]
      %v3978 = vld [vmem:[%s3947 + $0xb4] sm:$0xf]
      %v3979 = vld [vmem:[%s3947 + $0xb8] sm:$0xf]
      %v3980 = vld [vmem:[%s1 + $0xc] sm:$0x3]
      %v4013 = vunpack.c.l.b16 %v3948
      %v4014 = vunpack.c.l.b16 %v3949
      %v4015 = vunpack.c.l.b16 %v3950
      %v4016 = vunpack.c.l.b16 %v3951
      %v4017 = vunpack.c.l.b16 %v3952
      %v4018 = vunpack.c.l.b16 %v3953
      %v4019 = vunpack.c.l.b16 %v3954
      %v4020 = vunpack.c.l.b16 %v3955
      %v4021 = vunpack.c.l.b16 %v3956
      %v4022 = vunpack.c.l.b16 %v3957
      %v4023 = vunpack.c.l.b16 %v3958
      %v4024 = vunpack.c.l.b16 %v3959
      %v4025 = vunpack.c.l.b16 %v3960
      %v4026 = vunpack.c.l.b16 %v3961
      %v4027 = vunpack.c.l.b16 %v3962
      %v4028 = vunpack.c.l.b16 %v3963
      %v4029 = vunpack.c.l.b16 %v3964
      %v4030 = vunpack.c.l.b16 %v3965
      %v4031 = vunpack.c.l.b16 %v3966
      %v4032 = vunpack.c.l.b16 %v3967
      %v4033 = vunpack.c.l.b16 %v3968
      %v4034 = vunpack.c.l.b16 %v3969
      %v4035 = vunpack.c.l.b16 %v3970
      %v4036 = vunpack.c.l.b16 %v3971
      %v4037 = vunpack.c.l.b16 %v3972
      %v4038 = vunpack.c.l.b16 %v3973
      %v4039 = vunpack.c.l.b16 %v3974
      %v4040 = vunpack.c.l.b16 %v3975
      %v4041 = vunpack.c.l.b16 %v3976
      %v4042 = vunpack.c.l.b16 %v3977
      %v4043 = vunpack.c.l.b16 %v3978
      %v4044 = vunpack.c.l.b16 %v3979
      %v4045 = vpack.c.b16 %v4014, %v4013
      %v4046 = vpack.c.b16 %v4016, %v4015
      %v4047 = vpack.c.b16 %v4018, %v4017
      %v4048 = vpack.c.b16 %v4020, %v4019
      %v4049 = vpack.c.b16 %v4022, %v4021
      %v4050 = vpack.c.b16 %v4024, %v4023
      %v4051 = vpack.c.b16 %v4026, %v4025
      %v4052 = vpack.c.b16 %v4028, %v4027
      %v4053 = vpack.c.b16 %v4030, %v4029
      %v4054 = vpack.c.b16 %v4032, %v4031
      %v4055 = vpack.c.b16 %v4034, %v4033
      %v4056 = vpack.c.b16 %v4036, %v4035
      %v4057 = vpack.c.b16 %v4038, %v4037
      %v4058 = vpack.c.b16 %v4040, %v4039
      %v4059 = vpack.c.b16 %v4042, %v4041
      %v4060 = vpack.c.b16 %v4044, %v4043
      %v4062 = vsel %vm1426, %v4045, 0
      %v4065 = vsel %vm1426, %v4046, 0
      %v4068 = vsel %vm1426, %v4047, 0
      %v4071 = vsel %vm1426, %v4048, 0
      %v4074 = vsel %vm1426, %v4049, 0
      %v4077 = vsel %vm1426, %v4050, 0
      %v4080 = vsel %vm1426, %v4051, 0
      %v4083 = vsel %vm1426, %v4052, 0
      %v4086 = vsel %vm1426, %v4053, 0
      %v4089 = vsel %vm1426, %v4054, 0
      %v4092 = vsel %vm1426, %v4055, 0
      %v4095 = vsel %vm1426, %v4056, 0
      %v4098 = vsel %vm1426, %v4057, 0
      %v4101 = vsel %vm1426, %v4058, 0
      %v4104 = vsel %vm1426, %v4059, 0
      %v4107 = vsel %vm1426, %v4060, 0
      %v4110 = vsel %vm1475, %v3980, 0
      %4112 = vmatprep.subr.bf16.mxu0 0
      %4113 = vmatpush1.bf16.msra.mxu0 0
      %4114 = vmatprep.subr.bf16.mxu0 0
      %4115 = vmatpush1.bf16.msra.mxu0 0
      %4116 = vmatprep.subr.bf16.mxu0 0
      %4117 = vmatpush1.bf16.msra.mxu0 0
      %4118 = vmatprep.subr.bf16.mxu0 0
      %4119 = vmatpush1.bf16.msra.mxu0 0
      %4120 = vmatprep.subr.bf16.mxu0 0
      %4121 = vmatpush1.bf16.msra.mxu0 0
      %4122 = vmatprep.subr.bf16.mxu0 0
      %4123 = vmatpush1.bf16.msra.mxu0 0
      %4124 = vmatprep.subr.bf16.mxu0 0
      %4125 = vmatpush1.bf16.msra.mxu0 0
      %4126 = vmatprep.subr.bf16.mxu0 0
      %4127 = vmatpush1.bf16.msra.mxu0 %v4110
      %4128 = vmatprep.subr.bf16.mxu0 0
      %4129 = vmatpush2.bf16.msra.mxu0 0
      %4130 = vmatprep.subr.bf16.mxu0 0
      %4131 = vmatpush2.bf16.msra.mxu0 0
      %4132 = vmatprep.subr.bf16.mxu0 0
      %4133 = vmatpush2.bf16.msra.mxu0 0
      %4134 = vmatprep.subr.bf16.mxu0 0
      %4135 = vmatpush2.bf16.msra.mxu0 0
      %4136 = vmatprep.subr.bf16.mxu0 0
      %4137 = vmatpush2.bf16.msra.mxu0 0
      %4138 = vmatprep.subr.bf16.mxu0 0
      %4139 = vmatpush2.bf16.msra.mxu0 0
      %4140 = vmatprep.subr.bf16.mxu0 0
      %4141 = vmatpush2.bf16.msra.mxu0 0
      %4142 = vmatprep.subr.bf16.mxu0 0
      %4143 = vmatpush2.bf16.msra.mxu0 0
      %4144 = vmatprep.mubr.bf16.mxu0 0
      %4145 = vmatmul.mubr.bf16.gmra.mxu0 %v4062
      %v4146 = vpop.f32.mrf.mxu0
      %v4147 = vadd.f32 0.0, %v4146
      %v4148 = vpop.f32.mrf.mxu0
      %v4149 = vpop.f32.mrf.mxu0
      %v4150 = vadd.f32 0.0, %v4149
      %v4151 = vpop.f32.mrf.mxu0
      %4152 = vmatprep.mubr.bf16.mxu0 0
      %4153 = vmatmul.mubr.bf16.gmra.mxu0 %v4065
      %v4154 = vpop.f32.mrf.mxu0
      %v4155 = vadd.f32 0.0, %v4154
      %v4156 = vpop.f32.mrf.mxu0
      %v4157 = vpop.f32.mrf.mxu0
      %v4158 = vadd.f32 0.0, %v4157
      %v4159 = vpop.f32.mrf.mxu0
      %4160 = vmatprep.mubr.bf16.mxu0 0
      %4161 = vmatmul.mubr.bf16.gmra.mxu0 %v4068
      %v4162 = vpop.f32.mrf.mxu0
      %v4163 = vadd.f32 0.0, %v4162
      %v4164 = vpop.f32.mrf.mxu0
      %v4165 = vpop.f32.mrf.mxu0
      %v4166 = vadd.f32 0.0, %v4165
      %v4167 = vpop.f32.mrf.mxu0
      %4168 = vmatprep.mubr.bf16.mxu0 0
      %4169 = vmatmul.mubr.bf16.gmra.mxu0 %v4071
      %v4170 = vpop.f32.mrf.mxu0
      %v4171 = vadd.f32 0.0, %v4170
      %v4172 = vpop.f32.mrf.mxu0
      %v4173 = vpop.f32.mrf.mxu0
      %v4174 = vadd.f32 0.0, %v4173
      %v4175 = vpop.f32.mrf.mxu0
      %4176 = vmatprep.mubr.bf16.mxu0 0
      %4177 = vmatmul.mubr.bf16.gmra.mxu0 %v4074
      %v4178 = vpop.f32.mrf.mxu0
      %v4179 = vadd.f32 0.0, %v4178
      %v4180 = vpop.f32.mrf.mxu0
      %v4181 = vpop.f32.mrf.mxu0
      %v4182 = vadd.f32 0.0, %v4181
      %v4183 = vpop.f32.mrf.mxu0
      %4184 = vmatprep.mubr.bf16.mxu0 0
      %4185 = vmatmul.mubr.bf16.gmra.mxu0 %v4077
      %v4186 = vpop.f32.mrf.mxu0
      %v4187 = vadd.f32 0.0, %v4186
      %v4188 = vpop.f32.mrf.mxu0
      %v4189 = vpop.f32.mrf.mxu0
      %v4190 = vadd.f32 0.0, %v4189
      %v4191 = vpop.f32.mrf.mxu0
      %4192 = vmatprep.mubr.bf16.mxu0 0
      %4193 = vmatmul.mubr.bf16.gmra.mxu0 %v4080
      %v4194 = vpop.f32.mrf.mxu0
      %v4195 = vadd.f32 0.0, %v4194
      %v4196 = vpop.f32.mrf.mxu0
      %v4197 = vpop.f32.mrf.mxu0
      %v4198 = vadd.f32 0.0, %v4197
      %v4199 = vpop.f32.mrf.mxu0
      %4200 = vmatprep.mubr.bf16.mxu0 0
      %4201 = vmatmul.mubr.bf16.gmra.mxu0 %v4083
      %v4202 = vpop.f32.mrf.mxu0
      %v4203 = vadd.f32 0.0, %v4202
      %v4204 = vpop.f32.mrf.mxu0
      %v4205 = vpop.f32.mrf.mxu0
      %v4206 = vadd.f32 0.0, %v4205
      %v4207 = vpop.f32.mrf.mxu0
      %4208 = vmatprep.mubr.bf16.mxu0 0
      %4209 = vmatmul.mubr.bf16.gmra.mxu0 %v4086
      %v4210 = vpop.f32.mrf.mxu0
      %v4211 = vadd.f32 0.0, %v4210
      %v4212 = vpop.f32.mrf.mxu0
      %v4213 = vpop.f32.mrf.mxu0
      %v4214 = vadd.f32 0.0, %v4213
      %v4215 = vpop.f32.mrf.mxu0
      %4216 = vmatprep.mubr.bf16.mxu0 0
      %4217 = vmatmul.mubr.bf16.gmra.mxu0 %v4089
      %v4218 = vpop.f32.mrf.mxu0
      %v4219 = vadd.f32 0.0, %v4218
      %v4220 = vpop.f32.mrf.mxu0
      %v4221 = vpop.f32.mrf.mxu0
      %v4222 = vadd.f32 0.0, %v4221
      %v4223 = vpop.f32.mrf.mxu0
      %4224 = vmatprep.mubr.bf16.mxu0 0
      %4225 = vmatmul.mubr.bf16.gmra.mxu0 %v4092
      %v4226 = vpop.f32.mrf.mxu0
      %v4227 = vadd.f32 0.0, %v4226
      %v4228 = vpop.f32.mrf.mxu0
      %v4229 = vpop.f32.mrf.mxu0
      %v4230 = vadd.f32 0.0, %v4229
      %v4231 = vpop.f32.mrf.mxu0
      %4232 = vmatprep.mubr.bf16.mxu0 0
      %4233 = vmatmul.mubr.bf16.gmra.mxu0 %v4095
      %v4234 = vpop.f32.mrf.mxu0
      %v4235 = vadd.f32 0.0, %v4234
      %v4236 = vpop.f32.mrf.mxu0
      %v4237 = vpop.f32.mrf.mxu0
      %v4238 = vadd.f32 0.0, %v4237
      %v4239 = vpop.f32.mrf.mxu0
      %4240 = vmatprep.mubr.bf16.mxu0 0
      %4241 = vmatmul.mubr.bf16.gmra.mxu0 %v4098
      %v4242 = vpop.f32.mrf.mxu0
      %v4243 = vadd.f32 0.0, %v4242
      %v4244 = vpop.f32.mrf.mxu0
      %v4245 = vpop.f32.mrf.mxu0
      %v4246 = vadd.f32 0.0, %v4245
      %v4247 = vpop.f32.mrf.mxu0
      %4248 = vmatprep.mubr.bf16.mxu0 0
      %4249 = vmatmul.mubr.bf16.gmra.mxu0 %v4101
      %v4250 = vpop.f32.mrf.mxu0
      %v4251 = vadd.f32 0.0, %v4250
      %v4252 = vpop.f32.mrf.mxu0
      %v4253 = vpop.f32.mrf.mxu0
      %v4254 = vadd.f32 0.0, %v4253
      %v4255 = vpop.f32.mrf.mxu0
      %4256 = vmatprep.mubr.bf16.mxu0 0
      %4257 = vmatmul.mubr.bf16.gmra.mxu0 %v4104
      %v4258 = vpop.f32.mrf.mxu0
      %v4259 = vadd.f32 0.0, %v4258
      %v4260 = vpop.f32.mrf.mxu0
      %v4261 = vpop.f32.mrf.mxu0
      %v4262 = vadd.f32 0.0, %v4261
      %v4263 = vpop.f32.mrf.mxu0
      %4264 = vmatprep.mubr.bf16.mxu0 0
      %4265 = vmatmul.mubr.bf16.gmra.mxu0 %v4107
      %v4266 = vpop.f32.mrf.mxu0
      %v4267 = vadd.f32 0.0, %v4266
      %v4268 = vpop.f32.mrf.mxu0
      %v4269 = vpop.f32.mrf.mxu0
      %v4270 = vadd.f32 0.0, %v4269
      %v4271 = vpop.f32.mrf.mxu0
      %4272 = vdwg.mxu0
      %v4273 = vadd.f32 %v3915, %v4147
      %v4274 = vadd.f32 %v3916, %v4150
      %v4275 = vadd.f32 %v3917, %v4155
      %v4276 = vadd.f32 %v3918, %v4158
      %v4277 = vadd.f32 %v3919, %v4163
      %v4278 = vadd.f32 %v3920, %v4166
      %v4279 = vadd.f32 %v3921, %v4171
      %v4280 = vadd.f32 %v3922, %v4174
      %v4281 = vadd.f32 %v3923, %v4179
      %v4282 = vadd.f32 %v3924, %v4182
      %v4283 = vadd.f32 %v3925, %v4187
      %v4284 = vadd.f32 %v3926, %v4190
      %v4285 = vadd.f32 %v3927, %v4195
      %v4286 = vadd.f32 %v3928, %v4198
      %v4287 = vadd.f32 %v3929, %v4203
      %v4288 = vadd.f32 %v3930, %v4206
      %v4289 = vadd.f32 %v3931, %v4211
      %v4290 = vadd.f32 %v3932, %v4214
      %v4291 = vadd.f32 %v3933, %v4219
      %v4292 = vadd.f32 %v3934, %v4222
      %v4293 = vadd.f32 %v3935, %v4227
      %v4294 = vadd.f32 %v3936, %v4230
      %v4295 = vadd.f32 %v3937, %v4235
      %v4296 = vadd.f32 %v3938, %v4238
      %v4297 = vadd.f32 %v3939, %v4243
      %v4298 = vadd.f32 %v3940, %v4246
      %v4299 = vadd.f32 %v3941, %v4251
      %v4300 = vadd.f32 %v3942, %v4254
      %v4301 = vadd.f32 %v3943, %v4259
      %v4302 = vadd.f32 %v3944, %v4262
      %v4303 = vadd.f32 %v3945, %v4267
      %v4304 = vadd.f32 %v3946, %v4270
      %v4305 = vld [vmem:[%s3947] sm:$0xf]
      %v4306 = vld [vmem:[%s3947 + $0x4] sm:$0xf]
      %v4307 = vld [vmem:[%s3947 + $0x8] sm:$0x1]
      %v4308 = vld [vmem:[%s3947 + $0xc] sm:$0xf]
      %v4309 = vld [vmem:[%s3947 + $0x10] sm:$0xf]
      %v4310 = vld [vmem:[%s3947 + $0x14] sm:$0x1]
      %v4311 = vld [vmem:[%s3947 + $0x18] sm:$0xf]
      %v4312 = vld [vmem:[%s3947 + $0x1c] sm:$0xf]
      %v4313 = vld [vmem:[%s3947 + $0x20] sm:$0x1]
      %v4314 = vld [vmem:[%s3947 + $0x24] sm:$0xf]
      %v4315 = vld [vmem:[%s3947 + $0x28] sm:$0xf]
      %v4316 = vld [vmem:[%s3947 + $0x2c] sm:$0x1]
      %v4317 = vld [vmem:[%s3947 + $0x30] sm:$0xf]
      %v4318 = vld [vmem:[%s3947 + $0x34] sm:$0xf]
      %v4319 = vld [vmem:[%s3947 + $0x38] sm:$0x1]
      %v4320 = vld [vmem:[%s3947 + $0x3c] sm:$0xf]
      %v4321 = vld [vmem:[%s3947 + $0x40] sm:$0xf]
      %v4322 = vld [vmem:[%s3947 + $0x44] sm:$0x1]
      %v4323 = vld [vmem:[%s3947 + $0x48] sm:$0xf]
      %v4324 = vld [vmem:[%s3947 + $0x4c] sm:$0xf]
      %v4325 = vld [vmem:[%s3947 + $0x50] sm:$0x1]
      %v4326 = vld [vmem:[%s3947 + $0x54] sm:$0xf]
      %v4327 = vld [vmem:[%s3947 + $0x58] sm:$0xf]
      %v4328 = vld [vmem:[%s3947 + $0x5c] sm:$0x1]
      %v4329 = vld [vmem:[%s3947 + $0x60] sm:$0xf]
      %v4330 = vld [vmem:[%s3947 + $0x64] sm:$0xf]
      %v4331 = vld [vmem:[%s3947 + $0x68] sm:$0x1]
      %v4332 = vld [vmem:[%s3947 + $0x6c] sm:$0xf]
      %v4333 = vld [vmem:[%s3947 + $0x70] sm:$0xf]
      %v4334 = vld [vmem:[%s3947 + $0x74] sm:$0x1]
      %v4335 = vld [vmem:[%s3947 + $0x78] sm:$0xf]
      %v4336 = vld [vmem:[%s3947 + $0x7c] sm:$0xf]
      %v4337 = vld [vmem:[%s3947 + $0x80] sm:$0x1]
      %v4338 = vld [vmem:[%s3947 + $0x84] sm:$0xf]
      %v4339 = vld [vmem:[%s3947 + $0x88] sm:$0xf]
      %v4340 = vld [vmem:[%s3947 + $0x8c] sm:$0x1]
      %v4341 = vld [vmem:[%s3947 + $0x90] sm:$0xf]
      %v4342 = vld [vmem:[%s3947 + $0x94] sm:$0xf]
      %v4343 = vld [vmem:[%s3947 + $0x98] sm:$0x1]
      %v4344 = vld [vmem:[%s3947 + $0x9c] sm:$0xf]
      %v4345 = vld [vmem:[%s3947 + $0xa0] sm:$0xf]
      %v4346 = vld [vmem:[%s3947 + $0xa4] sm:$0x1]
      %v4347 = vld [vmem:[%s3947 + $0xa8] sm:$0xf]
      %v4348 = vld [vmem:[%s3947 + $0xac] sm:$0xf]
      %v4349 = vld [vmem:[%s3947 + $0xb0] sm:$0x1]
      %v4350 = vld [vmem:[%s3947 + $0xb4] sm:$0xf]
      %v4351 = vld [vmem:[%s3947 + $0xb8] sm:$0xf]
      %v4352 = vld [vmem:[%s3947 + $0xbc] sm:$0x1]
      %v4354 = vshrl.u32 %v4305, 16
      %v4356 = vrot.slane %v4354, 4
      %v4357 = vshll.u32 %v4305, 16
      %v4359 = vrot.slane %v4357, 5
      %v4360 = vor.u32 %v4356, %v4359
      %v4361 = vrot.slane %v4360, 4
      %v4363 = vshll.u32 %v4306, 16
      %v4365 = vrot.slane %v4363, 5
      %v4366 = vsel %vm988, %v4361, %v4365
      %v4367 = vshrl.u32 %v4306, 16
      %v4369 = vrot.slane %v4367, 4
      %v4370 = vor.u32 %v4369, %v4365
      %v4371 = vrot.slane %v4370, 4
      %v4373 = vshll.u32 %v4307, 16
      %v4375 = vrot.slane %v4373, 5
      %v4376 = vsel %vm988, %v4371, %v4375
      %v4378 = vshrl.u32 %v4308, 16
      %v4380 = vrot.slane %v4378, 4
      %v4381 = vshll.u32 %v4308, 16
      %v4383 = vrot.slane %v4381, 5
      %v4384 = vor.u32 %v4380, %v4383
      %v4385 = vrot.slane %v4384, 4
      %v4387 = vshll.u32 %v4309, 16
      %v4389 = vrot.slane %v4387, 5
      %v4390 = vsel %vm988, %v4385, %v4389
      %v4391 = vshrl.u32 %v4309, 16
      %v4393 = vrot.slane %v4391, 4
      %v4394 = vor.u32 %v4393, %v4389
      %v4395 = vrot.slane %v4394, 4
      %v4397 = vshll.u32 %v4310, 16
      %v4399 = vrot.slane %v4397, 5
      %v4400 = vsel %vm988, %v4395, %v4399
      %v4402 = vshrl.u32 %v4311, 16
      %v4404 = vrot.slane %v4402, 4
      %v4405 = vshll.u32 %v4311, 16
      %v4407 = vrot.slane %v4405, 5
      %v4408 = vor.u32 %v4404, %v4407
      %v4409 = vrot.slane %v4408, 4
      %v4411 = vshll.u32 %v4312, 16
      %v4413 = vrot.slane %v4411, 5
      %v4414 = vsel %vm988, %v4409, %v4413
      %v4415 = vshrl.u32 %v4312, 16
      %v4417 = vrot.slane %v4415, 4
      %v4418 = vor.u32 %v4417, %v4413
      %v4419 = vrot.slane %v4418, 4
      %v4421 = vshll.u32 %v4313, 16
      %v4423 = vrot.slane %v4421, 5
      %v4424 = vsel %vm988, %v4419, %v4423
      %v4426 = vshrl.u32 %v4314, 16
      %v4428 = vrot.slane %v4426, 4
      %v4429 = vshll.u32 %v4314, 16
      %v4431 = vrot.slane %v4429, 5
      %v4432 = vor.u32 %v4428, %v4431
      %v4433 = vrot.slane %v4432, 4
      %v4435 = vshll.u32 %v4315, 16
      %v4437 = vrot.slane %v4435, 5
      %v4438 = vsel %vm988, %v4433, %v4437
      %v4439 = vshrl.u32 %v4315, 16
      %v4441 = vrot.slane %v4439, 4
      %v4442 = vor.u32 %v4441, %v4437
      %v4443 = vrot.slane %v4442, 4
      %v4445 = vshll.u32 %v4316, 16
      %v4447 = vrot.slane %v4445, 5
      %v4448 = vsel %vm988, %v4443, %v4447
      %v4450 = vshrl.u32 %v4317, 16
      %v4452 = vrot.slane %v4450, 4
      %v4453 = vshll.u32 %v4317, 16
      %v4455 = vrot.slane %v4453, 5
      %v4456 = vor.u32 %v4452, %v4455
      %v4457 = vrot.slane %v4456, 4
      %v4459 = vshll.u32 %v4318, 16
      %v4461 = vrot.slane %v4459, 5
      %v4462 = vsel %vm988, %v4457, %v4461
      %v4463 = vshrl.u32 %v4318, 16
      %v4465 = vrot.slane %v4463, 4
      %v4466 = vor.u32 %v4465, %v4461
      %v4467 = vrot.slane %v4466, 4
      %v4469 = vshll.u32 %v4319, 16
      %v4471 = vrot.slane %v4469, 5
      %v4472 = vsel %vm988, %v4467, %v4471
      %v4474 = vshrl.u32 %v4320, 16
      %v4476 = vrot.slane %v4474, 4
      %v4477 = vshll.u32 %v4320, 16
      %v4479 = vrot.slane %v4477, 5
      %v4480 = vor.u32 %v4476, %v4479
      %v4481 = vrot.slane %v4480, 4
      %v4483 = vshll.u32 %v4321, 16
      %v4485 = vrot.slane %v4483, 5
      %v4486 = vsel %vm988, %v4481, %v4485
      %v4487 = vshrl.u32 %v4321, 16
      %v4489 = vrot.slane %v4487, 4
      %v4490 = vor.u32 %v4489, %v4485
      %v4491 = vrot.slane %v4490, 4
      %v4493 = vshll.u32 %v4322, 16
      %v4495 = vrot.slane %v4493, 5
      %v4496 = vsel %vm988, %v4491, %v4495
      %v4498 = vshrl.u32 %v4323, 16
      %v4500 = vrot.slane %v4498, 4
      %v4501 = vshll.u32 %v4323, 16
      %v4503 = vrot.slane %v4501, 5
      %v4504 = vor.u32 %v4500, %v4503
      %v4505 = vrot.slane %v4504, 4
      %v4507 = vshll.u32 %v4324, 16
      %v4509 = vrot.slane %v4507, 5
      %v4510 = vsel %vm988, %v4505, %v4509
      %v4511 = vshrl.u32 %v4324, 16
      %v4513 = vrot.slane %v4511, 4
      %v4514 = vor.u32 %v4513, %v4509
      %v4515 = vrot.slane %v4514, 4
      %v4517 = vshll.u32 %v4325, 16
      %v4519 = vrot.slane %v4517, 5
      %v4520 = vsel %vm988, %v4515, %v4519
      %v4522 = vshrl.u32 %v4326, 16
      %v4524 = vrot.slane %v4522, 4
      %v4525 = vshll.u32 %v4326, 16
      %v4527 = vrot.slane %v4525, 5
      %v4528 = vor.u32 %v4524, %v4527
      %v4529 = vrot.slane %v4528, 4
      %v4531 = vshll.u32 %v4327, 16
      %v4533 = vrot.slane %v4531, 5
      %v4534 = vsel %vm988, %v4529, %v4533
      %v4535 = vshrl.u32 %v4327, 16
      %v4537 = vrot.slane %v4535, 4
      %v4538 = vor.u32 %v4537, %v4533
      %v4539 = vrot.slane %v4538, 4
      %v4541 = vshll.u32 %v4328, 16
      %v4543 = vrot.slane %v4541, 5
      %v4544 = vsel %vm988, %v4539, %v4543
      %v4546 = vshrl.u32 %v4329, 16
      %v4548 = vrot.slane %v4546, 4
      %v4549 = vshll.u32 %v4329, 16
      %v4551 = vrot.slane %v4549, 5
      %v4552 = vor.u32 %v4548, %v4551
      %v4553 = vrot.slane %v4552, 4
      %v4555 = vshll.u32 %v4330, 16
      %v4557 = vrot.slane %v4555, 5
      %v4558 = vsel %vm988, %v4553, %v4557
      %v4559 = vshrl.u32 %v4330, 16
      %v4561 = vrot.slane %v4559, 4
      %v4562 = vor.u32 %v4561, %v4557
      %v4563 = vrot.slane %v4562, 4
      %v4565 = vshll.u32 %v4331, 16
      %v4567 = vrot.slane %v4565, 5
      %v4568 = vsel %vm988, %v4563, %v4567
      %v4570 = vshrl.u32 %v4332, 16
      %v4572 = vrot.slane %v4570, 4
      %v4573 = vshll.u32 %v4332, 16
      %v4575 = vrot.slane %v4573, 5
      %v4576 = vor.u32 %v4572, %v4575
      %v4577 = vrot.slane %v4576, 4
      %v4579 = vshll.u32 %v4333, 16
      %v4581 = vrot.slane %v4579, 5
      %v4582 = vsel %vm988, %v4577, %v4581
      %v4583 = vshrl.u32 %v4333, 16
      %v4585 = vrot.slane %v4583, 4
      %v4586 = vor.u32 %v4585, %v4581
      %v4587 = vrot.slane %v4586, 4
      %v4589 = vshll.u32 %v4334, 16
      %v4591 = vrot.slane %v4589, 5
      %v4592 = vsel %vm988, %v4587, %v4591
      %v4594 = vshrl.u32 %v4335, 16
      %v4596 = vrot.slane %v4594, 4
      %v4597 = vshll.u32 %v4335, 16
      %v4599 = vrot.slane %v4597, 5
      %v4600 = vor.u32 %v4596, %v4599
      %v4601 = vrot.slane %v4600, 4
      %v4603 = vshll.u32 %v4336, 16
      %v4605 = vrot.slane %v4603, 5
      %v4606 = vsel %vm988, %v4601, %v4605
      %v4607 = vshrl.u32 %v4336, 16
      %v4609 = vrot.slane %v4607, 4
      %v4610 = vor.u32 %v4609, %v4605
      %v4611 = vrot.slane %v4610, 4
      %v4613 = vshll.u32 %v4337, 16
      %v4615 = vrot.slane %v4613, 5
      %v4616 = vsel %vm988, %v4611, %v4615
      %v4618 = vshrl.u32 %v4338, 16
      %v4620 = vrot.slane %v4618, 4
      %v4621 = vshll.u32 %v4338, 16
      %v4623 = vrot.slane %v4621, 5
      %v4624 = vor.u32 %v4620, %v4623
      %v4625 = vrot.slane %v4624, 4
      %v4627 = vshll.u32 %v4339, 16
      %v4629 = vrot.slane %v4627, 5
      %v4630 = vsel %vm988, %v4625, %v4629
      %v4631 = vshrl.u32 %v4339, 16
      %v4633 = vrot.slane %v4631, 4
      %v4634 = vor.u32 %v4633, %v4629
      %v4635 = vrot.slane %v4634, 4
      %v4637 = vshll.u32 %v4340, 16
      %v4639 = vrot.slane %v4637, 5
      %v4640 = vsel %vm988, %v4635, %v4639
      %v4642 = vshrl.u32 %v4341, 16
      %v4644 = vrot.slane %v4642, 4
      %v4645 = vshll.u32 %v4341, 16
      %v4647 = vrot.slane %v4645, 5
      %v4648 = vor.u32 %v4644, %v4647
      %v4649 = vrot.slane %v4648, 4
      %v4651 = vshll.u32 %v4342, 16
      %v4653 = vrot.slane %v4651, 5
      %v4654 = vsel %vm988, %v4649, %v4653
      %v4655 = vshrl.u32 %v4342, 16
      %v4657 = vrot.slane %v4655, 4
      %v4658 = vor.u32 %v4657, %v4653
      %v4659 = vrot.slane %v4658, 4
      %v4661 = vshll.u32 %v4343, 16
      %v4663 = vrot.slane %v4661, 5
      %v4664 = vsel %vm988, %v4659, %v4663
      %v4666 = vshrl.u32 %v4344, 16
      %v4668 = vrot.slane %v4666, 4
      %v4669 = vshll.u32 %v4344, 16
      %v4671 = vrot.slane %v4669, 5
      %v4672 = vor.u32 %v4668, %v4671
      %v4673 = vrot.slane %v4672, 4
      %v4675 = vshll.u32 %v4345, 16
      %v4677 = vrot.slane %v4675, 5
      %v4678 = vsel %vm988, %v4673, %v4677
      %v4679 = vshrl.u32 %v4345, 16
      %v4681 = vrot.slane %v4679, 4
      %v4682 = vor.u32 %v4681, %v4677
      %v4683 = vrot.slane %v4682, 4
      %v4685 = vshll.u32 %v4346, 16
      %v4687 = vrot.slane %v4685, 5
      %v4688 = vsel %vm988, %v4683, %v4687
      %v4690 = vshrl.u32 %v4347, 16
      %v4692 = vrot.slane %v4690, 4
      %v4693 = vshll.u32 %v4347, 16
      %v4695 = vrot.slane %v4693, 5
      %v4696 = vor.u32 %v4692, %v4695
      %v4697 = vrot.slane %v4696, 4
      %v4699 = vshll.u32 %v4348, 16
      %v4701 = vrot.slane %v4699, 5
      %v4702 = vsel %vm988, %v4697, %v4701
      %v4703 = vshrl.u32 %v4348, 16
      %v4705 = vrot.slane %v4703, 4
      %v4706 = vor.u32 %v4705, %v4701
      %v4707 = vrot.slane %v4706, 4
      %v4709 = vshll.u32 %v4349, 16
      %v4711 = vrot.slane %v4709, 5
      %v4712 = vsel %vm988, %v4707, %v4711
      %v4714 = vshrl.u32 %v4350, 16
      %v4716 = vrot.slane %v4714, 4
      %v4717 = vshll.u32 %v4350, 16
      %v4719 = vrot.slane %v4717, 5
      %v4720 = vor.u32 %v4716, %v4719
      %v4721 = vrot.slane %v4720, 4
      %v4723 = vshll.u32 %v4351, 16
      %v4725 = vrot.slane %v4723, 5
      %v4726 = vsel %vm988, %v4721, %v4725
      %v4727 = vshrl.u32 %v4351, 16
      %v4729 = vrot.slane %v4727, 4
      %v4730 = vor.u32 %v4729, %v4725
      %v4731 = vrot.slane %v4730, 4
      %v4733 = vshll.u32 %v4352, 16
      %v4735 = vrot.slane %v4733, 5
      %v4736 = vsel %vm988, %v4731, %v4735
      %v4737 = vld [vmem:[%s1 + $0xc] sm:$0xc]
      %v4738 = vunpack.c.l.b16 %v4366
      %v4739 = vunpack.c.l.b16 %v4376
      %v4740 = vunpack.c.l.b16 %v4390
      %v4741 = vunpack.c.l.b16 %v4400
      %v4742 = vunpack.c.l.b16 %v4414
      %v4743 = vunpack.c.l.b16 %v4424
      %v4744 = vunpack.c.l.b16 %v4438
      %v4745 = vunpack.c.l.b16 %v4448
      %v4746 = vunpack.c.l.b16 %v4462
      %v4747 = vunpack.c.l.b16 %v4472
      %v4748 = vunpack.c.l.b16 %v4486
      %v4749 = vunpack.c.l.b16 %v4496
      %v4750 = vunpack.c.l.b16 %v4510
      %v4751 = vunpack.c.l.b16 %v4520
      %v4752 = vunpack.c.l.b16 %v4534
      %v4753 = vunpack.c.l.b16 %v4544
      %v4754 = vunpack.c.l.b16 %v4558
      %v4755 = vunpack.c.l.b16 %v4568
      %v4756 = vunpack.c.l.b16 %v4582
      %v4757 = vunpack.c.l.b16 %v4592
      %v4758 = vunpack.c.l.b16 %v4606
      %v4759 = vunpack.c.l.b16 %v4616
      %v4760 = vunpack.c.l.b16 %v4630
      %v4761 = vunpack.c.l.b16 %v4640
      %v4762 = vunpack.c.l.b16 %v4654
      %v4763 = vunpack.c.l.b16 %v4664
      %v4764 = vunpack.c.l.b16 %v4678
      %v4765 = vunpack.c.l.b16 %v4688
      %v4766 = vunpack.c.l.b16 %v4702
      %v4767 = vunpack.c.l.b16 %v4712
      %v4768 = vunpack.c.l.b16 %v4726
      %v4769 = vunpack.c.l.b16 %v4736
      %v4770 = vpack.c.b16 %v4739, %v4738
      %v4771 = vpack.c.b16 %v4741, %v4740
      %v4772 = vpack.c.b16 %v4743, %v4742
      %v4773 = vpack.c.b16 %v4745, %v4744
      %v4774 = vpack.c.b16 %v4747, %v4746
      %v4775 = vpack.c.b16 %v4749, %v4748
      %v4776 = vpack.c.b16 %v4751, %v4750
      %v4777 = vpack.c.b16 %v4753, %v4752
      %v4778 = vpack.c.b16 %v4755, %v4754
      %v4779 = vpack.c.b16 %v4757, %v4756
      %v4780 = vpack.c.b16 %v4759, %v4758
      %v4781 = vpack.c.b16 %v4761, %v4760
      %v4782 = vpack.c.b16 %v4763, %v4762
      %v4783 = vpack.c.b16 %v4765, %v4764
      %v4784 = vpack.c.b16 %v4767, %v4766
      %v4785 = vpack.c.b16 %v4769, %v4768
      %v4787 = vunpack.c.l.b16 %v4737
      %v4788 = vpack.c.b16 %v4787, %v4787
      %v4789 = vrot.slane %v4788, 2
      %v4791 = vsel %vm1426, %v4770, 0
      %v4794 = vsel %vm1426, %v4771, 0
      %v4797 = vsel %vm1426, %v4772, 0
      %v4800 = vsel %vm1426, %v4773, 0
      %v4803 = vsel %vm1426, %v4774, 0
      %v4806 = vsel %vm1426, %v4775, 0
      %v4809 = vsel %vm1426, %v4776, 0
      %v4812 = vsel %vm1426, %v4777, 0
      %v4815 = vsel %vm1426, %v4778, 0
      %v4818 = vsel %vm1426, %v4779, 0
      %v4821 = vsel %vm1426, %v4780, 0
      %v4824 = vsel %vm1426, %v4781, 0
      %v4827 = vsel %vm1426, %v4782, 0
      %v4830 = vsel %vm1426, %v4783, 0
      %v4833 = vsel %vm1426, %v4784, 0
      %v4836 = vsel %vm1426, %v4785, 0
      %v4839 = vsel %vm1475, %v4789, 0
      %4841 = vmatprep.subr.bf16.mxu0 0
      %4842 = vmatpush1.bf16.msra.mxu0 0
      %4843 = vmatprep.subr.bf16.mxu0 0
      %4844 = vmatpush1.bf16.msra.mxu0 0
      %4845 = vmatprep.subr.bf16.mxu0 0
      %4846 = vmatpush1.bf16.msra.mxu0 0
      %4847 = vmatprep.subr.bf16.mxu0 0
      %4848 = vmatpush1.bf16.msra.mxu0 0
      %4849 = vmatprep.subr.bf16.mxu0 0
      %4850 = vmatpush1.bf16.msra.mxu0 0
      %4851 = vmatprep.subr.bf16.mxu0 0
      %4852 = vmatpush1.bf16.msra.mxu0 0
      %4853 = vmatprep.subr.bf16.mxu0 0
      %4854 = vmatpush1.bf16.msra.mxu0 0
      %4855 = vmatprep.subr.bf16.mxu0 0
      %4856 = vmatpush1.bf16.msra.mxu0 %v4839
      %4857 = vmatprep.subr.bf16.mxu0 0
      %4858 = vmatpush2.bf16.msra.mxu0 0
      %4859 = vmatprep.subr.bf16.mxu0 0
      %4860 = vmatpush2.bf16.msra.mxu0 0
      %4861 = vmatprep.subr.bf16.mxu0 0
      %4862 = vmatpush2.bf16.msra.mxu0 0
      %4863 = vmatprep.subr.bf16.mxu0 0
      %4864 = vmatpush2.bf16.msra.mxu0 0
      %4865 = vmatprep.subr.bf16.mxu0 0
      %4866 = vmatpush2.bf16.msra.mxu0 0
      %4867 = vmatprep.subr.bf16.mxu0 0
      %4868 = vmatpush2.bf16.msra.mxu0 0
      %4869 = vmatprep.subr.bf16.mxu0 0
      %4870 = vmatpush2.bf16.msra.mxu0 0
      %4871 = vmatprep.subr.bf16.mxu0 0
      %4872 = vmatpush2.bf16.msra.mxu0 0
      %4873 = vmatprep.mubr.bf16.mxu0 0
      %4874 = vmatmul.mubr.bf16.gmra.mxu0 %v4791
      %v4875 = vpop.f32.mrf.mxu0
      %v4876 = vadd.f32 0.0, %v4875
      %v4877 = vpop.f32.mrf.mxu0
      %v4878 = vpop.f32.mrf.mxu0
      %v4879 = vadd.f32 0.0, %v4878
      %v4880 = vpop.f32.mrf.mxu0
      %4881 = vmatprep.mubr.bf16.mxu0 0
      %4882 = vmatmul.mubr.bf16.gmra.mxu0 %v4794
      %v4883 = vpop.f32.mrf.mxu0
      %v4884 = vadd.f32 0.0, %v4883
      %v4885 = vpop.f32.mrf.mxu0
      %v4886 = vpop.f32.mrf.mxu0
      %v4887 = vadd.f32 0.0, %v4886
      %v4888 = vpop.f32.mrf.mxu0
      %4889 = vmatprep.mubr.bf16.mxu0 0
      %4890 = vmatmul.mubr.bf16.gmra.mxu0 %v4797
      %v4891 = vpop.f32.mrf.mxu0
      %v4892 = vadd.f32 0.0, %v4891
      %v4893 = vpop.f32.mrf.mxu0
      %v4894 = vpop.f32.mrf.mxu0
      %v4895 = vadd.f32 0.0, %v4894
      %v4896 = vpop.f32.mrf.mxu0
      %4897 = vmatprep.mubr.bf16.mxu0 0
      %4898 = vmatmul.mubr.bf16.gmra.mxu0 %v4800
      %v4899 = vpop.f32.mrf.mxu0
      %v4900 = vadd.f32 0.0, %v4899
      %v4901 = vpop.f32.mrf.mxu0
      %v4902 = vpop.f32.mrf.mxu0
      %v4903 = vadd.f32 0.0, %v4902
      %v4904 = vpop.f32.mrf.mxu0
      %4905 = vmatprep.mubr.bf16.mxu0 0
      %4906 = vmatmul.mubr.bf16.gmra.mxu0 %v4803
      %v4907 = vpop.f32.mrf.mxu0
      %v4908 = vadd.f32 0.0, %v4907
      %v4909 = vpop.f32.mrf.mxu0
      %v4910 = vpop.f32.mrf.mxu0
      %v4911 = vadd.f32 0.0, %v4910
      %v4912 = vpop.f32.mrf.mxu0
      %4913 = vmatprep.mubr.bf16.mxu0 0
      %4914 = vmatmul.mubr.bf16.gmra.mxu0 %v4806
      %v4915 = vpop.f32.mrf.mxu0
      %v4916 = vadd.f32 0.0, %v4915
      %v4917 = vpop.f32.mrf.mxu0
      %v4918 = vpop.f32.mrf.mxu0
      %v4919 = vadd.f32 0.0, %v4918
      %v4920 = vpop.f32.mrf.mxu0
      %4921 = vmatprep.mubr.bf16.mxu0 0
      %4922 = vmatmul.mubr.bf16.gmra.mxu0 %v4809
      %v4923 = vpop.f32.mrf.mxu0
      %v4924 = vadd.f32 0.0, %v4923
      %v4925 = vpop.f32.mrf.mxu0
      %v4926 = vpop.f32.mrf.mxu0
      %v4927 = vadd.f32 0.0, %v4926
      %v4928 = vpop.f32.mrf.mxu0
      %4929 = vmatprep.mubr.bf16.mxu0 0
      %4930 = vmatmul.mubr.bf16.gmra.mxu0 %v4812
      %v4931 = vpop.f32.mrf.mxu0
      %v4932 = vadd.f32 0.0, %v4931
      %v4933 = vpop.f32.mrf.mxu0
      %v4934 = vpop.f32.mrf.mxu0
      %v4935 = vadd.f32 0.0, %v4934
      %v4936 = vpop.f32.mrf.mxu0
      %4937 = vmatprep.mubr.bf16.mxu0 0
      %4938 = vmatmul.mubr.bf16.gmra.mxu0 %v4815
      %v4939 = vpop.f32.mrf.mxu0
      %v4940 = vadd.f32 0.0, %v4939
      %v4941 = vpop.f32.mrf.mxu0
      %v4942 = vpop.f32.mrf.mxu0
      %v4943 = vadd.f32 0.0, %v4942
      %v4944 = vpop.f32.mrf.mxu0
      %4945 = vmatprep.mubr.bf16.mxu0 0
      %4946 = vmatmul.mubr.bf16.gmra.mxu0 %v4818
      %v4947 = vpop.f32.mrf.mxu0
      %v4948 = vadd.f32 0.0, %v4947
      %v4949 = vpop.f32.mrf.mxu0
      %v4950 = vpop.f32.mrf.mxu0
      %v4951 = vadd.f32 0.0, %v4950
      %v4952 = vpop.f32.mrf.mxu0
      %4953 = vmatprep.mubr.bf16.mxu0 0
      %4954 = vmatmul.mubr.bf16.gmra.mxu0 %v4821
      %v4955 = vpop.f32.mrf.mxu0
      %v4956 = vadd.f32 0.0, %v4955
      %v4957 = vpop.f32.mrf.mxu0
      %v4958 = vpop.f32.mrf.mxu0
      %v4959 = vadd.f32 0.0, %v4958
      %v4960 = vpop.f32.mrf.mxu0
      %4961 = vmatprep.mubr.bf16.mxu0 0
      %4962 = vmatmul.mubr.bf16.gmra.mxu0 %v4824
      %v4963 = vpop.f32.mrf.mxu0
      %v4964 = vadd.f32 0.0, %v4963
      %v4965 = vpop.f32.mrf.mxu0
      %v4966 = vpop.f32.mrf.mxu0
      %v4967 = vadd.f32 0.0, %v4966
      %v4968 = vpop.f32.mrf.mxu0
      %4969 = vmatprep.mubr.bf16.mxu0 0
      %4970 = vmatmul.mubr.bf16.gmra.mxu0 %v4827
      %v4971 = vpop.f32.mrf.mxu0
      %v4972 = vadd.f32 0.0, %v4971
      %v4973 = vpop.f32.mrf.mxu0
      %v4974 = vpop.f32.mrf.mxu0
      %v4975 = vadd.f32 0.0, %v4974
      %v4976 = vpop.f32.mrf.mxu0
      %4977 = vmatprep.mubr.bf16.mxu0 0
      %4978 = vmatmul.mubr.bf16.gmra.mxu0 %v4830
      %v4979 = vpop.f32.mrf.mxu0
      %v4980 = vadd.f32 0.0, %v4979
      %v4981 = vpop.f32.mrf.mxu0
      %v4982 = vpop.f32.mrf.mxu0
      %v4983 = vadd.f32 0.0, %v4982
      %v4984 = vpop.f32.mrf.mxu0
      %4985 = vmatprep.mubr.bf16.mxu0 0
      %4986 = vmatmul.mubr.bf16.gmra.mxu0 %v4833
      %v4987 = vpop.f32.mrf.mxu0
      %v4988 = vadd.f32 0.0, %v4987
      %v4989 = vpop.f32.mrf.mxu0
      %v4990 = vpop.f32.mrf.mxu0
      %v4991 = vadd.f32 0.0, %v4990
      %v4992 = vpop.f32.mrf.mxu0
      %4993 = vmatprep.mubr.bf16.mxu0 0
      %4994 = vmatmul.mubr.bf16.gmra.mxu0 %v4836
      %v4995 = vpop.f32.mrf.mxu0
      %v4996 = vadd.f32 0.0, %v4995
      %v4997 = vpop.f32.mrf.mxu0
      %v4998 = vpop.f32.mrf.mxu0
      %v4999 = vadd.f32 0.0, %v4998
      %v5000 = vpop.f32.mrf.mxu0
      %5001 = vdwg.mxu0
      %v5002 = vadd.f32 %v4273, %v4876
      %v5003 = vadd.f32 %v4274, %v4879
      %v5004 = vadd.f32 %v4275, %v4884
      %v5005 = vadd.f32 %v4276, %v4887
      %v5006 = vadd.f32 %v4277, %v4892
      %v5007 = vadd.f32 %v4278, %v4895
      %v5008 = vadd.f32 %v4279, %v4900
      %v5009 = vadd.f32 %v4280, %v4903
      %v5010 = vadd.f32 %v4281, %v4908
      %v5011 = vadd.f32 %v4282, %v4911
      %v5012 = vadd.f32 %v4283, %v4916
      %v5013 = vadd.f32 %v4284, %v4919
      %v5014 = vadd.f32 %v4285, %v4924
      %v5015 = vadd.f32 %v4286, %v4927
      %v5016 = vadd.f32 %v4287, %v4932
      %v5017 = vadd.f32 %v4288, %v4935
      %v5018 = vadd.f32 %v4289, %v4940
      %v5019 = vadd.f32 %v4290, %v4943
      %v5020 = vadd.f32 %v4291, %v4948
      %v5021 = vadd.f32 %v4292, %v4951
      %v5022 = vadd.f32 %v4293, %v4956
      %v5023 = vadd.f32 %v4294, %v4959
      %v5024 = vadd.f32 %v4295, %v4964
      %v5025 = vadd.f32 %v4296, %v4967
      %v5026 = vadd.f32 %v4297, %v4972
      %v5027 = vadd.f32 %v4298, %v4975
      %v5028 = vadd.f32 %v4299, %v4980
      %v5029 = vadd.f32 %v4300, %v4983
      %v5030 = vadd.f32 %v4301, %v4988
      %v5031 = vadd.f32 %v4302, %v4991
      %v5032 = vadd.f32 %v4303, %v4996
      %v5033 = vadd.f32 %v4304, %v4999
      %v5034 = vld [vmem:[%s3947] sm:$0xe]
      %v5035 = vld [vmem:[%s3947 + $0xc] sm:$0xe]
      %v5036 = vld [vmem:[%s3947 + $0x18] sm:$0xe]
      %v5037 = vld [vmem:[%s3947 + $0x24] sm:$0xe]
      %v5038 = vld [vmem:[%s3947 + $0x30] sm:$0xe]
      %v5039 = vld [vmem:[%s3947 + $0x3c] sm:$0xe]
      %v5040 = vld [vmem:[%s3947 + $0x48] sm:$0xe]
      %v5041 = vld [vmem:[%s3947 + $0x54] sm:$0xe]
      %v5042 = vld [vmem:[%s3947 + $0x60] sm:$0xe]
      %v5043 = vld [vmem:[%s3947 + $0x6c] sm:$0xe]
      %v5044 = vld [vmem:[%s3947 + $0x78] sm:$0xe]
      %v5045 = vld [vmem:[%s3947 + $0x84] sm:$0xe]
      %v5046 = vld [vmem:[%s3947 + $0x90] sm:$0xe]
      %v5047 = vld [vmem:[%s3947 + $0x9c] sm:$0xe]
      %v5048 = vld [vmem:[%s3947 + $0xa8] sm:$0xe]
      %v5049 = vld [vmem:[%s3947 + $0xb4] sm:$0xe]
      %v5098 = vrot.slane %v5034, 5
      %v5099 = vrot.slane %v5098, 4
      %v5100 = vrot.slane %v4306, 5
      %v5101 = vsel %vm1982, %v5099, %v5100
      %v5102 = vrot.slane %v5100, 4
      %v5103 = vrot.slane %v4307, 5
      %v5104 = vsel %vm1982, %v5102, %v5103
      %v5105 = vrot.slane %v5035, 5
      %v5106 = vrot.slane %v5105, 4
      %v5107 = vrot.slane %v4309, 5
      %v5108 = vsel %vm1982, %v5106, %v5107
      %v5109 = vrot.slane %v5107, 4
      %v5110 = vrot.slane %v4310, 5
      %v5111 = vsel %vm1982, %v5109, %v5110
      %v5112 = vrot.slane %v5036, 5
      %v5113 = vrot.slane %v5112, 4
      %v5114 = vrot.slane %v4312, 5
      %v5115 = vsel %vm1982, %v5113, %v5114
      %v5116 = vrot.slane %v5114, 4
      %v5117 = vrot.slane %v4313, 5
      %v5118 = vsel %vm1982, %v5116, %v5117
      %v5119 = vrot.slane %v5037, 5
      %v5120 = vrot.slane %v5119, 4
      %v5121 = vrot.slane %v4315, 5
      %v5122 = vsel %vm1982, %v5120, %v5121
      %v5123 = vrot.slane %v5121, 4
      %v5124 = vrot.slane %v4316, 5
      %v5125 = vsel %vm1982, %v5123, %v5124
      %v5126 = vrot.slane %v5038, 5
      %v5127 = vrot.slane %v5126, 4
      %v5128 = vrot.slane %v4318, 5
      %v5129 = vsel %vm1982, %v5127, %v5128
      %v5130 = vrot.slane %v5128, 4
      %v5131 = vrot.slane %v4319, 5
      %v5132 = vsel %vm1982, %v5130, %v5131
      %v5133 = vrot.slane %v5039, 5
      %v5134 = vrot.slane %v5133, 4
      %v5135 = vrot.slane %v4321, 5
      %v5136 = vsel %vm1982, %v5134, %v5135
      %v5137 = vrot.slane %v5135, 4
      %v5138 = vrot.slane %v4322, 5
      %v5139 = vsel %vm1982, %v5137, %v5138
      %v5140 = vrot.slane %v5040, 5
      %v5141 = vrot.slane %v5140, 4
      %v5142 = vrot.slane %v4324, 5
      %v5143 = vsel %vm1982, %v5141, %v5142
      %v5144 = vrot.slane %v5142, 4
      %v5145 = vrot.slane %v4325, 5
      %v5146 = vsel %vm1982, %v5144, %v5145
      %v5147 = vrot.slane %v5041, 5
      %v5148 = vrot.slane %v5147, 4
      %v5149 = vrot.slane %v4327, 5
      %v5150 = vsel %vm1982, %v5148, %v5149
      %v5151 = vrot.slane %v5149, 4
      %v5152 = vrot.slane %v4328, 5
      %v5153 = vsel %vm1982, %v5151, %v5152
      %v5154 = vrot.slane %v5042, 5
      %v5155 = vrot.slane %v5154, 4
      %v5156 = vrot.slane %v4330, 5
      %v5157 = vsel %vm1982, %v5155, %v5156
      %v5158 = vrot.slane %v5156, 4
      %v5159 = vrot.slane %v4331, 5
      %v5160 = vsel %vm1982, %v5158, %v5159
      %v5161 = vrot.slane %v5043, 5
      %v5162 = vrot.slane %v5161, 4
      %v5163 = vrot.slane %v4333, 5
      %v5164 = vsel %vm1982, %v5162, %v5163
      %v5165 = vrot.slane %v5163, 4
      %v5166 = vrot.slane %v4334, 5
      %v5167 = vsel %vm1982, %v5165, %v5166
      %v5168 = vrot.slane %v5044, 5
      %v5169 = vrot.slane %v5168, 4
      %v5170 = vrot.slane %v4336, 5
      %v5171 = vsel %vm1982, %v5169, %v5170
      %v5172 = vrot.slane %v5170, 4
      %v5173 = vrot.slane %v4337, 5
      %v5174 = vsel %vm1982, %v5172, %v5173
      %v5175 = vrot.slane %v5045, 5
      %v5176 = vrot.slane %v5175, 4
      %v5177 = vrot.slane %v4339, 5
      %v5178 = vsel %vm1982, %v5176, %v5177
      %v5179 = vrot.slane %v5177, 4
      %v5180 = vrot.slane %v4340, 5
      %v5181 = vsel %vm1982, %v5179, %v5180
      %v5182 = vrot.slane %v5046, 5
      %v5183 = vrot.slane %v5182, 4
      %v5184 = vrot.slane %v4342, 5
      %v5185 = vsel %vm1982, %v5183, %v5184
      %v5186 = vrot.slane %v5184, 4
      %v5187 = vrot.slane %v4343, 5
      %v5188 = vsel %vm1982, %v5186, %v5187
      %v5189 = vrot.slane %v5047, 5
      %v5190 = vrot.slane %v5189, 4
      %v5191 = vrot.slane %v4345, 5
      %v5192 = vsel %vm1982, %v5190, %v5191
      %v5193 = vrot.slane %v5191, 4
      %v5194 = vrot.slane %v4346, 5
      %v5195 = vsel %vm1982, %v5193, %v5194
      %v5196 = vrot.slane %v5048, 5
      %v5197 = vrot.slane %v5196, 4
      %v5198 = vrot.slane %v4348, 5
      %v5199 = vsel %vm1982, %v5197, %v5198
      %v5200 = vrot.slane %v5198, 4
      %v5201 = vrot.slane %v4349, 5
      %v5202 = vsel %vm1982, %v5200, %v5201
      %v5203 = vrot.slane %v5049, 5
      %v5204 = vrot.slane %v5203, 4
      %v5205 = vrot.slane %v4351, 5
      %v5206 = vsel %vm1982, %v5204, %v5205
      %v5207 = vrot.slane %v5205, 4
      %v5208 = vrot.slane %v4352, 5
      %v5209 = vsel %vm1982, %v5207, %v5208
      %v5210 = vld [vmem:[%s1 + $0x10] sm:$0x3]
      %v5211 = vunpack.c.l.b16 %v5101
      %v5212 = vunpack.c.l.b16 %v5104
      %v5213 = vunpack.c.l.b16 %v5108
      %v5214 = vunpack.c.l.b16 %v5111
      %v5215 = vunpack.c.l.b16 %v5115
      %v5216 = vunpack.c.l.b16 %v5118
      %v5217 = vunpack.c.l.b16 %v5122
      %v5218 = vunpack.c.l.b16 %v5125
      %v5219 = vunpack.c.l.b16 %v5129
      %v5220 = vunpack.c.l.b16 %v5132
      %v5221 = vunpack.c.l.b16 %v5136
      %v5222 = vunpack.c.l.b16 %v5139
      %v5223 = vunpack.c.l.b16 %v5143
      %v5224 = vunpack.c.l.b16 %v5146
      %v5225 = vunpack.c.l.b16 %v5150
      %v5226 = vunpack.c.l.b16 %v5153
      %v5227 = vunpack.c.l.b16 %v5157
      %v5228 = vunpack.c.l.b16 %v5160
      %v5229 = vunpack.c.l.b16 %v5164
      %v5230 = vunpack.c.l.b16 %v5167
      %v5231 = vunpack.c.l.b16 %v5171
      %v5232 = vunpack.c.l.b16 %v5174
      %v5233 = vunpack.c.l.b16 %v5178
      %v5234 = vunpack.c.l.b16 %v5181
      %v5235 = vunpack.c.l.b16 %v5185
      %v5236 = vunpack.c.l.b16 %v5188
      %v5237 = vunpack.c.l.b16 %v5192
      %v5238 = vunpack.c.l.b16 %v5195
      %v5239 = vunpack.c.l.b16 %v5199
      %v5240 = vunpack.c.l.b16 %v5202
      %v5241 = vunpack.c.l.b16 %v5206
      %v5242 = vunpack.c.l.b16 %v5209
      %v5243 = vpack.c.b16 %v5212, %v5211
      %v5244 = vpack.c.b16 %v5214, %v5213
      %v5245 = vpack.c.b16 %v5216, %v5215
      %v5246 = vpack.c.b16 %v5218, %v5217
      %v5247 = vpack.c.b16 %v5220, %v5219
      %v5248 = vpack.c.b16 %v5222, %v5221
      %v5249 = vpack.c.b16 %v5224, %v5223
      %v5250 = vpack.c.b16 %v5226, %v5225
      %v5251 = vpack.c.b16 %v5228, %v5227
      %v5252 = vpack.c.b16 %v5230, %v5229
      %v5253 = vpack.c.b16 %v5232, %v5231
      %v5254 = vpack.c.b16 %v5234, %v5233
      %v5255 = vpack.c.b16 %v5236, %v5235
      %v5256 = vpack.c.b16 %v5238, %v5237
      %v5257 = vpack.c.b16 %v5240, %v5239
      %v5258 = vpack.c.b16 %v5242, %v5241
      %v5260 = vsel %vm1426, %v5243, 0
      %v5263 = vsel %vm1426, %v5244, 0
      %v5266 = vsel %vm1426, %v5245, 0
      %v5269 = vsel %vm1426, %v5246, 0
      %v5272 = vsel %vm1426, %v5247, 0
      %v5275 = vsel %vm1426, %v5248, 0
      %v5278 = vsel %vm1426, %v5249, 0
      %v5281 = vsel %vm1426, %v5250, 0
      %v5284 = vsel %vm1426, %v5251, 0
      %v5287 = vsel %vm1426, %v5252, 0
      %v5290 = vsel %vm1426, %v5253, 0
      %v5293 = vsel %vm1426, %v5254, 0
      %v5296 = vsel %vm1426, %v5255, 0
      %v5299 = vsel %vm1426, %v5256, 0
      %v5302 = vsel %vm1426, %v5257, 0
      %v5305 = vsel %vm1426, %v5258, 0
      %v5308 = vsel %vm1475, %v5210, 0
      %5310 = vmatprep.subr.bf16.mxu0 0
      %5311 = vmatpush1.bf16.msra.mxu0 0
      %5312 = vmatprep.subr.bf16.mxu0 0
      %5313 = vmatpush1.bf16.msra.mxu0 0
      %5314 = vmatprep.subr.bf16.mxu0 0
      %5315 = vmatpush1.bf16.msra.mxu0 0
      %5316 = vmatprep.subr.bf16.mxu0 0
      %5317 = vmatpush1.bf16.msra.mxu0 0
      %5318 = vmatprep.subr.bf16.mxu0 0
      %5319 = vmatpush1.bf16.msra.mxu0 0
      %5320 = vmatprep.subr.bf16.mxu0 0
      %5321 = vmatpush1.bf16.msra.mxu0 0
      %5322 = vmatprep.subr.bf16.mxu0 0
      %5323 = vmatpush1.bf16.msra.mxu0 0
      %5324 = vmatprep.subr.bf16.mxu0 0
      %5325 = vmatpush1.bf16.msra.mxu0 %v5308
      %5326 = vmatprep.subr.bf16.mxu0 0
      %5327 = vmatpush2.bf16.msra.mxu0 0
      %5328 = vmatprep.subr.bf16.mxu0 0
      %5329 = vmatpush2.bf16.msra.mxu0 0
      %5330 = vmatprep.subr.bf16.mxu0 0
      %5331 = vmatpush2.bf16.msra.mxu0 0
      %5332 = vmatprep.subr.bf16.mxu0 0
      %5333 = vmatpush2.bf16.msra.mxu0 0
      %5334 = vmatprep.subr.bf16.mxu0 0
      %5335 = vmatpush2.bf16.msra.mxu0 0
      %5336 = vmatprep.subr.bf16.mxu0 0
      %5337 = vmatpush2.bf16.msra.mxu0 0
      %5338 = vmatprep.subr.bf16.mxu0 0
      %5339 = vmatpush2.bf16.msra.mxu0 0
      %5340 = vmatprep.subr.bf16.mxu0 0
      %5341 = vmatpush2.bf16.msra.mxu0 0
      %5342 = vmatprep.mubr.bf16.mxu0 0
      %5343 = vmatmul.mubr.bf16.gmra.mxu0 %v5260
      %v5344 = vpop.f32.mrf.mxu0
      %v5345 = vadd.f32 0.0, %v5344
      %v5346 = vpop.f32.mrf.mxu0
      %v5347 = vpop.f32.mrf.mxu0
      %v5348 = vadd.f32 0.0, %v5347
      %v5349 = vpop.f32.mrf.mxu0
      %5350 = vmatprep.mubr.bf16.mxu0 0
      %5351 = vmatmul.mubr.bf16.gmra.mxu0 %v5263
      %v5352 = vpop.f32.mrf.mxu0
      %v5353 = vadd.f32 0.0, %v5352
      %v5354 = vpop.f32.mrf.mxu0
      %v5355 = vpop.f32.mrf.mxu0
      %v5356 = vadd.f32 0.0, %v5355
      %v5357 = vpop.f32.mrf.mxu0
      %5358 = vmatprep.mubr.bf16.mxu0 0
      %5359 = vmatmul.mubr.bf16.gmra.mxu0 %v5266
      %v5360 = vpop.f32.mrf.mxu0
      %v5361 = vadd.f32 0.0, %v5360
      %v5362 = vpop.f32.mrf.mxu0
      %v5363 = vpop.f32.mrf.mxu0
      %v5364 = vadd.f32 0.0, %v5363
      %v5365 = vpop.f32.mrf.mxu0
      %5366 = vmatprep.mubr.bf16.mxu0 0
      %5367 = vmatmul.mubr.bf16.gmra.mxu0 %v5269
      %v5368 = vpop.f32.mrf.mxu0
      %v5369 = vadd.f32 0.0, %v5368
      %v5370 = vpop.f32.mrf.mxu0
      %v5371 = vpop.f32.mrf.mxu0
      %v5372 = vadd.f32 0.0, %v5371
      %v5373 = vpop.f32.mrf.mxu0
      %5374 = vmatprep.mubr.bf16.mxu0 0
      %5375 = vmatmul.mubr.bf16.gmra.mxu0 %v5272
      %v5376 = vpop.f32.mrf.mxu0
      %v5377 = vadd.f32 0.0, %v5376
      %v5378 = vpop.f32.mrf.mxu0
      %v5379 = vpop.f32.mrf.mxu0
      %v5380 = vadd.f32 0.0, %v5379
      %v5381 = vpop.f32.mrf.mxu0
      %5382 = vmatprep.mubr.bf16.mxu0 0
      %5383 = vmatmul.mubr.bf16.gmra.mxu0 %v5275
      %v5384 = vpop.f32.mrf.mxu0
      %v5385 = vadd.f32 0.0, %v5384
      %v5386 = vpop.f32.mrf.mxu0
      %v5387 = vpop.f32.mrf.mxu0
      %v5388 = vadd.f32 0.0, %v5387
      %v5389 = vpop.f32.mrf.mxu0
      %5390 = vmatprep.mubr.bf16.mxu0 0
      %5391 = vmatmul.mubr.bf16.gmra.mxu0 %v5278
      %v5392 = vpop.f32.mrf.mxu0
      %v5393 = vadd.f32 0.0, %v5392
      %v5394 = vpop.f32.mrf.mxu0
      %v5395 = vpop.f32.mrf.mxu0
      %v5396 = vadd.f32 0.0, %v5395
      %v5397 = vpop.f32.mrf.mxu0
      %5398 = vmatprep.mubr.bf16.mxu0 0
      %5399 = vmatmul.mubr.bf16.gmra.mxu0 %v5281
      %v5400 = vpop.f32.mrf.mxu0
      %v5401 = vadd.f32 0.0, %v5400
      %v5402 = vpop.f32.mrf.mxu0
      %v5403 = vpop.f32.mrf.mxu0
      %v5404 = vadd.f32 0.0, %v5403
      %v5405 = vpop.f32.mrf.mxu0
      %5406 = vmatprep.mubr.bf16.mxu0 0
      %5407 = vmatmul.mubr.bf16.gmra.mxu0 %v5284
      %v5408 = vpop.f32.mrf.mxu0
      %v5409 = vadd.f32 0.0, %v5408
      %v5410 = vpop.f32.mrf.mxu0
      %v5411 = vpop.f32.mrf.mxu0
      %v5412 = vadd.f32 0.0, %v5411
      %v5413 = vpop.f32.mrf.mxu0
      %5414 = vmatprep.mubr.bf16.mxu0 0
      %5415 = vmatmul.mubr.bf16.gmra.mxu0 %v5287
      %v5416 = vpop.f32.mrf.mxu0
      %v5417 = vadd.f32 0.0, %v5416
      %v5418 = vpop.f32.mrf.mxu0
      %v5419 = vpop.f32.mrf.mxu0
      %v5420 = vadd.f32 0.0, %v5419
      %v5421 = vpop.f32.mrf.mxu0
      %5422 = vmatprep.mubr.bf16.mxu0 0
      %5423 = vmatmul.mubr.bf16.gmra.mxu0 %v5290
      %v5424 = vpop.f32.mrf.mxu0
      %v5425 = vadd.f32 0.0, %v5424
      %v5426 = vpop.f32.mrf.mxu0
      %v5427 = vpop.f32.mrf.mxu0
      %v5428 = vadd.f32 0.0, %v5427
      %v5429 = vpop.f32.mrf.mxu0
      %5430 = vmatprep.mubr.bf16.mxu0 0
      %5431 = vmatmul.mubr.bf16.gmra.mxu0 %v5293
      %v5432 = vpop.f32.mrf.mxu0
      %v5433 = vadd.f32 0.0, %v5432
      %v5434 = vpop.f32.mrf.mxu0
      %v5435 = vpop.f32.mrf.mxu0
      %v5436 = vadd.f32 0.0, %v5435
      %v5437 = vpop.f32.mrf.mxu0
      %5438 = vmatprep.mubr.bf16.mxu0 0
      %5439 = vmatmul.mubr.bf16.gmra.mxu0 %v5296
      %v5440 = vpop.f32.mrf.mxu0
      %v5441 = vadd.f32 0.0, %v5440
      %v5442 = vpop.f32.mrf.mxu0
      %v5443 = vpop.f32.mrf.mxu0
      %v5444 = vadd.f32 0.0, %v5443
      %v5445 = vpop.f32.mrf.mxu0
      %5446 = vmatprep.mubr.bf16.mxu0 0
      %5447 = vmatmul.mubr.bf16.gmra.mxu0 %v5299
      %v5448 = vpop.f32.mrf.mxu0
      %v5449 = vadd.f32 0.0, %v5448
      %v5450 = vpop.f32.mrf.mxu0
      %v5451 = vpop.f32.mrf.mxu0
      %v5452 = vadd.f32 0.0, %v5451
      %v5453 = vpop.f32.mrf.mxu0
      %5454 = vmatprep.mubr.bf16.mxu0 0
      %5455 = vmatmul.mubr.bf16.gmra.mxu0 %v5302
      %v5456 = vpop.f32.mrf.mxu0
      %v5457 = vadd.f32 0.0, %v5456
      %v5458 = vpop.f32.mrf.mxu0
      %v5459 = vpop.f32.mrf.mxu0
      %v5460 = vadd.f32 0.0, %v5459
      %v5461 = vpop.f32.mrf.mxu0
      %5462 = vmatprep.mubr.bf16.mxu0 0
      %5463 = vmatmul.mubr.bf16.gmra.mxu0 %v5305
      %v5464 = vpop.f32.mrf.mxu0
      %v5465 = vadd.f32 0.0, %v5464
      %v5466 = vpop.f32.mrf.mxu0
      %v5467 = vpop.f32.mrf.mxu0
      %v5468 = vadd.f32 0.0, %v5467
      %v5469 = vpop.f32.mrf.mxu0
      %5470 = vdwg.mxu0
      %v5471 = vadd.f32 %v5002, %v5345
      %v5472 = vadd.f32 %v5003, %v5348
      %v5473 = vadd.f32 %v5004, %v5353
      %v5474 = vadd.f32 %v5005, %v5356
      %v5475 = vadd.f32 %v5006, %v5361
      %v5476 = vadd.f32 %v5007, %v5364
      %v5477 = vadd.f32 %v5008, %v5369
      %v5478 = vadd.f32 %v5009, %v5372
      %v5479 = vadd.f32 %v5010, %v5377
      %v5480 = vadd.f32 %v5011, %v5380
      %v5481 = vadd.f32 %v5012, %v5385
      %v5482 = vadd.f32 %v5013, %v5388
      %v5483 = vadd.f32 %v5014, %v5393
      %v5484 = vadd.f32 %v5015, %v5396
      %v5485 = vadd.f32 %v5016, %v5401
      %v5486 = vadd.f32 %v5017, %v5404
      %v5487 = vadd.f32 %v5018, %v5409
      %v5488 = vadd.f32 %v5019, %v5412
      %v5489 = vadd.f32 %v5020, %v5417
      %v5490 = vadd.f32 %v5021, %v5420
      %v5491 = vadd.f32 %v5022, %v5425
      %v5492 = vadd.f32 %v5023, %v5428
      %v5493 = vadd.f32 %v5024, %v5433
      %v5494 = vadd.f32 %v5025, %v5436
      %v5495 = vadd.f32 %v5026, %v5441
      %v5496 = vadd.f32 %v5027, %v5444
      %v5497 = vadd.f32 %v5028, %v5449
      %v5498 = vadd.f32 %v5029, %v5452
      %v5499 = vadd.f32 %v5030, %v5457
      %v5500 = vadd.f32 %v5031, %v5460
      %v5501 = vadd.f32 %v5032, %v5465
      %v5502 = vadd.f32 %v5033, %v5468
      %v5503 = vlaneseq
      %v5504 = vshrl.u32 %v5503, 7
      %v5505 = vsub.s32 0, %v5504
      %v5506 = vrot.slane %v307, %v5505
      %v5507 = vmul.f32 %v5471, %v5506
      %v5508 = vmul.f32 %v5472, %v5506
      %v5509 = vmul.f32 %v5473, %v5506
      %v5510 = vmul.f32 %v5474, %v5506
      %v5511 = vmul.f32 %v5475, %v5506
      %v5512 = vmul.f32 %v5476, %v5506
      %v5513 = vmul.f32 %v5477, %v5506
      %v5514 = vmul.f32 %v5478, %v5506
      %v5515 = vmul.f32 %v5479, %v5506
      %v5516 = vmul.f32 %v5480, %v5506
      %v5517 = vmul.f32 %v5481, %v5506
      %v5518 = vmul.f32 %v5482, %v5506
      %v5519 = vmul.f32 %v5483, %v5506
      %v5520 = vmul.f32 %v5484, %v5506
      %v5521 = vmul.f32 %v5485, %v5506
      %v5522 = vmul.f32 %v5486, %v5506
      %v5523 = vmul.f32 %v5487, %v5506
      %v5524 = vmul.f32 %v5488, %v5506
      %v5525 = vmul.f32 %v5489, %v5506
      %v5526 = vmul.f32 %v5490, %v5506
      %v5527 = vmul.f32 %v5491, %v5506
      %v5528 = vmul.f32 %v5492, %v5506
      %v5529 = vmul.f32 %v5493, %v5506
      %v5530 = vmul.f32 %v5494, %v5506
      %v5531 = vmul.f32 %v5495, %v5506
      %v5532 = vmul.f32 %v5496, %v5506
      %v5533 = vmul.f32 %v5497, %v5506
      %v5534 = vmul.f32 %v5498, %v5506
      %v5535 = vmul.f32 %v5499, %v5506
      %v5536 = vmul.f32 %v5500, %v5506
      %v5537 = vmul.f32 %v5501, %v5506
      %v5538 = vmul.f32 %v5502, %v5506
      %v5539 = vlaneseq
      %v5540 = vshrl.u32 %v5539, 7
      %v5541 = vsub.s32 0, %v5540
      %v5542 = vrot.slane %v308, %v5541
      %v5543 = vadd.f32 %v5507, %v5542
      %v5544 = vadd.f32 %v5508, %v5542
      %v5545 = vadd.f32 %v5509, %v5542
      %v5546 = vadd.f32 %v5510, %v5542
      %v5547 = vadd.f32 %v5511, %v5542
      %v5548 = vadd.f32 %v5512, %v5542
      %v5549 = vadd.f32 %v5513, %v5542
      %v5550 = vadd.f32 %v5514, %v5542
      %v5551 = vadd.f32 %v5515, %v5542
      %v5552 = vadd.f32 %v5516, %v5542
      %v5553 = vadd.f32 %v5517, %v5542
      %v5554 = vadd.f32 %v5518, %v5542
      %v5555 = vadd.f32 %v5519, %v5542
      %v5556 = vadd.f32 %v5520, %v5542
      %v5557 = vadd.f32 %v5521, %v5542
      %v5558 = vadd.f32 %v5522, %v5542
      %v5559 = vadd.f32 %v5523, %v5542
      %v5560 = vadd.f32 %v5524, %v5542
      %v5561 = vadd.f32 %v5525, %v5542
      %v5562 = vadd.f32 %v5526, %v5542
      %v5563 = vadd.f32 %v5527, %v5542
      %v5564 = vadd.f32 %v5528, %v5542
      %v5565 = vadd.f32 %v5529, %v5542
      %v5566 = vadd.f32 %v5530, %v5542
      %v5567 = vadd.f32 %v5531, %v5542
      %v5568 = vadd.f32 %v5532, %v5542
      %v5569 = vadd.f32 %v5533, %v5542
      %v5570 = vadd.f32 %v5534, %v5542
      %v5571 = vadd.f32 %v5535, %v5542
      %v5572 = vadd.f32 %v5536, %v5542
      %v5573 = vadd.f32 %v5537, %v5542
      %v5574 = vadd.f32 %v5538, %v5542
      %v5575 = vlaneseq
      %v5576 = vshrl.u32 %v5575, 7
      %v5577 = vsub.s32 0, %v5576
      %v5578 = vrot.slane %v309, %v5577
      %5580 = vrot.lane.b32.xlu0 %v5578, 32
      %v5581 = vpop.permute.xlu0 %5580
      %v5583 = vadd.f32 %v5471, %v5581
      %v5584 = vadd.f32 %v5472, %v5581
      %v5585 = vadd.f32 %v5473, %v5581
      %v5586 = vadd.f32 %v5474, %v5581
      %v5587 = vadd.f32 %v5475, %v5581
      %v5588 = vadd.f32 %v5476, %v5581
      %v5589 = vadd.f32 %v5477, %v5581
      %v5590 = vadd.f32 %v5478, %v5581
      %v5591 = vadd.f32 %v5479, %v5581
      %v5592 = vadd.f32 %v5480, %v5581
      %v5593 = vadd.f32 %v5481, %v5581
      %v5594 = vadd.f32 %v5482, %v5581
      %v5595 = vadd.f32 %v5483, %v5581
      %v5596 = vadd.f32 %v5484, %v5581
      %v5597 = vadd.f32 %v5485, %v5581
      %v5598 = vadd.f32 %v5486, %v5581
      %v5599 = vadd.f32 %v5487, %v5581
      %v5600 = vadd.f32 %v5488, %v5581
      %v5601 = vadd.f32 %v5489, %v5581
      %v5602 = vadd.f32 %v5490, %v5581
      %v5603 = vadd.f32 %v5491, %v5581
      %v5604 = vadd.f32 %v5492, %v5581
      %v5605 = vadd.f32 %v5493, %v5581
      %v5606 = vadd.f32 %v5494, %v5581
      %v5607 = vadd.f32 %v5495, %v5581
      %v5608 = vadd.f32 %v5496, %v5581
      %v5609 = vadd.f32 %v5497, %v5581
      %v5610 = vadd.f32 %v5498, %v5581
      %v5611 = vadd.f32 %v5499, %v5581
      %v5612 = vadd.f32 %v5500, %v5581
      %v5613 = vadd.f32 %v5501, %v5581
      %v5614 = vadd.f32 %v5502, %v5581
      %vm5615 = vcmask 261120
      %v5616 = vsel %vm5615, %v5543, 0.0
      %v5617 = vsel %vm5615, %v5544, 0.0
      %v5618 = vadd.f32 %v5616, %v5617
      %v5619 = vsel %vm5615, %v5545, 0.0
      %v5620 = vadd.f32 %v5618, %v5619
      %v5621 = vsel %vm5615, %v5546, 0.0
      %v5622 = vadd.f32 %v5620, %v5621
      %v5623 = vsel %vm5615, %v5547, 0.0
      %v5624 = vadd.f32 %v5622, %v5623
      %v5625 = vsel %vm5615, %v5548, 0.0
      %v5626 = vadd.f32 %v5624, %v5625
      %v5627 = vsel %vm5615, %v5549, 0.0
      %v5628 = vadd.f32 %v5626, %v5627
      %v5629 = vsel %vm5615, %v5550, 0.0
      %v5630 = vadd.f32 %v5628, %v5629
      %v5631 = vsel %vm5615, %v5551, 0.0
      %v5632 = vadd.f32 %v5630, %v5631
      %v5633 = vsel %vm5615, %v5552, 0.0
      %v5634 = vadd.f32 %v5632, %v5633
      %v5635 = vsel %vm5615, %v5553, 0.0
      %v5636 = vadd.f32 %v5634, %v5635
      %v5637 = vsel %vm5615, %v5554, 0.0
      %v5638 = vadd.f32 %v5636, %v5637
      %v5639 = vsel %vm5615, %v5555, 0.0
      %v5640 = vadd.f32 %v5638, %v5639
      %v5641 = vsel %vm5615, %v5556, 0.0
      %v5642 = vadd.f32 %v5640, %v5641
      %v5643 = vsel %vm5615, %v5557, 0.0
      %v5644 = vadd.f32 %v5642, %v5643
      %v5645 = vsel %vm5615, %v5558, 0.0
      %v5646 = vadd.f32 %v5644, %v5645
      %v5647 = vsel %vm5615, %v5559, 0.0
      %v5648 = vadd.f32 %v5646, %v5647
      %v5649 = vsel %vm5615, %v5560, 0.0
      %v5650 = vadd.f32 %v5648, %v5649
      %v5651 = vsel %vm5615, %v5561, 0.0
      %v5652 = vadd.f32 %v5650, %v5651
      %v5653 = vsel %vm5615, %v5562, 0.0
      %v5654 = vadd.f32 %v5652, %v5653
      %v5655 = vsel %vm5615, %v5563, 0.0
      %v5656 = vadd.f32 %v5654, %v5655
      %v5657 = vsel %vm5615, %v5564, 0.0
      %v5658 = vadd.f32 %v5656, %v5657
      %v5659 = vsel %vm5615, %v5565, 0.0
      %v5660 = vadd.f32 %v5658, %v5659
      %v5661 = vsel %vm5615, %v5566, 0.0
      %v5662 = vadd.f32 %v5660, %v5661
      %v5663 = vsel %vm5615, %v5567, 0.0
      %v5664 = vadd.f32 %v5662, %v5663
      %v5665 = vsel %vm5615, %v5568, 0.0
      %v5666 = vadd.f32 %v5664, %v5665
      %v5667 = vsel %vm5615, %v5569, 0.0
      %v5668 = vadd.f32 %v5666, %v5667
      %v5669 = vsel %vm5615, %v5570, 0.0
      %v5670 = vadd.f32 %v5668, %v5669
      %v5671 = vsel %vm5615, %v5571, 0.0
      %v5672 = vadd.f32 %v5670, %v5671
      %v5673 = vsel %vm5615, %v5572, 0.0
      %v5674 = vadd.f32 %v5672, %v5673
      %v5675 = vsel %vm5615, %v5573, 0.0
      %v5676 = vadd.f32 %v5674, %v5675
      %v5677 = vsel %vm5615, %v5574, 0.0
      %v5678 = vadd.f32 %v5676, %v5677
      %v5679 = vrot.slane %v5678, 4
      %v5680 = vadd.f32 %v5678, %v5679
      %v5681 = vrot.slane %v5680, 2
      %v5682 = vadd.f32 %v5680, %v5681
      %v5683 = vrot.slane %v5682, 1
      %v5684 = vadd.f32 %v5682, %v5683
      %v5685 = vmul.f32 %v5684, 0.00390625
      %v5686 = vld [vmem:[%s4] sm:$0xff]
      %v5687 = vld [vmem:[%s4 + $0x8] sm:$0xff]
      %v5688 = vld [vmem:[%s4 + $0x10] sm:$0xff]
      %v5689 = vld [vmem:[%s4 + $0x18] sm:$0xff]
      %v5691 = vsel %vm5615, %v5685, 0
      %5693 = vmatprep.subr.mxu0 0.0
      %5694 = vmatpush1.msra.mxu0 0.0
      %5695 = vmatprep.subr.mxu0 0.0
      %5696 = vmatpush1.msra.mxu0 0.0
      %5697 = vmatprep.subr.mxu0 0.0
      %5698 = vmatpush1.msra.mxu0 0.0
      %5699 = vmatprep.subr.mxu0 0.0
      %5700 = vmatpush1.msra.mxu0 0.0
      %5701 = vmatprep.subr.mxu0 0.0
      %5702 = vmatpush1.msra.mxu0 0.0
      %5703 = vmatprep.subr.mxu0 0.0
      %5704 = vmatpush1.msra.mxu0 0.0
      %5705 = vmatprep.subr.mxu0 0.0
      %5706 = vmatpush1.msra.mxu0 0.0
      %5707 = vmatprep.subr.mxu0 0.0
      %5708 = vmatpush1.msra.mxu0 0.0
      %5709 = vmatprep.subr.mxu0 0.0
      %5710 = vmatpush1.msra.mxu0 0.0
      %5711 = vmatprep.subr.mxu0 0.0
      %5712 = vmatpush1.msra.mxu0 0.0
      %5713 = vmatprep.subr.mxu0 0.0
      %5714 = vmatpush1.msra.mxu0 0.0
      %5715 = vmatprep.subr.mxu0 0.0
      %5716 = vmatpush1.msra.mxu0 0.0
      %5717 = vmatprep.subr.mxu0 0.0
      %5718 = vmatpush1.msra.mxu0 %v5689
      %5719 = vmatprep.subr.mxu0 0.0
      %5720 = vmatpush1.msra.mxu0 %v5688
      %5721 = vmatprep.subr.mxu0 0.0
      %5722 = vmatpush1.msra.mxu0 %v5687
      %5723 = vmatprep.subr.mxu0 0.0
      %5724 = vmatpush1.msra.mxu0 %v5686
      %5725 = vmatprep.subr.mxu0 0.0
      %5726 = vmatpush2.msra.mxu0 0.0
      %5727 = vmatprep.subr.mxu0 0.0
      %5728 = vmatpush2.msra.mxu0 0.0
      %5729 = vmatprep.subr.mxu0 0.0
      %5730 = vmatpush2.msra.mxu0 0.0
      %5731 = vmatprep.subr.mxu0 0.0
      %5732 = vmatpush2.msra.mxu0 0.0
      %5733 = vmatprep.subr.mxu0 0.0
      %5734 = vmatpush2.msra.mxu0 0.0
      %5735 = vmatprep.subr.mxu0 0.0
      %5736 = vmatpush2.msra.mxu0 0.0
      %5737 = vmatprep.subr.mxu0 0.0
      %5738 = vmatpush2.msra.mxu0 0.0
      %5739 = vmatprep.subr.mxu0 0.0
      %5740 = vmatpush2.msra.mxu0 0.0
      %5741 = vmatprep.subr.mxu0 0.0
      %5742 = vmatpush2.msra.mxu0 0.0
      %5743 = vmatprep.subr.mxu0 0.0
      %5744 = vmatpush2.msra.mxu0 0.0
      %5745 = vmatprep.subr.mxu0 0.0
      %5746 = vmatpush2.msra.mxu0 0.0
      %5747 = vmatprep.subr.mxu0 0.0
      %5748 = vmatpush2.msra.mxu0 0.0
      %5749 = vmatprep.subr.mxu0 0.0
      %5750 = vmatpush2.msra.mxu0 0.0
      %5751 = vmatprep.subr.mxu0 0.0
      %5752 = vmatpush2.msra.mxu0 0.0
      %5753 = vmatprep.subr.mxu0 0.0
      %5754 = vmatpush2.msra.mxu0 0.0
      %5755 = vmatprep.subr.mxu0 0.0
      %5756 = vmatpush2.msra.mxu0 0.0
      %5757 = vmatprep.mubr.f32.mxu0 0.0
      %5758 = vmatmul.mubr.f32.gmra.mxu0 %v5691
      %v5759 = vpop.f32.mrf.mxu0
      %v5760 = vadd.f32 0.0, %v5759
      %v5761 = vpop.f32.mrf.mxu0
      %5762 = vdwg.mxu0
      %v5763 = vmax.f32 %v5760, 0.0
      %v5764 = vld [vmem:[%s5] sm:$0xff]
      %v5765 = vld [vmem:[%s5 + $0x8] sm:$0xff]
      %v5766 = vld [vmem:[%s5 + $0x10] sm:$0xff]
      %v5767 = vld [vmem:[%s5 + $0x18] sm:$0xff]
      %v5768 = vld [vmem:[%s5 + $0x20] sm:$0xff]
      %v5769 = vld [vmem:[%s5 + $0x28] sm:$0xff]
      %v5770 = vld [vmem:[%s5 + $0x30] sm:$0xff]
      %v5771 = vld [vmem:[%s5 + $0x38] sm:$0xff]
      %v5772 = vld [vmem:[%s5 + $0x40] sm:$0xff]
      %v5773 = vld [vmem:[%s5 + $0x48] sm:$0xff]
      %v5774 = vld [vmem:[%s5 + $0x50] sm:$0xff]
      %v5775 = vld [vmem:[%s5 + $0x58] sm:$0xff]
      %v5776 = vld [vmem:[%s5 + $0x60] sm:$0xff]
      %v5777 = vld [vmem:[%s5 + $0x68] sm:$0xff]
      %v5778 = vld [vmem:[%s5 + $0x70] sm:$0xff]
      %v5779 = vld [vmem:[%s5 + $0x78] sm:$0xff]
      %5780 = vmatprep.subr.mxu0 0.0
      %5781 = vmatpush1.msra.mxu0 %v5779
      %5782 = vmatprep.subr.mxu0 0.0
      %5783 = vmatpush1.msra.mxu0 %v5778
      %5784 = vmatprep.subr.mxu0 0.0
      %5785 = vmatpush1.msra.mxu0 %v5777
      %5786 = vmatprep.subr.mxu0 0.0
      %5787 = vmatpush1.msra.mxu0 %v5776
      %5788 = vmatprep.subr.mxu0 0.0
      %5789 = vmatpush1.msra.mxu0 %v5775
      %5790 = vmatprep.subr.mxu0 0.0
      %5791 = vmatpush1.msra.mxu0 %v5774
      %5792 = vmatprep.subr.mxu0 0.0
      %5793 = vmatpush1.msra.mxu0 %v5773
      %5794 = vmatprep.subr.mxu0 0.0
      %5795 = vmatpush1.msra.mxu0 %v5772
      %5796 = vmatprep.subr.mxu0 0.0
      %5797 = vmatpush1.msra.mxu0 %v5771
      %5798 = vmatprep.subr.mxu0 0.0
      %5799 = vmatpush1.msra.mxu0 %v5770
      %5800 = vmatprep.subr.mxu0 0.0
      %5801 = vmatpush1.msra.mxu0 %v5769
      %5802 = vmatprep.subr.mxu0 0.0
      %5803 = vmatpush1.msra.mxu0 %v5768
      %5804 = vmatprep.subr.mxu0 0.0
      %5805 = vmatpush1.msra.mxu0 %v5767
      %5806 = vmatprep.subr.mxu0 0.0
      %5807 = vmatpush1.msra.mxu0 %v5766
      %5808 = vmatprep.subr.mxu0 0.0
      %5809 = vmatpush1.msra.mxu0 %v5765
      %5810 = vmatprep.subr.mxu0 0.0
      %5811 = vmatpush1.msra.mxu0 %v5764
      %5812 = vmatprep.subr.mxu0 0.0
      %5813 = vmatpush2.msra.mxu0 0.0
      %5814 = vmatprep.subr.mxu0 0.0
      %5815 = vmatpush2.msra.mxu0 0.0
      %5816 = vmatprep.subr.mxu0 0.0
      %5817 = vmatpush2.msra.mxu0 0.0
      %5818 = vmatprep.subr.mxu0 0.0
      %5819 = vmatpush2.msra.mxu0 0.0
      %5820 = vmatprep.subr.mxu0 0.0
      %5821 = vmatpush2.msra.mxu0 0.0
      %5822 = vmatprep.subr.mxu0 0.0
      %5823 = vmatpush2.msra.mxu0 0.0
      %5824 = vmatprep.subr.mxu0 0.0
      %5825 = vmatpush2.msra.mxu0 0.0
      %5826 = vmatprep.subr.mxu0 0.0
      %5827 = vmatpush2.msra.mxu0 0.0
      %5828 = vmatprep.subr.mxu0 0.0
      %5829 = vmatpush2.msra.mxu0 0.0
      %5830 = vmatprep.subr.mxu0 0.0
      %5831 = vmatpush2.msra.mxu0 0.0
      %5832 = vmatprep.subr.mxu0 0.0
      %5833 = vmatpush2.msra.mxu0 0.0
      %5834 = vmatprep.subr.mxu0 0.0
      %5835 = vmatpush2.msra.mxu0 0.0
      %5836 = vmatprep.subr.mxu0 0.0
      %5837 = vmatpush2.msra.mxu0 0.0
      %5838 = vmatprep.subr.mxu0 0.0
      %5839 = vmatpush2.msra.mxu0 0.0
      %5840 = vmatprep.subr.mxu0 0.0
      %5841 = vmatpush2.msra.mxu0 0.0
      %5842 = vmatprep.subr.mxu0 0.0
      %5843 = vmatpush2.msra.mxu0 0.0
      %5844 = vmatprep.mubr.f32.mxu0 0.0
      %5845 = vmatmul.mubr.f32.gmra.mxu0 %v5763
      %v5846 = vpop.f32.mrf.mxu0
      %v5847 = vadd.f32 0.0, %v5846
      %v5848 = vpop.f32.mrf.mxu0
      %5849 = vdwg.mxu0
      %v5850 = vsub.f32 0.0, %v5847
      %v5851 = vmul.f32 %v5850, 1.442695
      %v5852 = vpow.pop %v5851
      %v5853 = vadd.f32 %v5852, 1.0
      %v5854 = vrcp.pop %v5853
      %v5855 = vmul.f32 1.0, %v5854
      %v5856 = vlaneseq
      %v5857 = vshrl.u32 %v5856, 7
      %v5858 = vsub.s32 0, %v5857
      %v5859 = vrot.slane %v5855, %v5858
      %v5860 = vmul.f32 %v5543, %v5859
      %v5861 = vmul.f32 %v5544, %v5859
      %v5862 = vmul.f32 %v5545, %v5859
      %v5863 = vmul.f32 %v5546, %v5859
      %v5864 = vmul.f32 %v5547, %v5859
      %v5865 = vmul.f32 %v5548, %v5859
      %v5866 = vmul.f32 %v5549, %v5859
      %v5867 = vmul.f32 %v5550, %v5859
      %v5868 = vmul.f32 %v5551, %v5859
      %v5869 = vmul.f32 %v5552, %v5859
      %v5870 = vmul.f32 %v5553, %v5859
      %v5871 = vmul.f32 %v5554, %v5859
      %v5872 = vmul.f32 %v5555, %v5859
      %v5873 = vmul.f32 %v5556, %v5859
      %v5874 = vmul.f32 %v5557, %v5859
      %v5875 = vmul.f32 %v5558, %v5859
      %v5876 = vmul.f32 %v5559, %v5859
      %v5877 = vmul.f32 %v5560, %v5859
      %v5878 = vmul.f32 %v5561, %v5859
      %v5879 = vmul.f32 %v5562, %v5859
      %v5880 = vmul.f32 %v5563, %v5859
      %v5881 = vmul.f32 %v5564, %v5859
      %v5882 = vmul.f32 %v5565, %v5859
      %v5883 = vmul.f32 %v5566, %v5859
      %v5884 = vmul.f32 %v5567, %v5859
      %v5885 = vmul.f32 %v5568, %v5859
      %v5886 = vmul.f32 %v5569, %v5859
      %v5887 = vmul.f32 %v5570, %v5859
      %v5888 = vmul.f32 %v5571, %v5859
      %v5889 = vmul.f32 %v5572, %v5859
      %v5890 = vmul.f32 %v5573, %v5859
      %v5891 = vmul.f32 %v5574, %v5859
      %5924 = vrot.lane.b32.xlu0 %v5583, 96
      %v5925 = vpop.permute.xlu0 %5924
      %5926 = vrot.lane.b32.xlu0 %v5584, 96
      %v5927 = vpop.permute.xlu0 %5926
      %5928 = vrot.lane.b32.xlu0 %v5585, 96
      %v5929 = vpop.permute.xlu0 %5928
      %5930 = vrot.lane.b32.xlu0 %v5586, 96
      %v5931 = vpop.permute.xlu0 %5930
      %5932 = vrot.lane.b32.xlu0 %v5587, 96
      %v5933 = vpop.permute.xlu0 %5932
      %5934 = vrot.lane.b32.xlu0 %v5588, 96
      %v5935 = vpop.permute.xlu0 %5934
      %5936 = vrot.lane.b32.xlu0 %v5589, 96
      %v5937 = vpop.permute.xlu0 %5936
      %5938 = vrot.lane.b32.xlu0 %v5590, 96
      %v5939 = vpop.permute.xlu0 %5938
      %5940 = vrot.lane.b32.xlu0 %v5591, 96
      %v5941 = vpop.permute.xlu0 %5940
      %5942 = vrot.lane.b32.xlu0 %v5592, 96
      %v5943 = vpop.permute.xlu0 %5942
      %5944 = vrot.lane.b32.xlu0 %v5593, 96
      %v5945 = vpop.permute.xlu0 %5944
      %5946 = vrot.lane.b32.xlu0 %v5594, 96
      %v5947 = vpop.permute.xlu0 %5946
      %5948 = vrot.lane.b32.xlu0 %v5595, 96
      %v5949 = vpop.permute.xlu0 %5948
      %5950 = vrot.lane.b32.xlu0 %v5596, 96
      %v5951 = vpop.permute.xlu0 %5950
      %5952 = vrot.lane.b32.xlu0 %v5597, 96
      %v5953 = vpop.permute.xlu0 %5952
      %5954 = vrot.lane.b32.xlu0 %v5598, 96
      %v5955 = vpop.permute.xlu0 %5954
      %5956 = vrot.lane.b32.xlu0 %v5599, 96
      %v5957 = vpop.permute.xlu0 %5956
      %5958 = vrot.lane.b32.xlu0 %v5600, 96
      %v5959 = vpop.permute.xlu0 %5958
      %5960 = vrot.lane.b32.xlu0 %v5601, 96
      %v5961 = vpop.permute.xlu0 %5960
      %5962 = vrot.lane.b32.xlu0 %v5602, 96
      %v5963 = vpop.permute.xlu0 %5962
      %5964 = vrot.lane.b32.xlu0 %v5603, 96
      %v5965 = vpop.permute.xlu0 %5964
      %5966 = vrot.lane.b32.xlu0 %v5604, 96
      %v5967 = vpop.permute.xlu0 %5966
      %5968 = vrot.lane.b32.xlu0 %v5605, 96
      %v5969 = vpop.permute.xlu0 %5968
      %5970 = vrot.lane.b32.xlu0 %v5606, 96
      %v5971 = vpop.permute.xlu0 %5970
      %5972 = vrot.lane.b32.xlu0 %v5607, 96
      %v5973 = vpop.permute.xlu0 %5972
      %5974 = vrot.lane.b32.xlu0 %v5608, 96
      %v5975 = vpop.permute.xlu0 %5974
      %5976 = vrot.lane.b32.xlu0 %v5609, 96
      %v5977 = vpop.permute.xlu0 %5976
      %5978 = vrot.lane.b32.xlu0 %v5610, 96
      %v5979 = vpop.permute.xlu0 %5978
      %5980 = vrot.lane.b32.xlu0 %v5611, 96
      %v5981 = vpop.permute.xlu0 %5980
      %5982 = vrot.lane.b32.xlu0 %v5612, 96
      %v5983 = vpop.permute.xlu0 %5982
      %5984 = vrot.lane.b32.xlu0 %v5613, 96
      %v5985 = vpop.permute.xlu0 %5984
      %5986 = vrot.lane.b32.xlu0 %v5614, 96
      %v5987 = vpop.permute.xlu0 %5986
      %v6020 = vadd.f32 %v5860, %v5925
      %v6021 = vadd.f32 %v5861, %v5927
      %v6022 = vadd.f32 %v5862, %v5929
      %v6023 = vadd.f32 %v5863, %v5931
      %v6024 = vadd.f32 %v5864, %v5933
      %v6025 = vadd.f32 %v5865, %v5935
      %v6026 = vadd.f32 %v5866, %v5937
      %v6027 = vadd.f32 %v5867, %v5939
      %v6028 = vadd.f32 %v5868, %v5941
      %v6029 = vadd.f32 %v5869, %v5943
      %v6030 = vadd.f32 %v5870, %v5945
      %v6031 = vadd.f32 %v5871, %v5947
      %v6032 = vadd.f32 %v5872, %v5949
      %v6033 = vadd.f32 %v5873, %v5951
      %v6034 = vadd.f32 %v5874, %v5953
      %v6035 = vadd.f32 %v5875, %v5955
      %v6036 = vadd.f32 %v5876, %v5957
      %v6037 = vadd.f32 %v5877, %v5959
      %v6038 = vadd.f32 %v5878, %v5961
      %v6039 = vadd.f32 %v5879, %v5963
      %v6040 = vadd.f32 %v5880, %v5965
      %v6041 = vadd.f32 %v5881, %v5967
      %v6042 = vadd.f32 %v5882, %v5969
      %v6043 = vadd.f32 %v5883, %v5971
      %v6044 = vadd.f32 %v5884, %v5973
      %v6045 = vadd.f32 %v5885, %v5975
      %v6046 = vadd.f32 %v5886, %v5977
      %v6047 = vadd.f32 %v5887, %v5979
      %v6048 = vadd.f32 %v5888, %v5981
      %v6049 = vadd.f32 %v5889, %v5983
      %v6050 = vadd.f32 %v5890, %v5985
      %v6051 = vadd.f32 %v5891, %v5987
      %v6052 = vmax.f32 %v6020, 0.0
      %v6053 = vmax.f32 %v6021, 0.0
      %v6054 = vmax.f32 %v6022, 0.0
      %v6055 = vmax.f32 %v6023, 0.0
      %v6056 = vmax.f32 %v6024, 0.0
      %v6057 = vmax.f32 %v6025, 0.0
      %v6058 = vmax.f32 %v6026, 0.0
      %v6059 = vmax.f32 %v6027, 0.0
      %v6060 = vmax.f32 %v6028, 0.0
      %v6061 = vmax.f32 %v6029, 0.0
      %v6062 = vmax.f32 %v6030, 0.0
      %v6063 = vmax.f32 %v6031, 0.0
      %v6064 = vmax.f32 %v6032, 0.0
      %v6065 = vmax.f32 %v6033, 0.0
      %v6066 = vmax.f32 %v6034, 0.0
      %v6067 = vmax.f32 %v6035, 0.0
      %v6068 = vmax.f32 %v6036, 0.0
      %v6069 = vmax.f32 %v6037, 0.0
      %v6070 = vmax.f32 %v6038, 0.0
      %v6071 = vmax.f32 %v6039, 0.0
      %v6072 = vmax.f32 %v6040, 0.0
      %v6073 = vmax.f32 %v6041, 0.0
      %v6074 = vmax.f32 %v6042, 0.0
      %v6075 = vmax.f32 %v6043, 0.0
      %v6076 = vmax.f32 %v6044, 0.0
      %v6077 = vmax.f32 %v6045, 0.0
      %v6078 = vmax.f32 %v6046, 0.0
      %v6079 = vmax.f32 %v6047, 0.0
      %v6080 = vmax.f32 %v6048, 0.0
      %v6081 = vmax.f32 %v6049, 0.0
      %v6082 = vmax.f32 %v6050, 0.0
      %v6083 = vmax.f32 %v6051, 0.0
      %vm6084 = vcmask 257024
      %6085 = vst.msk [vmem:[#allocation3] sm:$0xf] %vm6084, 0
      %6086 = vst.msk [vmem:[#allocation3 + $0x4] sm:$0xf] %vm6084, 0
      %vm6087 = vcmask 254976
      %6088 = vst.msk [vmem:[#allocation3 + $0x8] sm:$0x3] %vm6087, 0
      %6089 = vst.msk [vmem:[#allocation3 + $0xc] sm:$0xf] %vm6084, 0
      %6090 = vst.msk [vmem:[#allocation3 + $0x10] sm:$0xf] %vm6084, 0
      %6091 = vst.msk [vmem:[#allocation3 + $0x14] sm:$0x3] %vm6087, 0
      %6092 = vst.msk [vmem:[#allocation3 + $0x18] sm:$0xf] %vm6084, 0
      %6093 = vst.msk [vmem:[#allocation3 + $0x1c] sm:$0xf] %vm6084, 0
      %6094 = vst.msk [vmem:[#allocation3 + $0x20] sm:$0x3] %vm6087, 0
      %6095 = vst.msk [vmem:[#allocation3 + $0x24] sm:$0xf] %vm6084, 0
      %6096 = vst.msk [vmem:[#allocation3 + $0x28] sm:$0xf] %vm6084, 0
      %6097 = vst.msk [vmem:[#allocation3 + $0x2c] sm:$0x3] %vm6087, 0
      %6098 = vst.msk [vmem:[#allocation3 + $0x30] sm:$0xf] %vm6084, 0
      %6099 = vst.msk [vmem:[#allocation3 + $0x34] sm:$0xf] %vm6084, 0
      %6100 = vst.msk [vmem:[#allocation3 + $0x38] sm:$0x3] %vm6087, 0
      %6101 = vst.msk [vmem:[#allocation3 + $0x3c] sm:$0xf] %vm6084, 0
      %6102 = vst.msk [vmem:[#allocation3 + $0x40] sm:$0xf] %vm6084, 0
      %6103 = vst.msk [vmem:[#allocation3 + $0x44] sm:$0x3] %vm6087, 0
      %6104 = vst.msk [vmem:[#allocation3 + $0x48] sm:$0xf] %vm6084, 0
      %6105 = vst.msk [vmem:[#allocation3 + $0x4c] sm:$0xf] %vm6084, 0
      %6106 = vst.msk [vmem:[#allocation3 + $0x50] sm:$0x3] %vm6087, 0
      %6107 = vst.msk [vmem:[#allocation3 + $0x54] sm:$0xf] %vm6084, 0
      %6108 = vst.msk [vmem:[#allocation3 + $0x58] sm:$0xf] %vm6084, 0
      %6109 = vst.msk [vmem:[#allocation3 + $0x5c] sm:$0x3] %vm6087, 0
      %6110 = vst.msk [vmem:[#allocation3 + $0x60] sm:$0xf] %vm6084, 0
      %6111 = vst.msk [vmem:[#allocation3 + $0x64] sm:$0xf] %vm6084, 0
      %6112 = vst.msk [vmem:[#allocation3 + $0x68] sm:$0x3] %vm6087, 0
      %6113 = vst.msk [vmem:[#allocation3 + $0x6c] sm:$0xf] %vm6084, 0
      %6114 = vst.msk [vmem:[#allocation3 + $0x70] sm:$0xf] %vm6084, 0
      %6115 = vst.msk [vmem:[#allocation3 + $0x74] sm:$0x3] %vm6087, 0
      %6116 = vst.msk [vmem:[#allocation3 + $0x78] sm:$0xf] %vm6084, 0
      %6117 = vst.msk [vmem:[#allocation3 + $0x7c] sm:$0xf] %vm6084, 0
      %6118 = vst.msk [vmem:[#allocation3 + $0x80] sm:$0x3] %vm6087, 0
      %6119 = vst.msk [vmem:[#allocation3 + $0x84] sm:$0xf] %vm6084, 0
      %6120 = vst.msk [vmem:[#allocation3 + $0x88] sm:$0xf] %vm6084, 0
      %6121 = vst.msk [vmem:[#allocation3 + $0x8c] sm:$0x3] %vm6087, 0
      %6122 = vst.msk [vmem:[#allocation3 + $0x90] sm:$0xf] %vm6084, 0
      %6123 = vst.msk [vmem:[#allocation3 + $0x94] sm:$0xf] %vm6084, 0
      %6124 = vst.msk [vmem:[#allocation3 + $0x98] sm:$0x3] %vm6087, 0
      %6125 = vst.msk [vmem:[#allocation3 + $0x9c] sm:$0xf] %vm6084, 0
      %6126 = vst.msk [vmem:[#allocation3 + $0xa0] sm:$0xf] %vm6084, 0
      %6127 = vst.msk [vmem:[#allocation3 + $0xa4] sm:$0x3] %vm6087, 0
      %6128 = vst.msk [vmem:[#allocation3 + $0xa8] sm:$0xf] %vm6084, 0
      %6129 = vst.msk [vmem:[#allocation3 + $0xac] sm:$0xf] %vm6084, 0
      %6130 = vst.msk [vmem:[#allocation3 + $0xb0] sm:$0x3] %vm6087, 0
      %6131 = vst.msk [vmem:[#allocation3 + $0xb4] sm:$0xf] %vm6084, 0
      %6132 = vst.msk [vmem:[#allocation3 + $0xb8] sm:$0xf] %vm6084, 0
      %6133 = vst.msk [vmem:[#allocation3 + $0xbc] sm:$0x3] %vm6087, 0
      %6134 = vst.msk [vmem:[#allocation3 + $0xc0] sm:$0xf] %vm6084, 0
      %6135 = vst.msk [vmem:[#allocation3 + $0xc4] sm:$0xf] %vm6084, 0
      %6136 = vst.msk [vmem:[#allocation3 + $0xc8] sm:$0x3] %vm6087, 0
      %6137 = vst.msk [vmem:[#allocation3 + $0xcc] sm:$0xf] %vm6084, 0
      %6138 = vst.msk [vmem:[#allocation3 + $0xd0] sm:$0xf] %vm6084, 0
      %6139 = vst.msk [vmem:[#allocation3 + $0xd4] sm:$0x3] %vm6087, 0
      %6140 = vst.msk [vmem:[#allocation3 + $0xd8] sm:$0xf] %vm6084, 0
      %6141 = vst.msk [vmem:[#allocation3 + $0xdc] sm:$0xf] %vm6084, 0
      %6142 = vst.msk [vmem:[#allocation3 + $0xe0] sm:$0x3] %vm6087, 0
      %6143 = vst.msk [vmem:[#allocation3 + $0xe4] sm:$0xf] %vm6084, 0
      %6144 = vst.msk [vmem:[#allocation3 + $0xe8] sm:$0xf] %vm6084, 0
      %6145 = vst.msk [vmem:[#allocation3 + $0xec] sm:$0x3] %vm6087, 0
      %v6146 = vpack.c.bf16 %v6053, %v6052
      %v6147 = vpack.c.bf16 %v6055, %v6054
      %v6148 = vpack.c.bf16 %v6057, %v6056
      %v6149 = vpack.c.bf16 %v6059, %v6058
      %v6150 = vpack.c.bf16 %v6061, %v6060
      %v6151 = vpack.c.bf16 %v6063, %v6062
      %v6152 = vpack.c.bf16 %v6065, %v6064
      %v6153 = vpack.c.bf16 %v6067, %v6066
      %v6154 = vpack.c.bf16 %v6069, %v6068
      %v6155 = vpack.c.bf16 %v6071, %v6070
      %v6156 = vpack.c.bf16 %v6073, %v6072
      %v6157 = vpack.c.bf16 %v6075, %v6074
      %v6158 = vpack.c.bf16 %v6077, %v6076
      %v6159 = vpack.c.bf16 %v6079, %v6078
      %v6160 = vpack.c.bf16 %v6081, %v6080
      %v6161 = vpack.c.bf16 %v6083, %v6082
      %v6178 = vunpack.c.l.b16 %v6146
      %v6179 = vunpack.c.h.b16 %v6146
      %v6180 = vunpack.c.l.b16 %v6147
      %v6181 = vunpack.c.h.b16 %v6147
      %v6182 = vunpack.c.l.b16 %v6148
      %v6183 = vunpack.c.h.b16 %v6148
      %v6184 = vunpack.c.l.b16 %v6149
      %v6185 = vunpack.c.h.b16 %v6149
      %v6186 = vunpack.c.l.b16 %v6150
      %v6187 = vunpack.c.h.b16 %v6150
      %v6188 = vunpack.c.l.b16 %v6151
      %v6189 = vunpack.c.h.b16 %v6151
      %v6190 = vunpack.c.l.b16 %v6152
      %v6191 = vunpack.c.h.b16 %v6152
      %v6192 = vunpack.c.l.b16 %v6153
      %v6193 = vunpack.c.h.b16 %v6153
      %v6194 = vunpack.c.l.b16 %v6154
      %v6195 = vunpack.c.h.b16 %v6154
      %v6196 = vunpack.c.l.b16 %v6155
      %v6197 = vunpack.c.h.b16 %v6155
      %v6198 = vunpack.c.l.b16 %v6156
      %v6199 = vunpack.c.h.b16 %v6156
      %v6200 = vunpack.c.l.b16 %v6157
      %v6201 = vunpack.c.h.b16 %v6157
      %v6202 = vunpack.c.l.b16 %v6158
      %v6203 = vunpack.c.h.b16 %v6158
      %v6204 = vunpack.c.l.b16 %v6159
      %v6205 = vunpack.c.h.b16 %v6159
      %v6206 = vunpack.c.l.b16 %v6160
      %v6207 = vunpack.c.h.b16 %v6160
      %v6208 = vunpack.c.l.b16 %v6161
      %v6209 = vunpack.c.h.b16 %v6161
      %v6210 = vpack.c.b16 %v6178, %v6178
      %v6211 = vpack.c.b16 %v6179, %v6179
      %v6212 = vpack.c.b16 %v6180, %v6180
      %v6213 = vpack.c.b16 %v6181, %v6181
      %v6214 = vpack.c.b16 %v6182, %v6182
      %v6215 = vpack.c.b16 %v6183, %v6183
      %v6216 = vpack.c.b16 %v6184, %v6184
      %v6217 = vpack.c.b16 %v6185, %v6185
      %v6218 = vpack.c.b16 %v6186, %v6186
      %v6219 = vpack.c.b16 %v6187, %v6187
      %v6220 = vpack.c.b16 %v6188, %v6188
      %v6221 = vpack.c.b16 %v6189, %v6189
      %v6222 = vpack.c.b16 %v6190, %v6190
      %v6223 = vpack.c.b16 %v6191, %v6191
      %v6224 = vpack.c.b16 %v6192, %v6192
      %v6225 = vpack.c.b16 %v6193, %v6193
      %v6226 = vpack.c.b16 %v6194, %v6194
      %v6227 = vpack.c.b16 %v6195, %v6195
      %v6228 = vpack.c.b16 %v6196, %v6196
      %v6229 = vpack.c.b16 %v6197, %v6197
      %v6230 = vpack.c.b16 %v6198, %v6198
      %v6231 = vpack.c.b16 %v6199, %v6199
      %v6232 = vpack.c.b16 %v6200, %v6200
      %v6233 = vpack.c.b16 %v6201, %v6201
      %v6234 = vpack.c.b16 %v6202, %v6202
      %v6235 = vpack.c.b16 %v6203, %v6203
      %v6236 = vpack.c.b16 %v6204, %v6204
      %v6237 = vpack.c.b16 %v6205, %v6205
      %v6238 = vpack.c.b16 %v6206, %v6206
      %v6239 = vpack.c.b16 %v6207, %v6207
      %v6240 = vpack.c.b16 %v6208, %v6208
      %v6241 = vpack.c.b16 %v6209, %v6209
      %vm6242 = vcmask 1040384
      %vm6243 = vcmask 1044484
      %vm6244 = vmor %vm6242, %vm6243
      %v6245 = vrot.slane %v6210, 7
      %v6246 = vrot.slane %v6245, 4
      %v6247 = vrot.slane %v6211, 7
      %v6248 = vsel %vm6244, %v6246, %v6247
      %v6249 = vrot.slane %v6247, 4
      %v6250 = vrot.slane %v6212, 7
      %v6251 = vrot.slane %v6250, 4
      %v6252 = vrot.slane %v6213, 7
      %v6253 = vsel %vm6244, %v6251, %v6252
      %v6254 = vrot.slane %v6252, 4
      %v6255 = vrot.slane %v6214, 7
      %v6256 = vrot.slane %v6255, 4
      %v6257 = vrot.slane %v6215, 7
      %v6258 = vsel %vm6244, %v6256, %v6257
      %v6259 = vrot.slane %v6257, 4
      %v6260 = vrot.slane %v6216, 7
      %v6261 = vrot.slane %v6260, 4
      %v6262 = vrot.slane %v6217, 7
      %v6263 = vsel %vm6244, %v6261, %v6262
      %v6264 = vrot.slane %v6262, 4
      %v6265 = vrot.slane %v6218, 7
      %v6266 = vrot.slane %v6265, 4
      %v6267 = vrot.slane %v6219, 7
      %v6268 = vsel %vm6244, %v6266, %v6267
      %v6269 = vrot.slane %v6267, 4
      %v6270 = vrot.slane %v6220, 7
      %v6271 = vrot.slane %v6270, 4
      %v6272 = vrot.slane %v6221, 7
      %v6273 = vsel %vm6244, %v6271, %v6272
      %v6274 = vrot.slane %v6272, 4
      %v6275 = vrot.slane %v6222, 7
      %v6276 = vrot.slane %v6275, 4
      %v6277 = vrot.slane %v6223, 7
      %v6278 = vsel %vm6244, %v6276, %v6277
      %v6279 = vrot.slane %v6277, 4
      %v6280 = vrot.slane %v6224, 7
      %v6281 = vrot.slane %v6280, 4
      %v6282 = vrot.slane %v6225, 7
      %v6283 = vsel %vm6244, %v6281, %v6282
      %v6284 = vrot.slane %v6282, 4
      %v6285 = vrot.slane %v6226, 7
      %v6286 = vrot.slane %v6285, 4
      %v6287 = vrot.slane %v6227, 7
      %v6288 = vsel %vm6244, %v6286, %v6287
      %v6289 = vrot.slane %v6287, 4
      %v6290 = vrot.slane %v6228, 7
      %v6291 = vrot.slane %v6290, 4
      %v6292 = vrot.slane %v6229, 7
      %v6293 = vsel %vm6244, %v6291, %v6292
      %v6294 = vrot.slane %v6292, 4
      %v6295 = vrot.slane %v6230, 7
      %v6296 = vrot.slane %v6295, 4
      %v6297 = vrot.slane %v6231, 7
      %v6298 = vsel %vm6244, %v6296, %v6297
      %v6299 = vrot.slane %v6297, 4
      %v6300 = vrot.slane %v6232, 7
      %v6301 = vrot.slane %v6300, 4
      %v6302 = vrot.slane %v6233, 7
      %v6303 = vsel %vm6244, %v6301, %v6302
      %v6304 = vrot.slane %v6302, 4
      %v6305 = vrot.slane %v6234, 7
      %v6306 = vrot.slane %v6305, 4
      %v6307 = vrot.slane %v6235, 7
      %v6308 = vsel %vm6244, %v6306, %v6307
      %v6309 = vrot.slane %v6307, 4
      %v6310 = vrot.slane %v6236, 7
      %v6311 = vrot.slane %v6310, 4
      %v6312 = vrot.slane %v6237, 7
      %v6313 = vsel %vm6244, %v6311, %v6312
      %v6314 = vrot.slane %v6312, 4
      %v6315 = vrot.slane %v6238, 7
      %v6316 = vrot.slane %v6315, 4
      %v6317 = vrot.slane %v6239, 7
      %v6318 = vsel %vm6244, %v6316, %v6317
      %v6319 = vrot.slane %v6317, 4
      %v6320 = vrot.slane %v6240, 7
      %v6321 = vrot.slane %v6320, 4
      %v6322 = vrot.slane %v6241, 7
      %v6323 = vsel %vm6244, %v6321, %v6322
      %v6324 = vrot.slane %v6322, 4
      %s6373 = scalar_lea.vmem [#allocation3], 24
      %vm6374 = vcmask 257025
      %6375 = vst.msk [vmem:[%s6373] sm:$0xe] %vm6374, %v6245
      %6376 = vst.msk [vmem:[%s6373 + $0x4] sm:$0xf] %vm6084, %v6248
      %vm6377 = vcmask 253952
      %6378 = vst.msk [vmem:[%s6373 + $0x8] sm:$0x1] %vm6377, %v6249
      %6379 = vst.msk [vmem:[%s6373 + $0xc] sm:$0xe] %vm6374, %v6250
      %6380 = vst.msk [vmem:[%s6373 + $0x10] sm:$0xf] %vm6084, %v6253
      %6381 = vst.msk [vmem:[%s6373 + $0x14] sm:$0x1] %vm6377, %v6254
      %6382 = vst.msk [vmem:[%s6373 + $0x18] sm:$0xe] %vm6374, %v6255
      %6383 = vst.msk [vmem:[%s6373 + $0x1c] sm:$0xf] %vm6084, %v6258
      %6384 = vst.msk [vmem:[%s6373 + $0x20] sm:$0x1] %vm6377, %v6259
      %6385 = vst.msk [vmem:[%s6373 + $0x24] sm:$0xe] %vm6374, %v6260
      %6386 = vst.msk [vmem:[%s6373 + $0x28] sm:$0xf] %vm6084, %v6263
      %6387 = vst.msk [vmem:[%s6373 + $0x2c] sm:$0x1] %vm6377, %v6264
      %6388 = vst.msk [vmem:[%s6373 + $0x30] sm:$0xe] %vm6374, %v6265
      %6389 = vst.msk [vmem:[%s6373 + $0x34] sm:$0xf] %vm6084, %v6268
      %6390 = vst.msk [vmem:[%s6373 + $0x38] sm:$0x1] %vm6377, %v6269
      %6391 = vst.msk [vmem:[%s6373 + $0x3c] sm:$0xe] %vm6374, %v6270
      %6392 = vst.msk [vmem:[%s6373 + $0x40] sm:$0xf] %vm6084, %v6273
      %6393 = vst.msk [vmem:[%s6373 + $0x44] sm:$0x1] %vm6377, %v6274
      %6394 = vst.msk [vmem:[%s6373 + $0x48] sm:$0xe] %vm6374, %v6275
      %6395 = vst.msk [vmem:[%s6373 + $0x4c] sm:$0xf] %vm6084, %v6278
      %6396 = vst.msk [vmem:[%s6373 + $0x50] sm:$0x1] %vm6377, %v6279
      %6397 = vst.msk [vmem:[%s6373 + $0x54] sm:$0xe] %vm6374, %v6280
      %6398 = vst.msk [vmem:[%s6373 + $0x58] sm:$0xf] %vm6084, %v6283
      %6399 = vst.msk [vmem:[%s6373 + $0x5c] sm:$0x1] %vm6377, %v6284
      %6400 = vst.msk [vmem:[%s6373 + $0x60] sm:$0xe] %vm6374, %v6285
      %6401 = vst.msk [vmem:[%s6373 + $0x64] sm:$0xf] %vm6084, %v6288
      %6402 = vst.msk [vmem:[%s6373 + $0x68] sm:$0x1] %vm6377, %v6289
      %6403 = vst.msk [vmem:[%s6373 + $0x6c] sm:$0xe] %vm6374, %v6290
      %6404 = vst.msk [vmem:[%s6373 + $0x70] sm:$0xf] %vm6084, %v6293
      %6405 = vst.msk [vmem:[%s6373 + $0x74] sm:$0x1] %vm6377, %v6294
      %6406 = vst.msk [vmem:[%s6373 + $0x78] sm:$0xe] %vm6374, %v6295
      %6407 = vst.msk [vmem:[%s6373 + $0x7c] sm:$0xf] %vm6084, %v6298
      %6408 = vst.msk [vmem:[%s6373 + $0x80] sm:$0x1] %vm6377, %v6299
      %6409 = vst.msk [vmem:[%s6373 + $0x84] sm:$0xe] %vm6374, %v6300
      %6410 = vst.msk [vmem:[%s6373 + $0x88] sm:$0xf] %vm6084, %v6303
      %6411 = vst.msk [vmem:[%s6373 + $0x8c] sm:$0x1] %vm6377, %v6304
      %6412 = vst.msk [vmem:[%s6373 + $0x90] sm:$0xe] %vm6374, %v6305
      %6413 = vst.msk [vmem:[%s6373 + $0x94] sm:$0xf] %vm6084, %v6308
      %6414 = vst.msk [vmem:[%s6373 + $0x98] sm:$0x1] %vm6377, %v6309
      %6415 = vst.msk [vmem:[%s6373 + $0x9c] sm:$0xe] %vm6374, %v6310
      %6416 = vst.msk [vmem:[%s6373 + $0xa0] sm:$0xf] %vm6084, %v6313
      %6417 = vst.msk [vmem:[%s6373 + $0xa4] sm:$0x1] %vm6377, %v6314
      %6418 = vst.msk [vmem:[%s6373 + $0xa8] sm:$0xe] %vm6374, %v6315
      %6419 = vst.msk [vmem:[%s6373 + $0xac] sm:$0xf] %vm6084, %v6318
      %6420 = vst.msk [vmem:[%s6373 + $0xb0] sm:$0x1] %vm6377, %v6319
      %6421 = vst.msk [vmem:[%s6373 + $0xb4] sm:$0xe] %vm6374, %v6320
      %6422 = vst.msk [vmem:[%s6373 + $0xb8] sm:$0xf] %vm6084, %v6323
      %6423 = vst.msk [vmem:[%s6373 + $0xbc] sm:$0x1] %vm6377, %v6324
      %v6424 = vld [vmem:[#allocation3] sm:$0xf]
      %v6425 = vld [vmem:[#allocation3 + $0x4] sm:$0xf]
      %v6426 = vld [vmem:[#allocation3 + $0xc] sm:$0xf]
      %v6427 = vld [vmem:[#allocation3 + $0x10] sm:$0xf]
      %v6428 = vld [vmem:[#allocation3 + $0x18] sm:$0xf]
      %v6429 = vld [vmem:[#allocation3 + $0x1c] sm:$0xf]
      %v6430 = vld [vmem:[#allocation3 + $0x24] sm:$0xf]
      %v6431 = vld [vmem:[#allocation3 + $0x28] sm:$0xf]
      %v6432 = vld [vmem:[#allocation3 + $0x30] sm:$0xf]
      %v6433 = vld [vmem:[#allocation3 + $0x34] sm:$0xf]
      %v6434 = vld [vmem:[#allocation3 + $0x3c] sm:$0xf]
      %v6435 = vld [vmem:[#allocation3 + $0x40] sm:$0xf]
      %v6436 = vld [vmem:[#allocation3 + $0x48] sm:$0xf]
      %v6437 = vld [vmem:[#allocation3 + $0x4c] sm:$0xf]
      %v6438 = vld [vmem:[#allocation3 + $0x54] sm:$0xf]
      %v6439 = vld [vmem:[#allocation3 + $0x58] sm:$0xf]
      %v6440 = vld [vmem:[#allocation3 + $0x60] sm:$0xf]
      %v6441 = vld [vmem:[#allocation3 + $0x64] sm:$0xf]
      %v6442 = vld [vmem:[#allocation3 + $0x6c] sm:$0xf]
      %v6443 = vld [vmem:[#allocation3 + $0x70] sm:$0xf]
      %v6444 = vld [vmem:[#allocation3 + $0x78] sm:$0xf]
      %v6445 = vld [vmem:[#allocation3 + $0x7c] sm:$0xf]
      %v6446 = vld [vmem:[#allocation3 + $0x84] sm:$0xf]
      %v6447 = vld [vmem:[#allocation3 + $0x88] sm:$0xf]
      %v6448 = vld [vmem:[#allocation3 + $0x90] sm:$0xf]
      %v6449 = vld [vmem:[#allocation3 + $0x94] sm:$0xf]
      %v6450 = vld [vmem:[#allocation3 + $0x9c] sm:$0xf]
      %v6451 = vld [vmem:[#allocation3 + $0xa0] sm:$0xf]
      %v6452 = vld [vmem:[#allocation3 + $0xa8] sm:$0xf]
      %v6453 = vld [vmem:[#allocation3 + $0xac] sm:$0xf]
      %v6454 = vld [vmem:[#allocation3 + $0xb4] sm:$0xf]
      %v6455 = vld [vmem:[#allocation3 + $0xb8] sm:$0xf]
      %v6456 = vld [vmem:[%s2] sm:$0xf]
      %v6457 = vld [vmem:[%s2 + $0x4] sm:$0xf]
      %v6458 = vld [vmem:[%s2 + $0x8] sm:$0xf]
      %v6459 = vld [vmem:[%s2 + $0xc] sm:$0xf]
      %v6460 = vld [vmem:[#allocation3] sm:$0xe]
      %v6461 = vld [vmem:[#allocation3 + $0x8] sm:$0x1]
      %v6462 = vld [vmem:[#allocation3 + $0xc] sm:$0xe]
      %v6463 = vld [vmem:[#allocation3 + $0x14] sm:$0x1]
      %v6464 = vld [vmem:[#allocation3 + $0x18] sm:$0xe]
      %v6465 = vld [vmem:[#allocation3 + $0x20] sm:$0x1]
      %v6466 = vld [vmem:[#allocation3 + $0x24] sm:$0xe]
      %v6467 = vld [vmem:[#allocation3 + $0x2c] sm:$0x1]
      %v6468 = vld [vmem:[#allocation3 + $0x30] sm:$0xe]
      %v6469 = vld [vmem:[#allocation3 + $0x38] sm:$0x1]
      %v6470 = vld [vmem:[#allocation3 + $0x3c] sm:$0xe]
      %v6471 = vld [vmem:[#allocation3 + $0x44] sm:$0x1]
      %v6472 = vld [vmem:[#allocation3 + $0x48] sm:$0xe]
      %v6473 = vld [vmem:[#allocation3 + $0x50] sm:$0x1]
      %v6474 = vld [vmem:[#allocation3 + $0x54] sm:$0xe]
      %v6475 = vld [vmem:[#allocation3 + $0x5c] sm:$0x1]
      %v6476 = vld [vmem:[#allocation3 + $0x60] sm:$0xe]
      %v6477 = vld [vmem:[#allocation3 + $0x68] sm:$0x1]
      %v6478 = vld [vmem:[#allocation3 + $0x6c] sm:$0xe]
      %v6479 = vld [vmem:[#allocation3 + $0x74] sm:$0x1]
      %v6480 = vld [vmem:[#allocation3 + $0x78] sm:$0xe]
      %v6481 = vld [vmem:[#allocation3 + $0x80] sm:$0x1]
      %v6482 = vld [vmem:[#allocation3 + $0x84] sm:$0xe]
      %v6483 = vld [vmem:[#allocation3 + $0x8c] sm:$0x1]
      %v6484 = vld [vmem:[#allocation3 + $0x90] sm:$0xe]
      %v6485 = vld [vmem:[#allocation3 + $0x98] sm:$0x1]
      %v6486 = vld [vmem:[#allocation3 + $0x9c] sm:$0xe]
      %v6487 = vld [vmem:[#allocation3 + $0xa4] sm:$0x1]
      %v6488 = vld [vmem:[#allocation3 + $0xa8] sm:$0xe]
      %v6489 = vld [vmem:[#allocation3 + $0xb0] sm:$0x1]
      %v6490 = vld [vmem:[#allocation3 + $0xb4] sm:$0xe]
      %v6491 = vld [vmem:[#allocation3 + $0xbc] sm:$0x1]
      %v6540 = vrot.slane %v6460, 5
      %v6541 = vrot.slane %v6540, 4
      %v6542 = vrot.slane %v6425, 5
      %v6543 = vsel %vm1982, %v6541, %v6542
      %v6544 = vrot.slane %v6542, 4
      %v6545 = vrot.slane %v6461, 5
      %v6546 = vsel %vm1982, %v6544, %v6545
      %v6547 = vrot.slane %v6462, 5
      %v6548 = vrot.slane %v6547, 4
      %v6549 = vrot.slane %v6427, 5
      %v6550 = vsel %vm1982, %v6548, %v6549
      %v6551 = vrot.slane %v6549, 4
      %v6552 = vrot.slane %v6463, 5
      %v6553 = vsel %vm1982, %v6551, %v6552
      %v6554 = vrot.slane %v6464, 5
      %v6555 = vrot.slane %v6554, 4
      %v6556 = vrot.slane %v6429, 5
      %v6557 = vsel %vm1982, %v6555, %v6556
      %v6558 = vrot.slane %v6556, 4
      %v6559 = vrot.slane %v6465, 5
      %v6560 = vsel %vm1982, %v6558, %v6559
      %v6561 = vrot.slane %v6466, 5
      %v6562 = vrot.slane %v6561, 4
      %v6563 = vrot.slane %v6431, 5
      %v6564 = vsel %vm1982, %v6562, %v6563
      %v6565 = vrot.slane %v6563, 4
      %v6566 = vrot.slane %v6467, 5
      %v6567 = vsel %vm1982, %v6565, %v6566
      %v6568 = vrot.slane %v6468, 5
      %v6569 = vrot.slane %v6568, 4
      %v6570 = vrot.slane %v6433, 5
      %v6571 = vsel %vm1982, %v6569, %v6570
      %v6572 = vrot.slane %v6570, 4
      %v6573 = vrot.slane %v6469, 5
      %v6574 = vsel %vm1982, %v6572, %v6573
      %v6575 = vrot.slane %v6470, 5
      %v6576 = vrot.slane %v6575, 4
      %v6577 = vrot.slane %v6435, 5
      %v6578 = vsel %vm1982, %v6576, %v6577
      %v6579 = vrot.slane %v6577, 4
      %v6580 = vrot.slane %v6471, 5
      %v6581 = vsel %vm1982, %v6579, %v6580
      %v6582 = vrot.slane %v6472, 5
      %v6583 = vrot.slane %v6582, 4
      %v6584 = vrot.slane %v6437, 5
      %v6585 = vsel %vm1982, %v6583, %v6584
      %v6586 = vrot.slane %v6584, 4
      %v6587 = vrot.slane %v6473, 5
      %v6588 = vsel %vm1982, %v6586, %v6587
      %v6589 = vrot.slane %v6474, 5
      %v6590 = vrot.slane %v6589, 4
      %v6591 = vrot.slane %v6439, 5
      %v6592 = vsel %vm1982, %v6590, %v6591
      %v6593 = vrot.slane %v6591, 4
      %v6594 = vrot.slane %v6475, 5
      %v6595 = vsel %vm1982, %v6593, %v6594
      %v6596 = vrot.slane %v6476, 5
      %v6597 = vrot.slane %v6596, 4
      %v6598 = vrot.slane %v6441, 5
      %v6599 = vsel %vm1982, %v6597, %v6598
      %v6600 = vrot.slane %v6598, 4
      %v6601 = vrot.slane %v6477, 5
      %v6602 = vsel %vm1982, %v6600, %v6601
      %v6603 = vrot.slane %v6478, 5
      %v6604 = vrot.slane %v6603, 4
      %v6605 = vrot.slane %v6443, 5
      %v6606 = vsel %vm1982, %v6604, %v6605
      %v6607 = vrot.slane %v6605, 4
      %v6608 = vrot.slane %v6479, 5
      %v6609 = vsel %vm1982, %v6607, %v6608
      %v6610 = vrot.slane %v6480, 5
      %v6611 = vrot.slane %v6610, 4
      %v6612 = vrot.slane %v6445, 5
      %v6613 = vsel %vm1982, %v6611, %v6612
      %v6614 = vrot.slane %v6612, 4
      %v6615 = vrot.slane %v6481, 5
      %v6616 = vsel %vm1982, %v6614, %v6615
      %v6617 = vrot.slane %v6482, 5
      %v6618 = vrot.slane %v6617, 4
      %v6619 = vrot.slane %v6447, 5
      %v6620 = vsel %vm1982, %v6618, %v6619
      %v6621 = vrot.slane %v6619, 4
      %v6622 = vrot.slane %v6483, 5
      %v6623 = vsel %vm1982, %v6621, %v6622
      %v6624 = vrot.slane %v6484, 5
      %v6625 = vrot.slane %v6624, 4
      %v6626 = vrot.slane %v6449, 5
      %v6627 = vsel %vm1982, %v6625, %v6626
      %v6628 = vrot.slane %v6626, 4
      %v6629 = vrot.slane %v6485, 5
      %v6630 = vsel %vm1982, %v6628, %v6629
      %v6631 = vrot.slane %v6486, 5
      %v6632 = vrot.slane %v6631, 4
      %v6633 = vrot.slane %v6451, 5
      %v6634 = vsel %vm1982, %v6632, %v6633
      %v6635 = vrot.slane %v6633, 4
      %v6636 = vrot.slane %v6487, 5
      %v6637 = vsel %vm1982, %v6635, %v6636
      %v6638 = vrot.slane %v6488, 5
      %v6639 = vrot.slane %v6638, 4
      %v6640 = vrot.slane %v6453, 5
      %v6641 = vsel %vm1982, %v6639, %v6640
      %v6642 = vrot.slane %v6640, 4
      %v6643 = vrot.slane %v6489, 5
      %v6644 = vsel %vm1982, %v6642, %v6643
      %v6645 = vrot.slane %v6490, 5
      %v6646 = vrot.slane %v6645, 4
      %v6647 = vrot.slane %v6455, 5
      %v6648 = vsel %vm1982, %v6646, %v6647
      %v6649 = vrot.slane %v6647, 4
      %v6650 = vrot.slane %v6491, 5
      %v6651 = vsel %vm1982, %v6649, %v6650
      %v6652 = vld [vmem:[%s2 + $0x10] sm:$0xf]
      %v6653 = vld [vmem:[%s2 + $0x14] sm:$0xf]
      %v6654 = vld [vmem:[%s2 + $0x18] sm:$0xf]
      %v6655 = vld [vmem:[%s2 + $0x1c] sm:$0xf]
      %v6656 = vunpack.c.l.b16 %v6543
      %v6657 = vunpack.c.l.b16 %v6546
      %v6658 = vunpack.c.l.b16 %v6550
      %v6659 = vunpack.c.l.b16 %v6553
      %v6660 = vunpack.c.l.b16 %v6557
      %v6661 = vunpack.c.l.b16 %v6560
      %v6662 = vunpack.c.l.b16 %v6564
      %v6663 = vunpack.c.l.b16 %v6567
      %v6664 = vunpack.c.l.b16 %v6571
      %v6665 = vunpack.c.l.b16 %v6574
      %v6666 = vunpack.c.l.b16 %v6578
      %v6667 = vunpack.c.l.b16 %v6581
      %v6668 = vunpack.c.l.b16 %v6585
      %v6669 = vunpack.c.l.b16 %v6588
      %v6670 = vunpack.c.l.b16 %v6592
      %v6671 = vunpack.c.l.b16 %v6595
      %v6672 = vunpack.c.l.b16 %v6599
      %v6673 = vunpack.c.l.b16 %v6602
      %v6674 = vunpack.c.l.b16 %v6606
      %v6675 = vunpack.c.l.b16 %v6609
      %v6676 = vunpack.c.l.b16 %v6613
      %v6677 = vunpack.c.l.b16 %v6616
      %v6678 = vunpack.c.l.b16 %v6620
      %v6679 = vunpack.c.l.b16 %v6623
      %v6680 = vunpack.c.l.b16 %v6627
      %v6681 = vunpack.c.l.b16 %v6630
      %v6682 = vunpack.c.l.b16 %v6634
      %v6683 = vunpack.c.l.b16 %v6637
      %v6684 = vunpack.c.l.b16 %v6641
      %v6685 = vunpack.c.l.b16 %v6644
      %v6686 = vunpack.c.l.b16 %v6648
      %v6687 = vunpack.c.l.b16 %v6651
      %v6688 = vpack.c.b16 %v6657, %v6656
      %v6689 = vpack.c.b16 %v6659, %v6658
      %v6690 = vpack.c.b16 %v6661, %v6660
      %v6691 = vpack.c.b16 %v6663, %v6662
      %v6692 = vpack.c.b16 %v6665, %v6664
      %v6693 = vpack.c.b16 %v6667, %v6666
      %v6694 = vpack.c.b16 %v6669, %v6668
      %v6695 = vpack.c.b16 %v6671, %v6670
      %v6696 = vpack.c.b16 %v6673, %v6672
      %v6697 = vpack.c.b16 %v6675, %v6674
      %v6698 = vpack.c.b16 %v6677, %v6676
      %v6699 = vpack.c.b16 %v6679, %v6678
      %v6700 = vpack.c.b16 %v6681, %v6680
      %v6701 = vpack.c.b16 %v6683, %v6682
      %v6702 = vpack.c.b16 %v6685, %v6684
      %v6703 = vpack.c.b16 %v6687, %v6686
      %v6708 = vunpack.c.l.b16 %v6652
      %v6709 = vunpack.c.l.b16 %v6653
      %v6710 = vunpack.c.l.b16 %v6654
      %v6711 = vunpack.c.l.b16 %v6655
      %v6712 = vpack.c.b16 %v6709, %v6708
      %v6713 = vpack.c.b16 %v6711, %v6710
      %v6717 = vsel %vm5615, %v6688, 0
      %v6720 = vsel %vm5615, %v6689, 0
      %v6723 = vsel %vm5615, %v6690, 0
      %v6726 = vsel %vm5615, %v6691, 0
      %v6729 = vsel %vm5615, %v6692, 0
      %v6732 = vsel %vm5615, %v6693, 0
      %v6735 = vsel %vm5615, %v6694, 0
      %v6738 = vsel %vm5615, %v6695, 0
      %v6741 = vsel %vm5615, %v6696, 0
      %v6744 = vsel %vm5615, %v6697, 0
      %v6747 = vsel %vm5615, %v6698, 0
      %v6750 = vsel %vm5615, %v6699, 0
      %v6753 = vsel %vm5615, %v6700, 0
      %v6756 = vsel %vm5615, %v6701, 0
      %v6759 = vsel %vm5615, %v6702, 0
      %v6762 = vsel %vm5615, %v6703, 0
      %6764 = vmatprep.subr.bf16.mxu0 0
      %6765 = vmatpush1.bf16.msra.mxu0 0
      %6766 = vmatprep.subr.bf16.mxu0 0
      %6767 = vmatpush1.bf16.msra.mxu0 0
      %6768 = vmatprep.subr.bf16.mxu0 0
      %6769 = vmatpush1.bf16.msra.mxu0 0
      %6770 = vmatprep.subr.bf16.mxu0 0
      %6771 = vmatpush1.bf16.msra.mxu0 0
      %6772 = vmatprep.subr.bf16.mxu0 0
      %6773 = vmatpush1.bf16.msra.mxu0 0
      %6774 = vmatprep.subr.bf16.mxu0 0
      %6775 = vmatpush1.bf16.msra.mxu0 0
      %6776 = vmatprep.subr.bf16.mxu0 0
      %6777 = vmatpush1.bf16.msra.mxu0 %v6713
      %6778 = vmatprep.subr.bf16.mxu0 0
      %6779 = vmatpush1.bf16.msra.mxu0 %v6712
      %6780 = vmatprep.subr.bf16.mxu0 0
      %6781 = vmatpush2.bf16.msra.mxu0 0
      %6782 = vmatprep.subr.bf16.mxu0 0
      %6783 = vmatpush2.bf16.msra.mxu0 0
      %6784 = vmatprep.subr.bf16.mxu0 0
      %6785 = vmatpush2.bf16.msra.mxu0 0
      %6786 = vmatprep.subr.bf16.mxu0 0
      %6787 = vmatpush2.bf16.msra.mxu0 0
      %6788 = vmatprep.subr.bf16.mxu0 0
      %6789 = vmatpush2.bf16.msra.mxu0 0
      %6790 = vmatprep.subr.bf16.mxu0 0
      %6791 = vmatpush2.bf16.msra.mxu0 0
      %6792 = vmatprep.subr.bf16.mxu0 0
      %6793 = vmatpush2.bf16.msra.mxu0 0
      %6794 = vmatprep.subr.bf16.mxu0 0
      %6795 = vmatpush2.bf16.msra.mxu0 0
      %6796 = vmatprep.mubr.bf16.mxu0 0
      %6797 = vmatmul.mubr.bf16.gmra.mxu0 %v6717
      %v6798 = vpop.f32.mrf.mxu0
      %v6799 = vadd.f32 0.0, %v6798
      %v6800 = vpop.f32.mrf.mxu0
      %v6801 = vpop.f32.mrf.mxu0
      %v6802 = vadd.f32 0.0, %v6801
      %v6803 = vpop.f32.mrf.mxu0
      %6804 = vmatprep.mubr.bf16.mxu0 0
      %6805 = vmatmul.mubr.bf16.gmra.mxu0 %v6720
      %v6806 = vpop.f32.mrf.mxu0
      %v6807 = vadd.f32 0.0, %v6806
      %v6808 = vpop.f32.mrf.mxu0
      %v6809 = vpop.f32.mrf.mxu0
      %v6810 = vadd.f32 0.0, %v6809
      %v6811 = vpop.f32.mrf.mxu0
      %6812 = vmatprep.mubr.bf16.mxu0 0
      %6813 = vmatmul.mubr.bf16.gmra.mxu0 %v6723
      %v6814 = vpop.f32.mrf.mxu0
      %v6815 = vadd.f32 0.0, %v6814
      %v6816 = vpop.f32.mrf.mxu0
      %v6817 = vpop.f32.mrf.mxu0
      %v6818 = vadd.f32 0.0, %v6817
      %v6819 = vpop.f32.mrf.mxu0
      %6820 = vmatprep.mubr.bf16.mxu0 0
      %6821 = vmatmul.mubr.bf16.gmra.mxu0 %v6726
      %v6822 = vpop.f32.mrf.mxu0
      %v6823 = vadd.f32 0.0, %v6822
      %v6824 = vpop.f32.mrf.mxu0
      %v6825 = vpop.f32.mrf.mxu0
      %v6826 = vadd.f32 0.0, %v6825
      %v6827 = vpop.f32.mrf.mxu0
      %6828 = vmatprep.mubr.bf16.mxu0 0
      %6829 = vmatmul.mubr.bf16.gmra.mxu0 %v6729
      %v6830 = vpop.f32.mrf.mxu0
      %v6831 = vadd.f32 0.0, %v6830
      %v6832 = vpop.f32.mrf.mxu0
      %v6833 = vpop.f32.mrf.mxu0
      %v6834 = vadd.f32 0.0, %v6833
      %v6835 = vpop.f32.mrf.mxu0
      %6836 = vmatprep.mubr.bf16.mxu0 0
      %6837 = vmatmul.mubr.bf16.gmra.mxu0 %v6732
      %v6838 = vpop.f32.mrf.mxu0
      %v6839 = vadd.f32 0.0, %v6838
      %v6840 = vpop.f32.mrf.mxu0
      %v6841 = vpop.f32.mrf.mxu0
      %v6842 = vadd.f32 0.0, %v6841
      %v6843 = vpop.f32.mrf.mxu0
      %6844 = vmatprep.mubr.bf16.mxu0 0
      %6845 = vmatmul.mubr.bf16.gmra.mxu0 %v6735
      %v6846 = vpop.f32.mrf.mxu0
      %v6847 = vadd.f32 0.0, %v6846
      %v6848 = vpop.f32.mrf.mxu0
      %v6849 = vpop.f32.mrf.mxu0
      %v6850 = vadd.f32 0.0, %v6849
      %v6851 = vpop.f32.mrf.mxu0
      %6852 = vmatprep.mubr.bf16.mxu0 0
      %6853 = vmatmul.mubr.bf16.gmra.mxu0 %v6738
      %v6854 = vpop.f32.mrf.mxu0
      %v6855 = vadd.f32 0.0, %v6854
      %v6856 = vpop.f32.mrf.mxu0
      %v6857 = vpop.f32.mrf.mxu0
      %v6858 = vadd.f32 0.0, %v6857
      %v6859 = vpop.f32.mrf.mxu0
      %6860 = vmatprep.mubr.bf16.mxu0 0
      %6861 = vmatmul.mubr.bf16.gmra.mxu0 %v6741
      %v6862 = vpop.f32.mrf.mxu0
      %v6863 = vadd.f32 0.0, %v6862
      %v6864 = vpop.f32.mrf.mxu0
      %v6865 = vpop.f32.mrf.mxu0
      %v6866 = vadd.f32 0.0, %v6865
      %v6867 = vpop.f32.mrf.mxu0
      %6868 = vmatprep.mubr.bf16.mxu0 0
      %6869 = vmatmul.mubr.bf16.gmra.mxu0 %v6744
      %v6870 = vpop.f32.mrf.mxu0
      %v6871 = vadd.f32 0.0, %v6870
      %v6872 = vpop.f32.mrf.mxu0
      %v6873 = vpop.f32.mrf.mxu0
      %v6874 = vadd.f32 0.0, %v6873
      %v6875 = vpop.f32.mrf.mxu0
      %6876 = vmatprep.mubr.bf16.mxu0 0
      %6877 = vmatmul.mubr.bf16.gmra.mxu0 %v6747
      %v6878 = vpop.f32.mrf.mxu0
      %v6879 = vadd.f32 0.0, %v6878
      %v6880 = vpop.f32.mrf.mxu0
      %v6881 = vpop.f32.mrf.mxu0
      %v6882 = vadd.f32 0.0, %v6881
      %v6883 = vpop.f32.mrf.mxu0
      %6884 = vmatprep.mubr.bf16.mxu0 0
      %6885 = vmatmul.mubr.bf16.gmra.mxu0 %v6750
      %v6886 = vpop.f32.mrf.mxu0
      %v6887 = vadd.f32 0.0, %v6886
      %v6888 = vpop.f32.mrf.mxu0
      %v6889 = vpop.f32.mrf.mxu0
      %v6890 = vadd.f32 0.0, %v6889
      %v6891 = vpop.f32.mrf.mxu0
      %6892 = vmatprep.mubr.bf16.mxu0 0
      %6893 = vmatmul.mubr.bf16.gmra.mxu0 %v6753
      %v6894 = vpop.f32.mrf.mxu0
      %v6895 = vadd.f32 0.0, %v6894
      %v6896 = vpop.f32.mrf.mxu0
      %v6897 = vpop.f32.mrf.mxu0
      %v6898 = vadd.f32 0.0, %v6897
      %v6899 = vpop.f32.mrf.mxu0
      %6900 = vmatprep.mubr.bf16.mxu0 0
      %6901 = vmatmul.mubr.bf16.gmra.mxu0 %v6756
      %v6902 = vpop.f32.mrf.mxu0
      %v6903 = vadd.f32 0.0, %v6902
      %v6904 = vpop.f32.mrf.mxu0
      %v6905 = vpop.f32.mrf.mxu0
      %v6906 = vadd.f32 0.0, %v6905
      %v6907 = vpop.f32.mrf.mxu0
      %6908 = vmatprep.mubr.bf16.mxu0 0
      %6909 = vmatmul.mubr.bf16.gmra.mxu0 %v6759
      %v6910 = vpop.f32.mrf.mxu0
      %v6911 = vadd.f32 0.0, %v6910
      %v6912 = vpop.f32.mrf.mxu0
      %v6913 = vpop.f32.mrf.mxu0
      %v6914 = vadd.f32 0.0, %v6913
      %v6915 = vpop.f32.mrf.mxu0
      %6916 = vmatprep.mubr.bf16.mxu0 0
      %6917 = vmatmul.mubr.bf16.gmra.mxu0 %v6762
      %v6918 = vpop.f32.mrf.mxu0
      %v6919 = vadd.f32 0.0, %v6918
      %v6920 = vpop.f32.mrf.mxu0
      %v6921 = vpop.f32.mrf.mxu0
      %v6922 = vadd.f32 0.0, %v6921
      %v6923 = vpop.f32.mrf.mxu0
      %6924 = vdwg.mxu0
      %v6941 = vunpack.c.l.b16 %v6424
      %v6942 = vunpack.c.l.b16 %v6425
      %v6943 = vunpack.c.l.b16 %v6426
      %v6944 = vunpack.c.l.b16 %v6427
      %v6945 = vunpack.c.l.b16 %v6428
      %v6946 = vunpack.c.l.b16 %v6429
      %v6947 = vunpack.c.l.b16 %v6430
      %v6948 = vunpack.c.l.b16 %v6431
      %v6949 = vunpack.c.l.b16 %v6432
      %v6950 = vunpack.c.l.b16 %v6433
      %v6951 = vunpack.c.l.b16 %v6434
      %v6952 = vunpack.c.l.b16 %v6435
      %v6953 = vunpack.c.l.b16 %v6436
      %v6954 = vunpack.c.l.b16 %v6437
      %v6955 = vunpack.c.l.b16 %v6438
      %v6956 = vunpack.c.l.b16 %v6439
      %v6957 = vunpack.c.l.b16 %v6440
      %v6958 = vunpack.c.l.b16 %v6441
      %v6959 = vunpack.c.l.b16 %v6442
      %v6960 = vunpack.c.l.b16 %v6443
      %v6961 = vunpack.c.l.b16 %v6444
      %v6962 = vunpack.c.l.b16 %v6445
      %v6963 = vunpack.c.l.b16 %v6446
      %v6964 = vunpack.c.l.b16 %v6447
      %v6965 = vunpack.c.l.b16 %v6448
      %v6966 = vunpack.c.l.b16 %v6449
      %v6967 = vunpack.c.l.b16 %v6450
      %v6968 = vunpack.c.l.b16 %v6451
      %v6969 = vunpack.c.l.b16 %v6452
      %v6970 = vunpack.c.l.b16 %v6453
      %v6971 = vunpack.c.l.b16 %v6454
      %v6972 = vunpack.c.l.b16 %v6455
      %v6973 = vpack.c.b16 %v6942, %v6941
      %v6974 = vpack.c.b16 %v6944, %v6943
      %v6975 = vpack.c.b16 %v6946, %v6945
      %v6976 = vpack.c.b16 %v6948, %v6947
      %v6977 = vpack.c.b16 %v6950, %v6949
      %v6978 = vpack.c.b16 %v6952, %v6951
      %v6979 = vpack.c.b16 %v6954, %v6953
      %v6980 = vpack.c.b16 %v6956, %v6955
      %v6981 = vpack.c.b16 %v6958, %v6957
      %v6982 = vpack.c.b16 %v6960, %v6959
      %v6983 = vpack.c.b16 %v6962, %v6961
      %v6984 = vpack.c.b16 %v6964, %v6963
      %v6985 = vpack.c.b16 %v6966, %v6965
      %v6986 = vpack.c.b16 %v6968, %v6967
      %v6987 = vpack.c.b16 %v6970, %v6969
      %v6988 = vpack.c.b16 %v6972, %v6971
      %v6993 = vunpack.c.l.b16 %v6456
      %v6994 = vunpack.c.l.b16 %v6457
      %v6995 = vunpack.c.l.b16 %v6458
      %v6996 = vunpack.c.l.b16 %v6459
      %v6997 = vpack.c.b16 %v6994, %v6993
      %v6998 = vpack.c.b16 %v6996, %v6995
      %v7002 = vsel %vm5615, %v6973, 0
      %v7005 = vsel %vm5615, %v6974, 0
      %v7008 = vsel %vm5615, %v6975, 0
      %v7011 = vsel %vm5615, %v6976, 0
      %v7014 = vsel %vm5615, %v6977, 0
      %v7017 = vsel %vm5615, %v6978, 0
      %v7020 = vsel %vm5615, %v6979, 0
      %v7023 = vsel %vm5615, %v6980, 0
      %v7026 = vsel %vm5615, %v6981, 0
      %v7029 = vsel %vm5615, %v6982, 0
      %v7032 = vsel %vm5615, %v6983, 0
      %v7035 = vsel %vm5615, %v6984, 0
      %v7038 = vsel %vm5615, %v6985, 0
      %v7041 = vsel %vm5615, %v6986, 0
      %v7044 = vsel %vm5615, %v6987, 0
      %v7047 = vsel %vm5615, %v6988, 0
      %7049 = vmatprep.subr.bf16.mxu0 0
      %7050 = vmatpush1.bf16.msra.mxu0 0
      %7051 = vmatprep.subr.bf16.mxu0 0
      %7052 = vmatpush1.bf16.msra.mxu0 0
      %7053 = vmatprep.subr.bf16.mxu0 0
      %7054 = vmatpush1.bf16.msra.mxu0 0
      %7055 = vmatprep.subr.bf16.mxu0 0
      %7056 = vmatpush1.bf16.msra.mxu0 0
      %7057 = vmatprep.subr.bf16.mxu0 0
      %7058 = vmatpush1.bf16.msra.mxu0 0
      %7059 = vmatprep.subr.bf16.mxu0 0
      %7060 = vmatpush1.bf16.msra.mxu0 0
      %7061 = vmatprep.subr.bf16.mxu0 0
      %7062 = vmatpush1.bf16.msra.mxu0 %v6998
      %7063 = vmatprep.subr.bf16.mxu0 0
      %7064 = vmatpush1.bf16.msra.mxu0 %v6997
      %7065 = vmatprep.subr.bf16.mxu0 0
      %7066 = vmatpush2.bf16.msra.mxu0 0
      %7067 = vmatprep.subr.bf16.mxu0 0
      %7068 = vmatpush2.bf16.msra.mxu0 0
      %7069 = vmatprep.subr.bf16.mxu0 0
      %7070 = vmatpush2.bf16.msra.mxu0 0
      %7071 = vmatprep.subr.bf16.mxu0 0
      %7072 = vmatpush2.bf16.msra.mxu0 0
      %7073 = vmatprep.subr.bf16.mxu0 0
      %7074 = vmatpush2.bf16.msra.mxu0 0
      %7075 = vmatprep.subr.bf16.mxu0 0
      %7076 = vmatpush2.bf16.msra.mxu0 0
      %7077 = vmatprep.subr.bf16.mxu0 0
      %7078 = vmatpush2.bf16.msra.mxu0 0
      %7079 = vmatprep.subr.bf16.mxu0 0
      %7080 = vmatpush2.bf16.msra.mxu0 0
      %7081 = vmatprep.mubr.bf16.mxu0 0
      %7082 = vmatmul.mubr.bf16.gmra.mxu0 %v7002
      %v7083 = vpop.f32.mrf.mxu0
      %v7084 = vadd.f32 %v6799, %v7083
      %v7085 = vpop.f32.mrf.mxu0
      %v7086 = vpop.f32.mrf.mxu0
      %v7087 = vadd.f32 %v6802, %v7086
      %v7088 = vpop.f32.mrf.mxu0
      %7089 = vmatprep.mubr.bf16.mxu0 0
      %7090 = vmatmul.mubr.bf16.gmra.mxu0 %v7005
      %v7091 = vpop.f32.mrf.mxu0
      %v7092 = vadd.f32 %v6807, %v7091
      %v7093 = vpop.f32.mrf.mxu0
      %v7094 = vpop.f32.mrf.mxu0
      %v7095 = vadd.f32 %v6810, %v7094
      %v7096 = vpop.f32.mrf.mxu0
      %7097 = vmatprep.mubr.bf16.mxu0 0
      %7098 = vmatmul.mubr.bf16.gmra.mxu0 %v7008
      %v7099 = vpop.f32.mrf.mxu0
      %v7100 = vadd.f32 %v6815, %v7099
      %v7101 = vpop.f32.mrf.mxu0
      %v7102 = vpop.f32.mrf.mxu0
      %v7103 = vadd.f32 %v6818, %v7102
      %v7104 = vpop.f32.mrf.mxu0
      %7105 = vmatprep.mubr.bf16.mxu0 0
      %7106 = vmatmul.mubr.bf16.gmra.mxu0 %v7011
      %v7107 = vpop.f32.mrf.mxu0
      %v7108 = vadd.f32 %v6823, %v7107
      %v7109 = vpop.f32.mrf.mxu0
      %v7110 = vpop.f32.mrf.mxu0
      %v7111 = vadd.f32 %v6826, %v7110
      %v7112 = vpop.f32.mrf.mxu0
      %7113 = vmatprep.mubr.bf16.mxu0 0
      %7114 = vmatmul.mubr.bf16.gmra.mxu0 %v7014
      %v7115 = vpop.f32.mrf.mxu0
      %v7116 = vadd.f32 %v6831, %v7115
      %v7117 = vpop.f32.mrf.mxu0
      %v7118 = vpop.f32.mrf.mxu0
      %v7119 = vadd.f32 %v6834, %v7118
      %v7120 = vpop.f32.mrf.mxu0
      %7121 = vmatprep.mubr.bf16.mxu0 0
      %7122 = vmatmul.mubr.bf16.gmra.mxu0 %v7017
      %v7123 = vpop.f32.mrf.mxu0
      %v7124 = vadd.f32 %v6839, %v7123
      %v7125 = vpop.f32.mrf.mxu0
      %v7126 = vpop.f32.mrf.mxu0
      %v7127 = vadd.f32 %v6842, %v7126
      %v7128 = vpop.f32.mrf.mxu0
      %7129 = vmatprep.mubr.bf16.mxu0 0
      %7130 = vmatmul.mubr.bf16.gmra.mxu0 %v7020
      %v7131 = vpop.f32.mrf.mxu0
      %v7132 = vadd.f32 %v6847, %v7131
      %v7133 = vpop.f32.mrf.mxu0
      %v7134 = vpop.f32.mrf.mxu0
      %v7135 = vadd.f32 %v6850, %v7134
      %v7136 = vpop.f32.mrf.mxu0
      %7137 = vmatprep.mubr.bf16.mxu0 0
      %7138 = vmatmul.mubr.bf16.gmra.mxu0 %v7023
      %v7139 = vpop.f32.mrf.mxu0
      %v7140 = vadd.f32 %v6855, %v7139
      %v7141 = vpop.f32.mrf.mxu0
      %v7142 = vpop.f32.mrf.mxu0
      %v7143 = vadd.f32 %v6858, %v7142
      %v7144 = vpop.f32.mrf.mxu0
      %7145 = vmatprep.mubr.bf16.mxu0 0
      %7146 = vmatmul.mubr.bf16.gmra.mxu0 %v7026
      %v7147 = vpop.f32.mrf.mxu0
      %v7148 = vadd.f32 %v6863, %v7147
      %v7149 = vpop.f32.mrf.mxu0
      %v7150 = vpop.f32.mrf.mxu0
      %v7151 = vadd.f32 %v6866, %v7150
      %v7152 = vpop.f32.mrf.mxu0
      %7153 = vmatprep.mubr.bf16.mxu0 0
      %7154 = vmatmul.mubr.bf16.gmra.mxu0 %v7029
      %v7155 = vpop.f32.mrf.mxu0
      %v7156 = vadd.f32 %v6871, %v7155
      %v7157 = vpop.f32.mrf.mxu0
      %v7158 = vpop.f32.mrf.mxu0
      %v7159 = vadd.f32 %v6874, %v7158
      %v7160 = vpop.f32.mrf.mxu0
      %7161 = vmatprep.mubr.bf16.mxu0 0
      %7162 = vmatmul.mubr.bf16.gmra.mxu0 %v7032
      %v7163 = vpop.f32.mrf.mxu0
      %v7164 = vadd.f32 %v6879, %v7163
      %v7165 = vpop.f32.mrf.mxu0
      %v7166 = vpop.f32.mrf.mxu0
      %v7167 = vadd.f32 %v6882, %v7166
      %v7168 = vpop.f32.mrf.mxu0
      %7169 = vmatprep.mubr.bf16.mxu0 0
      %7170 = vmatmul.mubr.bf16.gmra.mxu0 %v7035
      %v7171 = vpop.f32.mrf.mxu0
      %v7172 = vadd.f32 %v6887, %v7171
      %v7173 = vpop.f32.mrf.mxu0
      %v7174 = vpop.f32.mrf.mxu0
      %v7175 = vadd.f32 %v6890, %v7174
      %v7176 = vpop.f32.mrf.mxu0
      %7177 = vmatprep.mubr.bf16.mxu0 0
      %7178 = vmatmul.mubr.bf16.gmra.mxu0 %v7038
      %v7179 = vpop.f32.mrf.mxu0
      %v7180 = vadd.f32 %v6895, %v7179
      %v7181 = vpop.f32.mrf.mxu0
      %v7182 = vpop.f32.mrf.mxu0
      %v7183 = vadd.f32 %v6898, %v7182
      %v7184 = vpop.f32.mrf.mxu0
      %7185 = vmatprep.mubr.bf16.mxu0 0
      %7186 = vmatmul.mubr.bf16.gmra.mxu0 %v7041
      %v7187 = vpop.f32.mrf.mxu0
      %v7188 = vadd.f32 %v6903, %v7187
      %v7189 = vpop.f32.mrf.mxu0
      %v7190 = vpop.f32.mrf.mxu0
      %v7191 = vadd.f32 %v6906, %v7190
      %v7192 = vpop.f32.mrf.mxu0
      %7193 = vmatprep.mubr.bf16.mxu0 0
      %7194 = vmatmul.mubr.bf16.gmra.mxu0 %v7044
      %v7195 = vpop.f32.mrf.mxu0
      %v7196 = vadd.f32 %v6911, %v7195
      %v7197 = vpop.f32.mrf.mxu0
      %v7198 = vpop.f32.mrf.mxu0
      %v7199 = vadd.f32 %v6914, %v7198
      %v7200 = vpop.f32.mrf.mxu0
      %7201 = vmatprep.mubr.bf16.mxu0 0
      %7202 = vmatmul.mubr.bf16.gmra.mxu0 %v7047
      %v7203 = vpop.f32.mrf.mxu0
      %v7204 = vadd.f32 %v6919, %v7203
      %v7205 = vpop.f32.mrf.mxu0
      %v7206 = vpop.f32.mrf.mxu0
      %v7207 = vadd.f32 %v6922, %v7206
      %v7208 = vpop.f32.mrf.mxu0
      %7209 = vdwg.mxu0
      %v7210 = vld [vmem:[#allocation3] sm:$0xc]
      %v7211 = vld [vmem:[#allocation3 + $0x8] sm:$0x3]
      %v7212 = vld [vmem:[#allocation3 + $0xc] sm:$0xc]
      %v7213 = vld [vmem:[#allocation3 + $0x14] sm:$0x3]
      %v7214 = vld [vmem:[#allocation3 + $0x18] sm:$0xc]
      %v7215 = vld [vmem:[#allocation3 + $0x20] sm:$0x3]
      %v7216 = vld [vmem:[#allocation3 + $0x24] sm:$0xc]
      %v7217 = vld [vmem:[#allocation3 + $0x2c] sm:$0x3]
      %v7218 = vld [vmem:[#allocation3 + $0x30] sm:$0xc]
      %v7219 = vld [vmem:[#allocation3 + $0x38] sm:$0x3]
      %v7220 = vld [vmem:[#allocation3 + $0x3c] sm:$0xc]
      %v7221 = vld [vmem:[#allocation3 + $0x44] sm:$0x3]
      %v7222 = vld [vmem:[#allocation3 + $0x48] sm:$0xc]
      %v7223 = vld [vmem:[#allocation3 + $0x50] sm:$0x3]
      %v7224 = vld [vmem:[#allocation3 + $0x54] sm:$0xc]
      %v7225 = vld [vmem:[#allocation3 + $0x5c] sm:$0x3]
      %v7226 = vld [vmem:[#allocation3 + $0x60] sm:$0xc]
      %v7227 = vld [vmem:[#allocation3 + $0x68] sm:$0x3]
      %v7228 = vld [vmem:[#allocation3 + $0x6c] sm:$0xc]
      %v7229 = vld [vmem:[#allocation3 + $0x74] sm:$0x3]
      %v7230 = vld [vmem:[#allocation3 + $0x78] sm:$0xc]
      %v7231 = vld [vmem:[#allocation3 + $0x80] sm:$0x3]
      %v7232 = vld [vmem:[#allocation3 + $0x84] sm:$0xc]
      %v7233 = vld [vmem:[#allocation3 + $0x8c] sm:$0x3]
      %v7234 = vld [vmem:[#allocation3 + $0x90] sm:$0xc]
      %v7235 = vld [vmem:[#allocation3 + $0x98] sm:$0x3]
      %v7236 = vld [vmem:[#allocation3 + $0x9c] sm:$0xc]
      %v7237 = vld [vmem:[#allocation3 + $0xa4] sm:$0x3]
      %v7238 = vld [vmem:[#allocation3 + $0xa8] sm:$0xc]
      %v7239 = vld [vmem:[#allocation3 + $0xb0] sm:$0x3]
      %v7240 = vld [vmem:[#allocation3 + $0xb4] sm:$0xc]
      %v7241 = vld [vmem:[#allocation3 + $0xbc] sm:$0x3]
      %vm7274 = vcmask 1041408
      %vm7275 = vcmask 1045508
      %vm7276 = vmor %vm7274, %vm7275
      %v7277 = vrot.slane %v7210, 6
      %v7278 = vrot.slane %v7277, 4
      %v7279 = vrot.slane %v6425, 6
      %v7280 = vsel %vm7276, %v7278, %v7279
      %v7281 = vrot.slane %v7279, 4
      %v7282 = vrot.slane %v7211, 6
      %v7283 = vsel %vm7276, %v7281, %v7282
      %v7284 = vrot.slane %v7212, 6
      %v7285 = vrot.slane %v7284, 4
      %v7286 = vrot.slane %v6427, 6
      %v7287 = vsel %vm7276, %v7285, %v7286
      %v7288 = vrot.slane %v7286, 4
      %v7289 = vrot.slane %v7213, 6
      %v7290 = vsel %vm7276, %v7288, %v7289
      %v7291 = vrot.slane %v7214, 6
      %v7292 = vrot.slane %v7291, 4
      %v7293 = vrot.slane %v6429, 6
      %v7294 = vsel %vm7276, %v7292, %v7293
      %v7295 = vrot.slane %v7293, 4
      %v7296 = vrot.slane %v7215, 6
      %v7297 = vsel %vm7276, %v7295, %v7296
      %v7298 = vrot.slane %v7216, 6
      %v7299 = vrot.slane %v7298, 4
      %v7300 = vrot.slane %v6431, 6
      %v7301 = vsel %vm7276, %v7299, %v7300
      %v7302 = vrot.slane %v7300, 4
      %v7303 = vrot.slane %v7217, 6
      %v7304 = vsel %vm7276, %v7302, %v7303
      %v7305 = vrot.slane %v7218, 6
      %v7306 = vrot.slane %v7305, 4
      %v7307 = vrot.slane %v6433, 6
      %v7308 = vsel %vm7276, %v7306, %v7307
      %v7309 = vrot.slane %v7307, 4
      %v7310 = vrot.slane %v7219, 6
      %v7311 = vsel %vm7276, %v7309, %v7310
      %v7312 = vrot.slane %v7220, 6
      %v7313 = vrot.slane %v7312, 4
      %v7314 = vrot.slane %v6435, 6
      %v7315 = vsel %vm7276, %v7313, %v7314
      %v7316 = vrot.slane %v7314, 4
      %v7317 = vrot.slane %v7221, 6
      %v7318 = vsel %vm7276, %v7316, %v7317
      %v7319 = vrot.slane %v7222, 6
      %v7320 = vrot.slane %v7319, 4
      %v7321 = vrot.slane %v6437, 6
      %v7322 = vsel %vm7276, %v7320, %v7321
      %v7323 = vrot.slane %v7321, 4
      %v7324 = vrot.slane %v7223, 6
      %v7325 = vsel %vm7276, %v7323, %v7324
      %v7326 = vrot.slane %v7224, 6
      %v7327 = vrot.slane %v7326, 4
      %v7328 = vrot.slane %v6439, 6
      %v7329 = vsel %vm7276, %v7327, %v7328
      %v7330 = vrot.slane %v7328, 4
      %v7331 = vrot.slane %v7225, 6
      %v7332 = vsel %vm7276, %v7330, %v7331
      %v7333 = vrot.slane %v7226, 6
      %v7334 = vrot.slane %v7333, 4
      %v7335 = vrot.slane %v6441, 6
      %v7336 = vsel %vm7276, %v7334, %v7335
      %v7337 = vrot.slane %v7335, 4
      %v7338 = vrot.slane %v7227, 6
      %v7339 = vsel %vm7276, %v7337, %v7338
      %v7340 = vrot.slane %v7228, 6
      %v7341 = vrot.slane %v7340, 4
      %v7342 = vrot.slane %v6443, 6
      %v7343 = vsel %vm7276, %v7341, %v7342
      %v7344 = vrot.slane %v7342, 4
      %v7345 = vrot.slane %v7229, 6
      %v7346 = vsel %vm7276, %v7344, %v7345
      %v7347 = vrot.slane %v7230, 6
      %v7348 = vrot.slane %v7347, 4
      %v7349 = vrot.slane %v6445, 6
      %v7350 = vsel %vm7276, %v7348, %v7349
      %v7351 = vrot.slane %v7349, 4
      %v7352 = vrot.slane %v7231, 6
      %v7353 = vsel %vm7276, %v7351, %v7352
      %v7354 = vrot.slane %v7232, 6
      %v7355 = vrot.slane %v7354, 4
      %v7356 = vrot.slane %v6447, 6
      %v7357 = vsel %vm7276, %v7355, %v7356
      %v7358 = vrot.slane %v7356, 4
      %v7359 = vrot.slane %v7233, 6
      %v7360 = vsel %vm7276, %v7358, %v7359
      %v7361 = vrot.slane %v7234, 6
      %v7362 = vrot.slane %v7361, 4
      %v7363 = vrot.slane %v6449, 6
      %v7364 = vsel %vm7276, %v7362, %v7363
      %v7365 = vrot.slane %v7363, 4
      %v7366 = vrot.slane %v7235, 6
      %v7367 = vsel %vm7276, %v7365, %v7366
      %v7368 = vrot.slane %v7236, 6
      %v7369 = vrot.slane %v7368, 4
      %v7370 = vrot.slane %v6451, 6
      %v7371 = vsel %vm7276, %v7369, %v7370
      %v7372 = vrot.slane %v7370, 4
      %v7373 = vrot.slane %v7237, 6
      %v7374 = vsel %vm7276, %v7372, %v7373
      %v7375 = vrot.slane %v7238, 6
      %v7376 = vrot.slane %v7375, 4
      %v7377 = vrot.slane %v6453, 6
      %v7378 = vsel %vm7276, %v7376, %v7377
      %v7379 = vrot.slane %v7377, 4
      %v7380 = vrot.slane %v7239, 6
      %v7381 = vsel %vm7276, %v7379, %v7380
      %v7382 = vrot.slane %v7240, 6
      %v7383 = vrot.slane %v7382, 4
      %v7384 = vrot.slane %v6455, 6
      %v7385 = vsel %vm7276, %v7383, %v7384
      %v7386 = vrot.slane %v7384, 4
      %v7387 = vrot.slane %v7241, 6
      %v7388 = vsel %vm7276, %v7386, %v7387
      %v7389 = vld [vmem:[%s2 + $0x20] sm:$0xf]
      %v7390 = vld [vmem:[%s2 + $0x24] sm:$0xf]
      %v7391 = vld [vmem:[%s2 + $0x28] sm:$0xf]
      %v7392 = vld [vmem:[%s2 + $0x2c] sm:$0xf]
      %v7393 = vunpack.c.l.b16 %v7280
      %v7394 = vunpack.c.l.b16 %v7283
      %v7395 = vunpack.c.l.b16 %v7287
      %v7396 = vunpack.c.l.b16 %v7290
      %v7397 = vunpack.c.l.b16 %v7294
      %v7398 = vunpack.c.l.b16 %v7297
      %v7399 = vunpack.c.l.b16 %v7301
      %v7400 = vunpack.c.l.b16 %v7304
      %v7401 = vunpack.c.l.b16 %v7308
      %v7402 = vunpack.c.l.b16 %v7311
      %v7403 = vunpack.c.l.b16 %v7315
      %v7404 = vunpack.c.l.b16 %v7318
      %v7405 = vunpack.c.l.b16 %v7322
      %v7406 = vunpack.c.l.b16 %v7325
      %v7407 = vunpack.c.l.b16 %v7329
      %v7408 = vunpack.c.l.b16 %v7332
      %v7409 = vunpack.c.l.b16 %v7336
      %v7410 = vunpack.c.l.b16 %v7339
      %v7411 = vunpack.c.l.b16 %v7343
      %v7412 = vunpack.c.l.b16 %v7346
      %v7413 = vunpack.c.l.b16 %v7350
      %v7414 = vunpack.c.l.b16 %v7353
      %v7415 = vunpack.c.l.b16 %v7357
      %v7416 = vunpack.c.l.b16 %v7360
      %v7417 = vunpack.c.l.b16 %v7364
      %v7418 = vunpack.c.l.b16 %v7367
      %v7419 = vunpack.c.l.b16 %v7371
      %v7420 = vunpack.c.l.b16 %v7374
      %v7421 = vunpack.c.l.b16 %v7378
      %v7422 = vunpack.c.l.b16 %v7381
      %v7423 = vunpack.c.l.b16 %v7385
      %v7424 = vunpack.c.l.b16 %v7388
      %v7425 = vpack.c.b16 %v7394, %v7393
      %v7426 = vpack.c.b16 %v7396, %v7395
      %v7427 = vpack.c.b16 %v7398, %v7397
      %v7428 = vpack.c.b16 %v7400, %v7399
      %v7429 = vpack.c.b16 %v7402, %v7401
      %v7430 = vpack.c.b16 %v7404, %v7403
      %v7431 = vpack.c.b16 %v7406, %v7405
      %v7432 = vpack.c.b16 %v7408, %v7407
      %v7433 = vpack.c.b16 %v7410, %v7409
      %v7434 = vpack.c.b16 %v7412, %v7411
      %v7435 = vpack.c.b16 %v7414, %v7413
      %v7436 = vpack.c.b16 %v7416, %v7415
      %v7437 = vpack.c.b16 %v7418, %v7417
      %v7438 = vpack.c.b16 %v7420, %v7419
      %v7439 = vpack.c.b16 %v7422, %v7421
      %v7440 = vpack.c.b16 %v7424, %v7423
      %v7445 = vunpack.c.l.b16 %v7389
      %v7446 = vunpack.c.l.b16 %v7390
      %v7447 = vunpack.c.l.b16 %v7391
      %v7448 = vunpack.c.l.b16 %v7392
      %v7449 = vpack.c.b16 %v7446, %v7445
      %v7450 = vpack.c.b16 %v7448, %v7447
      %v7454 = vsel %vm5615, %v7425, 0
      %v7457 = vsel %vm5615, %v7426, 0
      %v7460 = vsel %vm5615, %v7427, 0
      %v7463 = vsel %vm5615, %v7428, 0
      %v7466 = vsel %vm5615, %v7429, 0
      %v7469 = vsel %vm5615, %v7430, 0
      %v7472 = vsel %vm5615, %v7431, 0
      %v7475 = vsel %vm5615, %v7432, 0
      %v7478 = vsel %vm5615, %v7433, 0
      %v7481 = vsel %vm5615, %v7434, 0
      %v7484 = vsel %vm5615, %v7435, 0
      %v7487 = vsel %vm5615, %v7436, 0
      %v7490 = vsel %vm5615, %v7437, 0
      %v7493 = vsel %vm5615, %v7438, 0
      %v7496 = vsel %vm5615, %v7439, 0
      %v7499 = vsel %vm5615, %v7440, 0
      %7501 = vmatprep.subr.bf16.mxu0 0
      %7502 = vmatpush1.bf16.msra.mxu0 0
      %7503 = vmatprep.subr.bf16.mxu0 0
      %7504 = vmatpush1.bf16.msra.mxu0 0
      %7505 = vmatprep.subr.bf16.mxu0 0
      %7506 = vmatpush1.bf16.msra.mxu0 0
      %7507 = vmatprep.subr.bf16.mxu0 0
      %7508 = vmatpush1.bf16.msra.mxu0 0
      %7509 = vmatprep.subr.bf16.mxu0 0
      %7510 = vmatpush1.bf16.msra.mxu0 0
      %7511 = vmatprep.subr.bf16.mxu0 0
      %7512 = vmatpush1.bf16.msra.mxu0 0
      %7513 = vmatprep.subr.bf16.mxu0 0
      %7514 = vmatpush1.bf16.msra.mxu0 %v7450
      %7515 = vmatprep.subr.bf16.mxu0 0
      %7516 = vmatpush1.bf16.msra.mxu0 %v7449
      %7517 = vmatprep.subr.bf16.mxu0 0
      %7518 = vmatpush2.bf16.msra.mxu0 0
      %7519 = vmatprep.subr.bf16.mxu0 0
      %7520 = vmatpush2.bf16.msra.mxu0 0
      %7521 = vmatprep.subr.bf16.mxu0 0
      %7522 = vmatpush2.bf16.msra.mxu0 0
      %7523 = vmatprep.subr.bf16.mxu0 0
      %7524 = vmatpush2.bf16.msra.mxu0 0
      %7525 = vmatprep.subr.bf16.mxu0 0
      %7526 = vmatpush2.bf16.msra.mxu0 0
      %7527 = vmatprep.subr.bf16.mxu0 0
      %7528 = vmatpush2.bf16.msra.mxu0 0
      %7529 = vmatprep.subr.bf16.mxu0 0
      %7530 = vmatpush2.bf16.msra.mxu0 0
      %7531 = vmatprep.subr.bf16.mxu0 0
      %7532 = vmatpush2.bf16.msra.mxu0 0
      %7533 = vmatprep.mubr.bf16.mxu0 0
      %7534 = vmatmul.mubr.bf16.gmra.mxu0 %v7454
      %v7535 = vpop.f32.mrf.mxu0
      %v7536 = vadd.f32 0.0, %v7535
      %v7537 = vpop.f32.mrf.mxu0
      %v7538 = vpop.f32.mrf.mxu0
      %v7539 = vadd.f32 0.0, %v7538
      %v7540 = vpop.f32.mrf.mxu0
      %7541 = vmatprep.mubr.bf16.mxu0 0
      %7542 = vmatmul.mubr.bf16.gmra.mxu0 %v7457
      %v7543 = vpop.f32.mrf.mxu0
      %v7544 = vadd.f32 0.0, %v7543
      %v7545 = vpop.f32.mrf.mxu0
      %v7546 = vpop.f32.mrf.mxu0
      %v7547 = vadd.f32 0.0, %v7546
      %v7548 = vpop.f32.mrf.mxu0
      %7549 = vmatprep.mubr.bf16.mxu0 0
      %7550 = vmatmul.mubr.bf16.gmra.mxu0 %v7460
      %v7551 = vpop.f32.mrf.mxu0
      %v7552 = vadd.f32 0.0, %v7551
      %v7553 = vpop.f32.mrf.mxu0
      %v7554 = vpop.f32.mrf.mxu0
      %v7555 = vadd.f32 0.0, %v7554
      %v7556 = vpop.f32.mrf.mxu0
      %7557 = vmatprep.mubr.bf16.mxu0 0
      %7558 = vmatmul.mubr.bf16.gmra.mxu0 %v7463
      %v7559 = vpop.f32.mrf.mxu0
      %v7560 = vadd.f32 0.0, %v7559
      %v7561 = vpop.f32.mrf.mxu0
      %v7562 = vpop.f32.mrf.mxu0
      %v7563 = vadd.f32 0.0, %v7562
      %v7564 = vpop.f32.mrf.mxu0
      %7565 = vmatprep.mubr.bf16.mxu0 0
      %7566 = vmatmul.mubr.bf16.gmra.mxu0 %v7466
      %v7567 = vpop.f32.mrf.mxu0
      %v7568 = vadd.f32 0.0, %v7567
      %v7569 = vpop.f32.mrf.mxu0
      %v7570 = vpop.f32.mrf.mxu0
      %v7571 = vadd.f32 0.0, %v7570
      %v7572 = vpop.f32.mrf.mxu0
      %7573 = vmatprep.mubr.bf16.mxu0 0
      %7574 = vmatmul.mubr.bf16.gmra.mxu0 %v7469
      %v7575 = vpop.f32.mrf.mxu0
      %v7576 = vadd.f32 0.0, %v7575
      %v7577 = vpop.f32.mrf.mxu0
      %v7578 = vpop.f32.mrf.mxu0
      %v7579 = vadd.f32 0.0, %v7578
      %v7580 = vpop.f32.mrf.mxu0
      %7581 = vmatprep.mubr.bf16.mxu0 0
      %7582 = vmatmul.mubr.bf16.gmra.mxu0 %v7472
      %v7583 = vpop.f32.mrf.mxu0
      %v7584 = vadd.f32 0.0, %v7583
      %v7585 = vpop.f32.mrf.mxu0
      %v7586 = vpop.f32.mrf.mxu0
      %v7587 = vadd.f32 0.0, %v7586
      %v7588 = vpop.f32.mrf.mxu0
      %7589 = vmatprep.mubr.bf16.mxu0 0
      %7590 = vmatmul.mubr.bf16.gmra.mxu0 %v7475
      %v7591 = vpop.f32.mrf.mxu0
      %v7592 = vadd.f32 0.0, %v7591
      %v7593 = vpop.f32.mrf.mxu0
      %v7594 = vpop.f32.mrf.mxu0
      %v7595 = vadd.f32 0.0, %v7594
      %v7596 = vpop.f32.mrf.mxu0
      %7597 = vmatprep.mubr.bf16.mxu0 0
      %7598 = vmatmul.mubr.bf16.gmra.mxu0 %v7478
      %v7599 = vpop.f32.mrf.mxu0
      %v7600 = vadd.f32 0.0, %v7599
      %v7601 = vpop.f32.mrf.mxu0
      %v7602 = vpop.f32.mrf.mxu0
      %v7603 = vadd.f32 0.0, %v7602
      %v7604 = vpop.f32.mrf.mxu0
      %7605 = vmatprep.mubr.bf16.mxu0 0
      %7606 = vmatmul.mubr.bf16.gmra.mxu0 %v7481
      %v7607 = vpop.f32.mrf.mxu0
      %v7608 = vadd.f32 0.0, %v7607
      %v7609 = vpop.f32.mrf.mxu0
      %v7610 = vpop.f32.mrf.mxu0
      %v7611 = vadd.f32 0.0, %v7610
      %v7612 = vpop.f32.mrf.mxu0
      %7613 = vmatprep.mubr.bf16.mxu0 0
      %7614 = vmatmul.mubr.bf16.gmra.mxu0 %v7484
      %v7615 = vpop.f32.mrf.mxu0
      %v7616 = vadd.f32 0.0, %v7615
      %v7617 = vpop.f32.mrf.mxu0
      %v7618 = vpop.f32.mrf.mxu0
      %v7619 = vadd.f32 0.0, %v7618
      %v7620 = vpop.f32.mrf.mxu0
      %7621 = vmatprep.mubr.bf16.mxu0 0
      %7622 = vmatmul.mubr.bf16.gmra.mxu0 %v7487
      %v7623 = vpop.f32.mrf.mxu0
      %v7624 = vadd.f32 0.0, %v7623
      %v7625 = vpop.f32.mrf.mxu0
      %v7626 = vpop.f32.mrf.mxu0
      %v7627 = vadd.f32 0.0, %v7626
      %v7628 = vpop.f32.mrf.mxu0
      %7629 = vmatprep.mubr.bf16.mxu0 0
      %7630 = vmatmul.mubr.bf16.gmra.mxu0 %v7490
      %v7631 = vpop.f32.mrf.mxu0
      %v7632 = vadd.f32 0.0, %v7631
      %v7633 = vpop.f32.mrf.mxu0
      %v7634 = vpop.f32.mrf.mxu0
      %v7635 = vadd.f32 0.0, %v7634
      %v7636 = vpop.f32.mrf.mxu0
      %7637 = vmatprep.mubr.bf16.mxu0 0
      %7638 = vmatmul.mubr.bf16.gmra.mxu0 %v7493
      %v7639 = vpop.f32.mrf.mxu0
      %v7640 = vadd.f32 0.0, %v7639
      %v7641 = vpop.f32.mrf.mxu0
      %v7642 = vpop.f32.mrf.mxu0
      %v7643 = vadd.f32 0.0, %v7642
      %v7644 = vpop.f32.mrf.mxu0
      %7645 = vmatprep.mubr.bf16.mxu0 0
      %7646 = vmatmul.mubr.bf16.gmra.mxu0 %v7496
      %v7647 = vpop.f32.mrf.mxu0
      %v7648 = vadd.f32 0.0, %v7647
      %v7649 = vpop.f32.mrf.mxu0
      %v7650 = vpop.f32.mrf.mxu0
      %v7651 = vadd.f32 0.0, %v7650
      %v7652 = vpop.f32.mrf.mxu0
      %7653 = vmatprep.mubr.bf16.mxu0 0
      %7654 = vmatmul.mubr.bf16.gmra.mxu0 %v7499
      %v7655 = vpop.f32.mrf.mxu0
      %v7656 = vadd.f32 0.0, %v7655
      %v7657 = vpop.f32.mrf.mxu0
      %v7658 = vpop.f32.mrf.mxu0
      %v7659 = vadd.f32 0.0, %v7658
      %v7660 = vpop.f32.mrf.mxu0
      %7661 = vdwg.mxu0
      %v7662 = vadd.f32 %v7084, %v7536
      %v7663 = vadd.f32 %v7087, %v7539
      %v7664 = vadd.f32 %v7092, %v7544
      %v7665 = vadd.f32 %v7095, %v7547
      %v7666 = vadd.f32 %v7100, %v7552
      %v7667 = vadd.f32 %v7103, %v7555
      %v7668 = vadd.f32 %v7108, %v7560
      %v7669 = vadd.f32 %v7111, %v7563
      %v7670 = vadd.f32 %v7116, %v7568
      %v7671 = vadd.f32 %v7119, %v7571
      %v7672 = vadd.f32 %v7124, %v7576
      %v7673 = vadd.f32 %v7127, %v7579
      %v7674 = vadd.f32 %v7132, %v7584
      %v7675 = vadd.f32 %v7135, %v7587
      %v7676 = vadd.f32 %v7140, %v7592
      %v7677 = vadd.f32 %v7143, %v7595
      %v7678 = vadd.f32 %v7148, %v7600
      %v7679 = vadd.f32 %v7151, %v7603
      %v7680 = vadd.f32 %v7156, %v7608
      %v7681 = vadd.f32 %v7159, %v7611
      %v7682 = vadd.f32 %v7164, %v7616
      %v7683 = vadd.f32 %v7167, %v7619
      %v7684 = vadd.f32 %v7172, %v7624
      %v7685 = vadd.f32 %v7175, %v7627
      %v7686 = vadd.f32 %v7180, %v7632
      %v7687 = vadd.f32 %v7183, %v7635
      %v7688 = vadd.f32 %v7188, %v7640
      %v7689 = vadd.f32 %v7191, %v7643
      %v7690 = vadd.f32 %v7196, %v7648
      %v7691 = vadd.f32 %v7199, %v7651
      %v7692 = vadd.f32 %v7204, %v7656
      %v7693 = vadd.f32 %v7207, %v7659
      %v7694 = vld [vmem:[%s6373] sm:$0xf]
      %v7695 = vld [vmem:[%s6373 + $0x4] sm:$0xf]
      %v7696 = vld [vmem:[%s6373 + $0xc] sm:$0xf]
      %v7697 = vld [vmem:[%s6373 + $0x10] sm:$0xf]
      %v7698 = vld [vmem:[%s6373 + $0x18] sm:$0xf]
      %v7699 = vld [vmem:[%s6373 + $0x1c] sm:$0xf]
      %v7700 = vld [vmem:[%s6373 + $0x24] sm:$0xf]
      %v7701 = vld [vmem:[%s6373 + $0x28] sm:$0xf]
      %v7702 = vld [vmem:[%s6373 + $0x30] sm:$0xf]
      %v7703 = vld [vmem:[%s6373 + $0x34] sm:$0xf]
      %v7704 = vld [vmem:[%s6373 + $0x3c] sm:$0xf]
      %v7705 = vld [vmem:[%s6373 + $0x40] sm:$0xf]
      %v7706 = vld [vmem:[%s6373 + $0x48] sm:$0xf]
      %v7707 = vld [vmem:[%s6373 + $0x4c] sm:$0xf]
      %v7708 = vld [vmem:[%s6373 + $0x54] sm:$0xf]
      %v7709 = vld [vmem:[%s6373 + $0x58] sm:$0xf]
      %v7710 = vld [vmem:[%s6373 + $0x60] sm:$0xf]
      %v7711 = vld [vmem:[%s6373 + $0x64] sm:$0xf]
      %v7712 = vld [vmem:[%s6373 + $0x6c] sm:$0xf]
      %v7713 = vld [vmem:[%s6373 + $0x70] sm:$0xf]
      %v7714 = vld [vmem:[%s6373 + $0x78] sm:$0xf]
      %v7715 = vld [vmem:[%s6373 + $0x7c] sm:$0xf]
      %v7716 = vld [vmem:[%s6373 + $0x84] sm:$0xf]
      %v7717 = vld [vmem:[%s6373 + $0x88] sm:$0xf]
      %v7718 = vld [vmem:[%s6373 + $0x90] sm:$0xf]
      %v7719 = vld [vmem:[%s6373 + $0x94] sm:$0xf]
      %v7720 = vld [vmem:[%s6373 + $0x9c] sm:$0xf]
      %v7721 = vld [vmem:[%s6373 + $0xa0] sm:$0xf]
      %v7722 = vld [vmem:[%s6373 + $0xa8] sm:$0xf]
      %v7723 = vld [vmem:[%s6373 + $0xac] sm:$0xf]
      %v7724 = vld [vmem:[%s6373 + $0xb4] sm:$0xf]
      %v7725 = vld [vmem:[%s6373 + $0xb8] sm:$0xf]
      %v7726 = vld [vmem:[%s2 + $0x30] sm:$0xf]
      %v7727 = vld [vmem:[%s2 + $0x34] sm:$0xf]
      %v7728 = vld [vmem:[%s2 + $0x38] sm:$0xf]
      %v7729 = vld [vmem:[%s2 + $0x3c] sm:$0xf]
      %v7762 = vunpack.c.l.b16 %v7694
      %v7763 = vunpack.c.l.b16 %v7695
      %v7764 = vunpack.c.l.b16 %v7696
      %v7765 = vunpack.c.l.b16 %v7697
      %v7766 = vunpack.c.l.b16 %v7698
      %v7767 = vunpack.c.l.b16 %v7699
      %v7768 = vunpack.c.l.b16 %v7700
      %v7769 = vunpack.c.l.b16 %v7701
      %v7770 = vunpack.c.l.b16 %v7702
      %v7771 = vunpack.c.l.b16 %v7703
      %v7772 = vunpack.c.l.b16 %v7704
      %v7773 = vunpack.c.l.b16 %v7705
      %v7774 = vunpack.c.l.b16 %v7706
      %v7775 = vunpack.c.l.b16 %v7707
      %v7776 = vunpack.c.l.b16 %v7708
      %v7777 = vunpack.c.l.b16 %v7709
      %v7778 = vunpack.c.l.b16 %v7710
      %v7779 = vunpack.c.l.b16 %v7711
      %v7780 = vunpack.c.l.b16 %v7712
      %v7781 = vunpack.c.l.b16 %v7713
      %v7782 = vunpack.c.l.b16 %v7714
      %v7783 = vunpack.c.l.b16 %v7715
      %v7784 = vunpack.c.l.b16 %v7716
      %v7785 = vunpack.c.l.b16 %v7717
      %v7786 = vunpack.c.l.b16 %v7718
      %v7787 = vunpack.c.l.b16 %v7719
      %v7788 = vunpack.c.l.b16 %v7720
      %v7789 = vunpack.c.l.b16 %v7721
      %v7790 = vunpack.c.l.b16 %v7722
      %v7791 = vunpack.c.l.b16 %v7723
      %v7792 = vunpack.c.l.b16 %v7724
      %v7793 = vunpack.c.l.b16 %v7725
      %v7794 = vpack.c.b16 %v7763, %v7762
      %v7795 = vpack.c.b16 %v7765, %v7764
      %v7796 = vpack.c.b16 %v7767, %v7766
      %v7797 = vpack.c.b16 %v7769, %v7768
      %v7798 = vpack.c.b16 %v7771, %v7770
      %v7799 = vpack.c.b16 %v7773, %v7772
      %v7800 = vpack.c.b16 %v7775, %v7774
      %v7801 = vpack.c.b16 %v7777, %v7776
      %v7802 = vpack.c.b16 %v7779, %v7778
      %v7803 = vpack.c.b16 %v7781, %v7780
      %v7804 = vpack.c.b16 %v7783, %v7782
      %v7805 = vpack.c.b16 %v7785, %v7784
      %v7806 = vpack.c.b16 %v7787, %v7786
      %v7807 = vpack.c.b16 %v7789, %v7788
      %v7808 = vpack.c.b16 %v7791, %v7790
      %v7809 = vpack.c.b16 %v7793, %v7792
      %v7814 = vunpack.c.l.b16 %v7726
      %v7815 = vunpack.c.l.b16 %v7727
      %v7816 = vunpack.c.l.b16 %v7728
      %v7817 = vunpack.c.l.b16 %v7729
      %v7818 = vpack.c.b16 %v7815, %v7814
      %v7819 = vpack.c.b16 %v7817, %v7816
      %v7823 = vsel %vm5615, %v7794, 0
      %v7826 = vsel %vm5615, %v7795, 0
      %v7829 = vsel %vm5615, %v7796, 0
      %v7832 = vsel %vm5615, %v7797, 0
      %v7835 = vsel %vm5615, %v7798, 0
      %v7838 = vsel %vm5615, %v7799, 0
      %v7841 = vsel %vm5615, %v7800, 0
      %v7844 = vsel %vm5615, %v7801, 0
      %v7847 = vsel %vm5615, %v7802, 0
      %v7850 = vsel %vm5615, %v7803, 0
      %v7853 = vsel %vm5615, %v7804, 0
      %v7856 = vsel %vm5615, %v7805, 0
      %v7859 = vsel %vm5615, %v7806, 0
      %v7862 = vsel %vm5615, %v7807, 0
      %v7865 = vsel %vm5615, %v7808, 0
      %v7868 = vsel %vm5615, %v7809, 0
      %7870 = vmatprep.subr.bf16.mxu0 0
      %7871 = vmatpush1.bf16.msra.mxu0 0
      %7872 = vmatprep.subr.bf16.mxu0 0
      %7873 = vmatpush1.bf16.msra.mxu0 0
      %7874 = vmatprep.subr.bf16.mxu0 0
      %7875 = vmatpush1.bf16.msra.mxu0 0
      %7876 = vmatprep.subr.bf16.mxu0 0
      %7877 = vmatpush1.bf16.msra.mxu0 0
      %7878 = vmatprep.subr.bf16.mxu0 0
      %7879 = vmatpush1.bf16.msra.mxu0 0
      %7880 = vmatprep.subr.bf16.mxu0 0
      %7881 = vmatpush1.bf16.msra.mxu0 0
      %7882 = vmatprep.subr.bf16.mxu0 0
      %7883 = vmatpush1.bf16.msra.mxu0 %v7819
      %7884 = vmatprep.subr.bf16.mxu0 0
      %7885 = vmatpush1.bf16.msra.mxu0 %v7818
      %7886 = vmatprep.subr.bf16.mxu0 0
      %7887 = vmatpush2.bf16.msra.mxu0 0
      %7888 = vmatprep.subr.bf16.mxu0 0
      %7889 = vmatpush2.bf16.msra.mxu0 0
      %7890 = vmatprep.subr.bf16.mxu0 0
      %7891 = vmatpush2.bf16.msra.mxu0 0
      %7892 = vmatprep.subr.bf16.mxu0 0
      %7893 = vmatpush2.bf16.msra.mxu0 0
      %7894 = vmatprep.subr.bf16.mxu0 0
      %7895 = vmatpush2.bf16.msra.mxu0 0
      %7896 = vmatprep.subr.bf16.mxu0 0
      %7897 = vmatpush2.bf16.msra.mxu0 0
      %7898 = vmatprep.subr.bf16.mxu0 0
      %7899 = vmatpush2.bf16.msra.mxu0 0
      %7900 = vmatprep.subr.bf16.mxu0 0
      %7901 = vmatpush2.bf16.msra.mxu0 0
      %7902 = vmatprep.mubr.bf16.mxu0 0
      %7903 = vmatmul.mubr.bf16.gmra.mxu0 %v7823
      %v7904 = vpop.f32.mrf.mxu0
      %v7905 = vadd.f32 0.0, %v7904
      %v7906 = vpop.f32.mrf.mxu0
      %v7907 = vpop.f32.mrf.mxu0
      %v7908 = vadd.f32 0.0, %v7907
      %v7909 = vpop.f32.mrf.mxu0
      %7910 = vmatprep.mubr.bf16.mxu0 0
      %7911 = vmatmul.mubr.bf16.gmra.mxu0 %v7826
      %v7912 = vpop.f32.mrf.mxu0
      %v7913 = vadd.f32 0.0, %v7912
      %v7914 = vpop.f32.mrf.mxu0
      %v7915 = vpop.f32.mrf.mxu0
      %v7916 = vadd.f32 0.0, %v7915
      %v7917 = vpop.f32.mrf.mxu0
      %7918 = vmatprep.mubr.bf16.mxu0 0
      %7919 = vmatmul.mubr.bf16.gmra.mxu0 %v7829
      %v7920 = vpop.f32.mrf.mxu0
      %v7921 = vadd.f32 0.0, %v7920
      %v7922 = vpop.f32.mrf.mxu0
      %v7923 = vpop.f32.mrf.mxu0
      %v7924 = vadd.f32 0.0, %v7923
      %v7925 = vpop.f32.mrf.mxu0
      %7926 = vmatprep.mubr.bf16.mxu0 0
      %7927 = vmatmul.mubr.bf16.gmra.mxu0 %v7832
      %v7928 = vpop.f32.mrf.mxu0
      %v7929 = vadd.f32 0.0, %v7928
      %v7930 = vpop.f32.mrf.mxu0
      %v7931 = vpop.f32.mrf.mxu0
      %v7932 = vadd.f32 0.0, %v7931
      %v7933 = vpop.f32.mrf.mxu0
      %7934 = vmatprep.mubr.bf16.mxu0 0
      %7935 = vmatmul.mubr.bf16.gmra.mxu0 %v7835
      %v7936 = vpop.f32.mrf.mxu0
      %v7937 = vadd.f32 0.0, %v7936
      %v7938 = vpop.f32.mrf.mxu0
      %v7939 = vpop.f32.mrf.mxu0
      %v7940 = vadd.f32 0.0, %v7939
      %v7941 = vpop.f32.mrf.mxu0
      %7942 = vmatprep.mubr.bf16.mxu0 0
      %7943 = vmatmul.mubr.bf16.gmra.mxu0 %v7838
      %v7944 = vpop.f32.mrf.mxu0
      %v7945 = vadd.f32 0.0, %v7944
      %v7946 = vpop.f32.mrf.mxu0
      %v7947 = vpop.f32.mrf.mxu0
      %v7948 = vadd.f32 0.0, %v7947
      %v7949 = vpop.f32.mrf.mxu0
      %7950 = vmatprep.mubr.bf16.mxu0 0
      %7951 = vmatmul.mubr.bf16.gmra.mxu0 %v7841
      %v7952 = vpop.f32.mrf.mxu0
      %v7953 = vadd.f32 0.0, %v7952
      %v7954 = vpop.f32.mrf.mxu0
      %v7955 = vpop.f32.mrf.mxu0
      %v7956 = vadd.f32 0.0, %v7955
      %v7957 = vpop.f32.mrf.mxu0
      %7958 = vmatprep.mubr.bf16.mxu0 0
      %7959 = vmatmul.mubr.bf16.gmra.mxu0 %v7844
      %v7960 = vpop.f32.mrf.mxu0
      %v7961 = vadd.f32 0.0, %v7960
      %v7962 = vpop.f32.mrf.mxu0
      %v7963 = vpop.f32.mrf.mxu0
      %v7964 = vadd.f32 0.0, %v7963
      %v7965 = vpop.f32.mrf.mxu0
      %7966 = vmatprep.mubr.bf16.mxu0 0
      %7967 = vmatmul.mubr.bf16.gmra.mxu0 %v7847
      %v7968 = vpop.f32.mrf.mxu0
      %v7969 = vadd.f32 0.0, %v7968
      %v7970 = vpop.f32.mrf.mxu0
      %v7971 = vpop.f32.mrf.mxu0
      %v7972 = vadd.f32 0.0, %v7971
      %v7973 = vpop.f32.mrf.mxu0
      %7974 = vmatprep.mubr.bf16.mxu0 0
      %7975 = vmatmul.mubr.bf16.gmra.mxu0 %v7850
      %v7976 = vpop.f32.mrf.mxu0
      %v7977 = vadd.f32 0.0, %v7976
      %v7978 = vpop.f32.mrf.mxu0
      %v7979 = vpop.f32.mrf.mxu0
      %v7980 = vadd.f32 0.0, %v7979
      %v7981 = vpop.f32.mrf.mxu0
      %7982 = vmatprep.mubr.bf16.mxu0 0
      %7983 = vmatmul.mubr.bf16.gmra.mxu0 %v7853
      %v7984 = vpop.f32.mrf.mxu0
      %v7985 = vadd.f32 0.0, %v7984
      %v7986 = vpop.f32.mrf.mxu0
      %v7987 = vpop.f32.mrf.mxu0
      %v7988 = vadd.f32 0.0, %v7987
      %v7989 = vpop.f32.mrf.mxu0
      %7990 = vmatprep.mubr.bf16.mxu0 0
      %7991 = vmatmul.mubr.bf16.gmra.mxu0 %v7856
      %v7992 = vpop.f32.mrf.mxu0
      %v7993 = vadd.f32 0.0, %v7992
      %v7994 = vpop.f32.mrf.mxu0
      %v7995 = vpop.f32.mrf.mxu0
      %v7996 = vadd.f32 0.0, %v7995
      %v7997 = vpop.f32.mrf.mxu0
      %7998 = vmatprep.mubr.bf16.mxu0 0
      %7999 = vmatmul.mubr.bf16.gmra.mxu0 %v7859
      %v8000 = vpop.f32.mrf.mxu0
      %v8001 = vadd.f32 0.0, %v8000
      %v8002 = vpop.f32.mrf.mxu0
      %v8003 = vpop.f32.mrf.mxu0
      %v8004 = vadd.f32 0.0, %v8003
      %v8005 = vpop.f32.mrf.mxu0
      %8006 = vmatprep.mubr.bf16.mxu0 0
      %8007 = vmatmul.mubr.bf16.gmra.mxu0 %v7862
      %v8008 = vpop.f32.mrf.mxu0
      %v8009 = vadd.f32 0.0, %v8008
      %v8010 = vpop.f32.mrf.mxu0
      %v8011 = vpop.f32.mrf.mxu0
      %v8012 = vadd.f32 0.0, %v8011
      %v8013 = vpop.f32.mrf.mxu0
      %8014 = vmatprep.mubr.bf16.mxu0 0
      %8015 = vmatmul.mubr.bf16.gmra.mxu0 %v7865
      %v8016 = vpop.f32.mrf.mxu0
      %v8017 = vadd.f32 0.0, %v8016
      %v8018 = vpop.f32.mrf.mxu0
      %v8019 = vpop.f32.mrf.mxu0
      %v8020 = vadd.f32 0.0, %v8019
      %v8021 = vpop.f32.mrf.mxu0
      %8022 = vmatprep.mubr.bf16.mxu0 0
      %8023 = vmatmul.mubr.bf16.gmra.mxu0 %v7868
      %v8024 = vpop.f32.mrf.mxu0
      %v8025 = vadd.f32 0.0, %v8024
      %v8026 = vpop.f32.mrf.mxu0
      %v8027 = vpop.f32.mrf.mxu0
      %v8028 = vadd.f32 0.0, %v8027
      %v8029 = vpop.f32.mrf.mxu0
      %8030 = vdwg.mxu0
      %v8031 = vadd.f32 %v7662, %v7905
      %v8032 = vadd.f32 %v7663, %v7908
      %v8033 = vadd.f32 %v7664, %v7913
      %v8034 = vadd.f32 %v7665, %v7916
      %v8035 = vadd.f32 %v7666, %v7921
      %v8036 = vadd.f32 %v7667, %v7924
      %v8037 = vadd.f32 %v7668, %v7929
      %v8038 = vadd.f32 %v7669, %v7932
      %v8039 = vadd.f32 %v7670, %v7937
      %v8040 = vadd.f32 %v7671, %v7940
      %v8041 = vadd.f32 %v7672, %v7945
      %v8042 = vadd.f32 %v7673, %v7948
      %v8043 = vadd.f32 %v7674, %v7953
      %v8044 = vadd.f32 %v7675, %v7956
      %v8045 = vadd.f32 %v7676, %v7961
      %v8046 = vadd.f32 %v7677, %v7964
      %v8047 = vadd.f32 %v7678, %v7969
      %v8048 = vadd.f32 %v7679, %v7972
      %v8049 = vadd.f32 %v7680, %v7977
      %v8050 = vadd.f32 %v7681, %v7980
      %v8051 = vadd.f32 %v7682, %v7985
      %v8052 = vadd.f32 %v7683, %v7988
      %v8053 = vadd.f32 %v7684, %v7993
      %v8054 = vadd.f32 %v7685, %v7996
      %v8055 = vadd.f32 %v7686, %v8001
      %v8056 = vadd.f32 %v7687, %v8004
      %v8057 = vadd.f32 %v7688, %v8009
      %v8058 = vadd.f32 %v7689, %v8012
      %v8059 = vadd.f32 %v7690, %v8017
      %v8060 = vadd.f32 %v7691, %v8020
      %v8061 = vadd.f32 %v7692, %v8025
      %v8062 = vadd.f32 %v7693, %v8028
      %v8063 = vld [vmem:[%s6373] sm:$0xe]
      %v8064 = vld [vmem:[%s6373 + $0x4] sm:$0xf]
      %v8065 = vld [vmem:[%s6373 + $0x8] sm:$0x1]
      %v8066 = vld [vmem:[%s6373 + $0xc] sm:$0xe]
      %v8067 = vld [vmem:[%s6373 + $0x10] sm:$0xf]
      %v8068 = vld [vmem:[%s6373 + $0x14] sm:$0x1]
      %v8069 = vld [vmem:[%s6373 + $0x18] sm:$0xe]
      %v8070 = vld [vmem:[%s6373 + $0x1c] sm:$0xf]
      %v8071 = vld [vmem:[%s6373 + $0x20] sm:$0x1]
      %v8072 = vld [vmem:[%s6373 + $0x24] sm:$0xe]
      %v8073 = vld [vmem:[%s6373 + $0x28] sm:$0xf]
      %v8074 = vld [vmem:[%s6373 + $0x2c] sm:$0x1]
      %v8075 = vld [vmem:[%s6373 + $0x30] sm:$0xe]
      %v8076 = vld [vmem:[%s6373 + $0x34] sm:$0xf]
      %v8077 = vld [vmem:[%s6373 + $0x38] sm:$0x1]
      %v8078 = vld [vmem:[%s6373 + $0x3c] sm:$0xe]
      %v8079 = vld [vmem:[%s6373 + $0x40] sm:$0xf]
      %v8080 = vld [vmem:[%s6373 + $0x44] sm:$0x1]
      %v8081 = vld [vmem:[%s6373 + $0x48] sm:$0xe]
      %v8082 = vld [vmem:[%s6373 + $0x4c] sm:$0xf]
      %v8083 = vld [vmem:[%s6373 + $0x50] sm:$0x1]
      %v8084 = vld [vmem:[%s6373 + $0x54] sm:$0xe]
      %v8085 = vld [vmem:[%s6373 + $0x58] sm:$0xf]
      %v8086 = vld [vmem:[%s6373 + $0x5c] sm:$0x1]
      %v8087 = vld [vmem:[%s6373 + $0x60] sm:$0xe]
      %v8088 = vld [vmem:[%s6373 + $0x64] sm:$0xf]
      %v8089 = vld [vmem:[%s6373 + $0x68] sm:$0x1]
      %v8090 = vld [vmem:[%s6373 + $0x6c] sm:$0xe]
      %v8091 = vld [vmem:[%s6373 + $0x70] sm:$0xf]
      %v8092 = vld [vmem:[%s6373 + $0x74] sm:$0x1]
      %v8093 = vld [vmem:[%s6373 + $0x78] sm:$0xe]
      %v8094 = vld [vmem:[%s6373 + $0x7c] sm:$0xf]
      %v8095 = vld [vmem:[%s6373 + $0x80] sm:$0x1]
      %v8096 = vld [vmem:[%s6373 + $0x84] sm:$0xe]
      %v8097 = vld [vmem:[%s6373 + $0x88] sm:$0xf]
      %v8098 = vld [vmem:[%s6373 + $0x8c] sm:$0x1]
      %v8099 = vld [vmem:[%s6373 + $0x90] sm:$0xe]
      %v8100 = vld [vmem:[%s6373 + $0x94] sm:$0xf]
      %v8101 = vld [vmem:[%s6373 + $0x98] sm:$0x1]
      %v8102 = vld [vmem:[%s6373 + $0x9c] sm:$0xe]
      %v8103 = vld [vmem:[%s6373 + $0xa0] sm:$0xf]
      %v8104 = vld [vmem:[%s6373 + $0xa4] sm:$0x1]
      %v8105 = vld [vmem:[%s6373 + $0xa8] sm:$0xe]
      %v8106 = vld [vmem:[%s6373 + $0xac] sm:$0xf]
      %v8107 = vld [vmem:[%s6373 + $0xb0] sm:$0x1]
      %v8108 = vld [vmem:[%s6373 + $0xb4] sm:$0xe]
      %v8109 = vld [vmem:[%s6373 + $0xb8] sm:$0xf]
      %v8110 = vld [vmem:[%s6373 + $0xbc] sm:$0x1]
      %v8159 = vrot.slane %v8063, 5
      %v8160 = vrot.slane %v8159, 4
      %v8161 = vrot.slane %v8064, 5
      %v8162 = vsel %vm1982, %v8160, %v8161
      %v8163 = vrot.slane %v8161, 4
      %v8164 = vrot.slane %v8065, 5
      %v8165 = vsel %vm1982, %v8163, %v8164
      %v8166 = vrot.slane %v8066, 5
      %v8167 = vrot.slane %v8166, 4
      %v8168 = vrot.slane %v8067, 5
      %v8169 = vsel %vm1982, %v8167, %v8168
      %v8170 = vrot.slane %v8168, 4
      %v8171 = vrot.slane %v8068, 5
      %v8172 = vsel %vm1982, %v8170, %v8171
      %v8173 = vrot.slane %v8069, 5
      %v8174 = vrot.slane %v8173, 4
      %v8175 = vrot.slane %v8070, 5
      %v8176 = vsel %vm1982, %v8174, %v8175
      %v8177 = vrot.slane %v8175, 4
      %v8178 = vrot.slane %v8071, 5
      %v8179 = vsel %vm1982, %v8177, %v8178
      %v8180 = vrot.slane %v8072, 5
      %v8181 = vrot.slane %v8180, 4
      %v8182 = vrot.slane %v8073, 5
      %v8183 = vsel %vm1982, %v8181, %v8182
      %v8184 = vrot.slane %v8182, 4
      %v8185 = vrot.slane %v8074, 5
      %v8186 = vsel %vm1982, %v8184, %v8185
      %v8187 = vrot.slane %v8075, 5
      %v8188 = vrot.slane %v8187, 4
      %v8189 = vrot.slane %v8076, 5
      %v8190 = vsel %vm1982, %v8188, %v8189
      %v8191 = vrot.slane %v8189, 4
      %v8192 = vrot.slane %v8077, 5
      %v8193 = vsel %vm1982, %v8191, %v8192
      %v8194 = vrot.slane %v8078, 5
      %v8195 = vrot.slane %v8194, 4
      %v8196 = vrot.slane %v8079, 5
      %v8197 = vsel %vm1982, %v8195, %v8196
      %v8198 = vrot.slane %v8196, 4
      %v8199 = vrot.slane %v8080, 5
      %v8200 = vsel %vm1982, %v8198, %v8199
      %v8201 = vrot.slane %v8081, 5
      %v8202 = vrot.slane %v8201, 4
      %v8203 = vrot.slane %v8082, 5
      %v8204 = vsel %vm1982, %v8202, %v8203
      %v8205 = vrot.slane %v8203, 4
      %v8206 = vrot.slane %v8083, 5
      %v8207 = vsel %vm1982, %v8205, %v8206
      %v8208 = vrot.slane %v8084, 5
      %v8209 = vrot.slane %v8208, 4
      %v8210 = vrot.slane %v8085, 5
      %v8211 = vsel %vm1982, %v8209, %v8210
      %v8212 = vrot.slane %v8210, 4
      %v8213 = vrot.slane %v8086, 5
      %v8214 = vsel %vm1982, %v8212, %v8213
      %v8215 = vrot.slane %v8087, 5
      %v8216 = vrot.slane %v8215, 4
      %v8217 = vrot.slane %v8088, 5
      %v8218 = vsel %vm1982, %v8216, %v8217
      %v8219 = vrot.slane %v8217, 4
      %v8220 = vrot.slane %v8089, 5
      %v8221 = vsel %vm1982, %v8219, %v8220
      %v8222 = vrot.slane %v8090, 5
      %v8223 = vrot.slane %v8222, 4
      %v8224 = vrot.slane %v8091, 5
      %v8225 = vsel %vm1982, %v8223, %v8224
      %v8226 = vrot.slane %v8224, 4
      %v8227 = vrot.slane %v8092, 5
      %v8228 = vsel %vm1982, %v8226, %v8227
      %v8229 = vrot.slane %v8093, 5
      %v8230 = vrot.slane %v8229, 4
      %v8231 = vrot.slane %v8094, 5
      %v8232 = vsel %vm1982, %v8230, %v8231
      %v8233 = vrot.slane %v8231, 4
      %v8234 = vrot.slane %v8095, 5
      %v8235 = vsel %vm1982, %v8233, %v8234
      %v8236 = vrot.slane %v8096, 5
      %v8237 = vrot.slane %v8236, 4
      %v8238 = vrot.slane %v8097, 5
      %v8239 = vsel %vm1982, %v8237, %v8238
      %v8240 = vrot.slane %v8238, 4
      %v8241 = vrot.slane %v8098, 5
      %v8242 = vsel %vm1982, %v8240, %v8241
      %v8243 = vrot.slane %v8099, 5
      %v8244 = vrot.slane %v8243, 4
      %v8245 = vrot.slane %v8100, 5
      %v8246 = vsel %vm1982, %v8244, %v8245
      %v8247 = vrot.slane %v8245, 4
      %v8248 = vrot.slane %v8101, 5
      %v8249 = vsel %vm1982, %v8247, %v8248
      %v8250 = vrot.slane %v8102, 5
      %v8251 = vrot.slane %v8250, 4
      %v8252 = vrot.slane %v8103, 5
      %v8253 = vsel %vm1982, %v8251, %v8252
      %v8254 = vrot.slane %v8252, 4
      %v8255 = vrot.slane %v8104, 5
      %v8256 = vsel %vm1982, %v8254, %v8255
      %v8257 = vrot.slane %v8105, 5
      %v8258 = vrot.slane %v8257, 4
      %v8259 = vrot.slane %v8106, 5
      %v8260 = vsel %vm1982, %v8258, %v8259
      %v8261 = vrot.slane %v8259, 4
      %v8262 = vrot.slane %v8107, 5
      %v8263 = vsel %vm1982, %v8261, %v8262
      %v8264 = vrot.slane %v8108, 5
      %v8265 = vrot.slane %v8264, 4
      %v8266 = vrot.slane %v8109, 5
      %v8267 = vsel %vm1982, %v8265, %v8266
      %v8268 = vrot.slane %v8266, 4
      %v8269 = vrot.slane %v8110, 5
      %v8270 = vsel %vm1982, %v8268, %v8269
      %v8271 = vld [vmem:[%s2 + $0x40] sm:$0xf]
      %v8272 = vld [vmem:[%s2 + $0x44] sm:$0xf]
      %v8273 = vld [vmem:[%s2 + $0x48] sm:$0xf]
      %v8274 = vld [vmem:[%s2 + $0x4c] sm:$0xf]
      %v8275 = vunpack.c.l.b16 %v8162
      %v8276 = vunpack.c.l.b16 %v8165
      %v8277 = vunpack.c.l.b16 %v8169
      %v8278 = vunpack.c.l.b16 %v8172
      %v8279 = vunpack.c.l.b16 %v8176
      %v8280 = vunpack.c.l.b16 %v8179
      %v8281 = vunpack.c.l.b16 %v8183
      %v8282 = vunpack.c.l.b16 %v8186
      %v8283 = vunpack.c.l.b16 %v8190
      %v8284 = vunpack.c.l.b16 %v8193
      %v8285 = vunpack.c.l.b16 %v8197
      %v8286 = vunpack.c.l.b16 %v8200
      %v8287 = vunpack.c.l.b16 %v8204
      %v8288 = vunpack.c.l.b16 %v8207
      %v8289 = vunpack.c.l.b16 %v8211
      %v8290 = vunpack.c.l.b16 %v8214
      %v8291 = vunpack.c.l.b16 %v8218
      %v8292 = vunpack.c.l.b16 %v8221
      %v8293 = vunpack.c.l.b16 %v8225
      %v8294 = vunpack.c.l.b16 %v8228
      %v8295 = vunpack.c.l.b16 %v8232
      %v8296 = vunpack.c.l.b16 %v8235
      %v8297 = vunpack.c.l.b16 %v8239
      %v8298 = vunpack.c.l.b16 %v8242
      %v8299 = vunpack.c.l.b16 %v8246
      %v8300 = vunpack.c.l.b16 %v8249
      %v8301 = vunpack.c.l.b16 %v8253
      %v8302 = vunpack.c.l.b16 %v8256
      %v8303 = vunpack.c.l.b16 %v8260
      %v8304 = vunpack.c.l.b16 %v8263
      %v8305 = vunpack.c.l.b16 %v8267
      %v8306 = vunpack.c.l.b16 %v8270
      %v8307 = vpack.c.b16 %v8276, %v8275
      %v8308 = vpack.c.b16 %v8278, %v8277
      %v8309 = vpack.c.b16 %v8280, %v8279
      %v8310 = vpack.c.b16 %v8282, %v8281
      %v8311 = vpack.c.b16 %v8284, %v8283
      %v8312 = vpack.c.b16 %v8286, %v8285
      %v8313 = vpack.c.b16 %v8288, %v8287
      %v8314 = vpack.c.b16 %v8290, %v8289
      %v8315 = vpack.c.b16 %v8292, %v8291
      %v8316 = vpack.c.b16 %v8294, %v8293
      %v8317 = vpack.c.b16 %v8296, %v8295
      %v8318 = vpack.c.b16 %v8298, %v8297
      %v8319 = vpack.c.b16 %v8300, %v8299
      %v8320 = vpack.c.b16 %v8302, %v8301
      %v8321 = vpack.c.b16 %v8304, %v8303
      %v8322 = vpack.c.b16 %v8306, %v8305
      %v8327 = vunpack.c.l.b16 %v8271
      %v8328 = vunpack.c.l.b16 %v8272
      %v8329 = vunpack.c.l.b16 %v8273
      %v8330 = vunpack.c.l.b16 %v8274
      %v8331 = vpack.c.b16 %v8328, %v8327
      %v8332 = vpack.c.b16 %v8330, %v8329
      %v8336 = vsel %vm5615, %v8307, 0
      %v8339 = vsel %vm5615, %v8308, 0
      %v8342 = vsel %vm5615, %v8309, 0
      %v8345 = vsel %vm5615, %v8310, 0
      %v8348 = vsel %vm5615, %v8311, 0
      %v8351 = vsel %vm5615, %v8312, 0
      %v8354 = vsel %vm5615, %v8313, 0
      %v8357 = vsel %vm5615, %v8314, 0
      %v8360 = vsel %vm5615, %v8315, 0
      %v8363 = vsel %vm5615, %v8316, 0
      %v8366 = vsel %vm5615, %v8317, 0
      %v8369 = vsel %vm5615, %v8318, 0
      %v8372 = vsel %vm5615, %v8319, 0
      %v8375 = vsel %vm5615, %v8320, 0
      %v8378 = vsel %vm5615, %v8321, 0
      %v8381 = vsel %vm5615, %v8322, 0
      %8383 = vmatprep.subr.bf16.mxu0 0
      %8384 = vmatpush1.bf16.msra.mxu0 0
      %8385 = vmatprep.subr.bf16.mxu0 0
      %8386 = vmatpush1.bf16.msra.mxu0 0
      %8387 = vmatprep.subr.bf16.mxu0 0
      %8388 = vmatpush1.bf16.msra.mxu0 0
      %8389 = vmatprep.subr.bf16.mxu0 0
      %8390 = vmatpush1.bf16.msra.mxu0 0
      %8391 = vmatprep.subr.bf16.mxu0 0
      %8392 = vmatpush1.bf16.msra.mxu0 0
      %8393 = vmatprep.subr.bf16.mxu0 0
      %8394 = vmatpush1.bf16.msra.mxu0 0
      %8395 = vmatprep.subr.bf16.mxu0 0
      %8396 = vmatpush1.bf16.msra.mxu0 %v8332
      %8397 = vmatprep.subr.bf16.mxu0 0
      %8398 = vmatpush1.bf16.msra.mxu0 %v8331
      %8399 = vmatprep.subr.bf16.mxu0 0
      %8400 = vmatpush2.bf16.msra.mxu0 0
      %8401 = vmatprep.subr.bf16.mxu0 0
      %8402 = vmatpush2.bf16.msra.mxu0 0
      %8403 = vmatprep.subr.bf16.mxu0 0
      %8404 = vmatpush2.bf16.msra.mxu0 0
      %8405 = vmatprep.subr.bf16.mxu0 0
      %8406 = vmatpush2.bf16.msra.mxu0 0
      %8407 = vmatprep.subr.bf16.mxu0 0
      %8408 = vmatpush2.bf16.msra.mxu0 0
      %8409 = vmatprep.subr.bf16.mxu0 0
      %8410 = vmatpush2.bf16.msra.mxu0 0
      %8411 = vmatprep.subr.bf16.mxu0 0
      %8412 = vmatpush2.bf16.msra.mxu0 0
      %8413 = vmatprep.subr.bf16.mxu0 0
      %8414 = vmatpush2.bf16.msra.mxu0 0
      %8415 = vmatprep.mubr.bf16.mxu0 0
      %8416 = vmatmul.mubr.bf16.gmra.mxu0 %v8336
      %v8417 = vpop.f32.mrf.mxu0
      %v8418 = vadd.f32 0.0, %v8417
      %v8419 = vpop.f32.mrf.mxu0
      %v8420 = vpop.f32.mrf.mxu0
      %v8421 = vadd.f32 0.0, %v8420
      %v8422 = vpop.f32.mrf.mxu0
      %8423 = vmatprep.mubr.bf16.mxu0 0
      %8424 = vmatmul.mubr.bf16.gmra.mxu0 %v8339
      %v8425 = vpop.f32.mrf.mxu0
      %v8426 = vadd.f32 0.0, %v8425
      %v8427 = vpop.f32.mrf.mxu0
      %v8428 = vpop.f32.mrf.mxu0
      %v8429 = vadd.f32 0.0, %v8428
      %v8430 = vpop.f32.mrf.mxu0
      %8431 = vmatprep.mubr.bf16.mxu0 0
      %8432 = vmatmul.mubr.bf16.gmra.mxu0 %v8342
      %v8433 = vpop.f32.mrf.mxu0
      %v8434 = vadd.f32 0.0, %v8433
      %v8435 = vpop.f32.mrf.mxu0
      %v8436 = vpop.f32.mrf.mxu0
      %v8437 = vadd.f32 0.0, %v8436
      %v8438 = vpop.f32.mrf.mxu0
      %8439 = vmatprep.mubr.bf16.mxu0 0
      %8440 = vmatmul.mubr.bf16.gmra.mxu0 %v8345
      %v8441 = vpop.f32.mrf.mxu0
      %v8442 = vadd.f32 0.0, %v8441
      %v8443 = vpop.f32.mrf.mxu0
      %v8444 = vpop.f32.mrf.mxu0
      %v8445 = vadd.f32 0.0, %v8444
      %v8446 = vpop.f32.mrf.mxu0
      %8447 = vmatprep.mubr.bf16.mxu0 0
      %8448 = vmatmul.mubr.bf16.gmra.mxu0 %v8348
      %v8449 = vpop.f32.mrf.mxu0
      %v8450 = vadd.f32 0.0, %v8449
      %v8451 = vpop.f32.mrf.mxu0
      %v8452 = vpop.f32.mrf.mxu0
      %v8453 = vadd.f32 0.0, %v8452
      %v8454 = vpop.f32.mrf.mxu0
      %8455 = vmatprep.mubr.bf16.mxu0 0
      %8456 = vmatmul.mubr.bf16.gmra.mxu0 %v8351
      %v8457 = vpop.f32.mrf.mxu0
      %v8458 = vadd.f32 0.0, %v8457
      %v8459 = vpop.f32.mrf.mxu0
      %v8460 = vpop.f32.mrf.mxu0
      %v8461 = vadd.f32 0.0, %v8460
      %v8462 = vpop.f32.mrf.mxu0
      %8463 = vmatprep.mubr.bf16.mxu0 0
      %8464 = vmatmul.mubr.bf16.gmra.mxu0 %v8354
      %v8465 = vpop.f32.mrf.mxu0
      %v8466 = vadd.f32 0.0, %v8465
      %v8467 = vpop.f32.mrf.mxu0
      %v8468 = vpop.f32.mrf.mxu0
      %v8469 = vadd.f32 0.0, %v8468
      %v8470 = vpop.f32.mrf.mxu0
      %8471 = vmatprep.mubr.bf16.mxu0 0
      %8472 = vmatmul.mubr.bf16.gmra.mxu0 %v8357
      %v8473 = vpop.f32.mrf.mxu0
      %v8474 = vadd.f32 0.0, %v8473
      %v8475 = vpop.f32.mrf.mxu0
      %v8476 = vpop.f32.mrf.mxu0
      %v8477 = vadd.f32 0.0, %v8476
      %v8478 = vpop.f32.mrf.mxu0
      %8479 = vmatprep.mubr.bf16.mxu0 0
      %8480 = vmatmul.mubr.bf16.gmra.mxu0 %v8360
      %v8481 = vpop.f32.mrf.mxu0
      %v8482 = vadd.f32 0.0, %v8481
      %v8483 = vpop.f32.mrf.mxu0
      %v8484 = vpop.f32.mrf.mxu0
      %v8485 = vadd.f32 0.0, %v8484
      %v8486 = vpop.f32.mrf.mxu0
      %8487 = vmatprep.mubr.bf16.mxu0 0
      %8488 = vmatmul.mubr.bf16.gmra.mxu0 %v8363
      %v8489 = vpop.f32.mrf.mxu0
      %v8490 = vadd.f32 0.0, %v8489
      %v8491 = vpop.f32.mrf.mxu0
      %v8492 = vpop.f32.mrf.mxu0
      %v8493 = vadd.f32 0.0, %v8492
      %v8494 = vpop.f32.mrf.mxu0
      %8495 = vmatprep.mubr.bf16.mxu0 0
      %8496 = vmatmul.mubr.bf16.gmra.mxu0 %v8366
      %v8497 = vpop.f32.mrf.mxu0
      %v8498 = vadd.f32 0.0, %v8497
      %v8499 = vpop.f32.mrf.mxu0
      %v8500 = vpop.f32.mrf.mxu0
      %v8501 = vadd.f32 0.0, %v8500
      %v8502 = vpop.f32.mrf.mxu0
      %8503 = vmatprep.mubr.bf16.mxu0 0
      %8504 = vmatmul.mubr.bf16.gmra.mxu0 %v8369
      %v8505 = vpop.f32.mrf.mxu0
      %v8506 = vadd.f32 0.0, %v8505
      %v8507 = vpop.f32.mrf.mxu0
      %v8508 = vpop.f32.mrf.mxu0
      %v8509 = vadd.f32 0.0, %v8508
      %v8510 = vpop.f32.mrf.mxu0
      %8511 = vmatprep.mubr.bf16.mxu0 0
      %8512 = vmatmul.mubr.bf16.gmra.mxu0 %v8372
      %v8513 = vpop.f32.mrf.mxu0
      %v8514 = vadd.f32 0.0, %v8513
      %v8515 = vpop.f32.mrf.mxu0
      %v8516 = vpop.f32.mrf.mxu0
      %v8517 = vadd.f32 0.0, %v8516
      %v8518 = vpop.f32.mrf.mxu0
      %8519 = vmatprep.mubr.bf16.mxu0 0
      %8520 = vmatmul.mubr.bf16.gmra.mxu0 %v8375
      %v8521 = vpop.f32.mrf.mxu0
      %v8522 = vadd.f32 0.0, %v8521
      %v8523 = vpop.f32.mrf.mxu0
      %v8524 = vpop.f32.mrf.mxu0
      %v8525 = vadd.f32 0.0, %v8524
      %v8526 = vpop.f32.mrf.mxu0
      %8527 = vmatprep.mubr.bf16.mxu0 0
      %8528 = vmatmul.mubr.bf16.gmra.mxu0 %v8378
      %v8529 = vpop.f32.mrf.mxu0
      %v8530 = vadd.f32 0.0, %v8529
      %v8531 = vpop.f32.mrf.mxu0
      %v8532 = vpop.f32.mrf.mxu0
      %v8533 = vadd.f32 0.0, %v8532
      %v8534 = vpop.f32.mrf.mxu0
      %8535 = vmatprep.mubr.bf16.mxu0 0
      %8536 = vmatmul.mubr.bf16.gmra.mxu0 %v8381
      %v8537 = vpop.f32.mrf.mxu0
      %v8538 = vadd.f32 0.0, %v8537
      %v8539 = vpop.f32.mrf.mxu0
      %v8540 = vpop.f32.mrf.mxu0
      %v8541 = vadd.f32 0.0, %v8540
      %v8542 = vpop.f32.mrf.mxu0
      %8543 = vdwg.mxu0
      %v8544 = vadd.f32 %v8031, %v8418
      %v8545 = vadd.f32 %v8032, %v8421
      %v8546 = vadd.f32 %v8033, %v8426
      %v8547 = vadd.f32 %v8034, %v8429
      %v8548 = vadd.f32 %v8035, %v8434
      %v8549 = vadd.f32 %v8036, %v8437
      %v8550 = vadd.f32 %v8037, %v8442
      %v8551 = vadd.f32 %v8038, %v8445
      %v8552 = vadd.f32 %v8039, %v8450
      %v8553 = vadd.f32 %v8040, %v8453
      %v8554 = vadd.f32 %v8041, %v8458
      %v8555 = vadd.f32 %v8042, %v8461
      %v8556 = vadd.f32 %v8043, %v8466
      %v8557 = vadd.f32 %v8044, %v8469
      %v8558 = vadd.f32 %v8045, %v8474
      %v8559 = vadd.f32 %v8046, %v8477
      %v8560 = vadd.f32 %v8047, %v8482
      %v8561 = vadd.f32 %v8048, %v8485
      %v8562 = vadd.f32 %v8049, %v8490
      %v8563 = vadd.f32 %v8050, %v8493
      %v8564 = vadd.f32 %v8051, %v8498
      %v8565 = vadd.f32 %v8052, %v8501
      %v8566 = vadd.f32 %v8053, %v8506
      %v8567 = vadd.f32 %v8054, %v8509
      %v8568 = vadd.f32 %v8055, %v8514
      %v8569 = vadd.f32 %v8056, %v8517
      %v8570 = vadd.f32 %v8057, %v8522
      %v8571 = vadd.f32 %v8058, %v8525
      %v8572 = vadd.f32 %v8059, %v8530
      %v8573 = vadd.f32 %v8060, %v8533
      %v8574 = vadd.f32 %v8061, %v8538
      %v8575 = vadd.f32 %v8062, %v8541
      %v8576 = vld [vmem:[%s6373] sm:$0xc]
      %v8577 = vld [vmem:[%s6373 + $0x8] sm:$0x3]
      %v8578 = vld [vmem:[%s6373 + $0xc] sm:$0xc]
      %v8579 = vld [vmem:[%s6373 + $0x14] sm:$0x3]
      %v8580 = vld [vmem:[%s6373 + $0x18] sm:$0xc]
      %v8581 = vld [vmem:[%s6373 + $0x20] sm:$0x3]
      %v8582 = vld [vmem:[%s6373 + $0x24] sm:$0xc]
      %v8583 = vld [vmem:[%s6373 + $0x2c] sm:$0x3]
      %v8584 = vld [vmem:[%s6373 + $0x30] sm:$0xc]
      %v8585 = vld [vmem:[%s6373 + $0x38] sm:$0x3]
      %v8586 = vld [vmem:[%s6373 + $0x3c] sm:$0xc]
      %v8587 = vld [vmem:[%s6373 + $0x44] sm:$0x3]
      %v8588 = vld [vmem:[%s6373 + $0x48] sm:$0xc]
      %v8589 = vld [vmem:[%s6373 + $0x50] sm:$0x3]
      %v8590 = vld [vmem:[%s6373 + $0x54] sm:$0xc]
      %v8591 = vld [vmem:[%s6373 + $0x5c] sm:$0x3]
      %v8592 = vld [vmem:[%s6373 + $0x60] sm:$0xc]
      %v8593 = vld [vmem:[%s6373 + $0x68] sm:$0x3]
      %v8594 = vld [vmem:[%s6373 + $0x6c] sm:$0xc]
      %v8595 = vld [vmem:[%s6373 + $0x74] sm:$0x3]
      %v8596 = vld [vmem:[%s6373 + $0x78] sm:$0xc]
      %v8597 = vld [vmem:[%s6373 + $0x80] sm:$0x3]
      %v8598 = vld [vmem:[%s6373 + $0x84] sm:$0xc]
      %v8599 = vld [vmem:[%s6373 + $0x8c] sm:$0x3]
      %v8600 = vld [vmem:[%s6373 + $0x90] sm:$0xc]
      %v8601 = vld [vmem:[%s6373 + $0x98] sm:$0x3]
      %v8602 = vld [vmem:[%s6373 + $0x9c] sm:$0xc]
      %v8603 = vld [vmem:[%s6373 + $0xa4] sm:$0x3]
      %v8604 = vld [vmem:[%s6373 + $0xa8] sm:$0xc]
      %v8605 = vld [vmem:[%s6373 + $0xb0] sm:$0x3]
      %v8606 = vld [vmem:[%s6373 + $0xb4] sm:$0xc]
      %v8607 = vld [vmem:[%s6373 + $0xbc] sm:$0x3]
      %v8640 = vrot.slane %v8576, 6
      %v8641 = vrot.slane %v8640, 4
      %v8642 = vrot.slane %v8064, 6
      %v8643 = vsel %vm7276, %v8641, %v8642
      %v8644 = vrot.slane %v8642, 4
      %v8645 = vrot.slane %v8577, 6
      %v8646 = vsel %vm7276, %v8644, %v8645
      %v8647 = vrot.slane %v8578, 6
      %v8648 = vrot.slane %v8647, 4
      %v8649 = vrot.slane %v8067, 6
      %v8650 = vsel %vm7276, %v8648, %v8649
      %v8651 = vrot.slane %v8649, 4
      %v8652 = vrot.slane %v8579, 6
      %v8653 = vsel %vm7276, %v8651, %v8652
      %v8654 = vrot.slane %v8580, 6
      %v8655 = vrot.slane %v8654, 4
      %v8656 = vrot.slane %v8070, 6
      %v8657 = vsel %vm7276, %v8655, %v8656
      %v8658 = vrot.slane %v8656, 4
      %v8659 = vrot.slane %v8581, 6
      %v8660 = vsel %vm7276, %v8658, %v8659
      %v8661 = vrot.slane %v8582, 6
      %v8662 = vrot.slane %v8661, 4
      %v8663 = vrot.slane %v8073, 6
      %v8664 = vsel %vm7276, %v8662, %v8663
      %v8665 = vrot.slane %v8663, 4
      %v8666 = vrot.slane %v8583, 6
      %v8667 = vsel %vm7276, %v8665, %v8666
      %v8668 = vrot.slane %v8584, 6
      %v8669 = vrot.slane %v8668, 4
      %v8670 = vrot.slane %v8076, 6
      %v8671 = vsel %vm7276, %v8669, %v8670
      %v8672 = vrot.slane %v8670, 4
      %v8673 = vrot.slane %v8585, 6
      %v8674 = vsel %vm7276, %v8672, %v8673
      %v8675 = vrot.slane %v8586, 6
      %v8676 = vrot.slane %v8675, 4
      %v8677 = vrot.slane %v8079, 6
      %v8678 = vsel %vm7276, %v8676, %v8677
      %v8679 = vrot.slane %v8677, 4
      %v8680 = vrot.slane %v8587, 6
      %v8681 = vsel %vm7276, %v8679, %v8680
      %v8682 = vrot.slane %v8588, 6
      %v8683 = vrot.slane %v8682, 4
      %v8684 = vrot.slane %v8082, 6
      %v8685 = vsel %vm7276, %v8683, %v8684
      %v8686 = vrot.slane %v8684, 4
      %v8687 = vrot.slane %v8589, 6
      %v8688 = vsel %vm7276, %v8686, %v8687
      %v8689 = vrot.slane %v8590, 6
      %v8690 = vrot.slane %v8689, 4
      %v8691 = vrot.slane %v8085, 6
      %v8692 = vsel %vm7276, %v8690, %v8691
      %v8693 = vrot.slane %v8691, 4
      %v8694 = vrot.slane %v8591, 6
      %v8695 = vsel %vm7276, %v8693, %v8694
      %v8696 = vrot.slane %v8592, 6
      %v8697 = vrot.slane %v8696, 4
      %v8698 = vrot.slane %v8088, 6
      %v8699 = vsel %vm7276, %v8697, %v8698
      %v8700 = vrot.slane %v8698, 4
      %v8701 = vrot.slane %v8593, 6
      %v8702 = vsel %vm7276, %v8700, %v8701
      %v8703 = vrot.slane %v8594, 6
      %v8704 = vrot.slane %v8703, 4
      %v8705 = vrot.slane %v8091, 6
      %v8706 = vsel %vm7276, %v8704, %v8705
      %v8707 = vrot.slane %v8705, 4
      %v8708 = vrot.slane %v8595, 6
      %v8709 = vsel %vm7276, %v8707, %v8708
      %v8710 = vrot.slane %v8596, 6
      %v8711 = vrot.slane %v8710, 4
      %v8712 = vrot.slane %v8094, 6
      %v8713 = vsel %vm7276, %v8711, %v8712
      %v8714 = vrot.slane %v8712, 4
      %v8715 = vrot.slane %v8597, 6
      %v8716 = vsel %vm7276, %v8714, %v8715
      %v8717 = vrot.slane %v8598, 6
      %v8718 = vrot.slane %v8717, 4
      %v8719 = vrot.slane %v8097, 6
      %v8720 = vsel %vm7276, %v8718, %v8719
      %v8721 = vrot.slane %v8719, 4
      %v8722 = vrot.slane %v8599, 6
      %v8723 = vsel %vm7276, %v8721, %v8722
      %v8724 = vrot.slane %v8600, 6
      %v8725 = vrot.slane %v8724, 4
      %v8726 = vrot.slane %v8100, 6
      %v8727 = vsel %vm7276, %v8725, %v8726
      %v8728 = vrot.slane %v8726, 4
      %v8729 = vrot.slane %v8601, 6
      %v8730 = vsel %vm7276, %v8728, %v8729
      %v8731 = vrot.slane %v8602, 6
      %v8732 = vrot.slane %v8731, 4
      %v8733 = vrot.slane %v8103, 6
      %v8734 = vsel %vm7276, %v8732, %v8733
      %v8735 = vrot.slane %v8733, 4
      %v8736 = vrot.slane %v8603, 6
      %v8737 = vsel %vm7276, %v8735, %v8736
      %v8738 = vrot.slane %v8604, 6
      %v8739 = vrot.slane %v8738, 4
      %v8740 = vrot.slane %v8106, 6
      %v8741 = vsel %vm7276, %v8739, %v8740
      %v8742 = vrot.slane %v8740, 4
      %v8743 = vrot.slane %v8605, 6
      %v8744 = vsel %vm7276, %v8742, %v8743
      %v8745 = vrot.slane %v8606, 6
      %v8746 = vrot.slane %v8745, 4
      %v8747 = vrot.slane %v8109, 6
      %v8748 = vsel %vm7276, %v8746, %v8747
      %v8749 = vrot.slane %v8747, 4
      %v8750 = vrot.slane %v8607, 6
      %v8751 = vsel %vm7276, %v8749, %v8750
      %v8752 = vld [vmem:[%s2 + $0x50] sm:$0xf]
      %v8753 = vld [vmem:[%s2 + $0x54] sm:$0xf]
      %v8754 = vld [vmem:[%s2 + $0x58] sm:$0xf]
      %v8755 = vld [vmem:[%s2 + $0x5c] sm:$0xf]
      %v8756 = vunpack.c.l.b16 %v8643
      %v8757 = vunpack.c.l.b16 %v8646
      %v8758 = vunpack.c.l.b16 %v8650
      %v8759 = vunpack.c.l.b16 %v8653
      %v8760 = vunpack.c.l.b16 %v8657
      %v8761 = vunpack.c.l.b16 %v8660
      %v8762 = vunpack.c.l.b16 %v8664
      %v8763 = vunpack.c.l.b16 %v8667
      %v8764 = vunpack.c.l.b16 %v8671
      %v8765 = vunpack.c.l.b16 %v8674
      %v8766 = vunpack.c.l.b16 %v8678
      %v8767 = vunpack.c.l.b16 %v8681
      %v8768 = vunpack.c.l.b16 %v8685
      %v8769 = vunpack.c.l.b16 %v8688
      %v8770 = vunpack.c.l.b16 %v8692
      %v8771 = vunpack.c.l.b16 %v8695
      %v8772 = vunpack.c.l.b16 %v8699
      %v8773 = vunpack.c.l.b16 %v8702
      %v8774 = vunpack.c.l.b16 %v8706
      %v8775 = vunpack.c.l.b16 %v8709
      %v8776 = vunpack.c.l.b16 %v8713
      %v8777 = vunpack.c.l.b16 %v8716
      %v8778 = vunpack.c.l.b16 %v8720
      %v8779 = vunpack.c.l.b16 %v8723
      %v8780 = vunpack.c.l.b16 %v8727
      %v8781 = vunpack.c.l.b16 %v8730
      %v8782 = vunpack.c.l.b16 %v8734
      %v8783 = vunpack.c.l.b16 %v8737
      %v8784 = vunpack.c.l.b16 %v8741
      %v8785 = vunpack.c.l.b16 %v8744
      %v8786 = vunpack.c.l.b16 %v8748
      %v8787 = vunpack.c.l.b16 %v8751
      %v8788 = vpack.c.b16 %v8757, %v8756
      %v8789 = vpack.c.b16 %v8759, %v8758
      %v8790 = vpack.c.b16 %v8761, %v8760
      %v8791 = vpack.c.b16 %v8763, %v8762
      %v8792 = vpack.c.b16 %v8765, %v8764
      %v8793 = vpack.c.b16 %v8767, %v8766
      %v8794 = vpack.c.b16 %v8769, %v8768
      %v8795 = vpack.c.b16 %v8771, %v8770
      %v8796 = vpack.c.b16 %v8773, %v8772
      %v8797 = vpack.c.b16 %v8775, %v8774
      %v8798 = vpack.c.b16 %v8777, %v8776
      %v8799 = vpack.c.b16 %v8779, %v8778
      %v8800 = vpack.c.b16 %v8781, %v8780
      %v8801 = vpack.c.b16 %v8783, %v8782
      %v8802 = vpack.c.b16 %v8785, %v8784
      %v8803 = vpack.c.b16 %v8787, %v8786
      %v8808 = vunpack.c.l.b16 %v8752
      %v8809 = vunpack.c.l.b16 %v8753
      %v8810 = vunpack.c.l.b16 %v8754
      %v8811 = vunpack.c.l.b16 %v8755
      %v8812 = vpack.c.b16 %v8809, %v8808
      %v8813 = vpack.c.b16 %v8811, %v8810
      %v8817 = vsel %vm5615, %v8788, 0
      %v8820 = vsel %vm5615, %v8789, 0
      %v8823 = vsel %vm5615, %v8790, 0
      %v8826 = vsel %vm5615, %v8791, 0
      %v8829 = vsel %vm5615, %v8792, 0
      %v8832 = vsel %vm5615, %v8793, 0
      %v8835 = vsel %vm5615, %v8794, 0
      %v8838 = vsel %vm5615, %v8795, 0
      %v8841 = vsel %vm5615, %v8796, 0
      %v8844 = vsel %vm5615, %v8797, 0
      %v8847 = vsel %vm5615, %v8798, 0
      %v8850 = vsel %vm5615, %v8799, 0
      %v8853 = vsel %vm5615, %v8800, 0
      %v8856 = vsel %vm5615, %v8801, 0
      %v8859 = vsel %vm5615, %v8802, 0
      %v8862 = vsel %vm5615, %v8803, 0
      %8864 = vmatprep.subr.bf16.mxu0 0
      %8865 = vmatpush1.bf16.msra.mxu0 0
      %8866 = vmatprep.subr.bf16.mxu0 0
      %8867 = vmatpush1.bf16.msra.mxu0 0
      %8868 = vmatprep.subr.bf16.mxu0 0
      %8869 = vmatpush1.bf16.msra.mxu0 0
      %8870 = vmatprep.subr.bf16.mxu0 0
      %8871 = vmatpush1.bf16.msra.mxu0 0
      %8872 = vmatprep.subr.bf16.mxu0 0
      %8873 = vmatpush1.bf16.msra.mxu0 0
      %8874 = vmatprep.subr.bf16.mxu0 0
      %8875 = vmatpush1.bf16.msra.mxu0 0
      %8876 = vmatprep.subr.bf16.mxu0 0
      %8877 = vmatpush1.bf16.msra.mxu0 %v8813
      %8878 = vmatprep.subr.bf16.mxu0 0
      %8879 = vmatpush1.bf16.msra.mxu0 %v8812
      %8880 = vmatprep.subr.bf16.mxu0 0
      %8881 = vmatpush2.bf16.msra.mxu0 0
      %8882 = vmatprep.subr.bf16.mxu0 0
      %8883 = vmatpush2.bf16.msra.mxu0 0
      %8884 = vmatprep.subr.bf16.mxu0 0
      %8885 = vmatpush2.bf16.msra.mxu0 0
      %8886 = vmatprep.subr.bf16.mxu0 0
      %8887 = vmatpush2.bf16.msra.mxu0 0
      %8888 = vmatprep.subr.bf16.mxu0 0
      %8889 = vmatpush2.bf16.msra.mxu0 0
      %8890 = vmatprep.subr.bf16.mxu0 0
      %8891 = vmatpush2.bf16.msra.mxu0 0
      %8892 = vmatprep.subr.bf16.mxu0 0
      %8893 = vmatpush2.bf16.msra.mxu0 0
      %8894 = vmatprep.subr.bf16.mxu0 0
      %8895 = vmatpush2.bf16.msra.mxu0 0
      %8896 = vmatprep.mubr.bf16.mxu0 0
      %8897 = vmatmul.mubr.bf16.gmra.mxu0 %v8817
      %v8898 = vpop.f32.mrf.mxu0
      %v8899 = vadd.f32 0.0, %v8898
      %v8900 = vpop.f32.mrf.mxu0
      %v8901 = vpop.f32.mrf.mxu0
      %v8902 = vadd.f32 0.0, %v8901
      %v8903 = vpop.f32.mrf.mxu0
      %8904 = vmatprep.mubr.bf16.mxu0 0
      %8905 = vmatmul.mubr.bf16.gmra.mxu0 %v8820
      %v8906 = vpop.f32.mrf.mxu0
      %v8907 = vadd.f32 0.0, %v8906
      %v8908 = vpop.f32.mrf.mxu0
      %v8909 = vpop.f32.mrf.mxu0
      %v8910 = vadd.f32 0.0, %v8909
      %v8911 = vpop.f32.mrf.mxu0
      %8912 = vmatprep.mubr.bf16.mxu0 0
      %8913 = vmatmul.mubr.bf16.gmra.mxu0 %v8823
      %v8914 = vpop.f32.mrf.mxu0
      %v8915 = vadd.f32 0.0, %v8914
      %v8916 = vpop.f32.mrf.mxu0
      %v8917 = vpop.f32.mrf.mxu0
      %v8918 = vadd.f32 0.0, %v8917
      %v8919 = vpop.f32.mrf.mxu0
      %8920 = vmatprep.mubr.bf16.mxu0 0
      %8921 = vmatmul.mubr.bf16.gmra.mxu0 %v8826
      %v8922 = vpop.f32.mrf.mxu0
      %v8923 = vadd.f32 0.0, %v8922
      %v8924 = vpop.f32.mrf.mxu0
      %v8925 = vpop.f32.mrf.mxu0
      %v8926 = vadd.f32 0.0, %v8925
      %v8927 = vpop.f32.mrf.mxu0
      %8928 = vmatprep.mubr.bf16.mxu0 0
      %8929 = vmatmul.mubr.bf16.gmra.mxu0 %v8829
      %v8930 = vpop.f32.mrf.mxu0
      %v8931 = vadd.f32 0.0, %v8930
      %v8932 = vpop.f32.mrf.mxu0
      %v8933 = vpop.f32.mrf.mxu0
      %v8934 = vadd.f32 0.0, %v8933
      %v8935 = vpop.f32.mrf.mxu0
      %8936 = vmatprep.mubr.bf16.mxu0 0
      %8937 = vmatmul.mubr.bf16.gmra.mxu0 %v8832
      %v8938 = vpop.f32.mrf.mxu0
      %v8939 = vadd.f32 0.0, %v8938
      %v8940 = vpop.f32.mrf.mxu0
      %v8941 = vpop.f32.mrf.mxu0
      %v8942 = vadd.f32 0.0, %v8941
      %v8943 = vpop.f32.mrf.mxu0
      %8944 = vmatprep.mubr.bf16.mxu0 0
      %8945 = vmatmul.mubr.bf16.gmra.mxu0 %v8835
      %v8946 = vpop.f32.mrf.mxu0
      %v8947 = vadd.f32 0.0, %v8946
      %v8948 = vpop.f32.mrf.mxu0
      %v8949 = vpop.f32.mrf.mxu0
      %v8950 = vadd.f32 0.0, %v8949
      %v8951 = vpop.f32.mrf.mxu0
      %8952 = vmatprep.mubr.bf16.mxu0 0
      %8953 = vmatmul.mubr.bf16.gmra.mxu0 %v8838
      %v8954 = vpop.f32.mrf.mxu0
      %v8955 = vadd.f32 0.0, %v8954
      %v8956 = vpop.f32.mrf.mxu0
      %v8957 = vpop.f32.mrf.mxu0
      %v8958 = vadd.f32 0.0, %v8957
      %v8959 = vpop.f32.mrf.mxu0
      %8960 = vmatprep.mubr.bf16.mxu0 0
      %8961 = vmatmul.mubr.bf16.gmra.mxu0 %v8841
      %v8962 = vpop.f32.mrf.mxu0
      %v8963 = vadd.f32 0.0, %v8962
      %v8964 = vpop.f32.mrf.mxu0
      %v8965 = vpop.f32.mrf.mxu0
      %v8966 = vadd.f32 0.0, %v8965
      %v8967 = vpop.f32.mrf.mxu0
      %8968 = vmatprep.mubr.bf16.mxu0 0
      %8969 = vmatmul.mubr.bf16.gmra.mxu0 %v8844
      %v8970 = vpop.f32.mrf.mxu0
      %v8971 = vadd.f32 0.0, %v8970
      %v8972 = vpop.f32.mrf.mxu0
      %v8973 = vpop.f32.mrf.mxu0
      %v8974 = vadd.f32 0.0, %v8973
      %v8975 = vpop.f32.mrf.mxu0
      %8976 = vmatprep.mubr.bf16.mxu0 0
      %8977 = vmatmul.mubr.bf16.gmra.mxu0 %v8847
      %v8978 = vpop.f32.mrf.mxu0
      %v8979 = vadd.f32 0.0, %v8978
      %v8980 = vpop.f32.mrf.mxu0
      %v8981 = vpop.f32.mrf.mxu0
      %v8982 = vadd.f32 0.0, %v8981
      %v8983 = vpop.f32.mrf.mxu0
      %8984 = vmatprep.mubr.bf16.mxu0 0
      %8985 = vmatmul.mubr.bf16.gmra.mxu0 %v8850
      %v8986 = vpop.f32.mrf.mxu0
      %v8987 = vadd.f32 0.0, %v8986
      %v8988 = vpop.f32.mrf.mxu0
      %v8989 = vpop.f32.mrf.mxu0
      %v8990 = vadd.f32 0.0, %v8989
      %v8991 = vpop.f32.mrf.mxu0
      %8992 = vmatprep.mubr.bf16.mxu0 0
      %8993 = vmatmul.mubr.bf16.gmra.mxu0 %v8853
      %v8994 = vpop.f32.mrf.mxu0
      %v8995 = vadd.f32 0.0, %v8994
      %v8996 = vpop.f32.mrf.mxu0
      %v8997 = vpop.f32.mrf.mxu0
      %v8998 = vadd.f32 0.0, %v8997
      %v8999 = vpop.f32.mrf.mxu0
      %9000 = vmatprep.mubr.bf16.mxu0 0
      %9001 = vmatmul.mubr.bf16.gmra.mxu0 %v8856
      %v9002 = vpop.f32.mrf.mxu0
      %v9003 = vadd.f32 0.0, %v9002
      %v9004 = vpop.f32.mrf.mxu0
      %v9005 = vpop.f32.mrf.mxu0
      %v9006 = vadd.f32 0.0, %v9005
      %v9007 = vpop.f32.mrf.mxu0
      %9008 = vmatprep.mubr.bf16.mxu0 0
      %9009 = vmatmul.mubr.bf16.gmra.mxu0 %v8859
      %v9010 = vpop.f32.mrf.mxu0
      %v9011 = vadd.f32 0.0, %v9010
      %v9012 = vpop.f32.mrf.mxu0
      %v9013 = vpop.f32.mrf.mxu0
      %v9014 = vadd.f32 0.0, %v9013
      %v9015 = vpop.f32.mrf.mxu0
      %9016 = vmatprep.mubr.bf16.mxu0 0
      %9017 = vmatmul.mubr.bf16.gmra.mxu0 %v8862
      %v9018 = vpop.f32.mrf.mxu0
      %v9019 = vadd.f32 0.0, %v9018
      %v9020 = vpop.f32.mrf.mxu0
      %v9021 = vpop.f32.mrf.mxu0
      %v9022 = vadd.f32 0.0, %v9021
      %v9023 = vpop.f32.mrf.mxu0
      %9024 = vdwg.mxu0
      %v9025 = vadd.f32 %v8544, %v8899
      %v9026 = vadd.f32 %v8545, %v8902
      %v9027 = vadd.f32 %v8546, %v8907
      %v9028 = vadd.f32 %v8547, %v8910
      %v9029 = vadd.f32 %v8548, %v8915
      %v9030 = vadd.f32 %v8549, %v8918
      %v9031 = vadd.f32 %v8550, %v8923
      %v9032 = vadd.f32 %v8551, %v8926
      %v9033 = vadd.f32 %v8552, %v8931
      %v9034 = vadd.f32 %v8553, %v8934
      %v9035 = vadd.f32 %v8554, %v8939
      %v9036 = vadd.f32 %v8555, %v8942
      %v9037 = vadd.f32 %v8556, %v8947
      %v9038 = vadd.f32 %v8557, %v8950
      %v9039 = vadd.f32 %v8558, %v8955
      %v9040 = vadd.f32 %v8559, %v8958
      %v9041 = vadd.f32 %v8560, %v8963
      %v9042 = vadd.f32 %v8561, %v8966
      %v9043 = vadd.f32 %v8562, %v8971
      %v9044 = vadd.f32 %v8563, %v8974
      %v9045 = vadd.f32 %v8564, %v8979
      %v9046 = vadd.f32 %v8565, %v8982
      %v9047 = vadd.f32 %v8566, %v8987
      %v9048 = vadd.f32 %v8567, %v8990
      %v9049 = vadd.f32 %v8568, %v8995
      %v9050 = vadd.f32 %v8569, %v8998
      %v9051 = vadd.f32 %v8570, %v9003
      %v9052 = vadd.f32 %v8571, %v9006
      %v9053 = vadd.f32 %v8572, %v9011
      %v9054 = vadd.f32 %v8573, %v9014
      %v9055 = vadd.f32 %v8574, %v9019
      %v9056 = vadd.f32 %v8575, %v9022
      %s9057 = scalar_lea.vmem [#allocation3], 48
      %v9058 = vld [vmem:[%s9057] sm:$0xf]
      %v9059 = vld [vmem:[%s9057 + $0x4] sm:$0xf]
      %v9060 = vld [vmem:[%s9057 + $0xc] sm:$0xf]
      %v9061 = vld [vmem:[%s9057 + $0x10] sm:$0xf]
      %v9062 = vld [vmem:[%s9057 + $0x18] sm:$0xf]
      %v9063 = vld [vmem:[%s9057 + $0x1c] sm:$0xf]
      %v9064 = vld [vmem:[%s9057 + $0x24] sm:$0xf]
      %v9065 = vld [vmem:[%s9057 + $0x28] sm:$0xf]
      %v9066 = vld [vmem:[%s9057 + $0x30] sm:$0xf]
      %v9067 = vld [vmem:[%s9057 + $0x34] sm:$0xf]
      %v9068 = vld [vmem:[%s9057 + $0x3c] sm:$0xf]
      %v9069 = vld [vmem:[%s9057 + $0x40] sm:$0xf]
      %v9070 = vld [vmem:[%s9057 + $0x48] sm:$0xf]
      %v9071 = vld [vmem:[%s9057 + $0x4c] sm:$0xf]
      %v9072 = vld [vmem:[%s9057 + $0x54] sm:$0xf]
      %v9073 = vld [vmem:[%s9057 + $0x58] sm:$0xf]
      %v9074 = vld [vmem:[%s9057 + $0x60] sm:$0xf]
      %v9075 = vld [vmem:[%s9057 + $0x64] sm:$0xf]
      %v9076 = vld [vmem:[%s9057 + $0x6c] sm:$0xf]
      %v9077 = vld [vmem:[%s9057 + $0x70] sm:$0xf]
      %v9078 = vld [vmem:[%s9057 + $0x78] sm:$0xf]
      %v9079 = vld [vmem:[%s9057 + $0x7c] sm:$0xf]
      %v9080 = vld [vmem:[%s9057 + $0x84] sm:$0xf]
      %v9081 = vld [vmem:[%s9057 + $0x88] sm:$0xf]
      %v9082 = vld [vmem:[%s9057 + $0x90] sm:$0xf]
      %v9083 = vld [vmem:[%s9057 + $0x94] sm:$0xf]
      %v9084 = vld [vmem:[%s9057 + $0x9c] sm:$0xf]
      %v9085 = vld [vmem:[%s9057 + $0xa0] sm:$0xf]
      %v9086 = vld [vmem:[%s9057 + $0xa8] sm:$0xf]
      %v9087 = vld [vmem:[%s9057 + $0xac] sm:$0xf]
      %v9088 = vld [vmem:[%s9057 + $0xb4] sm:$0xf]
      %v9089 = vld [vmem:[%s9057 + $0xb8] sm:$0xf]
      %v9090 = vld [vmem:[%s2 + $0x60] sm:$0xf]
      %v9091 = vld [vmem:[%s2 + $0x64] sm:$0xf]
      %v9092 = vld [vmem:[%s2 + $0x68] sm:$0xf]
      %v9093 = vld [vmem:[%s2 + $0x6c] sm:$0xf]
      %v9126 = vunpack.c.l.b16 %v9058
      %v9127 = vunpack.c.l.b16 %v9059
      %v9128 = vunpack.c.l.b16 %v9060
      %v9129 = vunpack.c.l.b16 %v9061
      %v9130 = vunpack.c.l.b16 %v9062
      %v9131 = vunpack.c.l.b16 %v9063
      %v9132 = vunpack.c.l.b16 %v9064
      %v9133 = vunpack.c.l.b16 %v9065
      %v9134 = vunpack.c.l.b16 %v9066
      %v9135 = vunpack.c.l.b16 %v9067
      %v9136 = vunpack.c.l.b16 %v9068
      %v9137 = vunpack.c.l.b16 %v9069
      %v9138 = vunpack.c.l.b16 %v9070
      %v9139 = vunpack.c.l.b16 %v9071
      %v9140 = vunpack.c.l.b16 %v9072
      %v9141 = vunpack.c.l.b16 %v9073
      %v9142 = vunpack.c.l.b16 %v9074
      %v9143 = vunpack.c.l.b16 %v9075
      %v9144 = vunpack.c.l.b16 %v9076
      %v9145 = vunpack.c.l.b16 %v9077
      %v9146 = vunpack.c.l.b16 %v9078
      %v9147 = vunpack.c.l.b16 %v9079
      %v9148 = vunpack.c.l.b16 %v9080
      %v9149 = vunpack.c.l.b16 %v9081
      %v9150 = vunpack.c.l.b16 %v9082
      %v9151 = vunpack.c.l.b16 %v9083
      %v9152 = vunpack.c.l.b16 %v9084
      %v9153 = vunpack.c.l.b16 %v9085
      %v9154 = vunpack.c.l.b16 %v9086
      %v9155 = vunpack.c.l.b16 %v9087
      %v9156 = vunpack.c.l.b16 %v9088
      %v9157 = vunpack.c.l.b16 %v9089
      %v9158 = vpack.c.b16 %v9127, %v9126
      %v9159 = vpack.c.b16 %v9129, %v9128
      %v9160 = vpack.c.b16 %v9131, %v9130
      %v9161 = vpack.c.b16 %v9133, %v9132
      %v9162 = vpack.c.b16 %v9135, %v9134
      %v9163 = vpack.c.b16 %v9137, %v9136
      %v9164 = vpack.c.b16 %v9139, %v9138
      %v9165 = vpack.c.b16 %v9141, %v9140
      %v9166 = vpack.c.b16 %v9143, %v9142
      %v9167 = vpack.c.b16 %v9145, %v9144
      %v9168 = vpack.c.b16 %v9147, %v9146
      %v9169 = vpack.c.b16 %v9149, %v9148
      %v9170 = vpack.c.b16 %v9151, %v9150
      %v9171 = vpack.c.b16 %v9153, %v9152
      %v9172 = vpack.c.b16 %v9155, %v9154
      %v9173 = vpack.c.b16 %v9157, %v9156
      %v9178 = vunpack.c.l.b16 %v9090
      %v9179 = vunpack.c.l.b16 %v9091
      %v9180 = vunpack.c.l.b16 %v9092
      %v9181 = vunpack.c.l.b16 %v9093
      %v9182 = vpack.c.b16 %v9179, %v9178
      %v9183 = vpack.c.b16 %v9181, %v9180
      %v9187 = vsel %vm5615, %v9158, 0
      %v9190 = vsel %vm5615, %v9159, 0
      %v9193 = vsel %vm5615, %v9160, 0
      %v9196 = vsel %vm5615, %v9161, 0
      %v9199 = vsel %vm5615, %v9162, 0
      %v9202 = vsel %vm5615, %v9163, 0
      %v9205 = vsel %vm5615, %v9164, 0
      %v9208 = vsel %vm5615, %v9165, 0
      %v9211 = vsel %vm5615, %v9166, 0
      %v9214 = vsel %vm5615, %v9167, 0
      %v9217 = vsel %vm5615, %v9168, 0
      %v9220 = vsel %vm5615, %v9169, 0
      %v9223 = vsel %vm5615, %v9170, 0
      %v9226 = vsel %vm5615, %v9171, 0
      %v9229 = vsel %vm5615, %v9172, 0
      %v9232 = vsel %vm5615, %v9173, 0
      %9234 = vmatprep.subr.bf16.mxu0 0
      %9235 = vmatpush1.bf16.msra.mxu0 0
      %9236 = vmatprep.subr.bf16.mxu0 0
      %9237 = vmatpush1.bf16.msra.mxu0 0
      %9238 = vmatprep.subr.bf16.mxu0 0
      %9239 = vmatpush1.bf16.msra.mxu0 0
      %9240 = vmatprep.subr.bf16.mxu0 0
      %9241 = vmatpush1.bf16.msra.mxu0 0
      %9242 = vmatprep.subr.bf16.mxu0 0
      %9243 = vmatpush1.bf16.msra.mxu0 0
      %9244 = vmatprep.subr.bf16.mxu0 0
      %9245 = vmatpush1.bf16.msra.mxu0 0
      %9246 = vmatprep.subr.bf16.mxu0 0
      %9247 = vmatpush1.bf16.msra.mxu0 %v9183
      %9248 = vmatprep.subr.bf16.mxu0 0
      %9249 = vmatpush1.bf16.msra.mxu0 %v9182
      %9250 = vmatprep.subr.bf16.mxu0 0
      %9251 = vmatpush2.bf16.msra.mxu0 0
      %9252 = vmatprep.subr.bf16.mxu0 0
      %9253 = vmatpush2.bf16.msra.mxu0 0
      %9254 = vmatprep.subr.bf16.mxu0 0
      %9255 = vmatpush2.bf16.msra.mxu0 0
      %9256 = vmatprep.subr.bf16.mxu0 0
      %9257 = vmatpush2.bf16.msra.mxu0 0
      %9258 = vmatprep.subr.bf16.mxu0 0
      %9259 = vmatpush2.bf16.msra.mxu0 0
      %9260 = vmatprep.subr.bf16.mxu0 0
      %9261 = vmatpush2.bf16.msra.mxu0 0
      %9262 = vmatprep.subr.bf16.mxu0 0
      %9263 = vmatpush2.bf16.msra.mxu0 0
      %9264 = vmatprep.subr.bf16.mxu0 0
      %9265 = vmatpush2.bf16.msra.mxu0 0
      %9266 = vmatprep.mubr.bf16.mxu0 0
      %9267 = vmatmul.mubr.bf16.gmra.mxu0 %v9187
      %v9268 = vpop.f32.mrf.mxu0
      %v9269 = vadd.f32 0.0, %v9268
      %v9270 = vpop.f32.mrf.mxu0
      %v9271 = vpop.f32.mrf.mxu0
      %v9272 = vadd.f32 0.0, %v9271
      %v9273 = vpop.f32.mrf.mxu0
      %9274 = vmatprep.mubr.bf16.mxu0 0
      %9275 = vmatmul.mubr.bf16.gmra.mxu0 %v9190
      %v9276 = vpop.f32.mrf.mxu0
      %v9277 = vadd.f32 0.0, %v9276
      %v9278 = vpop.f32.mrf.mxu0
      %v9279 = vpop.f32.mrf.mxu0
      %v9280 = vadd.f32 0.0, %v9279
      %v9281 = vpop.f32.mrf.mxu0
      %9282 = vmatprep.mubr.bf16.mxu0 0
      %9283 = vmatmul.mubr.bf16.gmra.mxu0 %v9193
      %v9284 = vpop.f32.mrf.mxu0
      %v9285 = vadd.f32 0.0, %v9284
      %v9286 = vpop.f32.mrf.mxu0
      %v9287 = vpop.f32.mrf.mxu0
      %v9288 = vadd.f32 0.0, %v9287
      %v9289 = vpop.f32.mrf.mxu0
      %9290 = vmatprep.mubr.bf16.mxu0 0
      %9291 = vmatmul.mubr.bf16.gmra.mxu0 %v9196
      %v9292 = vpop.f32.mrf.mxu0
      %v9293 = vadd.f32 0.0, %v9292
      %v9294 = vpop.f32.mrf.mxu0
      %v9295 = vpop.f32.mrf.mxu0
      %v9296 = vadd.f32 0.0, %v9295
      %v9297 = vpop.f32.mrf.mxu0
      %9298 = vmatprep.mubr.bf16.mxu0 0
      %9299 = vmatmul.mubr.bf16.gmra.mxu0 %v9199
      %v9300 = vpop.f32.mrf.mxu0
      %v9301 = vadd.f32 0.0, %v9300
      %v9302 = vpop.f32.mrf.mxu0
      %v9303 = vpop.f32.mrf.mxu0
      %v9304 = vadd.f32 0.0, %v9303
      %v9305 = vpop.f32.mrf.mxu0
      %9306 = vmatprep.mubr.bf16.mxu0 0
      %9307 = vmatmul.mubr.bf16.gmra.mxu0 %v9202
      %v9308 = vpop.f32.mrf.mxu0
      %v9309 = vadd.f32 0.0, %v9308
      %v9310 = vpop.f32.mrf.mxu0
      %v9311 = vpop.f32.mrf.mxu0
      %v9312 = vadd.f32 0.0, %v9311
      %v9313 = vpop.f32.mrf.mxu0
      %9314 = vmatprep.mubr.bf16.mxu0 0
      %9315 = vmatmul.mubr.bf16.gmra.mxu0 %v9205
      %v9316 = vpop.f32.mrf.mxu0
      %v9317 = vadd.f32 0.0, %v9316
      %v9318 = vpop.f32.mrf.mxu0
      %v9319 = vpop.f32.mrf.mxu0
      %v9320 = vadd.f32 0.0, %v9319
      %v9321 = vpop.f32.mrf.mxu0
      %9322 = vmatprep.mubr.bf16.mxu0 0
      %9323 = vmatmul.mubr.bf16.gmra.mxu0 %v9208
      %v9324 = vpop.f32.mrf.mxu0
      %v9325 = vadd.f32 0.0, %v9324
      %v9326 = vpop.f32.mrf.mxu0
      %v9327 = vpop.f32.mrf.mxu0
      %v9328 = vadd.f32 0.0, %v9327
      %v9329 = vpop.f32.mrf.mxu0
      %9330 = vmatprep.mubr.bf16.mxu0 0
      %9331 = vmatmul.mubr.bf16.gmra.mxu0 %v9211
      %v9332 = vpop.f32.mrf.mxu0
      %v9333 = vadd.f32 0.0, %v9332
      %v9334 = vpop.f32.mrf.mxu0
      %v9335 = vpop.f32.mrf.mxu0
      %v9336 = vadd.f32 0.0, %v9335
      %v9337 = vpop.f32.mrf.mxu0
      %9338 = vmatprep.mubr.bf16.mxu0 0
      %9339 = vmatmul.mubr.bf16.gmra.mxu0 %v9214
      %v9340 = vpop.f32.mrf.mxu0
      %v9341 = vadd.f32 0.0, %v9340
      %v9342 = vpop.f32.mrf.mxu0
      %v9343 = vpop.f32.mrf.mxu0
      %v9344 = vadd.f32 0.0, %v9343
      %v9345 = vpop.f32.mrf.mxu0
      %9346 = vmatprep.mubr.bf16.mxu0 0
      %9347 = vmatmul.mubr.bf16.gmra.mxu0 %v9217
      %v9348 = vpop.f32.mrf.mxu0
      %v9349 = vadd.f32 0.0, %v9348
      %v9350 = vpop.f32.mrf.mxu0
      %v9351 = vpop.f32.mrf.mxu0
      %v9352 = vadd.f32 0.0, %v9351
      %v9353 = vpop.f32.mrf.mxu0
      %9354 = vmatprep.mubr.bf16.mxu0 0
      %9355 = vmatmul.mubr.bf16.gmra.mxu0 %v9220
      %v9356 = vpop.f32.mrf.mxu0
      %v9357 = vadd.f32 0.0, %v9356
      %v9358 = vpop.f32.mrf.mxu0
      %v9359 = vpop.f32.mrf.mxu0
      %v9360 = vadd.f32 0.0, %v9359
      %v9361 = vpop.f32.mrf.mxu0
      %9362 = vmatprep.mubr.bf16.mxu0 0
      %9363 = vmatmul.mubr.bf16.gmra.mxu0 %v9223
      %v9364 = vpop.f32.mrf.mxu0
      %v9365 = vadd.f32 0.0, %v9364
      %v9366 = vpop.f32.mrf.mxu0
      %v9367 = vpop.f32.mrf.mxu0
      %v9368 = vadd.f32 0.0, %v9367
      %v9369 = vpop.f32.mrf.mxu0
      %9370 = vmatprep.mubr.bf16.mxu0 0
      %9371 = vmatmul.mubr.bf16.gmra.mxu0 %v9226
      %v9372 = vpop.f32.mrf.mxu0
      %v9373 = vadd.f32 0.0, %v9372
      %v9374 = vpop.f32.mrf.mxu0
      %v9375 = vpop.f32.mrf.mxu0
      %v9376 = vadd.f32 0.0, %v9375
      %v9377 = vpop.f32.mrf.mxu0
      %9378 = vmatprep.mubr.bf16.mxu0 0
      %9379 = vmatmul.mubr.bf16.gmra.mxu0 %v9229
      %v9380 = vpop.f32.mrf.mxu0
      %v9381 = vadd.f32 0.0, %v9380
      %v9382 = vpop.f32.mrf.mxu0
      %v9383 = vpop.f32.mrf.mxu0
      %v9384 = vadd.f32 0.0, %v9383
      %v9385 = vpop.f32.mrf.mxu0
      %9386 = vmatprep.mubr.bf16.mxu0 0
      %9387 = vmatmul.mubr.bf16.gmra.mxu0 %v9232
      %v9388 = vpop.f32.mrf.mxu0
      %v9389 = vadd.f32 0.0, %v9388
      %v9390 = vpop.f32.mrf.mxu0
      %v9391 = vpop.f32.mrf.mxu0
      %v9392 = vadd.f32 0.0, %v9391
      %v9393 = vpop.f32.mrf.mxu0
      %9394 = vdwg.mxu0
      %v9395 = vadd.f32 %v9025, %v9269
      %v9396 = vadd.f32 %v9026, %v9272
      %v9397 = vadd.f32 %v9027, %v9277
      %v9398 = vadd.f32 %v9028, %v9280
      %v9399 = vadd.f32 %v9029, %v9285
      %v9400 = vadd.f32 %v9030, %v9288
      %v9401 = vadd.f32 %v9031, %v9293
      %v9402 = vadd.f32 %v9032, %v9296
      %v9403 = vadd.f32 %v9033, %v9301
      %v9404 = vadd.f32 %v9034, %v9304
      %v9405 = vadd.f32 %v9035, %v9309
      %v9406 = vadd.f32 %v9036, %v9312
      %v9407 = vadd.f32 %v9037, %v9317
      %v9408 = vadd.f32 %v9038, %v9320
      %v9409 = vadd.f32 %v9039, %v9325
      %v9410 = vadd.f32 %v9040, %v9328
      %v9411 = vadd.f32 %v9041, %v9333
      %v9412 = vadd.f32 %v9042, %v9336
      %v9413 = vadd.f32 %v9043, %v9341
      %v9414 = vadd.f32 %v9044, %v9344
      %v9415 = vadd.f32 %v9045, %v9349
      %v9416 = vadd.f32 %v9046, %v9352
      %v9417 = vadd.f32 %v9047, %v9357
      %v9418 = vadd.f32 %v9048, %v9360
      %v9419 = vadd.f32 %v9049, %v9365
      %v9420 = vadd.f32 %v9050, %v9368
      %v9421 = vadd.f32 %v9051, %v9373
      %v9422 = vadd.f32 %v9052, %v9376
      %v9423 = vadd.f32 %v9053, %v9381
      %v9424 = vadd.f32 %v9054, %v9384
      %v9425 = vadd.f32 %v9055, %v9389
      %v9426 = vadd.f32 %v9056, %v9392
      %v9427 = vld [vmem:[%s9057] sm:$0xe]
      %v9428 = vld [vmem:[%s9057 + $0x4] sm:$0xf]
      %v9429 = vld [vmem:[%s9057 + $0x8] sm:$0x1]
      %v9430 = vld [vmem:[%s9057 + $0xc] sm:$0xe]
      %v9431 = vld [vmem:[%s9057 + $0x10] sm:$0xf]
      %v9432 = vld [vmem:[%s9057 + $0x14] sm:$0x1]
      %v9433 = vld [vmem:[%s9057 + $0x18] sm:$0xe]
      %v9434 = vld [vmem:[%s9057 + $0x1c] sm:$0xf]
      %v9435 = vld [vmem:[%s9057 + $0x20] sm:$0x1]
      %v9436 = vld [vmem:[%s9057 + $0x24] sm:$0xe]
      %v9437 = vld [vmem:[%s9057 + $0x28] sm:$0xf]
      %v9438 = vld [vmem:[%s9057 + $0x2c] sm:$0x1]
      %v9439 = vld [vmem:[%s9057 + $0x30] sm:$0xe]
      %v9440 = vld [vmem:[%s9057 + $0x34] sm:$0xf]
      %v9441 = vld [vmem:[%s9057 + $0x38] sm:$0x1]
      %v9442 = vld [vmem:[%s9057 + $0x3c] sm:$0xe]
      %v9443 = vld [vmem:[%s9057 + $0x40] sm:$0xf]
      %v9444 = vld [vmem:[%s9057 + $0x44] sm:$0x1]
      %v9445 = vld [vmem:[%s9057 + $0x48] sm:$0xe]
      %v9446 = vld [vmem:[%s9057 + $0x4c] sm:$0xf]
      %v9447 = vld [vmem:[%s9057 + $0x50] sm:$0x1]
      %v9448 = vld [vmem:[%s9057 + $0x54] sm:$0xe]
      %v9449 = vld [vmem:[%s9057 + $0x58] sm:$0xf]
      %v9450 = vld [vmem:[%s9057 + $0x5c] sm:$0x1]
      %v9451 = vld [vmem:[%s9057 + $0x60] sm:$0xe]
      %v9452 = vld [vmem:[%s9057 + $0x64] sm:$0xf]
      %v9453 = vld [vmem:[%s9057 + $0x68] sm:$0x1]
      %v9454 = vld [vmem:[%s9057 + $0x6c] sm:$0xe]
      %v9455 = vld [vmem:[%s9057 + $0x70] sm:$0xf]
      %v9456 = vld [vmem:[%s9057 + $0x74] sm:$0x1]
      %v9457 = vld [vmem:[%s9057 + $0x78] sm:$0xe]
      %v9458 = vld [vmem:[%s9057 + $0x7c] sm:$0xf]
      %v9459 = vld [vmem:[%s9057 + $0x80] sm:$0x1]
      %v9460 = vld [vmem:[%s9057 + $0x84] sm:$0xe]
      %v9461 = vld [vmem:[%s9057 + $0x88] sm:$0xf]
      %v9462 = vld [vmem:[%s9057 + $0x8c] sm:$0x1]
      %v9463 = vld [vmem:[%s9057 + $0x90] sm:$0xe]
      %v9464 = vld [vmem:[%s9057 + $0x94] sm:$0xf]
      %v9465 = vld [vmem:[%s9057 + $0x98] sm:$0x1]
      %v9466 = vld [vmem:[%s9057 + $0x9c] sm:$0xe]
      %v9467 = vld [vmem:[%s9057 + $0xa0] sm:$0xf]
      %v9468 = vld [vmem:[%s9057 + $0xa4] sm:$0x1]
      %v9469 = vld [vmem:[%s9057 + $0xa8] sm:$0xe]
      %v9470 = vld [vmem:[%s9057 + $0xac] sm:$0xf]
      %v9471 = vld [vmem:[%s9057 + $0xb0] sm:$0x1]
      %v9472 = vld [vmem:[%s9057 + $0xb4] sm:$0xe]
      %v9473 = vld [vmem:[%s9057 + $0xb8] sm:$0xf]
      %v9474 = vld [vmem:[%s9057 + $0xbc] sm:$0x1]
      %v9523 = vrot.slane %v9427, 5
      %v9524 = vrot.slane %v9523, 4
      %v9525 = vrot.slane %v9428, 5
      %v9526 = vsel %vm1982, %v9524, %v9525
      %v9527 = vrot.slane %v9525, 4
      %v9528 = vrot.slane %v9429, 5
      %v9529 = vsel %vm1982, %v9527, %v9528
      %v9530 = vrot.slane %v9430, 5
      %v9531 = vrot.slane %v9530, 4
      %v9532 = vrot.slane %v9431, 5
      %v9533 = vsel %vm1982, %v9531, %v9532
      %v9534 = vrot.slane %v9532, 4
      %v9535 = vrot.slane %v9432, 5
      %v9536 = vsel %vm1982, %v9534, %v9535
      %v9537 = vrot.slane %v9433, 5
      %v9538 = vrot.slane %v9537, 4
      %v9539 = vrot.slane %v9434, 5
      %v9540 = vsel %vm1982, %v9538, %v9539
      %v9541 = vrot.slane %v9539, 4
      %v9542 = vrot.slane %v9435, 5
      %v9543 = vsel %vm1982, %v9541, %v9542
      %v9544 = vrot.slane %v9436, 5
      %v9545 = vrot.slane %v9544, 4
      %v9546 = vrot.slane %v9437, 5
      %v9547 = vsel %vm1982, %v9545, %v9546
      %v9548 = vrot.slane %v9546, 4
      %v9549 = vrot.slane %v9438, 5
      %v9550 = vsel %vm1982, %v9548, %v9549
      %v9551 = vrot.slane %v9439, 5
      %v9552 = vrot.slane %v9551, 4
      %v9553 = vrot.slane %v9440, 5
      %v9554 = vsel %vm1982, %v9552, %v9553
      %v9555 = vrot.slane %v9553, 4
      %v9556 = vrot.slane %v9441, 5
      %v9557 = vsel %vm1982, %v9555, %v9556
      %v9558 = vrot.slane %v9442, 5
      %v9559 = vrot.slane %v9558, 4
      %v9560 = vrot.slane %v9443, 5
      %v9561 = vsel %vm1982, %v9559, %v9560
      %v9562 = vrot.slane %v9560, 4
      %v9563 = vrot.slane %v9444, 5
      %v9564 = vsel %vm1982, %v9562, %v9563
      %v9565 = vrot.slane %v9445, 5
      %v9566 = vrot.slane %v9565, 4
      %v9567 = vrot.slane %v9446, 5
      %v9568 = vsel %vm1982, %v9566, %v9567
      %v9569 = vrot.slane %v9567, 4
      %v9570 = vrot.slane %v9447, 5
      %v9571 = vsel %vm1982, %v9569, %v9570
      %v9572 = vrot.slane %v9448, 5
      %v9573 = vrot.slane %v9572, 4
      %v9574 = vrot.slane %v9449, 5
      %v9575 = vsel %vm1982, %v9573, %v9574
      %v9576 = vrot.slane %v9574, 4
      %v9577 = vrot.slane %v9450, 5
      %v9578 = vsel %vm1982, %v9576, %v9577
      %v9579 = vrot.slane %v9451, 5
      %v9580 = vrot.slane %v9579, 4
      %v9581 = vrot.slane %v9452, 5
      %v9582 = vsel %vm1982, %v9580, %v9581
      %v9583 = vrot.slane %v9581, 4
      %v9584 = vrot.slane %v9453, 5
      %v9585 = vsel %vm1982, %v9583, %v9584
      %v9586 = vrot.slane %v9454, 5
      %v9587 = vrot.slane %v9586, 4
      %v9588 = vrot.slane %v9455, 5
      %v9589 = vsel %vm1982, %v9587, %v9588
      %v9590 = vrot.slane %v9588, 4
      %v9591 = vrot.slane %v9456, 5
      %v9592 = vsel %vm1982, %v9590, %v9591
      %v9593 = vrot.slane %v9457, 5
      %v9594 = vrot.slane %v9593, 4
      %v9595 = vrot.slane %v9458, 5
      %v9596 = vsel %vm1982, %v9594, %v9595
      %v9597 = vrot.slane %v9595, 4
      %v9598 = vrot.slane %v9459, 5
      %v9599 = vsel %vm1982, %v9597, %v9598
      %v9600 = vrot.slane %v9460, 5
      %v9601 = vrot.slane %v9600, 4
      %v9602 = vrot.slane %v9461, 5
      %v9603 = vsel %vm1982, %v9601, %v9602
      %v9604 = vrot.slane %v9602, 4
      %v9605 = vrot.slane %v9462, 5
      %v9606 = vsel %vm1982, %v9604, %v9605
      %v9607 = vrot.slane %v9463, 5
      %v9608 = vrot.slane %v9607, 4
      %v9609 = vrot.slane %v9464, 5
      %v9610 = vsel %vm1982, %v9608, %v9609
      %v9611 = vrot.slane %v9609, 4
      %v9612 = vrot.slane %v9465, 5
      %v9613 = vsel %vm1982, %v9611, %v9612
      %v9614 = vrot.slane %v9466, 5
      %v9615 = vrot.slane %v9614, 4
      %v9616 = vrot.slane %v9467, 5
      %v9617 = vsel %vm1982, %v9615, %v9616
      %v9618 = vrot.slane %v9616, 4
      %v9619 = vrot.slane %v9468, 5
      %v9620 = vsel %vm1982, %v9618, %v9619
      %v9621 = vrot.slane %v9469, 5
      %v9622 = vrot.slane %v9621, 4
      %v9623 = vrot.slane %v9470, 5
      %v9624 = vsel %vm1982, %v9622, %v9623
      %v9625 = vrot.slane %v9623, 4
      %v9626 = vrot.slane %v9471, 5
      %v9627 = vsel %vm1982, %v9625, %v9626
      %v9628 = vrot.slane %v9472, 5
      %v9629 = vrot.slane %v9628, 4
      %v9630 = vrot.slane %v9473, 5
      %v9631 = vsel %vm1982, %v9629, %v9630
      %v9632 = vrot.slane %v9630, 4
      %v9633 = vrot.slane %v9474, 5
      %v9634 = vsel %vm1982, %v9632, %v9633
      %v9635 = vld [vmem:[%s2 + $0x70] sm:$0xf]
      %v9636 = vld [vmem:[%s2 + $0x74] sm:$0xf]
      %v9637 = vld [vmem:[%s2 + $0x78] sm:$0xf]
      %v9638 = vld [vmem:[%s2 + $0x7c] sm:$0xf]
      %v9639 = vunpack.c.l.b16 %v9526
      %v9640 = vunpack.c.l.b16 %v9529
      %v9641 = vunpack.c.l.b16 %v9533
      %v9642 = vunpack.c.l.b16 %v9536
      %v9643 = vunpack.c.l.b16 %v9540
      %v9644 = vunpack.c.l.b16 %v9543
      %v9645 = vunpack.c.l.b16 %v9547
      %v9646 = vunpack.c.l.b16 %v9550
      %v9647 = vunpack.c.l.b16 %v9554
      %v9648 = vunpack.c.l.b16 %v9557
      %v9649 = vunpack.c.l.b16 %v9561
      %v9650 = vunpack.c.l.b16 %v9564
      %v9651 = vunpack.c.l.b16 %v9568
      %v9652 = vunpack.c.l.b16 %v9571
      %v9653 = vunpack.c.l.b16 %v9575
      %v9654 = vunpack.c.l.b16 %v9578
      %v9655 = vunpack.c.l.b16 %v9582
      %v9656 = vunpack.c.l.b16 %v9585
      %v9657 = vunpack.c.l.b16 %v9589
      %v9658 = vunpack.c.l.b16 %v9592
      %v9659 = vunpack.c.l.b16 %v9596
      %v9660 = vunpack.c.l.b16 %v9599
      %v9661 = vunpack.c.l.b16 %v9603
      %v9662 = vunpack.c.l.b16 %v9606
      %v9663 = vunpack.c.l.b16 %v9610
      %v9664 = vunpack.c.l.b16 %v9613
      %v9665 = vunpack.c.l.b16 %v9617
      %v9666 = vunpack.c.l.b16 %v9620
      %v9667 = vunpack.c.l.b16 %v9624
      %v9668 = vunpack.c.l.b16 %v9627
      %v9669 = vunpack.c.l.b16 %v9631
      %v9670 = vunpack.c.l.b16 %v9634
      %v9671 = vpack.c.b16 %v9640, %v9639
      %v9672 = vpack.c.b16 %v9642, %v9641
      %v9673 = vpack.c.b16 %v9644, %v9643
      %v9674 = vpack.c.b16 %v9646, %v9645
      %v9675 = vpack.c.b16 %v9648, %v9647
      %v9676 = vpack.c.b16 %v9650, %v9649
      %v9677 = vpack.c.b16 %v9652, %v9651
      %v9678 = vpack.c.b16 %v9654, %v9653
      %v9679 = vpack.c.b16 %v9656, %v9655
      %v9680 = vpack.c.b16 %v9658, %v9657
      %v9681 = vpack.c.b16 %v9660, %v9659
      %v9682 = vpack.c.b16 %v9662, %v9661
      %v9683 = vpack.c.b16 %v9664, %v9663
      %v9684 = vpack.c.b16 %v9666, %v9665
      %v9685 = vpack.c.b16 %v9668, %v9667
      %v9686 = vpack.c.b16 %v9670, %v9669
      %v9691 = vunpack.c.l.b16 %v9635
      %v9692 = vunpack.c.l.b16 %v9636
      %v9693 = vunpack.c.l.b16 %v9637
      %v9694 = vunpack.c.l.b16 %v9638
      %v9695 = vpack.c.b16 %v9692, %v9691
      %v9696 = vpack.c.b16 %v9694, %v9693
      %v9700 = vsel %vm5615, %v9671, 0
      %v9703 = vsel %vm5615, %v9672, 0
      %v9706 = vsel %vm5615, %v9673, 0
      %v9709 = vsel %vm5615, %v9674, 0
      %v9712 = vsel %vm5615, %v9675, 0
      %v9715 = vsel %vm5615, %v9676, 0
      %v9718 = vsel %vm5615, %v9677, 0
      %v9721 = vsel %vm5615, %v9678, 0
      %v9724 = vsel %vm5615, %v9679, 0
      %v9727 = vsel %vm5615, %v9680, 0
      %v9730 = vsel %vm5615, %v9681, 0
      %v9733 = vsel %vm5615, %v9682, 0
      %v9736 = vsel %vm5615, %v9683, 0
      %v9739 = vsel %vm5615, %v9684, 0
      %v9742 = vsel %vm5615, %v9685, 0
      %v9745 = vsel %vm5615, %v9686, 0
      %9747 = vmatprep.subr.bf16.mxu0 0
      %9748 = vmatpush1.bf16.msra.mxu0 0
      %9749 = vmatprep.subr.bf16.mxu0 0
      %9750 = vmatpush1.bf16.msra.mxu0 0
      %9751 = vmatprep.subr.bf16.mxu0 0
      %9752 = vmatpush1.bf16.msra.mxu0 0
      %9753 = vmatprep.subr.bf16.mxu0 0
      %9754 = vmatpush1.bf16.msra.mxu0 0
      %9755 = vmatprep.subr.bf16.mxu0 0
      %9756 = vmatpush1.bf16.msra.mxu0 0
      %9757 = vmatprep.subr.bf16.mxu0 0
      %9758 = vmatpush1.bf16.msra.mxu0 0
      %9759 = vmatprep.subr.bf16.mxu0 0
      %9760 = vmatpush1.bf16.msra.mxu0 %v9696
      %9761 = vmatprep.subr.bf16.mxu0 0
      %9762 = vmatpush1.bf16.msra.mxu0 %v9695
      %9763 = vmatprep.subr.bf16.mxu0 0
      %9764 = vmatpush2.bf16.msra.mxu0 0
      %9765 = vmatprep.subr.bf16.mxu0 0
      %9766 = vmatpush2.bf16.msra.mxu0 0
      %9767 = vmatprep.subr.bf16.mxu0 0
      %9768 = vmatpush2.bf16.msra.mxu0 0
      %9769 = vmatprep.subr.bf16.mxu0 0
      %9770 = vmatpush2.bf16.msra.mxu0 0
      %9771 = vmatprep.subr.bf16.mxu0 0
      %9772 = vmatpush2.bf16.msra.mxu0 0
      %9773 = vmatprep.subr.bf16.mxu0 0
      %9774 = vmatpush2.bf16.msra.mxu0 0
      %9775 = vmatprep.subr.bf16.mxu0 0
      %9776 = vmatpush2.bf16.msra.mxu0 0
      %9777 = vmatprep.subr.bf16.mxu0 0
      %9778 = vmatpush2.bf16.msra.mxu0 0
      %9779 = vmatprep.mubr.bf16.mxu0 0
      %9780 = vmatmul.mubr.bf16.gmra.mxu0 %v9700
      %v9781 = vpop.f32.mrf.mxu0
      %v9782 = vadd.f32 0.0, %v9781
      %v9783 = vpop.f32.mrf.mxu0
      %v9784 = vpop.f32.mrf.mxu0
      %v9785 = vadd.f32 0.0, %v9784
      %v9786 = vpop.f32.mrf.mxu0
      %9787 = vmatprep.mubr.bf16.mxu0 0
      %9788 = vmatmul.mubr.bf16.gmra.mxu0 %v9703
      %v9789 = vpop.f32.mrf.mxu0
      %v9790 = vadd.f32 0.0, %v9789
      %v9791 = vpop.f32.mrf.mxu0
      %v9792 = vpop.f32.mrf.mxu0
      %v9793 = vadd.f32 0.0, %v9792
      %v9794 = vpop.f32.mrf.mxu0
      %9795 = vmatprep.mubr.bf16.mxu0 0
      %9796 = vmatmul.mubr.bf16.gmra.mxu0 %v9706
      %v9797 = vpop.f32.mrf.mxu0
      %v9798 = vadd.f32 0.0, %v9797
      %v9799 = vpop.f32.mrf.mxu0
      %v9800 = vpop.f32.mrf.mxu0
      %v9801 = vadd.f32 0.0, %v9800
      %v9802 = vpop.f32.mrf.mxu0
      %9803 = vmatprep.mubr.bf16.mxu0 0
      %9804 = vmatmul.mubr.bf16.gmra.mxu0 %v9709
      %v9805 = vpop.f32.mrf.mxu0
      %v9806 = vadd.f32 0.0, %v9805
      %v9807 = vpop.f32.mrf.mxu0
      %v9808 = vpop.f32.mrf.mxu0
      %v9809 = vadd.f32 0.0, %v9808
      %v9810 = vpop.f32.mrf.mxu0
      %9811 = vmatprep.mubr.bf16.mxu0 0
      %9812 = vmatmul.mubr.bf16.gmra.mxu0 %v9712
      %v9813 = vpop.f32.mrf.mxu0
      %v9814 = vadd.f32 0.0, %v9813
      %v9815 = vpop.f32.mrf.mxu0
      %v9816 = vpop.f32.mrf.mxu0
      %v9817 = vadd.f32 0.0, %v9816
      %v9818 = vpop.f32.mrf.mxu0
      %9819 = vmatprep.mubr.bf16.mxu0 0
      %9820 = vmatmul.mubr.bf16.gmra.mxu0 %v9715
      %v9821 = vpop.f32.mrf.mxu0
      %v9822 = vadd.f32 0.0, %v9821
      %v9823 = vpop.f32.mrf.mxu0
      %v9824 = vpop.f32.mrf.mxu0
      %v9825 = vadd.f32 0.0, %v9824
      %v9826 = vpop.f32.mrf.mxu0
      %9827 = vmatprep.mubr.bf16.mxu0 0
      %9828 = vmatmul.mubr.bf16.gmra.mxu0 %v9718
      %v9829 = vpop.f32.mrf.mxu0
      %v9830 = vadd.f32 0.0, %v9829
      %v9831 = vpop.f32.mrf.mxu0
      %v9832 = vpop.f32.mrf.mxu0
      %v9833 = vadd.f32 0.0, %v9832
      %v9834 = vpop.f32.mrf.mxu0
      %9835 = vmatprep.mubr.bf16.mxu0 0
      %9836 = vmatmul.mubr.bf16.gmra.mxu0 %v9721
      %v9837 = vpop.f32.mrf.mxu0
      %v9838 = vadd.f32 0.0, %v9837
      %v9839 = vpop.f32.mrf.mxu0
      %v9840 = vpop.f32.mrf.mxu0
      %v9841 = vadd.f32 0.0, %v9840
      %v9842 = vpop.f32.mrf.mxu0
      %9843 = vmatprep.mubr.bf16.mxu0 0
      %9844 = vmatmul.mubr.bf16.gmra.mxu0 %v9724
      %v9845 = vpop.f32.mrf.mxu0
      %v9846 = vadd.f32 0.0, %v9845
      %v9847 = vpop.f32.mrf.mxu0
      %v9848 = vpop.f32.mrf.mxu0
      %v9849 = vadd.f32 0.0, %v9848
      %v9850 = vpop.f32.mrf.mxu0
      %9851 = vmatprep.mubr.bf16.mxu0 0
      %9852 = vmatmul.mubr.bf16.gmra.mxu0 %v9727
      %v9853 = vpop.f32.mrf.mxu0
      %v9854 = vadd.f32 0.0, %v9853
      %v9855 = vpop.f32.mrf.mxu0
      %v9856 = vpop.f32.mrf.mxu0
      %v9857 = vadd.f32 0.0, %v9856
      %v9858 = vpop.f32.mrf.mxu0
      %9859 = vmatprep.mubr.bf16.mxu0 0
      %9860 = vmatmul.mubr.bf16.gmra.mxu0 %v9730
      %v9861 = vpop.f32.mrf.mxu0
      %v9862 = vadd.f32 0.0, %v9861
      %v9863 = vpop.f32.mrf.mxu0
      %v9864 = vpop.f32.mrf.mxu0
      %v9865 = vadd.f32 0.0, %v9864
      %v9866 = vpop.f32.mrf.mxu0
      %9867 = vmatprep.mubr.bf16.mxu0 0
      %9868 = vmatmul.mubr.bf16.gmra.mxu0 %v9733
      %v9869 = vpop.f32.mrf.mxu0
      %v9870 = vadd.f32 0.0, %v9869
      %v9871 = vpop.f32.mrf.mxu0
      %v9872 = vpop.f32.mrf.mxu0
      %v9873 = vadd.f32 0.0, %v9872
      %v9874 = vpop.f32.mrf.mxu0
      %9875 = vmatprep.mubr.bf16.mxu0 0
      %9876 = vmatmul.mubr.bf16.gmra.mxu0 %v9736
      %v9877 = vpop.f32.mrf.mxu0
      %v9878 = vadd.f32 0.0, %v9877
      %v9879 = vpop.f32.mrf.mxu0
      %v9880 = vpop.f32.mrf.mxu0
      %v9881 = vadd.f32 0.0, %v9880
      %v9882 = vpop.f32.mrf.mxu0
      %9883 = vmatprep.mubr.bf16.mxu0 0
      %9884 = vmatmul.mubr.bf16.gmra.mxu0 %v9739
      %v9885 = vpop.f32.mrf.mxu0
      %v9886 = vadd.f32 0.0, %v9885
      %v9887 = vpop.f32.mrf.mxu0
      %v9888 = vpop.f32.mrf.mxu0
      %v9889 = vadd.f32 0.0, %v9888
      %v9890 = vpop.f32.mrf.mxu0
      %9891 = vmatprep.mubr.bf16.mxu0 0
      %9892 = vmatmul.mubr.bf16.gmra.mxu0 %v9742
      %v9893 = vpop.f32.mrf.mxu0
      %v9894 = vadd.f32 0.0, %v9893
      %v9895 = vpop.f32.mrf.mxu0
      %v9896 = vpop.f32.mrf.mxu0
      %v9897 = vadd.f32 0.0, %v9896
      %v9898 = vpop.f32.mrf.mxu0
      %9899 = vmatprep.mubr.bf16.mxu0 0
      %9900 = vmatmul.mubr.bf16.gmra.mxu0 %v9745
      %v9901 = vpop.f32.mrf.mxu0
      %v9902 = vadd.f32 0.0, %v9901
      %v9903 = vpop.f32.mrf.mxu0
      %v9904 = vpop.f32.mrf.mxu0
      %v9905 = vadd.f32 0.0, %v9904
      %v9906 = vpop.f32.mrf.mxu0
      %9907 = vdwg.mxu0
      %v9908 = vadd.f32 %v9395, %v9782
      %v9909 = vadd.f32 %v9396, %v9785
      %v9910 = vadd.f32 %v9397, %v9790
      %v9911 = vadd.f32 %v9398, %v9793
      %v9912 = vadd.f32 %v9399, %v9798
      %v9913 = vadd.f32 %v9400, %v9801
      %v9914 = vadd.f32 %v9401, %v9806
      %v9915 = vadd.f32 %v9402, %v9809
      %v9916 = vadd.f32 %v9403, %v9814
      %v9917 = vadd.f32 %v9404, %v9817
      %v9918 = vadd.f32 %v9405, %v9822
      %v9919 = vadd.f32 %v9406, %v9825
      %v9920 = vadd.f32 %v9407, %v9830
      %v9921 = vadd.f32 %v9408, %v9833
      %v9922 = vadd.f32 %v9409, %v9838
      %v9923 = vadd.f32 %v9410, %v9841
      %v9924 = vadd.f32 %v9411, %v9846
      %v9925 = vadd.f32 %v9412, %v9849
      %v9926 = vadd.f32 %v9413, %v9854
      %v9927 = vadd.f32 %v9414, %v9857
      %v9928 = vadd.f32 %v9415, %v9862
      %v9929 = vadd.f32 %v9416, %v9865
      %v9930 = vadd.f32 %v9417, %v9870
      %v9931 = vadd.f32 %v9418, %v9873
      %v9932 = vadd.f32 %v9419, %v9878
      %v9933 = vadd.f32 %v9420, %v9881
      %v9934 = vadd.f32 %v9421, %v9886
      %v9935 = vadd.f32 %v9422, %v9889
      %v9936 = vadd.f32 %v9423, %v9894
      %v9937 = vadd.f32 %v9424, %v9897
      %v9938 = vadd.f32 %v9425, %v9902
      %v9939 = vadd.f32 %v9426, %v9905
      %v9940 = vld [vmem:[%s9057] sm:$0xc]
      %v9941 = vld [vmem:[%s9057 + $0x8] sm:$0x3]
      %v9942 = vld [vmem:[%s9057 + $0xc] sm:$0xc]
      %v9943 = vld [vmem:[%s9057 + $0x14] sm:$0x3]
      %v9944 = vld [vmem:[%s9057 + $0x18] sm:$0xc]
      %v9945 = vld [vmem:[%s9057 + $0x20] sm:$0x3]
      %v9946 = vld [vmem:[%s9057 + $0x24] sm:$0xc]
      %v9947 = vld [vmem:[%s9057 + $0x2c] sm:$0x3]
      %v9948 = vld [vmem:[%s9057 + $0x30] sm:$0xc]
      %v9949 = vld [vmem:[%s9057 + $0x38] sm:$0x3]
      %v9950 = vld [vmem:[%s9057 + $0x3c] sm:$0xc]
      %v9951 = vld [vmem:[%s9057 + $0x44] sm:$0x3]
      %v9952 = vld [vmem:[%s9057 + $0x48] sm:$0xc]
      %v9953 = vld [vmem:[%s9057 + $0x50] sm:$0x3]
      %v9954 = vld [vmem:[%s9057 + $0x54] sm:$0xc]
      %v9955 = vld [vmem:[%s9057 + $0x5c] sm:$0x3]
      %v9956 = vld [vmem:[%s9057 + $0x60] sm:$0xc]
      %v9957 = vld [vmem:[%s9057 + $0x68] sm:$0x3]
      %v9958 = vld [vmem:[%s9057 + $0x6c] sm:$0xc]
      %v9959 = vld [vmem:[%s9057 + $0x74] sm:$0x3]
      %v9960 = vld [vmem:[%s9057 + $0x78] sm:$0xc]
      %v9961 = vld [vmem:[%s9057 + $0x80] sm:$0x3]
      %v9962 = vld [vmem:[%s9057 + $0x84] sm:$0xc]
      %v9963 = vld [vmem:[%s9057 + $0x8c] sm:$0x3]
      %v9964 = vld [vmem:[%s9057 + $0x90] sm:$0xc]
      %v9965 = vld [vmem:[%s9057 + $0x98] sm:$0x3]
      %v9966 = vld [vmem:[%s9057 + $0x9c] sm:$0xc]
      %v9967 = vld [vmem:[%s9057 + $0xa4] sm:$0x3]
      %v9968 = vld [vmem:[%s9057 + $0xa8] sm:$0xc]
      %v9969 = vld [vmem:[%s9057 + $0xb0] sm:$0x3]
      %v9970 = vld [vmem:[%s9057 + $0xb4] sm:$0xc]
      %v9971 = vld [vmem:[%s9057 + $0xbc] sm:$0x3]
      %v10004 = vrot.slane %v9940, 6
      %v10005 = vrot.slane %v10004, 4
      %v10006 = vrot.slane %v9428, 6
      %v10007 = vsel %vm7276, %v10005, %v10006
      %v10008 = vrot.slane %v10006, 4
      %v10009 = vrot.slane %v9941, 6
      %v10010 = vsel %vm7276, %v10008, %v10009
      %v10011 = vrot.slane %v9942, 6
      %v10012 = vrot.slane %v10011, 4
      %v10013 = vrot.slane %v9431, 6
      %v10014 = vsel %vm7276, %v10012, %v10013
      %v10015 = vrot.slane %v10013, 4
      %v10016 = vrot.slane %v9943, 6
      %v10017 = vsel %vm7276, %v10015, %v10016
      %v10018 = vrot.slane %v9944, 6
      %v10019 = vrot.slane %v10018, 4
      %v10020 = vrot.slane %v9434, 6
      %v10021 = vsel %vm7276, %v10019, %v10020
      %v10022 = vrot.slane %v10020, 4
      %v10023 = vrot.slane %v9945, 6
      %v10024 = vsel %vm7276, %v10022, %v10023
      %v10025 = vrot.slane %v9946, 6
      %v10026 = vrot.slane %v10025, 4
      %v10027 = vrot.slane %v9437, 6
      %v10028 = vsel %vm7276, %v10026, %v10027
      %v10029 = vrot.slane %v10027, 4
      %v10030 = vrot.slane %v9947, 6
      %v10031 = vsel %vm7276, %v10029, %v10030
      %v10032 = vrot.slane %v9948, 6
      %v10033 = vrot.slane %v10032, 4
      %v10034 = vrot.slane %v9440, 6
      %v10035 = vsel %vm7276, %v10033, %v10034
      %v10036 = vrot.slane %v10034, 4
      %v10037 = vrot.slane %v9949, 6
      %v10038 = vsel %vm7276, %v10036, %v10037
      %v10039 = vrot.slane %v9950, 6
      %v10040 = vrot.slane %v10039, 4
      %v10041 = vrot.slane %v9443, 6
      %v10042 = vsel %vm7276, %v10040, %v10041
      %v10043 = vrot.slane %v10041, 4
      %v10044 = vrot.slane %v9951, 6
      %v10045 = vsel %vm7276, %v10043, %v10044
      %v10046 = vrot.slane %v9952, 6
      %v10047 = vrot.slane %v10046, 4
      %v10048 = vrot.slane %v9446, 6
      %v10049 = vsel %vm7276, %v10047, %v10048
      %v10050 = vrot.slane %v10048, 4
      %v10051 = vrot.slane %v9953, 6
      %v10052 = vsel %vm7276, %v10050, %v10051
      %v10053 = vrot.slane %v9954, 6
      %v10054 = vrot.slane %v10053, 4
      %v10055 = vrot.slane %v9449, 6
      %v10056 = vsel %vm7276, %v10054, %v10055
      %v10057 = vrot.slane %v10055, 4
      %v10058 = vrot.slane %v9955, 6
      %v10059 = vsel %vm7276, %v10057, %v10058
      %v10060 = vrot.slane %v9956, 6
      %v10061 = vrot.slane %v10060, 4
      %v10062 = vrot.slane %v9452, 6
      %v10063 = vsel %vm7276, %v10061, %v10062
      %v10064 = vrot.slane %v10062, 4
      %v10065 = vrot.slane %v9957, 6
      %v10066 = vsel %vm7276, %v10064, %v10065
      %v10067 = vrot.slane %v9958, 6
      %v10068 = vrot.slane %v10067, 4
      %v10069 = vrot.slane %v9455, 6
      %v10070 = vsel %vm7276, %v10068, %v10069
      %v10071 = vrot.slane %v10069, 4
      %v10072 = vrot.slane %v9959, 6
      %v10073 = vsel %vm7276, %v10071, %v10072
      %v10074 = vrot.slane %v9960, 6
      %v10075 = vrot.slane %v10074, 4
      %v10076 = vrot.slane %v9458, 6
      %v10077 = vsel %vm7276, %v10075, %v10076
      %v10078 = vrot.slane %v10076, 4
      %v10079 = vrot.slane %v9961, 6
      %v10080 = vsel %vm7276, %v10078, %v10079
      %v10081 = vrot.slane %v9962, 6
      %v10082 = vrot.slane %v10081, 4
      %v10083 = vrot.slane %v9461, 6
      %v10084 = vsel %vm7276, %v10082, %v10083
      %v10085 = vrot.slane %v10083, 4
      %v10086 = vrot.slane %v9963, 6
      %v10087 = vsel %vm7276, %v10085, %v10086
      %v10088 = vrot.slane %v9964, 6
      %v10089 = vrot.slane %v10088, 4
      %v10090 = vrot.slane %v9464, 6
      %v10091 = vsel %vm7276, %v10089, %v10090
      %v10092 = vrot.slane %v10090, 4
      %v10093 = vrot.slane %v9965, 6
      %v10094 = vsel %vm7276, %v10092, %v10093
      %v10095 = vrot.slane %v9966, 6
      %v10096 = vrot.slane %v10095, 4
      %v10097 = vrot.slane %v9467, 6
      %v10098 = vsel %vm7276, %v10096, %v10097
      %v10099 = vrot.slane %v10097, 4
      %v10100 = vrot.slane %v9967, 6
      %v10101 = vsel %vm7276, %v10099, %v10100
      %v10102 = vrot.slane %v9968, 6
      %v10103 = vrot.slane %v10102, 4
      %v10104 = vrot.slane %v9470, 6
      %v10105 = vsel %vm7276, %v10103, %v10104
      %v10106 = vrot.slane %v10104, 4
      %v10107 = vrot.slane %v9969, 6
      %v10108 = vsel %vm7276, %v10106, %v10107
      %v10109 = vrot.slane %v9970, 6
      %v10110 = vrot.slane %v10109, 4
      %v10111 = vrot.slane %v9473, 6
      %v10112 = vsel %vm7276, %v10110, %v10111
      %v10113 = vrot.slane %v10111, 4
      %v10114 = vrot.slane %v9971, 6
      %v10115 = vsel %vm7276, %v10113, %v10114
      %v10116 = vld [vmem:[%s2 + $0x80] sm:$0xf]
      %v10117 = vld [vmem:[%s2 + $0x84] sm:$0xf]
      %v10118 = vld [vmem:[%s2 + $0x88] sm:$0xf]
      %v10119 = vld [vmem:[%s2 + $0x8c] sm:$0xf]
      %v10120 = vunpack.c.l.b16 %v10007
      %v10121 = vunpack.c.l.b16 %v10010
      %v10122 = vunpack.c.l.b16 %v10014
      %v10123 = vunpack.c.l.b16 %v10017
      %v10124 = vunpack.c.l.b16 %v10021
      %v10125 = vunpack.c.l.b16 %v10024
      %v10126 = vunpack.c.l.b16 %v10028
      %v10127 = vunpack.c.l.b16 %v10031
      %v10128 = vunpack.c.l.b16 %v10035
      %v10129 = vunpack.c.l.b16 %v10038
      %v10130 = vunpack.c.l.b16 %v10042
      %v10131 = vunpack.c.l.b16 %v10045
      %v10132 = vunpack.c.l.b16 %v10049
      %v10133 = vunpack.c.l.b16 %v10052
      %v10134 = vunpack.c.l.b16 %v10056
      %v10135 = vunpack.c.l.b16 %v10059
      %v10136 = vunpack.c.l.b16 %v10063
      %v10137 = vunpack.c.l.b16 %v10066
      %v10138 = vunpack.c.l.b16 %v10070
      %v10139 = vunpack.c.l.b16 %v10073
      %v10140 = vunpack.c.l.b16 %v10077
      %v10141 = vunpack.c.l.b16 %v10080
      %v10142 = vunpack.c.l.b16 %v10084
      %v10143 = vunpack.c.l.b16 %v10087
      %v10144 = vunpack.c.l.b16 %v10091
      %v10145 = vunpack.c.l.b16 %v10094
      %v10146 = vunpack.c.l.b16 %v10098
      %v10147 = vunpack.c.l.b16 %v10101
      %v10148 = vunpack.c.l.b16 %v10105
      %v10149 = vunpack.c.l.b16 %v10108
      %v10150 = vunpack.c.l.b16 %v10112
      %v10151 = vunpack.c.l.b16 %v10115
      %v10152 = vpack.c.b16 %v10121, %v10120
      %v10153 = vpack.c.b16 %v10123, %v10122
      %v10154 = vpack.c.b16 %v10125, %v10124
      %v10155 = vpack.c.b16 %v10127, %v10126
      %v10156 = vpack.c.b16 %v10129, %v10128
      %v10157 = vpack.c.b16 %v10131, %v10130
      %v10158 = vpack.c.b16 %v10133, %v10132
      %v10159 = vpack.c.b16 %v10135, %v10134
      %v10160 = vpack.c.b16 %v10137, %v10136
      %v10161 = vpack.c.b16 %v10139, %v10138
      %v10162 = vpack.c.b16 %v10141, %v10140
      %v10163 = vpack.c.b16 %v10143, %v10142
      %v10164 = vpack.c.b16 %v10145, %v10144
      %v10165 = vpack.c.b16 %v10147, %v10146
      %v10166 = vpack.c.b16 %v10149, %v10148
      %v10167 = vpack.c.b16 %v10151, %v10150
      %v10172 = vunpack.c.l.b16 %v10116
      %v10173 = vunpack.c.l.b16 %v10117
      %v10174 = vunpack.c.l.b16 %v10118
      %v10175 = vunpack.c.l.b16 %v10119
      %v10176 = vpack.c.b16 %v10173, %v10172
      %v10177 = vpack.c.b16 %v10175, %v10174
      %v10181 = vsel %vm5615, %v10152, 0
      %v10184 = vsel %vm5615, %v10153, 0
      %v10187 = vsel %vm5615, %v10154, 0
      %v10190 = vsel %vm5615, %v10155, 0
      %v10193 = vsel %vm5615, %v10156, 0
      %v10196 = vsel %vm5615, %v10157, 0
      %v10199 = vsel %vm5615, %v10158, 0
      %v10202 = vsel %vm5615, %v10159, 0
      %v10205 = vsel %vm5615, %v10160, 0
      %v10208 = vsel %vm5615, %v10161, 0
      %v10211 = vsel %vm5615, %v10162, 0
      %v10214 = vsel %vm5615, %v10163, 0
      %v10217 = vsel %vm5615, %v10164, 0
      %v10220 = vsel %vm5615, %v10165, 0
      %v10223 = vsel %vm5615, %v10166, 0
      %v10226 = vsel %vm5615, %v10167, 0
      %10228 = vmatprep.subr.bf16.mxu0 0
      %10229 = vmatpush1.bf16.msra.mxu0 0
      %10230 = vmatprep.subr.bf16.mxu0 0
      %10231 = vmatpush1.bf16.msra.mxu0 0
      %10232 = vmatprep.subr.bf16.mxu0 0
      %10233 = vmatpush1.bf16.msra.mxu0 0
      %10234 = vmatprep.subr.bf16.mxu0 0
      %10235 = vmatpush1.bf16.msra.mxu0 0
      %10236 = vmatprep.subr.bf16.mxu0 0
      %10237 = vmatpush1.bf16.msra.mxu0 0
      %10238 = vmatprep.subr.bf16.mxu0 0
      %10239 = vmatpush1.bf16.msra.mxu0 0
      %10240 = vmatprep.subr.bf16.mxu0 0
      %10241 = vmatpush1.bf16.msra.mxu0 %v10177
      %10242 = vmatprep.subr.bf16.mxu0 0
      %10243 = vmatpush1.bf16.msra.mxu0 %v10176
      %10244 = vmatprep.subr.bf16.mxu0 0
      %10245 = vmatpush2.bf16.msra.mxu0 0
      %10246 = vmatprep.subr.bf16.mxu0 0
      %10247 = vmatpush2.bf16.msra.mxu0 0
      %10248 = vmatprep.subr.bf16.mxu0 0
      %10249 = vmatpush2.bf16.msra.mxu0 0
      %10250 = vmatprep.subr.bf16.mxu0 0
      %10251 = vmatpush2.bf16.msra.mxu0 0
      %10252 = vmatprep.subr.bf16.mxu0 0
      %10253 = vmatpush2.bf16.msra.mxu0 0
      %10254 = vmatprep.subr.bf16.mxu0 0
      %10255 = vmatpush2.bf16.msra.mxu0 0
      %10256 = vmatprep.subr.bf16.mxu0 0
      %10257 = vmatpush2.bf16.msra.mxu0 0
      %10258 = vmatprep.subr.bf16.mxu0 0
      %10259 = vmatpush2.bf16.msra.mxu0 0
      %10260 = vmatprep.mubr.bf16.mxu0 0
      %10261 = vmatmul.mubr.bf16.gmra.mxu0 %v10181
      %v10262 = vpop.f32.mrf.mxu0
      %v10263 = vadd.f32 0.0, %v10262
      %v10264 = vpop.f32.mrf.mxu0
      %v10265 = vpop.f32.mrf.mxu0
      %v10266 = vadd.f32 0.0, %v10265
      %v10267 = vpop.f32.mrf.mxu0
      %10268 = vmatprep.mubr.bf16.mxu0 0
      %10269 = vmatmul.mubr.bf16.gmra.mxu0 %v10184
      %v10270 = vpop.f32.mrf.mxu0
      %v10271 = vadd.f32 0.0, %v10270
      %v10272 = vpop.f32.mrf.mxu0
      %v10273 = vpop.f32.mrf.mxu0
      %v10274 = vadd.f32 0.0, %v10273
      %v10275 = vpop.f32.mrf.mxu0
      %10276 = vmatprep.mubr.bf16.mxu0 0
      %10277 = vmatmul.mubr.bf16.gmra.mxu0 %v10187
      %v10278 = vpop.f32.mrf.mxu0
      %v10279 = vadd.f32 0.0, %v10278
      %v10280 = vpop.f32.mrf.mxu0
      %v10281 = vpop.f32.mrf.mxu0
      %v10282 = vadd.f32 0.0, %v10281
      %v10283 = vpop.f32.mrf.mxu0
      %10284 = vmatprep.mubr.bf16.mxu0 0
      %10285 = vmatmul.mubr.bf16.gmra.mxu0 %v10190
      %v10286 = vpop.f32.mrf.mxu0
      %v10287 = vadd.f32 0.0, %v10286
      %v10288 = vpop.f32.mrf.mxu0
      %v10289 = vpop.f32.mrf.mxu0
      %v10290 = vadd.f32 0.0, %v10289
      %v10291 = vpop.f32.mrf.mxu0
      %10292 = vmatprep.mubr.bf16.mxu0 0
      %10293 = vmatmul.mubr.bf16.gmra.mxu0 %v10193
      %v10294 = vpop.f32.mrf.mxu0
      %v10295 = vadd.f32 0.0, %v10294
      %v10296 = vpop.f32.mrf.mxu0
      %v10297 = vpop.f32.mrf.mxu0
      %v10298 = vadd.f32 0.0, %v10297
      %v10299 = vpop.f32.mrf.mxu0
      %10300 = vmatprep.mubr.bf16.mxu0 0
      %10301 = vmatmul.mubr.bf16.gmra.mxu0 %v10196
      %v10302 = vpop.f32.mrf.mxu0
      %v10303 = vadd.f32 0.0, %v10302
      %v10304 = vpop.f32.mrf.mxu0
      %v10305 = vpop.f32.mrf.mxu0
      %v10306 = vadd.f32 0.0, %v10305
      %v10307 = vpop.f32.mrf.mxu0
      %10308 = vmatprep.mubr.bf16.mxu0 0
      %10309 = vmatmul.mubr.bf16.gmra.mxu0 %v10199
      %v10310 = vpop.f32.mrf.mxu0
      %v10311 = vadd.f32 0.0, %v10310
      %v10312 = vpop.f32.mrf.mxu0
      %v10313 = vpop.f32.mrf.mxu0
      %v10314 = vadd.f32 0.0, %v10313
      %v10315 = vpop.f32.mrf.mxu0
      %10316 = vmatprep.mubr.bf16.mxu0 0
      %10317 = vmatmul.mubr.bf16.gmra.mxu0 %v10202
      %v10318 = vpop.f32.mrf.mxu0
      %v10319 = vadd.f32 0.0, %v10318
      %v10320 = vpop.f32.mrf.mxu0
      %v10321 = vpop.f32.mrf.mxu0
      %v10322 = vadd.f32 0.0, %v10321
      %v10323 = vpop.f32.mrf.mxu0
      %10324 = vmatprep.mubr.bf16.mxu0 0
      %10325 = vmatmul.mubr.bf16.gmra.mxu0 %v10205
      %v10326 = vpop.f32.mrf.mxu0
      %v10327 = vadd.f32 0.0, %v10326
      %v10328 = vpop.f32.mrf.mxu0
      %v10329 = vpop.f32.mrf.mxu0
      %v10330 = vadd.f32 0.0, %v10329
      %v10331 = vpop.f32.mrf.mxu0
      %10332 = vmatprep.mubr.bf16.mxu0 0
      %10333 = vmatmul.mubr.bf16.gmra.mxu0 %v10208
      %v10334 = vpop.f32.mrf.mxu0
      %v10335 = vadd.f32 0.0, %v10334
      %v10336 = vpop.f32.mrf.mxu0
      %v10337 = vpop.f32.mrf.mxu0
      %v10338 = vadd.f32 0.0, %v10337
      %v10339 = vpop.f32.mrf.mxu0
      %10340 = vmatprep.mubr.bf16.mxu0 0
      %10341 = vmatmul.mubr.bf16.gmra.mxu0 %v10211
      %v10342 = vpop.f32.mrf.mxu0
      %v10343 = vadd.f32 0.0, %v10342
      %v10344 = vpop.f32.mrf.mxu0
      %v10345 = vpop.f32.mrf.mxu0
      %v10346 = vadd.f32 0.0, %v10345
      %v10347 = vpop.f32.mrf.mxu0
      %10348 = vmatprep.mubr.bf16.mxu0 0
      %10349 = vmatmul.mubr.bf16.gmra.mxu0 %v10214
      %v10350 = vpop.f32.mrf.mxu0
      %v10351 = vadd.f32 0.0, %v10350
      %v10352 = vpop.f32.mrf.mxu0
      %v10353 = vpop.f32.mrf.mxu0
      %v10354 = vadd.f32 0.0, %v10353
      %v10355 = vpop.f32.mrf.mxu0
      %10356 = vmatprep.mubr.bf16.mxu0 0
      %10357 = vmatmul.mubr.bf16.gmra.mxu0 %v10217
      %v10358 = vpop.f32.mrf.mxu0
      %v10359 = vadd.f32 0.0, %v10358
      %v10360 = vpop.f32.mrf.mxu0
      %v10361 = vpop.f32.mrf.mxu0
      %v10362 = vadd.f32 0.0, %v10361
      %v10363 = vpop.f32.mrf.mxu0
      %10364 = vmatprep.mubr.bf16.mxu0 0
      %10365 = vmatmul.mubr.bf16.gmra.mxu0 %v10220
      %v10366 = vpop.f32.mrf.mxu0
      %v10367 = vadd.f32 0.0, %v10366
      %v10368 = vpop.f32.mrf.mxu0
      %v10369 = vpop.f32.mrf.mxu0
      %v10370 = vadd.f32 0.0, %v10369
      %v10371 = vpop.f32.mrf.mxu0
      %10372 = vmatprep.mubr.bf16.mxu0 0
      %10373 = vmatmul.mubr.bf16.gmra.mxu0 %v10223
      %v10374 = vpop.f32.mrf.mxu0
      %v10375 = vadd.f32 0.0, %v10374
      %v10376 = vpop.f32.mrf.mxu0
      %v10377 = vpop.f32.mrf.mxu0
      %v10378 = vadd.f32 0.0, %v10377
      %v10379 = vpop.f32.mrf.mxu0
      %10380 = vmatprep.mubr.bf16.mxu0 0
      %10381 = vmatmul.mubr.bf16.gmra.mxu0 %v10226
      %v10382 = vpop.f32.mrf.mxu0
      %v10383 = vadd.f32 0.0, %v10382
      %v10384 = vpop.f32.mrf.mxu0
      %v10385 = vpop.f32.mrf.mxu0
      %v10386 = vadd.f32 0.0, %v10385
      %v10387 = vpop.f32.mrf.mxu0
      %10388 = vdwg.mxu0
      %v10389 = vadd.f32 %v9908, %v10263
      %v10390 = vadd.f32 %v9909, %v10266
      %v10391 = vadd.f32 %v9910, %v10271
      %v10392 = vadd.f32 %v9911, %v10274
      %v10393 = vadd.f32 %v9912, %v10279
      %v10394 = vadd.f32 %v9913, %v10282
      %v10395 = vadd.f32 %v9914, %v10287
      %v10396 = vadd.f32 %v9915, %v10290
      %v10397 = vadd.f32 %v9916, %v10295
      %v10398 = vadd.f32 %v9917, %v10298
      %v10399 = vadd.f32 %v9918, %v10303
      %v10400 = vadd.f32 %v9919, %v10306
      %v10401 = vadd.f32 %v9920, %v10311
      %v10402 = vadd.f32 %v9921, %v10314
      %v10403 = vadd.f32 %v9922, %v10319
      %v10404 = vadd.f32 %v9923, %v10322
      %v10405 = vadd.f32 %v9924, %v10327
      %v10406 = vadd.f32 %v9925, %v10330
      %v10407 = vadd.f32 %v9926, %v10335
      %v10408 = vadd.f32 %v9927, %v10338
      %v10409 = vadd.f32 %v9928, %v10343
      %v10410 = vadd.f32 %v9929, %v10346
      %v10411 = vadd.f32 %v9930, %v10351
      %v10412 = vadd.f32 %v9931, %v10354
      %v10413 = vadd.f32 %v9932, %v10359
      %v10414 = vadd.f32 %v9933, %v10362
      %v10415 = vadd.f32 %v9934, %v10367
      %v10416 = vadd.f32 %v9935, %v10370
      %v10417 = vadd.f32 %v9936, %v10375
      %v10418 = vadd.f32 %v9937, %v10378
      %v10419 = vadd.f32 %v9938, %v10383
      %v10420 = vadd.f32 %v9939, %v10386
      %v10421 = vlaneseq
      %v10422 = vshrl.u32 %v10421, 7
      %v10423 = vsub.s32 0, %v10422
      %v10424 = vrot.slane %v310, %v10423
      %v10425 = vmul.f32 %v10389, %v10424
      %v10426 = vmul.f32 %v10390, %v10424
      %v10427 = vmul.f32 %v10391, %v10424
      %v10428 = vmul.f32 %v10392, %v10424
      %v10429 = vmul.f32 %v10393, %v10424
      %v10430 = vmul.f32 %v10394, %v10424
      %v10431 = vmul.f32 %v10395, %v10424
      %v10432 = vmul.f32 %v10396, %v10424
      %v10433 = vmul.f32 %v10397, %v10424
      %v10434 = vmul.f32 %v10398, %v10424
      %v10435 = vmul.f32 %v10399, %v10424
      %v10436 = vmul.f32 %v10400, %v10424
      %v10437 = vmul.f32 %v10401, %v10424
      %v10438 = vmul.f32 %v10402, %v10424
      %v10439 = vmul.f32 %v10403, %v10424
      %v10440 = vmul.f32 %v10404, %v10424
      %v10441 = vmul.f32 %v10405, %v10424
      %v10442 = vmul.f32 %v10406, %v10424
      %v10443 = vmul.f32 %v10407, %v10424
      %v10444 = vmul.f32 %v10408, %v10424
      %v10445 = vmul.f32 %v10409, %v10424
      %v10446 = vmul.f32 %v10410, %v10424
      %v10447 = vmul.f32 %v10411, %v10424
      %v10448 = vmul.f32 %v10412, %v10424
      %v10449 = vmul.f32 %v10413, %v10424
      %v10450 = vmul.f32 %v10414, %v10424
      %v10451 = vmul.f32 %v10415, %v10424
      %v10452 = vmul.f32 %v10416, %v10424
      %v10453 = vmul.f32 %v10417, %v10424
      %v10454 = vmul.f32 %v10418, %v10424
      %v10455 = vmul.f32 %v10419, %v10424
      %v10456 = vmul.f32 %v10420, %v10424
      %v10457 = vlaneseq
      %v10458 = vshrl.u32 %v10457, 7
      %v10459 = vsub.s32 0, %v10458
      %v10460 = vrot.slane %v311, %v10459
      %v10461 = vadd.f32 %v10425, %v10460
      %v10462 = vadd.f32 %v10426, %v10460
      %v10463 = vadd.f32 %v10427, %v10460
      %v10464 = vadd.f32 %v10428, %v10460
      %v10465 = vadd.f32 %v10429, %v10460
      %v10466 = vadd.f32 %v10430, %v10460
      %v10467 = vadd.f32 %v10431, %v10460
      %v10468 = vadd.f32 %v10432, %v10460
      %v10469 = vadd.f32 %v10433, %v10460
      %v10470 = vadd.f32 %v10434, %v10460
      %v10471 = vadd.f32 %v10435, %v10460
      %v10472 = vadd.f32 %v10436, %v10460
      %v10473 = vadd.f32 %v10437, %v10460
      %v10474 = vadd.f32 %v10438, %v10460
      %v10475 = vadd.f32 %v10439, %v10460
      %v10476 = vadd.f32 %v10440, %v10460
      %v10477 = vadd.f32 %v10441, %v10460
      %v10478 = vadd.f32 %v10442, %v10460
      %v10479 = vadd.f32 %v10443, %v10460
      %v10480 = vadd.f32 %v10444, %v10460
      %v10481 = vadd.f32 %v10445, %v10460
      %v10482 = vadd.f32 %v10446, %v10460
      %v10483 = vadd.f32 %v10447, %v10460
      %v10484 = vadd.f32 %v10448, %v10460
      %v10485 = vadd.f32 %v10449, %v10460
      %v10486 = vadd.f32 %v10450, %v10460
      %v10487 = vadd.f32 %v10451, %v10460
      %v10488 = vadd.f32 %v10452, %v10460
      %v10489 = vadd.f32 %v10453, %v10460
      %v10490 = vadd.f32 %v10454, %v10460
      %v10491 = vadd.f32 %v10455, %v10460
      %v10492 = vadd.f32 %v10456, %v10460
      %v10493 = vsel %vm5615, %v10461, 0.0
      %v10494 = vsel %vm5615, %v10462, 0.0
      %v10495 = vadd.f32 %v10493, %v10494
      %v10496 = vsel %vm5615, %v10463, 0.0
      %v10497 = vadd.f32 %v10495, %v10496
      %v10498 = vsel %vm5615, %v10464, 0.0
      %v10499 = vadd.f32 %v10497, %v10498
      %v10500 = vsel %vm5615, %v10465, 0.0
      %v10501 = vadd.f32 %v10499, %v10500
      %v10502 = vsel %vm5615, %v10466, 0.0
      %v10503 = vadd.f32 %v10501, %v10502
      %v10504 = vsel %vm5615, %v10467, 0.0
      %v10505 = vadd.f32 %v10503, %v10504
      %v10506 = vsel %vm5615, %v10468, 0.0
      %v10507 = vadd.f32 %v10505, %v10506
      %v10508 = vsel %vm5615, %v10469, 0.0
      %v10509 = vadd.f32 %v10507, %v10508
      %v10510 = vsel %vm5615, %v10470, 0.0
      %v10511 = vadd.f32 %v10509, %v10510
      %v10512 = vsel %vm5615, %v10471, 0.0
      %v10513 = vadd.f32 %v10511, %v10512
      %v10514 = vsel %vm5615, %v10472, 0.0
      %v10515 = vadd.f32 %v10513, %v10514
      %v10516 = vsel %vm5615, %v10473, 0.0
      %v10517 = vadd.f32 %v10515, %v10516
      %v10518 = vsel %vm5615, %v10474, 0.0
      %v10519 = vadd.f32 %v10517, %v10518
      %v10520 = vsel %vm5615, %v10475, 0.0
      %v10521 = vadd.f32 %v10519, %v10520
      %v10522 = vsel %vm5615, %v10476, 0.0
      %v10523 = vadd.f32 %v10521, %v10522
      %v10524 = vsel %vm5615, %v10477, 0.0
      %v10525 = vadd.f32 %v10523, %v10524
      %v10526 = vsel %vm5615, %v10478, 0.0
      %v10527 = vadd.f32 %v10525, %v10526
      %v10528 = vsel %vm5615, %v10479, 0.0
      %v10529 = vadd.f32 %v10527, %v10528
      %v10530 = vsel %vm5615, %v10480, 0.0
      %v10531 = vadd.f32 %v10529, %v10530
      %v10532 = vsel %vm5615, %v10481, 0.0
      %v10533 = vadd.f32 %v10531, %v10532
      %v10534 = vsel %vm5615, %v10482, 0.0
      %v10535 = vadd.f32 %v10533, %v10534
      %v10536 = vsel %vm5615, %v10483, 0.0
      %v10537 = vadd.f32 %v10535, %v10536
      %v10538 = vsel %vm5615, %v10484, 0.0
      %v10539 = vadd.f32 %v10537, %v10538
      %v10540 = vsel %vm5615, %v10485, 0.0
      %v10541 = vadd.f32 %v10539, %v10540
      %v10542 = vsel %vm5615, %v10486, 0.0
      %v10543 = vadd.f32 %v10541, %v10542
      %v10544 = vsel %vm5615, %v10487, 0.0
      %v10545 = vadd.f32 %v10543, %v10544
      %v10546 = vsel %vm5615, %v10488, 0.0
      %v10547 = vadd.f32 %v10545, %v10546
      %v10548 = vsel %vm5615, %v10489, 0.0
      %v10549 = vadd.f32 %v10547, %v10548
      %v10550 = vsel %vm5615, %v10490, 0.0
      %v10551 = vadd.f32 %v10549, %v10550
      %v10552 = vsel %vm5615, %v10491, 0.0
      %v10553 = vadd.f32 %v10551, %v10552
      %v10554 = vsel %vm5615, %v10492, 0.0
      %v10555 = vadd.f32 %v10553, %v10554
      %v10556 = vrot.slane %v10555, 4
      %v10557 = vadd.f32 %v10555, %v10556
      %v10558 = vrot.slane %v10557, 2
      %v10559 = vadd.f32 %v10557, %v10558
      %v10560 = vrot.slane %v10559, 1
      %v10561 = vadd.f32 %v10559, %v10560
      %v10562 = vmul.f32 %v10561, 0.00390625
      %v10563 = vld [vmem:[%s6] sm:$0xff]
      %v10564 = vld [vmem:[%s6 + $0x8] sm:$0xff]
      %v10565 = vld [vmem:[%s6 + $0x10] sm:$0xff]
      %v10566 = vld [vmem:[%s6 + $0x18] sm:$0xff]
      %v10568 = vsel %vm5615, %v10562, 0
      %10570 = vmatprep.subr.mxu0 0.0
      %10571 = vmatpush1.msra.mxu0 0.0
      %10572 = vmatprep.subr.mxu0 0.0
      %10573 = vmatpush1.msra.mxu0 0.0
      %10574 = vmatprep.subr.mxu0 0.0
      %10575 = vmatpush1.msra.mxu0 0.0
      %10576 = vmatprep.subr.mxu0 0.0
      %10577 = vmatpush1.msra.mxu0 0.0
      %10578 = vmatprep.subr.mxu0 0.0
      %10579 = vmatpush1.msra.mxu0 0.0
      %10580 = vmatprep.subr.mxu0 0.0
      %10581 = vmatpush1.msra.mxu0 0.0
      %10582 = vmatprep.subr.mxu0 0.0
      %10583 = vmatpush1.msra.mxu0 0.0
      %10584 = vmatprep.subr.mxu0 0.0
      %10585 = vmatpush1.msra.mxu0 0.0
      %10586 = vmatprep.subr.mxu0 0.0
      %10587 = vmatpush1.msra.mxu0 0.0
      %10588 = vmatprep.subr.mxu0 0.0
      %10589 = vmatpush1.msra.mxu0 0.0
      %10590 = vmatprep.subr.mxu0 0.0
      %10591 = vmatpush1.msra.mxu0 0.0
      %10592 = vmatprep.subr.mxu0 0.0
      %10593 = vmatpush1.msra.mxu0 0.0
      %10594 = vmatprep.subr.mxu0 0.0
      %10595 = vmatpush1.msra.mxu0 %v10566
      %10596 = vmatprep.subr.mxu0 0.0
      %10597 = vmatpush1.msra.mxu0 %v10565
      %10598 = vmatprep.subr.mxu0 0.0
      %10599 = vmatpush1.msra.mxu0 %v10564
      %10600 = vmatprep.subr.mxu0 0.0
      %10601 = vmatpush1.msra.mxu0 %v10563
      %10602 = vmatprep.subr.mxu0 0.0
      %10603 = vmatpush2.msra.mxu0 0.0
      %10604 = vmatprep.subr.mxu0 0.0
      %10605 = vmatpush2.msra.mxu0 0.0
      %10606 = vmatprep.subr.mxu0 0.0
      %10607 = vmatpush2.msra.mxu0 0.0
      %10608 = vmatprep.subr.mxu0 0.0
      %10609 = vmatpush2.msra.mxu0 0.0
      %10610 = vmatprep.subr.mxu0 0.0
      %10611 = vmatpush2.msra.mxu0 0.0
      %10612 = vmatprep.subr.mxu0 0.0
      %10613 = vmatpush2.msra.mxu0 0.0
      %10614 = vmatprep.subr.mxu0 0.0
      %10615 = vmatpush2.msra.mxu0 0.0
      %10616 = vmatprep.subr.mxu0 0.0
      %10617 = vmatpush2.msra.mxu0 0.0
      %10618 = vmatprep.subr.mxu0 0.0
      %10619 = vmatpush2.msra.mxu0 0.0
      %10620 = vmatprep.subr.mxu0 0.0
      %10621 = vmatpush2.msra.mxu0 0.0
      %10622 = vmatprep.subr.mxu0 0.0
      %10623 = vmatpush2.msra.mxu0 0.0
      %10624 = vmatprep.subr.mxu0 0.0
      %10625 = vmatpush2.msra.mxu0 0.0
      %10626 = vmatprep.subr.mxu0 0.0
      %10627 = vmatpush2.msra.mxu0 0.0
      %10628 = vmatprep.subr.mxu0 0.0
      %10629 = vmatpush2.msra.mxu0 0.0
      %10630 = vmatprep.subr.mxu0 0.0
      %10631 = vmatpush2.msra.mxu0 0.0
      %10632 = vmatprep.subr.mxu0 0.0
      %10633 = vmatpush2.msra.mxu0 0.0
      %10634 = vmatprep.mubr.f32.mxu0 0.0
      %10635 = vmatmul.mubr.f32.gmra.mxu0 %v10568
      %v10636 = vpop.f32.mrf.mxu0
      %v10637 = vadd.f32 0.0, %v10636
      %v10638 = vpop.f32.mrf.mxu0
      %10639 = vdwg.mxu0
      %v10640 = vmax.f32 %v10637, 0.0
      %v10641 = vld [vmem:[%s7] sm:$0xff]
      %v10642 = vld [vmem:[%s7 + $0x8] sm:$0xff]
      %v10643 = vld [vmem:[%s7 + $0x10] sm:$0xff]
      %v10644 = vld [vmem:[%s7 + $0x18] sm:$0xff]
      %v10645 = vld [vmem:[%s7 + $0x20] sm:$0xff]
      %v10646 = vld [vmem:[%s7 + $0x28] sm:$0xff]
      %v10647 = vld [vmem:[%s7 + $0x30] sm:$0xff]
      %v10648 = vld [vmem:[%s7 + $0x38] sm:$0xff]
      %v10649 = vld [vmem:[%s7 + $0x40] sm:$0xff]
      %v10650 = vld [vmem:[%s7 + $0x48] sm:$0xff]
      %v10651 = vld [vmem:[%s7 + $0x50] sm:$0xff]
      %v10652 = vld [vmem:[%s7 + $0x58] sm:$0xff]
      %v10653 = vld [vmem:[%s7 + $0x60] sm:$0xff]
      %v10654 = vld [vmem:[%s7 + $0x68] sm:$0xff]
      %v10655 = vld [vmem:[%s7 + $0x70] sm:$0xff]
      %v10656 = vld [vmem:[%s7 + $0x78] sm:$0xff]
      %10657 = vmatprep.subr.mxu0 0.0
      %10658 = vmatpush1.msra.mxu0 %v10656
      %10659 = vmatprep.subr.mxu0 0.0
      %10660 = vmatpush1.msra.mxu0 %v10655
      %10661 = vmatprep.subr.mxu0 0.0
      %10662 = vmatpush1.msra.mxu0 %v10654
      %10663 = vmatprep.subr.mxu0 0.0
      %10664 = vmatpush1.msra.mxu0 %v10653
      %10665 = vmatprep.subr.mxu0 0.0
      %10666 = vmatpush1.msra.mxu0 %v10652
      %10667 = vmatprep.subr.mxu0 0.0
      %10668 = vmatpush1.msra.mxu0 %v10651
      %10669 = vmatprep.subr.mxu0 0.0
      %10670 = vmatpush1.msra.mxu0 %v10650
      %10671 = vmatprep.subr.mxu0 0.0
      %10672 = vmatpush1.msra.mxu0 %v10649
      %10673 = vmatprep.subr.mxu0 0.0
      %10674 = vmatpush1.msra.mxu0 %v10648
      %10675 = vmatprep.subr.mxu0 0.0
      %10676 = vmatpush1.msra.mxu0 %v10647
      %10677 = vmatprep.subr.mxu0 0.0
      %10678 = vmatpush1.msra.mxu0 %v10646
      %10679 = vmatprep.subr.mxu0 0.0
      %10680 = vmatpush1.msra.mxu0 %v10645
      %10681 = vmatprep.subr.mxu0 0.0
      %10682 = vmatpush1.msra.mxu0 %v10644
      %10683 = vmatprep.subr.mxu0 0.0
      %10684 = vmatpush1.msra.mxu0 %v10643
      %10685 = vmatprep.subr.mxu0 0.0
      %10686 = vmatpush1.msra.mxu0 %v10642
      %10687 = vmatprep.subr.mxu0 0.0
      %10688 = vmatpush1.msra.mxu0 %v10641
      %10689 = vmatprep.subr.mxu0 0.0
      %10690 = vmatpush2.msra.mxu0 0.0
      %10691 = vmatprep.subr.mxu0 0.0
      %10692 = vmatpush2.msra.mxu0 0.0
      %10693 = vmatprep.subr.mxu0 0.0
      %10694 = vmatpush2.msra.mxu0 0.0
      %10695 = vmatprep.subr.mxu0 0.0
      %10696 = vmatpush2.msra.mxu0 0.0
      %10697 = vmatprep.subr.mxu0 0.0
      %10698 = vmatpush2.msra.mxu0 0.0
      %10699 = vmatprep.subr.mxu0 0.0
      %10700 = vmatpush2.msra.mxu0 0.0
      %10701 = vmatprep.subr.mxu0 0.0
      %10702 = vmatpush2.msra.mxu0 0.0
      %10703 = vmatprep.subr.mxu0 0.0
      %10704 = vmatpush2.msra.mxu0 0.0
      %10705 = vmatprep.subr.mxu0 0.0
      %10706 = vmatpush2.msra.mxu0 0.0
      %10707 = vmatprep.subr.mxu0 0.0
      %10708 = vmatpush2.msra.mxu0 0.0
      %10709 = vmatprep.subr.mxu0 0.0
      %10710 = vmatpush2.msra.mxu0 0.0
      %10711 = vmatprep.subr.mxu0 0.0
      %10712 = vmatpush2.msra.mxu0 0.0
      %10713 = vmatprep.subr.mxu0 0.0
      %10714 = vmatpush2.msra.mxu0 0.0
      %10715 = vmatprep.subr.mxu0 0.0
      %10716 = vmatpush2.msra.mxu0 0.0
      %10717 = vmatprep.subr.mxu0 0.0
      %10718 = vmatpush2.msra.mxu0 0.0
      %10719 = vmatprep.subr.mxu0 0.0
      %10720 = vmatpush2.msra.mxu0 0.0
      %10721 = vmatprep.mubr.f32.mxu0 0.0
      %10722 = vmatmul.mubr.f32.gmra.mxu0 %v10640
      %v10723 = vpop.f32.mrf.mxu0
      %v10724 = vadd.f32 0.0, %v10723
      %v10725 = vpop.f32.mrf.mxu0
      %10726 = vdwg.mxu0
      %v10727 = vsub.f32 0.0, %v10724
      %v10728 = vmul.f32 %v10727, 1.442695
      %v10729 = vpow.pop %v10728
      %v10730 = vadd.f32 %v10729, 1.0
      %v10731 = vrcp.pop %v10730
      %v10732 = vmul.f32 1.0, %v10731
      %v10733 = vlaneseq
      %v10734 = vshrl.u32 %v10733, 7
      %v10735 = vsub.s32 0, %v10734
      %v10736 = vrot.slane %v10732, %v10735
      %v10737 = vmul.f32 %v10461, %v10736
      %v10738 = vmul.f32 %v10462, %v10736
      %v10739 = vmul.f32 %v10463, %v10736
      %v10740 = vmul.f32 %v10464, %v10736
      %v10741 = vmul.f32 %v10465, %v10736
      %v10742 = vmul.f32 %v10466, %v10736
      %v10743 = vmul.f32 %v10467, %v10736
      %v10744 = vmul.f32 %v10468, %v10736
      %v10745 = vmul.f32 %v10469, %v10736
      %v10746 = vmul.f32 %v10470, %v10736
      %v10747 = vmul.f32 %v10471, %v10736
      %v10748 = vmul.f32 %v10472, %v10736
      %v10749 = vmul.f32 %v10473, %v10736
      %v10750 = vmul.f32 %v10474, %v10736
      %v10751 = vmul.f32 %v10475, %v10736
      %v10752 = vmul.f32 %v10476, %v10736
      %v10753 = vmul.f32 %v10477, %v10736
      %v10754 = vmul.f32 %v10478, %v10736
      %v10755 = vmul.f32 %v10479, %v10736
      %v10756 = vmul.f32 %v10480, %v10736
      %v10757 = vmul.f32 %v10481, %v10736
      %v10758 = vmul.f32 %v10482, %v10736
      %v10759 = vmul.f32 %v10483, %v10736
      %v10760 = vmul.f32 %v10484, %v10736
      %v10761 = vmul.f32 %v10485, %v10736
      %v10762 = vmul.f32 %v10486, %v10736
      %v10763 = vmul.f32 %v10487, %v10736
      %v10764 = vmul.f32 %v10488, %v10736
      %v10765 = vmul.f32 %v10489, %v10736
      %v10766 = vmul.f32 %v10490, %v10736
      %v10767 = vmul.f32 %v10491, %v10736
      %v10768 = vmul.f32 %v10492, %v10736
      %v10769 = vadd.f32 %v10737, %v6052
      %v10770 = vadd.f32 %v10738, %v6053
      %v10771 = vadd.f32 %v10739, %v6054
      %v10772 = vadd.f32 %v10740, %v6055
      %v10773 = vadd.f32 %v10741, %v6056
      %v10774 = vadd.f32 %v10742, %v6057
      %v10775 = vadd.f32 %v10743, %v6058
      %v10776 = vadd.f32 %v10744, %v6059
      %v10777 = vadd.f32 %v10745, %v6060
      %v10778 = vadd.f32 %v10746, %v6061
      %v10779 = vadd.f32 %v10747, %v6062
      %v10780 = vadd.f32 %v10748, %v6063
      %v10781 = vadd.f32 %v10749, %v6064
      %v10782 = vadd.f32 %v10750, %v6065
      %v10783 = vadd.f32 %v10751, %v6066
      %v10784 = vadd.f32 %v10752, %v6067
      %v10785 = vadd.f32 %v10753, %v6068
      %v10786 = vadd.f32 %v10754, %v6069
      %v10787 = vadd.f32 %v10755, %v6070
      %v10788 = vadd.f32 %v10756, %v6071
      %v10789 = vadd.f32 %v10757, %v6072
      %v10790 = vadd.f32 %v10758, %v6073
      %v10791 = vadd.f32 %v10759, %v6074
      %v10792 = vadd.f32 %v10760, %v6075
      %v10793 = vadd.f32 %v10761, %v6076
      %v10794 = vadd.f32 %v10762, %v6077
      %v10795 = vadd.f32 %v10763, %v6078
      %v10796 = vadd.f32 %v10764, %v6079
      %v10797 = vadd.f32 %v10765, %v6080
      %v10798 = vadd.f32 %v10766, %v6081
      %v10799 = vadd.f32 %v10767, %v6082
      %v10800 = vadd.f32 %v10768, %v6083
      %v10801 = vmax.f32 %v10769, 0.0
      %v10802 = vmax.f32 %v10770, 0.0
      %v10803 = vmax.f32 %v10771, 0.0
      %v10804 = vmax.f32 %v10772, 0.0
      %v10805 = vmax.f32 %v10773, 0.0
      %v10806 = vmax.f32 %v10774, 0.0
      %v10807 = vmax.f32 %v10775, 0.0
      %v10808 = vmax.f32 %v10776, 0.0
      %v10809 = vmax.f32 %v10777, 0.0
      %v10810 = vmax.f32 %v10778, 0.0
      %v10811 = vmax.f32 %v10779, 0.0
      %v10812 = vmax.f32 %v10780, 0.0
      %v10813 = vmax.f32 %v10781, 0.0
      %v10814 = vmax.f32 %v10782, 0.0
      %v10815 = vmax.f32 %v10783, 0.0
      %v10816 = vmax.f32 %v10784, 0.0
      %v10817 = vmax.f32 %v10785, 0.0
      %v10818 = vmax.f32 %v10786, 0.0
      %v10819 = vmax.f32 %v10787, 0.0
      %v10820 = vmax.f32 %v10788, 0.0
      %v10821 = vmax.f32 %v10789, 0.0
      %v10822 = vmax.f32 %v10790, 0.0
      %v10823 = vmax.f32 %v10791, 0.0
      %v10824 = vmax.f32 %v10792, 0.0
      %v10825 = vmax.f32 %v10793, 0.0
      %v10826 = vmax.f32 %v10794, 0.0
      %v10827 = vmax.f32 %v10795, 0.0
      %v10828 = vmax.f32 %v10796, 0.0
      %v10829 = vmax.f32 %v10797, 0.0
      %v10830 = vmax.f32 %v10798, 0.0
      %v10831 = vmax.f32 %v10799, 0.0
      %v10832 = vmax.f32 %v10800, 0.0
      %10833 = vst.msk [vmem:[%s305] sm:$0xff] %vm5615, %v10801
      %10834 = vst.msk [vmem:[%s305 + $0x8] sm:$0xff] %vm5615, %v10802
      %10835 = vst.msk [vmem:[%s305 + $0x10] sm:$0xff] %vm5615, %v10803
      %10836 = vst.msk [vmem:[%s305 + $0x18] sm:$0xff] %vm5615, %v10804
      %10837 = vst.msk [vmem:[%s305 + $0x20] sm:$0xff] %vm5615, %v10805
      %10838 = vst.msk [vmem:[%s305 + $0x28] sm:$0xff] %vm5615, %v10806
      %10839 = vst.msk [vmem:[%s305 + $0x30] sm:$0xff] %vm5615, %v10807
      %10840 = vst.msk [vmem:[%s305 + $0x38] sm:$0xff] %vm5615, %v10808
      %10841 = vst.msk [vmem:[%s305 + $0x40] sm:$0xff] %vm5615, %v10809
      %10842 = vst.msk [vmem:[%s305 + $0x48] sm:$0xff] %vm5615, %v10810
      %10843 = vst.msk [vmem:[%s305 + $0x50] sm:$0xff] %vm5615, %v10811
      %10844 = vst.msk [vmem:[%s305 + $0x58] sm:$0xff] %vm5615, %v10812
      %10845 = vst.msk [vmem:[%s305 + $0x60] sm:$0xff] %vm5615, %v10813
      %10846 = vst.msk [vmem:[%s305 + $0x68] sm:$0xff] %vm5615, %v10814
      %10847 = vst.msk [vmem:[%s305 + $0x70] sm:$0xff] %vm5615, %v10815
      %10848 = vst.msk [vmem:[%s305 + $0x78] sm:$0xff] %vm5615, %v10816
      %10849 = vst.msk [vmem:[%s305 + $0x80] sm:$0xff] %vm5615, %v10817
      %10850 = vst.msk [vmem:[%s305 + $0x88] sm:$0xff] %vm5615, %v10818
      %10851 = vst.msk [vmem:[%s305 + $0x90] sm:$0xff] %vm5615, %v10819
      %10852 = vst.msk [vmem:[%s305 + $0x98] sm:$0xff] %vm5615, %v10820
      %10853 = vst.msk [vmem:[%s305 + $0xa0] sm:$0xff] %vm5615, %v10821
      %10854 = vst.msk [vmem:[%s305 + $0xa8] sm:$0xff] %vm5615, %v10822
      %10855 = vst.msk [vmem:[%s305 + $0xb0] sm:$0xff] %vm5615, %v10823
      %10856 = vst.msk [vmem:[%s305 + $0xb8] sm:$0xff] %vm5615, %v10824
      %10857 = vst.msk [vmem:[%s305 + $0xc0] sm:$0xff] %vm5615, %v10825
      %10858 = vst.msk [vmem:[%s305 + $0xc8] sm:$0xff] %vm5615, %v10826
      %10859 = vst.msk [vmem:[%s305 + $0xd0] sm:$0xff] %vm5615, %v10827
      %10860 = vst.msk [vmem:[%s305 + $0xd8] sm:$0xff] %vm5615, %v10828
      %10861 = vst.msk [vmem:[%s305 + $0xe0] sm:$0xff] %vm5615, %v10829
      %10862 = vst.msk [vmem:[%s305 + $0xe8] sm:$0xff] %vm5615, %v10830
      %10863 = vst.msk [vmem:[%s305 + $0xf0] sm:$0xff] %vm5615, %v10831
      %10864 = vst.msk [vmem:[%s305 + $0xf8] sm:$0xff] %vm5615, %v10832
      %p10865 = scmp.lt.s32.totalorder %s19, 1
      %s10866 = scalar_select %p10865, %s19, 1
      %s10867 = smul.addr %s10866, 32
      %s10868 = smul.addr %s10867, 8
      %s10869 = scalar_lea.vmem %s8, %s10868
      // Predicated region
      $region53: #{tpu_custom_call.1} parent=51 // pred_check
        %p10870 = pneg %p210
      $region54: #{tpu_custom_call.1} parent=51 // pred_check_branch
        %10872 = sbr.rel (%p10870) target = $region56
      $region55: #{tpu_custom_call.1} parent=51 // pred_region
        _
      $region56: #{tpu_custom_call.1} parent=51 // pred_fallthru
        _
    $region52: #{tpu_custom_call.1} parent=5 // pred_fallthru
      _
    %p10873 = scmp.le.s32.totalorder 2, %s14
    // Predicated region
    $region57: #{tpu_custom_call.1} parent=5 // pred_check
      %p10874 = pneg %p10873
    $region58: #{tpu_custom_call.1} parent=5 // pred_check_branch
      %10876 = sbr.rel (%p10874) target = $region60
    $region59: #{tpu_custom_call.1} parent=5 // pred_region
      %s10877 = ssub.s32 %s14, 2
      // Predicated region
      $region61: #{tpu_custom_call.1} parent=59 // pred_check
        %p10878 = pneg %p216
      $region62: #{tpu_custom_call.1} parent=59 // pred_check_branch
        %10880 = sbr.rel (%p10878) target = $region64
      $region63: #{tpu_custom_call.1} parent=59 // pred_region
        %p10881 = scmp.lt.s32.totalorder %s20, 1
        %s10882 = scalar_select %p10881, %s20, 1
        %s10883 = smul.addr %s10882, 32
        %s10884 = smul.addr %s10883, 8
        %s10885 = scalar_lea.vmem %s8, %s10884
      $region64: #{tpu_custom_call.1} parent=59 // pred_fallthru
        _
    $region60: #{tpu_custom_call.1} parent=5 // pred_fallthru
      _
  $region6: #{tpu_custom_call.1} parent=0 // loop_footer
    %s18 = sadd.s32 1, %s14
  $region7: #{tpu_custom_call.1} parent=0 // loop_footer_branch
    %13 = sbr.rel target = $region3
  $region8: #{tpu_custom_call.1} parent=0 // loop_exit
    _

</llo_original>
